<compile_context>
chip_gen: v7x
topology: tpu7x:2x2x1
jax: 0.10.0
libtpu: 0.0.40
codegen_flags: <defaults>
</compile_context>

<pallas_src>
import numpy as np

import jax
import jax.numpy as jnp
from jax import lax
from jax.experimental import pallas as pl
from jax.experimental.pallas import tpu as pltpu


# ----------------------------------------------------------------------------
# Deterministic parameter init (shapes per nn.Module.__init__)
# ----------------------------------------------------------------------------
def init_params(key, latent_dim):
    ks = jax.random.split(key, 14)

    def normal(k, shape, scale):
        return (scale * jax.random.normal(k, shape)).astype(jnp.float32)

    p = {}
    p["w1"] = normal(ks[0], (8, 1, 3, 3), 0.2)      # Conv2d(1, 8, 3, s=2, p=1)
    p["b1"] = normal(ks[1], (8,), 0.05)
    p["w2"] = normal(ks[2], (16, 8, 3, 3), 0.1)     # Conv2d(8, 16, 3, s=2, p=1)
    p["b2"] = normal(ks[3], (16,), 0.05)
    # BatchNorm2d(16) (inference-mode params)
    p["bn_gamma"] = (1.0 + 0.1 * jax.random.normal(ks[4], (16,))).astype(jnp.float32)
    p["bn_beta"] = normal(ks[5], (16,), 0.05)
    p["bn_mean"] = normal(ks[6], (16,), 0.01)
    p["bn_var"] = jnp.abs(1.0 + 0.1 * jax.random.normal(ks[7], (16,))).astype(jnp.float32)
    p["w3"] = normal(ks[8], (32, 16, 3, 3), 0.08)   # Conv2d(16, 32, 3, s=2, p=0)
    p["b3"] = normal(ks[9], (32,), 0.05)
    p["wl1"] = normal(ks[10], (128, 3 * 3 * 32), 0.05)   # Linear(288, 128), torch (out,in)
    p["bl1"] = normal(ks[11], (128,), 0.02)
    p["wl2"] = normal(ks[12], (latent_dim, 128), 0.05)   # Linear(128, latent_dim)
    p["bl2"] = normal(ks[13], (latent_dim,), 0.02)
    return p


# ----------------------------------------------------------------------------
# One-time packing: unroll each conv into a dense GEMM matrix + bias vector.
# Row order    = (c_in, ih, iw)   == NCHW flatten of the layer input.
# Column order = (c_out, oh, ow)  == NCHW flatten of the layer output.
# Hence layer outputs feed the next layer (and the final Flatten) unchanged.
# ----------------------------------------------------------------------------
def _conv_as_dense(w, b, H, W, stride, pad):
    C_out, C_in, k, _ = w.shape
    Ho = (H + 2 * pad - k) // stride + 1
    Wo = (W + 2 * pad - k) // stride + 1
    M = np.zeros((C_in * H * W, C_out * Ho * Wo), dtype=np.float32)
    ohs = np.arange(Ho)
    ows = np.arange(Wo)
    for co in range(C_out):
        for ci in range(C_in):
            for kh in range(k):
                ih = ohs * stride + kh - pad
                vh = (ih >= 0) & (ih < H)
                for kw in range(k):
                    iw = ows * stride + kw - pad
                    vw = (iw >= 0) & (iw < W)
                    rows = (ci * H * W + ih[vh][:, None] * W + iw[vw][None, :]).ravel()
                    cols = (co * Ho * Wo + ohs[vh][:, None] * Wo + ows[vw][None, :]).ravel()
                    M[rows, cols] = float(w[co, ci, kh, kw])
    bias = np.repeat(np.asarray(b, np.float32), Ho * Wo)
    return M, bias, Ho, Wo


def pack_params(params):
    g = lambda name: np.asarray(params[name], np.float32)
    w1, b1 = g("w1"), g("b1")
    w2, b2 = g("w2"), g("b2")
    gamma, beta = g("bn_gamma"), g("bn_beta")
    mean, var = g("bn_mean"), g("bn_var")
    w3, b3 = g("w3"), g("b3")
    wl1, bl1 = g("wl1"), g("bl1")
    wl2, bl2 = g("wl2"), g("bl2")

    # Fold eval-mode BatchNorm2d(16) into conv2 weights/bias.
    inv = gamma / np.sqrt(var + 1e-5)
    w2f = w2 * inv[:, None, None, None]
    b2f = (b2 - mean) * inv + beta

    M1, V1, H1, W1 = _conv_as_dense(w1, b1, 28, 28, 2, 1)     # -> (B, 8*14*14)
    M2, V2, H2, W2 = _conv_as_dense(w2f, b2f, H1, W1, 2, 1)   # -> (B, 16*7*7)
    M3, V3, H3, W3 = _conv_as_dense(w3, b3, H2, W2, 2, 0)     # -> (B, 32*3*3)
    assert (H3, W3) == (3, 3)

    def dev(a, dt):
        return jnp.asarray(a, dtype=dt)

    return dict(
        m1=dev(M1, jnp.bfloat16), v1=dev(V1[None, :], jnp.float32),
        m2=dev(M2, jnp.bfloat16), v2=dev(V2[None, :], jnp.float32),
        m3=dev(M3, jnp.bfloat16), v3=dev(V3[None, :], jnp.float32),
        m4=dev(wl1.T, jnp.bfloat16), v4=dev(bl1[None, :], jnp.float32),
        m5=dev(wl2.T, jnp.bfloat16), v5=dev(bl2[None, :], jnp.float32),
    )


# ----------------------------------------------------------------------------
# Single fused Pallas kernel: 5 chained (matmul + bias [+ ReLU]) stages.
# ----------------------------------------------------------------------------
def _encoder_kernel(x_ref, m1_ref, v1_ref, m2_ref, v2_ref, m3_ref, v3_ref,
                    m4_ref, v4_ref, m5_ref, v5_ref, o_ref):
    def fc(h, w_ref, b_ref, relu):
        acc = jnp.dot(h.astype(jnp.bfloat16), w_ref[...],
                      preferred_element_type=jnp.float32)
        acc = acc + b_ref[...]                       # (1, N) broadcasts over rows
        return jnp.maximum(acc, 0.0) if relu else acc

    h = x_ref[...]                                   # (tile_b, 784) f32
    h = fc(h, m1_ref, v1_ref, True)                  # conv1 + ReLU          -> (tb, 1568)
    h = fc(h, m2_ref, v2_ref, True)                  # conv2 + BN(folded)+ReLU -> (tb, 784)
    h = fc(h, m3_ref, v3_ref, True)                  # conv3 + ReLU (flatten is a no-op)
    h = fc(h, m4_ref, v4_ref, True)                  # Linear(288,128) + ReLU
    h = fc(h, m5_ref, v5_ref, False)                 # Linear(128, latent)
    o_ref[...] = h.astype(o_ref.dtype)


def encoder_forward(packed, x):
    B = x.shape[0]
    x_flat = x.reshape(B, -1).astype(jnp.float32)    # NCHW flatten (C=1) -> (B, 784)
    K_in = x_flat.shape[1]
    assert K_in == 28 * 28, "Encoder requires 1x28x28 inputs (3*3*32 flatten)."
    latent_dim = packed["v5"].shape[1]

    # Batch-row tiling (single block at B=2; scales to large B without blowing VMEM).
    if B <= 512:
        tile_b, grid_b = B, 1
    else:
        assert B % 512 == 0
        tile_b, grid_b = 512, B // 512

    in_specs = [pl.BlockSpec((tile_b, K_in), lambda i: (i, 0))]
    args = [x_flat]
    for nm in ("m1", "v1", "m2", "v2", "m3", "v3", "m4", "v4", "m5", "v5"):
        a = packed[nm]
        in_specs.append(pl.BlockSpec(a.shape, lambda i: (0, 0)))  # VMEM-resident weights
        args.append(a)

    return pl.pallas_call(
        _encoder_kernel,
        out_shape=jax.ShapeDtypeStruct((B, latent_dim), jnp.float32),
        grid_spec=pltpu.PrefetchScalarGridSpec(
            num_scalar_prefetch=0,
            grid=(grid_b,),
            in_specs=in_specs,
            out_specs=pl.BlockSpec((tile_b, latent_dim), lambda i: (i, 0)),
        ),
        compiler_params=pltpu.CompilerParams(
            dimension_semantics=("parallel",),
            vmem_limit_bytes=48 * 1024 * 1024,
        ),
    )(*args)


# ----------------------------------------------------------------------------
# Pure-JAX reference (eval-mode BN), used only for a correctness check.
# ----------------------------------------------------------------------------
def encoder_reference(params, x):
    def conv(h, w, b, stride, pad):
        y = lax.conv_general_dilated(
            h, w, window_strides=(stride, stride),
            padding=[(pad, pad), (pad, pad)],
            dimension_numbers=("NCHW", "OIHW", "NCHW"))
        return y + b[None, :, None, None]

    h = jax.nn.relu(conv(x, params["w1"], params["b1"], 2, 1))
    h = conv(h, params["w2"], params["b2"], 2, 1)
    inv = params["bn_gamma"] / jnp.sqrt(params["bn_var"] + 1e-5)
    h = (h - params["bn_mean"][None, :, None, None]) * inv[None, :, None, None] \
        + params["bn_beta"][None, :, None, None]
    h = jax.nn.relu(h)
    h = jax.nn.relu(conv(h, params["w3"], params["b3"], 2, 0))
    h = h.reshape(h.shape[0], -1)
    h = jax.nn.relu(h @ params["wl1"].T + params["bl1"])
    return h @ params["wl2"].T + params["bl2"]


if __name__ == "__main__":
    latent_dim = 8
    key = jax.random.PRNGKey(0)
    pkey, xkey = jax.random.split(key)

    params = init_params(pkey, latent_dim)
    packed = pack_params(params)

    # Input shape is fixed by the 3*3*32 -> 128 linear: 28x28 single-channel.
    x = jax.random.normal(xkey, (2, 1, 28, 28), dtype=jnp.float32)

    fwd = jax.jit(encoder_forward)
    out = fwd(packed, x)
    out = jax.block_until_ready(out)

    assert out.shape == (2, latent_dim), out.shape
    assert out.dtype == jnp.float32
    assert bool(jnp.all(jnp.isfinite(out)))

    # Correctness vs plain-JAX f32 reference (bf16 MXU operands -> loose tol).
    ref = jax.block_until_ready(jax.jit(encoder_reference)(params, x))
    max_err = float(jnp.max(jnp.abs(out - ref)))
    assert max_err < 5e-2, f"max |err| = {max_err}"

    print("KERNEL_OK")
</pallas_src>

<mosaic_0001>
module attributes {stable_mosaic.version = 11 : i64} {
  func.func @_encoder_kernel(%arg0: i32, %arg1: memref<2x784xf32, #tpu.memory_space<vmem>>, %arg2: memref<784x1568xbf16, #tpu.memory_space<vmem>>, %arg3: memref<1x1568xf32, #tpu.memory_space<vmem>>, %arg4: memref<1568x784xbf16, #tpu.memory_space<vmem>>, %arg5: memref<1x784xf32, #tpu.memory_space<vmem>>, %arg6: memref<784x288xbf16, #tpu.memory_space<vmem>>, %arg7: memref<1x288xf32, #tpu.memory_space<vmem>>, %arg8: memref<288x128xbf16, #tpu.memory_space<vmem>>, %arg9: memref<1x128xf32, #tpu.memory_space<vmem>>, %arg10: memref<128x8xbf16, #tpu.memory_space<vmem>>, %arg11: memref<1x8xf32, #tpu.memory_space<vmem>>, %arg12: memref<2x8xf32, #tpu.memory_space<vmem>>) attributes {dimension_semantics = [#tpu.dimension_semantics<parallel>], iteration_bounds = array<i64: 1>, scalar_prefetch = 0 : i64, scratch_operands = 0 : i64, tpu.core_type = #tpu.core_type<tc>, window_params = [{transform_indices = @transform_0, window_bounds = array<i64: 2, 784>}, {pipeline_mode = #tpu.pipeline_mode<synchronous>, transform_indices = @transform_1, window_bounds = array<i64: 784, 1568>}, {pipeline_mode = #tpu.pipeline_mode<synchronous>, transform_indices = @transform_2, window_bounds = array<i64: 1, 1568>}, {pipeline_mode = #tpu.pipeline_mode<synchronous>, transform_indices = @transform_3, window_bounds = array<i64: 1568, 784>}, {pipeline_mode = #tpu.pipeline_mode<synchronous>, transform_indices = @transform_4, window_bounds = array<i64: 1, 784>}, {pipeline_mode = #tpu.pipeline_mode<synchronous>, transform_indices = @transform_5, window_bounds = array<i64: 784, 288>}, {pipeline_mode = #tpu.pipeline_mode<synchronous>, transform_indices = @transform_6, window_bounds = array<i64: 1, 288>}, {pipeline_mode = #tpu.pipeline_mode<synchronous>, transform_indices = @transform_7, window_bounds = array<i64: 288, 128>}, {pipeline_mode = #tpu.pipeline_mode<synchronous>, transform_indices = @transform_8, window_bounds = array<i64: 1, 128>}, {pipeline_mode = #tpu.pipeline_mode<synchronous>, transform_indices = @transform_9, window_bounds = array<i64: 128, 8>}, {pipeline_mode = #tpu.pipeline_mode<synchronous>, transform_indices = @transform_10, window_bounds = array<i64: 1, 8>}, {transform_indices = @transform_11, window_bounds = array<i64: 2, 8>}]} {
    %c0 = arith.constant 0 : index
    %c0_0 = arith.constant 0 : index
    %0 = vector.load %arg1[%c0, %c0_0] : memref<2x784xf32, #tpu.memory_space<vmem>>, vector<2x784xf32>
    %1 = arith.truncf %0 : vector<2x784xf32> to vector<2x784xbf16>
    %c0_1 = arith.constant 0 : index
    %c0_2 = arith.constant 0 : index
    %2 = vector.load %arg2[%c0_1, %c0_2] : memref<784x1568xbf16, #tpu.memory_space<vmem>>, vector<784x1568xbf16>
    %cst = arith.constant dense<0.000000e+00> : vector<2x1568xf32>
    %3 = tpu.matmul %1, %2, %cst {dimension_numbers = #tpu.dot_dimension_numbers<[1], [0], [0], [1], [0, 0, 1, 1], [], []>} : vector<2x784xbf16>, vector<784x1568xbf16>, vector<2x1568xf32> -> vector<2x1568xf32>
    %c0_3 = arith.constant 0 : index
    %c0_4 = arith.constant 0 : index
    %4 = vector.load %arg3[%c0_3, %c0_4] : memref<1x1568xf32, #tpu.memory_space<vmem>>, vector<1x1568xf32>
    %5 = vector.broadcast %4 : vector<1x1568xf32> to vector<2x1568xf32>
    %6 = arith.addf %3, %5 : vector<2x1568xf32>
    %cst_5 = arith.constant 0.000000e+00 : f32
    %7 = vector.broadcast %cst_5 : f32 to vector<2x1568xf32>
    %8 = arith.maximumf %6, %7 : vector<2x1568xf32>
    %9 = arith.truncf %8 : vector<2x1568xf32> to vector<2x1568xbf16>
    %c0_6 = arith.constant 0 : index
    %c0_7 = arith.constant 0 : index
    %10 = vector.load %arg4[%c0_6, %c0_7] : memref<1568x784xbf16, #tpu.memory_space<vmem>>, vector<1568x784xbf16>
    %cst_8 = arith.constant dense<0.000000e+00> : vector<2x784xf32>
    %11 = tpu.matmul %9, %10, %cst_8 {dimension_numbers = #tpu.dot_dimension_numbers<[1], [0], [0], [1], [0, 0, 1, 1], [], []>} : vector<2x1568xbf16>, vector<1568x784xbf16>, vector<2x784xf32> -> vector<2x784xf32>
    %c0_9 = arith.constant 0 : index
    %c0_10 = arith.constant 0 : index
    %12 = vector.load %arg5[%c0_9, %c0_10] : memref<1x784xf32, #tpu.memory_space<vmem>>, vector<1x784xf32>
    %13 = vector.broadcast %12 : vector<1x784xf32> to vector<2x784xf32>
    %14 = arith.addf %11, %13 : vector<2x784xf32>
    %cst_11 = arith.constant 0.000000e+00 : f32
    %15 = vector.broadcast %cst_11 : f32 to vector<2x784xf32>
    %16 = arith.maximumf %14, %15 : vector<2x784xf32>
    %17 = arith.truncf %16 : vector<2x784xf32> to vector<2x784xbf16>
    %c0_12 = arith.constant 0 : index
    %c0_13 = arith.constant 0 : index
    %18 = vector.load %arg6[%c0_12, %c0_13] : memref<784x288xbf16, #tpu.memory_space<vmem>>, vector<784x288xbf16>
    %cst_14 = arith.constant dense<0.000000e+00> : vector<2x288xf32>
    %19 = tpu.matmul %17, %18, %cst_14 {dimension_numbers = #tpu.dot_dimension_numbers<[1], [0], [0], [1], [0, 0, 1, 1], [], []>} : vector<2x784xbf16>, vector<784x288xbf16>, vector<2x288xf32> -> vector<2x288xf32>
    %c0_15 = arith.constant 0 : index
    %c0_16 = arith.constant 0 : index
    %20 = vector.load %arg7[%c0_15, %c0_16] : memref<1x288xf32, #tpu.memory_space<vmem>>, vector<1x288xf32>
    %21 = vector.broadcast %20 : vector<1x288xf32> to vector<2x288xf32>
    %22 = arith.addf %19, %21 : vector<2x288xf32>
    %cst_17 = arith.constant 0.000000e+00 : f32
    %23 = vector.broadcast %cst_17 : f32 to vector<2x288xf32>
    %24 = arith.maximumf %22, %23 : vector<2x288xf32>
    %25 = arith.truncf %24 : vector<2x288xf32> to vector<2x288xbf16>
    %c0_18 = arith.constant 0 : index
    %c0_19 = arith.constant 0 : index
    %26 = vector.load %arg8[%c0_18, %c0_19] : memref<288x128xbf16, #tpu.memory_space<vmem>>, vector<288x128xbf16>
    %cst_20 = arith.constant dense<0.000000e+00> : vector<2x128xf32>
    %27 = tpu.matmul %25, %26, %cst_20 {dimension_numbers = #tpu.dot_dimension_numbers<[1], [0], [0], [1], [0, 0, 1, 1], [], []>} : vector<2x288xbf16>, vector<288x128xbf16>, vector<2x128xf32> -> vector<2x128xf32>
    %c0_21 = arith.constant 0 : index
    %c0_22 = arith.constant 0 : index
    %28 = vector.load %arg9[%c0_21, %c0_22] : memref<1x128xf32, #tpu.memory_space<vmem>>, vector<1x128xf32>
    %29 = vector.broadcast %28 : vector<1x128xf32> to vector<2x128xf32>
    %30 = arith.addf %27, %29 : vector<2x128xf32>
    %cst_23 = arith.constant 0.000000e+00 : f32
    %31 = vector.broadcast %cst_23 : f32 to vector<2x128xf32>
    %32 = arith.maximumf %30, %31 : vector<2x128xf32>
    %33 = arith.truncf %32 : vector<2x128xf32> to vector<2x128xbf16>
    %c0_24 = arith.constant 0 : index
    %c0_25 = arith.constant 0 : index
    %34 = vector.load %arg10[%c0_24, %c0_25] : memref<128x8xbf16, #tpu.memory_space<vmem>>, vector<128x8xbf16>
    %cst_26 = arith.constant dense<0.000000e+00> : vector<2x8xf32>
    %35 = tpu.matmul %33, %34, %cst_26 {dimension_numbers = #tpu.dot_dimension_numbers<[1], [0], [0], [1], [0, 0, 1, 1], [], []>} : vector<2x128xbf16>, vector<128x8xbf16>, vector<2x8xf32> -> vector<2x8xf32>
    %c0_27 = arith.constant 0 : index
    %c0_28 = arith.constant 0 : index
    %36 = vector.load %arg11[%c0_27, %c0_28] : memref<1x8xf32, #tpu.memory_space<vmem>>, vector<1x8xf32>
    %37 = vector.broadcast %36 : vector<1x8xf32> to vector<2x8xf32>
    %38 = arith.addf %35, %37 : vector<2x8xf32>
    %c0_29 = arith.constant 0 : index
    %c0_30 = arith.constant 0 : index
    %39 = vector.load %arg12[%c0_29, %c0_30] : memref<2x8xf32, #tpu.memory_space<vmem>>, vector<2x8xf32>
    tpu.vector_store %arg12[%c0_29, %c0_30], %38 {strides = array<i32>} : memref<2x8xf32, #tpu.memory_space<vmem>>, vector<2x8xf32>,
    return
  }
  func.func @transform_0(%arg0: i32) -> (i32, i32) {
    %c0_i32 = arith.constant 0 : i32
    %c0_i32_0 = arith.constant 0 : i32
    return %arg0, %c0_i32 : i32, i32
  }
  func.func @transform_1(%arg0: i32) -> (i32, i32) {
    %c0_i32 = arith.constant 0 : i32
    %c0_i32_0 = arith.constant 0 : i32
    %c0_i32_1 = arith.constant 0 : i32
    return %c0_i32, %c0_i32_0 : i32, i32
  }
  func.func @transform_2(%arg0: i32) -> (i32, i32) {
    %c0_i32 = arith.constant 0 : i32
    %c0_i32_0 = arith.constant 0 : i32
    %c0_i32_1 = arith.constant 0 : i32
    return %c0_i32, %c0_i32_0 : i32, i32
  }
  func.func @transform_3(%arg0: i32) -> (i32, i32) {
    %c0_i32 = arith.constant 0 : i32
    %c0_i32_0 = arith.constant 0 : i32
    %c0_i32_1 = arith.constant 0 : i32
    return %c0_i32, %c0_i32_0 : i32, i32
  }
  func.func @transform_4(%arg0: i32) -> (i32, i32) {
    %c0_i32 = arith.constant 0 : i32
    %c0_i32_0 = arith.constant 0 : i32
    %c0_i32_1 = arith.constant 0 : i32
    return %c0_i32, %c0_i32_0 : i32, i32
  }
  func.func @transform_5(%arg0: i32) -> (i32, i32) {
    %c0_i32 = arith.constant 0 : i32
    %c0_i32_0 = arith.constant 0 : i32
    %c0_i32_1 = arith.constant 0 : i32
    return %c0_i32, %c0_i32_0 : i32, i32
  }
  func.func @transform_6(%arg0: i32) -> (i32, i32) {
    %c0_i32 = arith.constant 0 : i32
    %c0_i32_0 = arith.constant 0 : i32
    %c0_i32_1 = arith.constant 0 : i32
    return %c0_i32, %c0_i32_0 : i32, i32
  }
  func.func @transform_7(%arg0: i32) -> (i32, i32) {
    %c0_i32 = arith.constant 0 : i32
    %c0_i32_0 = arith.constant 0 : i32
    %c0_i32_1 = arith.constant 0 : i32
    return %c0_i32, %c0_i32_0 : i32, i32
  }
  func.func @transform_8(%arg0: i32) -> (i32, i32) {
    %c0_i32 = arith.constant 0 : i32
    %c0_i32_0 = arith.constant 0 : i32
    %c0_i32_1 = arith.constant 0 : i32
    return %c0_i32, %c0_i32_0 : i32, i32
  }
  func.func @transform_9(%arg0: i32) -> (i32, i32) {
    %c0_i32 = arith.constant 0 : i32
    %c0_i32_0 = arith.constant 0 : i32
    %c0_i32_1 = arith.constant 0 : i32
    return %c0_i32, %c0_i32_0 : i32, i32
  }
  func.func @transform_10(%arg0: i32) -> (i32, i32) {
    %c0_i32 = arith.constant 0 : i32
    %c0_i32_0 = arith.constant 0 : i32
    %c0_i32_1 = arith.constant 0 : i32
    return %c0_i32, %c0_i32_0 : i32, i32
  }
  func.func @transform_11(%arg0: i32) -> (i32, i32) {
    %c0_i32 = arith.constant 0 : i32
    %c0_i32_0 = arith.constant 0 : i32
    return %arg0, %c0_i32 : i32, i32
  }
}

</mosaic_0001>

<llo_original>
// kernel: encoder_forward.1
$region0: #{encoder_forward.1}
  #allocation0 [shape = 'u32[]', space=smem, size = 0x4, offset = 0x4, fixed_abs, tag = 'smem constant byte address 0x4 - core index']
  #allocation1 [shape = 'u32[144,128]{1,0:T(1,128)}', space=vmem, size = 0x12000, scoped, tag = 'internal scratch']
  %s0 = inlined_call_operand.vmem [shape: f32[2,784], index: 0, kind: input, shape index: {}]
  %s1 = inlined_call_operand.vmem [shape: bf16[784,1568], index: 1, kind: input, shape index: {}]
  %s2 = inlined_call_operand.vmem [shape: f32[1,1568], index: 2, kind: input, shape index: {}]
  %s3 = inlined_call_operand.vmem [shape: bf16[1568,784], index: 3, kind: input, shape index: {}]
  %s4 = inlined_call_operand.vmem [shape: f32[1,784], index: 4, kind: input, shape index: {}]
  %s5 = inlined_call_operand.vmem [shape: bf16[784,288], index: 5, kind: input, shape index: {}]
  %s6 = inlined_call_operand.vmem [shape: f32[1,288], index: 6, kind: input, shape index: {}]
  %s7 = inlined_call_operand.vmem [shape: bf16[288,128], index: 7, kind: input, shape index: {}]
  %s8 = inlined_call_operand.vmem [shape: f32[1,128], index: 8, kind: input, shape index: {}]
  %s9 = inlined_call_operand.vmem [shape: bf16[128,8], index: 9, kind: input, shape index: {}]
  %s10 = inlined_call_operand.vmem [shape: f32[1,8], index: 10, kind: input, shape index: {}]
  %s11 = inlined_call_operand.hbm [shape: f32[2,8], index: 11, kind: output, shape index: {}]
  %s12 = sld [smem:[#allocation0]]
  $region54: #{encoder_forward.1} parent=0
    _
  %s14 = ssub.s32 1, %s12
  %s15 = scalar_select 0, %s14, %s12
  $region1: #{encoder_forward.1} parent=0
    #allocation2 [shape = 'u8[1024]{0}', space=vmem, size = 0x400, scoped, tag = 'output window, operand 0, single buffered']
    #allocation3 [shape = 's32[1]{0}', space=sflag, size = 0x4, scoped, tag = 'scoped memory for encoder_forward.1']
    %16 = vsyncpa [#allocation3], 0
    // Predicated region
    $region2: #{encoder_forward.1} parent=1 // pred_check
      _
    $region3: #{encoder_forward.1} parent=1 // pred_check_branch
      %18 = sbr.rel (0) target = $region5
    $region4: #{encoder_forward.1} parent=1 // pred_region
      _
    $region5: #{encoder_forward.1} parent=1 // pred_fallthru
      _
    // Predicated region
    $region6: #{encoder_forward.1} parent=1 // pred_check
      _
    $region7: #{encoder_forward.1} parent=1 // pred_check_branch
      %20 = sbr.rel (0) target = $region9
    $region8: #{encoder_forward.1} parent=1 // pred_region
      _
    $region9: #{encoder_forward.1} parent=1 // pred_fallthru
      _
    // Predicated region
    $region10: #{encoder_forward.1} parent=1 // pred_check
      _
    $region11: #{encoder_forward.1} parent=1 // pred_check_branch
      %22 = sbr.rel (0) target = $region13
    $region12: #{encoder_forward.1} parent=1 // pred_region
      _
    $region13: #{encoder_forward.1} parent=1 // pred_fallthru
      _
    // Predicated region
    $region14: #{encoder_forward.1} parent=1 // pred_check
      _
    $region15: #{encoder_forward.1} parent=1 // pred_check_branch
      %24 = sbr.rel (0) target = $region17
    $region16: #{encoder_forward.1} parent=1 // pred_region
      _
    $region17: #{encoder_forward.1} parent=1 // pred_fallthru
      _
    // Predicated region
    $region18: #{encoder_forward.1} parent=1 // pred_check
      _
    $region19: #{encoder_forward.1} parent=1 // pred_check_branch
      %26 = sbr.rel (0) target = $region21
    $region20: #{encoder_forward.1} parent=1 // pred_region
      _
    $region21: #{encoder_forward.1} parent=1 // pred_fallthru
      _
    // Predicated region
    $region22: #{encoder_forward.1} parent=1 // pred_check
      _
    $region23: #{encoder_forward.1} parent=1 // pred_check_branch
      %28 = sbr.rel (0) target = $region25
    $region24: #{encoder_forward.1} parent=1 // pred_region
      _
    $region25: #{encoder_forward.1} parent=1 // pred_fallthru
      _
    // Predicated region
    $region26: #{encoder_forward.1} parent=1 // pred_check
      _
    $region27: #{encoder_forward.1} parent=1 // pred_check_branch
      %30 = sbr.rel (0) target = $region29
    $region28: #{encoder_forward.1} parent=1 // pred_region
      _
    $region29: #{encoder_forward.1} parent=1 // pred_fallthru
      _
    // Predicated region
    $region30: #{encoder_forward.1} parent=1 // pred_check
      _
    $region31: #{encoder_forward.1} parent=1 // pred_check_branch
      %32 = sbr.rel (0) target = $region33
    $region32: #{encoder_forward.1} parent=1 // pred_region
      _
    $region33: #{encoder_forward.1} parent=1 // pred_fallthru
      _
    // Predicated region
    $region34: #{encoder_forward.1} parent=1 // pred_check
      _
    $region35: #{encoder_forward.1} parent=1 // pred_check_branch
      %34 = sbr.rel (0) target = $region37
    $region36: #{encoder_forward.1} parent=1 // pred_region
      _
    $region37: #{encoder_forward.1} parent=1 // pred_fallthru
      _
    // Predicated region
    $region38: #{encoder_forward.1} parent=1 // pred_check
      _
    $region39: #{encoder_forward.1} parent=1 // pred_check_branch
      %36 = sbr.rel (0) target = $region41
    $region40: #{encoder_forward.1} parent=1 // pred_region
      _
    $region41: #{encoder_forward.1} parent=1 // pred_fallthru
      _
    // Predicated region
    $region42: #{encoder_forward.1} parent=1 // pred_check
      _
    $region43: #{encoder_forward.1} parent=1 // pred_check_branch
      %38 = sbr.rel (0) target = $region45
    $region44: #{encoder_forward.1} parent=1 // pred_region
      _
    $region45: #{encoder_forward.1} parent=1 // pred_fallthru
      _
    %v40 = vld [vmem:[%s0] sm:$0xff]
    %v41 = vld [vmem:[%s0 + $0x8] sm:$0x3f]
    %v44 = vcombine.high %v40, %v40
    %v46 = vunpack.c.l.s4 1983009808
    %v47 = vunpack.c.0.s8 %v46
    %v48 = vlaneseq
    %v49 = vshrl.u32 %v48, 7
    %v50 = vsub.s32 %v47, %v49
    %v51 = vrot.slane %v40, %v50
    %v53 = vunpack.c.l.s4 1983009808
    %v54 = vunpack.c.0.s8 %v53
    %v55 = vlaneseq
    %v56 = vshrl.u32 %v55, 7
    %v57 = vsub.s32 %v54, %v56
    %v58 = vrot.slane %v44, %v57
    %v59 = vcombine.high %v51, %v51
    %v60 = vcombine.high %v58, %v58
    %v61 = vcombine.high %v41, %v41
    %v63 = vunpack.c.l.s4 1983009808
    %v64 = vunpack.c.0.s8 %v63
    %v65 = vlaneseq
    %v66 = vshrl.u32 %v65, 7
    %v67 = vsub.s32 %v64, %v66
    %v68 = vrot.slane %v41, %v67
    %v70 = vunpack.c.l.s4 1983009808
    %v71 = vunpack.c.0.s8 %v70
    %v72 = vlaneseq
    %v73 = vshrl.u32 %v72, 7
    %v74 = vsub.s32 %v71, %v73
    %v75 = vrot.slane %v61, %v74
    %v76 = vcombine.high %v68, %v68
    %v84 = vpack.c.bf16 %v51, %v51
    %v85 = vpack.c.bf16 %v59, %v59
    %v86 = vpack.c.bf16 %v58, %v58
    %v87 = vpack.c.bf16 %v60, %v60
    %v88 = vpack.c.bf16 %v68, %v68
    %v89 = vpack.c.bf16 %v76, %v76
    %v90 = vpack.c.bf16 %v75, %v75
    %v91 = vld [vmem:[%s1] sm:$0xff]
    %v92 = vld [vmem:[%s1 + $0x8] sm:$0xff]
    %v93 = vld [vmem:[%s1 + $0x10] sm:$0xff]
    %v94 = vld [vmem:[%s1 + $0x18] sm:$0xff]
    %v95 = vld [vmem:[%s1 + $0x20] sm:$0xff]
    %v96 = vld [vmem:[%s1 + $0x28] sm:$0xff]
    %v97 = vld [vmem:[%s1 + $0x30] sm:$0xf]
    %v98 = vld [vmem:[%s1 + $0x34] sm:$0xff]
    %v99 = vld [vmem:[%s1 + $0x3c] sm:$0xff]
    %v100 = vld [vmem:[%s1 + $0x44] sm:$0xff]
    %v101 = vld [vmem:[%s1 + $0x4c] sm:$0xff]
    %v102 = vld [vmem:[%s1 + $0x54] sm:$0xff]
    %v103 = vld [vmem:[%s1 + $0x5c] sm:$0xff]
    %v104 = vld [vmem:[%s1 + $0x64] sm:$0xf]
    %v105 = vld [vmem:[%s1 + $0x68] sm:$0xff]
    %v106 = vld [vmem:[%s1 + $0x70] sm:$0xff]
    %v107 = vld [vmem:[%s1 + $0x78] sm:$0xff]
    %v108 = vld [vmem:[%s1 + $0x80] sm:$0xff]
    %v109 = vld [vmem:[%s1 + $0x88] sm:$0xff]
    %v110 = vld [vmem:[%s1 + $0x90] sm:$0xff]
    %v111 = vld [vmem:[%s1 + $0x98] sm:$0xf]
    %v112 = vld [vmem:[%s1 + $0x9c] sm:$0xff]
    %v113 = vld [vmem:[%s1 + $0xa4] sm:$0xff]
    %v114 = vld [vmem:[%s1 + $0xac] sm:$0xff]
    %v115 = vld [vmem:[%s1 + $0xb4] sm:$0xff]
    %v116 = vld [vmem:[%s1 + $0xbc] sm:$0xff]
    %v117 = vld [vmem:[%s1 + $0xc4] sm:$0xff]
    %v118 = vld [vmem:[%s1 + $0xcc] sm:$0xf]
    %v119 = vld [vmem:[%s1 + $0xd0] sm:$0xff]
    %v120 = vld [vmem:[%s1 + $0xd8] sm:$0xff]
    %v121 = vld [vmem:[%s1 + $0xe0] sm:$0xff]
    %v122 = vld [vmem:[%s1 + $0xe8] sm:$0xff]
    %v123 = vld [vmem:[%s1 + $0xf0] sm:$0xff]
    %v124 = vld [vmem:[%s1 + $0xf8] sm:$0xff]
    %v125 = vld [vmem:[%s1 + $0x100] sm:$0xf]
    %v126 = vld [vmem:[%s1 + $0x104] sm:$0xff]
    %v127 = vld [vmem:[%s1 + $0x10c] sm:$0xff]
    %v128 = vld [vmem:[%s1 + $0x114] sm:$0xff]
    %v129 = vld [vmem:[%s1 + $0x11c] sm:$0xff]
    %v130 = vld [vmem:[%s1 + $0x124] sm:$0xff]
    %v131 = vld [vmem:[%s1 + $0x12c] sm:$0xff]
    %v132 = vld [vmem:[%s1 + $0x134] sm:$0xf]
    %v133 = vld [vmem:[%s1 + $0x138] sm:$0xff]
    %v134 = vld [vmem:[%s1 + $0x140] sm:$0xff]
    %v135 = vld [vmem:[%s1 + $0x148] sm:$0xff]
    %v136 = vld [vmem:[%s1 + $0x150] sm:$0xff]
    %v137 = vld [vmem:[%s1 + $0x158] sm:$0xff]
    %v138 = vld [vmem:[%s1 + $0x160] sm:$0xff]
    %v139 = vld [vmem:[%s1 + $0x168] sm:$0xf]
    %v140 = vld [vmem:[%s1 + $0x16c] sm:$0xff]
    %v141 = vld [vmem:[%s1 + $0x174] sm:$0xff]
    %v142 = vld [vmem:[%s1 + $0x17c] sm:$0xff]
    %v143 = vld [vmem:[%s1 + $0x184] sm:$0xff]
    %v144 = vld [vmem:[%s1 + $0x18c] sm:$0xff]
    %v145 = vld [vmem:[%s1 + $0x194] sm:$0xff]
    %v146 = vld [vmem:[%s1 + $0x19c] sm:$0xf]
    %v147 = vld [vmem:[%s1 + $0x1a0] sm:$0xff]
    %v148 = vld [vmem:[%s1 + $0x1a8] sm:$0xff]
    %v149 = vld [vmem:[%s1 + $0x1b0] sm:$0xff]
    %v150 = vld [vmem:[%s1 + $0x1b8] sm:$0xff]
    %v151 = vld [vmem:[%s1 + $0x1c0] sm:$0xff]
    %v152 = vld [vmem:[%s1 + $0x1c8] sm:$0xff]
    %v153 = vld [vmem:[%s1 + $0x1d0] sm:$0xf]
    %v154 = vld [vmem:[%s1 + $0x1d4] sm:$0xff]
    %v155 = vld [vmem:[%s1 + $0x1dc] sm:$0xff]
    %v156 = vld [vmem:[%s1 + $0x1e4] sm:$0xff]
    %v157 = vld [vmem:[%s1 + $0x1ec] sm:$0xff]
    %v158 = vld [vmem:[%s1 + $0x1f4] sm:$0xff]
    %v159 = vld [vmem:[%s1 + $0x1fc] sm:$0xff]
    %v160 = vld [vmem:[%s1 + $0x204] sm:$0xf]
    %v161 = vld [vmem:[%s1 + $0x208] sm:$0xff]
    %v162 = vld [vmem:[%s1 + $0x210] sm:$0xff]
    %v163 = vld [vmem:[%s1 + $0x218] sm:$0xff]
    %v164 = vld [vmem:[%s1 + $0x220] sm:$0xff]
    %v165 = vld [vmem:[%s1 + $0x228] sm:$0xff]
    %v166 = vld [vmem:[%s1 + $0x230] sm:$0xff]
    %v167 = vld [vmem:[%s1 + $0x238] sm:$0xf]
    %v168 = vld [vmem:[%s1 + $0x23c] sm:$0xff]
    %v169 = vld [vmem:[%s1 + $0x244] sm:$0xff]
    %v170 = vld [vmem:[%s1 + $0x24c] sm:$0xff]
    %v171 = vld [vmem:[%s1 + $0x254] sm:$0xff]
    %v172 = vld [vmem:[%s1 + $0x25c] sm:$0xff]
    %v173 = vld [vmem:[%s1 + $0x264] sm:$0xff]
    %v174 = vld [vmem:[%s1 + $0x26c] sm:$0xf]
    %v175 = vld [vmem:[%s1 + $0x270] sm:$0xff]
    %v176 = vld [vmem:[%s1 + $0x278] sm:$0xff]
    %v177 = vld [vmem:[%s1 + $0x280] sm:$0xff]
    %v178 = vld [vmem:[%s1 + $0x288] sm:$0xff]
    %v179 = vld [vmem:[%s1 + $0x290] sm:$0xff]
    %v180 = vld [vmem:[%s1 + $0x298] sm:$0xff]
    %v181 = vld [vmem:[%s1 + $0x2a0] sm:$0xf]
    %v182 = vld [vmem:[%s1 + $0x2a4] sm:$0xff]
    %v183 = vld [vmem:[%s1 + $0x2ac] sm:$0xff]
    %v184 = vld [vmem:[%s1 + $0x2b4] sm:$0xff]
    %v185 = vld [vmem:[%s1 + $0x2bc] sm:$0xff]
    %v186 = vld [vmem:[%s1 + $0x2c4] sm:$0xff]
    %v187 = vld [vmem:[%s1 + $0x2cc] sm:$0xff]
    %v188 = vld [vmem:[%s1 + $0x2d4] sm:$0xf]
    %v189 = vld [vmem:[%s1 + $0x2d8] sm:$0xff]
    %v190 = vld [vmem:[%s1 + $0x2e0] sm:$0xff]
    %v191 = vld [vmem:[%s1 + $0x2e8] sm:$0xff]
    %v192 = vld [vmem:[%s1 + $0x2f0] sm:$0xff]
    %v193 = vld [vmem:[%s1 + $0x2f8] sm:$0xff]
    %v194 = vld [vmem:[%s1 + $0x300] sm:$0xff]
    %v195 = vld [vmem:[%s1 + $0x308] sm:$0xf]
    %v196 = vld [vmem:[%s1 + $0x30c] sm:$0xff]
    %v197 = vld [vmem:[%s1 + $0x314] sm:$0xff]
    %v198 = vld [vmem:[%s1 + $0x31c] sm:$0xff]
    %v199 = vld [vmem:[%s1 + $0x324] sm:$0xff]
    %v200 = vld [vmem:[%s1 + $0x32c] sm:$0xff]
    %v201 = vld [vmem:[%s1 + $0x334] sm:$0xff]
    %v202 = vld [vmem:[%s1 + $0x33c] sm:$0xf]
    %v203 = vld [vmem:[%s1 + $0x340] sm:$0xff]
    %v204 = vld [vmem:[%s1 + $0x348] sm:$0xff]
    %v205 = vld [vmem:[%s1 + $0x350] sm:$0xff]
    %v206 = vld [vmem:[%s1 + $0x358] sm:$0xff]
    %v207 = vld [vmem:[%s1 + $0x360] sm:$0xff]
    %v208 = vld [vmem:[%s1 + $0x368] sm:$0xff]
    %v209 = vld [vmem:[%s1 + $0x370] sm:$0xf]
    %v210 = vld [vmem:[%s1 + $0x374] sm:$0xff]
    %v211 = vld [vmem:[%s1 + $0x37c] sm:$0xff]
    %v212 = vld [vmem:[%s1 + $0x384] sm:$0xff]
    %v213 = vld [vmem:[%s1 + $0x38c] sm:$0xff]
    %v214 = vld [vmem:[%s1 + $0x394] sm:$0xff]
    %v215 = vld [vmem:[%s1 + $0x39c] sm:$0xff]
    %v216 = vld [vmem:[%s1 + $0x3a4] sm:$0xf]
    %v217 = vld [vmem:[%s1 + $0x3a8] sm:$0xff]
    %v218 = vld [vmem:[%s1 + $0x3b0] sm:$0xff]
    %v219 = vld [vmem:[%s1 + $0x3b8] sm:$0xff]
    %v220 = vld [vmem:[%s1 + $0x3c0] sm:$0xff]
    %v221 = vld [vmem:[%s1 + $0x3c8] sm:$0xff]
    %v222 = vld [vmem:[%s1 + $0x3d0] sm:$0xff]
    %v223 = vld [vmem:[%s1 + $0x3d8] sm:$0xf]
    %v224 = vld [vmem:[%s1 + $0x3dc] sm:$0xff]
    %v225 = vld [vmem:[%s1 + $0x3e4] sm:$0xff]
    %v226 = vld [vmem:[%s1 + $0x3ec] sm:$0xff]
    %v227 = vld [vmem:[%s1 + $0x3f4] sm:$0xff]
    %v228 = vld [vmem:[%s1 + $0x3fc] sm:$0xff]
    %v229 = vld [vmem:[%s1 + $0x404] sm:$0xff]
    %v230 = vld [vmem:[%s1 + $0x40c] sm:$0xf]
    %v231 = vld [vmem:[%s1 + $0x410] sm:$0xff]
    %v232 = vld [vmem:[%s1 + $0x418] sm:$0xff]
    %v233 = vld [vmem:[%s1 + $0x420] sm:$0xff]
    %v234 = vld [vmem:[%s1 + $0x428] sm:$0xff]
    %v235 = vld [vmem:[%s1 + $0x430] sm:$0xff]
    %v236 = vld [vmem:[%s1 + $0x438] sm:$0xff]
    %v237 = vld [vmem:[%s1 + $0x440] sm:$0xf]
    %v238 = vld [vmem:[%s1 + $0x444] sm:$0xff]
    %v239 = vld [vmem:[%s1 + $0x44c] sm:$0xff]
    %v240 = vld [vmem:[%s1 + $0x454] sm:$0xff]
    %v241 = vld [vmem:[%s1 + $0x45c] sm:$0xff]
    %v242 = vld [vmem:[%s1 + $0x464] sm:$0xff]
    %v243 = vld [vmem:[%s1 + $0x46c] sm:$0xff]
    %v244 = vld [vmem:[%s1 + $0x474] sm:$0xf]
    %v245 = vld [vmem:[%s1 + $0x478] sm:$0xff]
    %v246 = vld [vmem:[%s1 + $0x480] sm:$0xff]
    %v247 = vld [vmem:[%s1 + $0x488] sm:$0xff]
    %v248 = vld [vmem:[%s1 + $0x490] sm:$0xff]
    %v249 = vld [vmem:[%s1 + $0x498] sm:$0xff]
    %v250 = vld [vmem:[%s1 + $0x4a0] sm:$0xff]
    %v251 = vld [vmem:[%s1 + $0x4a8] sm:$0xf]
    %v252 = vld [vmem:[%s1 + $0x4ac] sm:$0xff]
    %v253 = vld [vmem:[%s1 + $0x4b4] sm:$0xff]
    %v254 = vld [vmem:[%s1 + $0x4bc] sm:$0xff]
    %v255 = vld [vmem:[%s1 + $0x4c4] sm:$0xff]
    %v256 = vld [vmem:[%s1 + $0x4cc] sm:$0xff]
    %v257 = vld [vmem:[%s1 + $0x4d4] sm:$0xff]
    %v258 = vld [vmem:[%s1 + $0x4dc] sm:$0xf]
    %v259 = vld [vmem:[%s1 + $0x4e0] sm:$0xff]
    %v260 = vld [vmem:[%s1 + $0x4e8] sm:$0xff]
    %v261 = vld [vmem:[%s1 + $0x4f0] sm:$0xff]
    %v262 = vld [vmem:[%s1 + $0x4f8] sm:$0xff]
    %v263 = vld [vmem:[%s1 + $0x500] sm:$0xff]
    %v264 = vld [vmem:[%s1 + $0x508] sm:$0xff]
    %v265 = vld [vmem:[%s1 + $0x510] sm:$0xf]
    %v266 = vld [vmem:[%s1 + $0x514] sm:$0xff]
    %v267 = vld [vmem:[%s1 + $0x51c] sm:$0xff]
    %v268 = vld [vmem:[%s1 + $0x524] sm:$0xff]
    %v269 = vld [vmem:[%s1 + $0x52c] sm:$0xff]
    %v270 = vld [vmem:[%s1 + $0x534] sm:$0xff]
    %v271 = vld [vmem:[%s1 + $0x53c] sm:$0xff]
    %v272 = vld [vmem:[%s1 + $0x544] sm:$0xf]
    %v273 = vld [vmem:[%s1 + $0x548] sm:$0xff]
    %v274 = vld [vmem:[%s1 + $0x550] sm:$0xff]
    %v275 = vld [vmem:[%s1 + $0x558] sm:$0xff]
    %v276 = vld [vmem:[%s1 + $0x560] sm:$0xff]
    %v277 = vld [vmem:[%s1 + $0x568] sm:$0xff]
    %v278 = vld [vmem:[%s1 + $0x570] sm:$0xff]
    %v279 = vld [vmem:[%s1 + $0x578] sm:$0xf]
    %v280 = vld [vmem:[%s1 + $0x57c] sm:$0xff]
    %v281 = vld [vmem:[%s1 + $0x584] sm:$0xff]
    %v282 = vld [vmem:[%s1 + $0x58c] sm:$0xff]
    %v283 = vld [vmem:[%s1 + $0x594] sm:$0xff]
    %v284 = vld [vmem:[%s1 + $0x59c] sm:$0xff]
    %v285 = vld [vmem:[%s1 + $0x5a4] sm:$0xff]
    %v286 = vld [vmem:[%s1 + $0x5ac] sm:$0xf]
    %v287 = vld [vmem:[%s1 + $0x5b0] sm:$0xff]
    %v288 = vld [vmem:[%s1 + $0x5b8] sm:$0xff]
    %v289 = vld [vmem:[%s1 + $0x5c0] sm:$0xff]
    %v290 = vld [vmem:[%s1 + $0x5c8] sm:$0xff]
    %v291 = vld [vmem:[%s1 + $0x5d0] sm:$0xff]
    %v292 = vld [vmem:[%s1 + $0x5d8] sm:$0xff]
    %v293 = vld [vmem:[%s1 + $0x5e0] sm:$0xf]
    %v294 = vld [vmem:[%s1 + $0x5e4] sm:$0xff]
    %v295 = vld [vmem:[%s1 + $0x5ec] sm:$0xff]
    %v296 = vld [vmem:[%s1 + $0x5f4] sm:$0xff]
    %v297 = vld [vmem:[%s1 + $0x5fc] sm:$0xff]
    %v298 = vld [vmem:[%s1 + $0x604] sm:$0xff]
    %v299 = vld [vmem:[%s1 + $0x60c] sm:$0xff]
    %v300 = vld [vmem:[%s1 + $0x614] sm:$0xf]
    %v301 = vld [vmem:[%s1 + $0x618] sm:$0xff]
    %v302 = vld [vmem:[%s1 + $0x620] sm:$0xff]
    %v303 = vld [vmem:[%s1 + $0x628] sm:$0xff]
    %v304 = vld [vmem:[%s1 + $0x630] sm:$0xff]
    %v305 = vld [vmem:[%s1 + $0x638] sm:$0xff]
    %v306 = vld [vmem:[%s1 + $0x640] sm:$0xff]
    %v307 = vld [vmem:[%s1 + $0x648] sm:$0xf]
    %v308 = vld [vmem:[%s1 + $0x64c] sm:$0xff]
    %v309 = vld [vmem:[%s1 + $0x654] sm:$0xff]
    %v310 = vld [vmem:[%s1 + $0x65c] sm:$0xff]
    %v311 = vld [vmem:[%s1 + $0x664] sm:$0xff]
    %v312 = vld [vmem:[%s1 + $0x66c] sm:$0xff]
    %v313 = vld [vmem:[%s1 + $0x674] sm:$0xff]
    %v314 = vld [vmem:[%s1 + $0x67c] sm:$0xf]
    %v315 = vld [vmem:[%s1 + $0x680] sm:$0xff]
    %v316 = vld [vmem:[%s1 + $0x688] sm:$0xff]
    %v317 = vld [vmem:[%s1 + $0x690] sm:$0xff]
    %v318 = vld [vmem:[%s1 + $0x698] sm:$0xff]
    %v319 = vld [vmem:[%s1 + $0x6a0] sm:$0xff]
    %v320 = vld [vmem:[%s1 + $0x6a8] sm:$0xff]
    %v321 = vld [vmem:[%s1 + $0x6b0] sm:$0xf]
    %v322 = vld [vmem:[%s1 + $0x6b4] sm:$0xff]
    %v323 = vld [vmem:[%s1 + $0x6bc] sm:$0xff]
    %v324 = vld [vmem:[%s1 + $0x6c4] sm:$0xff]
    %v325 = vld [vmem:[%s1 + $0x6cc] sm:$0xff]
    %v326 = vld [vmem:[%s1 + $0x6d4] sm:$0xff]
    %v327 = vld [vmem:[%s1 + $0x6dc] sm:$0xff]
    %v328 = vld [vmem:[%s1 + $0x6e4] sm:$0xf]
    %v329 = vld [vmem:[%s1 + $0x6e8] sm:$0xff]
    %v330 = vld [vmem:[%s1 + $0x6f0] sm:$0xff]
    %v331 = vld [vmem:[%s1 + $0x6f8] sm:$0xff]
    %v332 = vld [vmem:[%s1 + $0x700] sm:$0xff]
    %v333 = vld [vmem:[%s1 + $0x708] sm:$0xff]
    %v334 = vld [vmem:[%s1 + $0x710] sm:$0xff]
    %v335 = vld [vmem:[%s1 + $0x718] sm:$0xf]
    %v336 = vld [vmem:[%s1 + $0x71c] sm:$0xff]
    %v337 = vld [vmem:[%s1 + $0x724] sm:$0xff]
    %v338 = vld [vmem:[%s1 + $0x72c] sm:$0xff]
    %v339 = vld [vmem:[%s1 + $0x734] sm:$0xff]
    %v340 = vld [vmem:[%s1 + $0x73c] sm:$0xff]
    %v341 = vld [vmem:[%s1 + $0x744] sm:$0xff]
    %v342 = vld [vmem:[%s1 + $0x74c] sm:$0xf]
    %v343 = vld [vmem:[%s1 + $0x750] sm:$0xff]
    %v344 = vld [vmem:[%s1 + $0x758] sm:$0xff]
    %v345 = vld [vmem:[%s1 + $0x760] sm:$0xff]
    %v346 = vld [vmem:[%s1 + $0x768] sm:$0xff]
    %v347 = vld [vmem:[%s1 + $0x770] sm:$0xff]
    %v348 = vld [vmem:[%s1 + $0x778] sm:$0xff]
    %v349 = vld [vmem:[%s1 + $0x780] sm:$0xf]
    %v350 = vld [vmem:[%s1 + $0x784] sm:$0xff]
    %v351 = vld [vmem:[%s1 + $0x78c] sm:$0xff]
    %v352 = vld [vmem:[%s1 + $0x794] sm:$0xff]
    %v353 = vld [vmem:[%s1 + $0x79c] sm:$0xff]
    %v354 = vld [vmem:[%s1 + $0x7a4] sm:$0xff]
    %v355 = vld [vmem:[%s1 + $0x7ac] sm:$0xff]
    %v356 = vld [vmem:[%s1 + $0x7b4] sm:$0xf]
    %v357 = vld [vmem:[%s1 + $0x7b8] sm:$0xff]
    %v358 = vld [vmem:[%s1 + $0x7c0] sm:$0xff]
    %v359 = vld [vmem:[%s1 + $0x7c8] sm:$0xff]
    %v360 = vld [vmem:[%s1 + $0x7d0] sm:$0xff]
    %v361 = vld [vmem:[%s1 + $0x7d8] sm:$0xff]
    %v362 = vld [vmem:[%s1 + $0x7e0] sm:$0xff]
    %v363 = vld [vmem:[%s1 + $0x7e8] sm:$0xf]
    %v364 = vld [vmem:[%s1 + $0x7ec] sm:$0xff]
    %v365 = vld [vmem:[%s1 + $0x7f4] sm:$0xff]
    %v366 = vld [vmem:[%s1 + $0x7fc] sm:$0xff]
    %v367 = vld [vmem:[%s1 + $0x804] sm:$0xff]
    %v368 = vld [vmem:[%s1 + $0x80c] sm:$0xff]
    %v369 = vld [vmem:[%s1 + $0x814] sm:$0xff]
    %v370 = vld [vmem:[%s1 + $0x81c] sm:$0xf]
    %v371 = vld [vmem:[%s1 + $0x820] sm:$0xff]
    %v372 = vld [vmem:[%s1 + $0x828] sm:$0xff]
    %v373 = vld [vmem:[%s1 + $0x830] sm:$0xff]
    %v374 = vld [vmem:[%s1 + $0x838] sm:$0xff]
    %v375 = vld [vmem:[%s1 + $0x840] sm:$0xff]
    %v376 = vld [vmem:[%s1 + $0x848] sm:$0xff]
    %v377 = vld [vmem:[%s1 + $0x850] sm:$0xf]
    %v378 = vld [vmem:[%s1 + $0x854] sm:$0xff]
    %v379 = vld [vmem:[%s1 + $0x85c] sm:$0xff]
    %v380 = vld [vmem:[%s1 + $0x864] sm:$0xff]
    %v381 = vld [vmem:[%s1 + $0x86c] sm:$0xff]
    %v382 = vld [vmem:[%s1 + $0x874] sm:$0xff]
    %v383 = vld [vmem:[%s1 + $0x87c] sm:$0xff]
    %v384 = vld [vmem:[%s1 + $0x884] sm:$0xf]
    %v385 = vld [vmem:[%s1 + $0x888] sm:$0xff]
    %v386 = vld [vmem:[%s1 + $0x890] sm:$0xff]
    %v387 = vld [vmem:[%s1 + $0x898] sm:$0xff]
    %v388 = vld [vmem:[%s1 + $0x8a0] sm:$0xff]
    %v389 = vld [vmem:[%s1 + $0x8a8] sm:$0xff]
    %v390 = vld [vmem:[%s1 + $0x8b0] sm:$0xff]
    %v391 = vld [vmem:[%s1 + $0x8b8] sm:$0xf]
    %v392 = vld [vmem:[%s1 + $0x8bc] sm:$0xff]
    %v393 = vld [vmem:[%s1 + $0x8c4] sm:$0xff]
    %v394 = vld [vmem:[%s1 + $0x8cc] sm:$0xff]
    %v395 = vld [vmem:[%s1 + $0x8d4] sm:$0xff]
    %v396 = vld [vmem:[%s1 + $0x8dc] sm:$0xff]
    %v397 = vld [vmem:[%s1 + $0x8e4] sm:$0xff]
    %v398 = vld [vmem:[%s1 + $0x8ec] sm:$0xf]
    %v399 = vld [vmem:[%s1 + $0x8f0] sm:$0xff]
    %v400 = vld [vmem:[%s1 + $0x8f8] sm:$0xff]
    %v401 = vld [vmem:[%s1 + $0x900] sm:$0xff]
    %v402 = vld [vmem:[%s1 + $0x908] sm:$0xff]
    %v403 = vld [vmem:[%s1 + $0x910] sm:$0xff]
    %v404 = vld [vmem:[%s1 + $0x918] sm:$0xff]
    %v405 = vld [vmem:[%s1 + $0x920] sm:$0xf]
    %v406 = vld [vmem:[%s1 + $0x924] sm:$0xff]
    %v407 = vld [vmem:[%s1 + $0x92c] sm:$0xff]
    %v408 = vld [vmem:[%s1 + $0x934] sm:$0xff]
    %v409 = vld [vmem:[%s1 + $0x93c] sm:$0xff]
    %v410 = vld [vmem:[%s1 + $0x944] sm:$0xff]
    %v411 = vld [vmem:[%s1 + $0x94c] sm:$0xff]
    %v412 = vld [vmem:[%s1 + $0x954] sm:$0xf]
    %v413 = vld [vmem:[%s1 + $0x958] sm:$0xff]
    %v414 = vld [vmem:[%s1 + $0x960] sm:$0xff]
    %v415 = vld [vmem:[%s1 + $0x968] sm:$0xff]
    %v416 = vld [vmem:[%s1 + $0x970] sm:$0xff]
    %v417 = vld [vmem:[%s1 + $0x978] sm:$0xff]
    %v418 = vld [vmem:[%s1 + $0x980] sm:$0xff]
    %v419 = vld [vmem:[%s1 + $0x988] sm:$0xf]
    %v420 = vld [vmem:[%s1 + $0x98c] sm:$0xff]
    %v421 = vld [vmem:[%s1 + $0x994] sm:$0xff]
    %v422 = vld [vmem:[%s1 + $0x99c] sm:$0xff]
    %v423 = vld [vmem:[%s1 + $0x9a4] sm:$0xff]
    %v424 = vld [vmem:[%s1 + $0x9ac] sm:$0xff]
    %v425 = vld [vmem:[%s1 + $0x9b4] sm:$0xff]
    %v426 = vld [vmem:[%s1 + $0x9bc] sm:$0xf]
    %v427 = vld [vmem:[%s1 + $0x9c0] sm:$0xff]
    %v428 = vld [vmem:[%s1 + $0x9c8] sm:$0xff]
    %v429 = vld [vmem:[%s1 + $0x9d0] sm:$0xff]
    %v430 = vld [vmem:[%s1 + $0x9d8] sm:$0xff]
    %v431 = vld [vmem:[%s1 + $0x9e0] sm:$0xff]
    %v432 = vld [vmem:[%s1 + $0x9e8] sm:$0xff]
    %v433 = vld [vmem:[%s1 + $0x9f0] sm:$0xf]
    %v434 = vld [vmem:[%s1 + $0x9f4] sm:$0xff]
    %v435 = vld [vmem:[%s1 + $0x9fc] sm:$0xff]
    %v436 = vld [vmem:[%s1 + $0xa04] sm:$0xff]
    %v437 = vld [vmem:[%s1 + $0xa0c] sm:$0xff]
    %v438 = vld [vmem:[%s1 + $0xa14] sm:$0xff]
    %v439 = vld [vmem:[%s1 + $0xa1c] sm:$0xff]
    %v440 = vld [vmem:[%s1 + $0xa24] sm:$0xf]
    %v441 = vld [vmem:[%s1 + $0xa28] sm:$0xff]
    %v442 = vld [vmem:[%s1 + $0xa30] sm:$0xff]
    %v443 = vld [vmem:[%s1 + $0xa38] sm:$0xff]
    %v444 = vld [vmem:[%s1 + $0xa40] sm:$0xff]
    %v445 = vld [vmem:[%s1 + $0xa48] sm:$0xff]
    %v446 = vld [vmem:[%s1 + $0xa50] sm:$0xff]
    %v447 = vld [vmem:[%s1 + $0xa58] sm:$0xf]
    %v448 = vld [vmem:[%s1 + $0xa5c] sm:$0xff]
    %v449 = vld [vmem:[%s1 + $0xa64] sm:$0xff]
    %v450 = vld [vmem:[%s1 + $0xa6c] sm:$0xff]
    %v451 = vld [vmem:[%s1 + $0xa74] sm:$0xff]
    %v452 = vld [vmem:[%s1 + $0xa7c] sm:$0xff]
    %v453 = vld [vmem:[%s1 + $0xa84] sm:$0xff]
    %v454 = vld [vmem:[%s1 + $0xa8c] sm:$0xf]
    %v455 = vld [vmem:[%s1 + $0xa90] sm:$0xff]
    %v456 = vld [vmem:[%s1 + $0xa98] sm:$0xff]
    %v457 = vld [vmem:[%s1 + $0xaa0] sm:$0xff]
    %v458 = vld [vmem:[%s1 + $0xaa8] sm:$0xff]
    %v459 = vld [vmem:[%s1 + $0xab0] sm:$0xff]
    %v460 = vld [vmem:[%s1 + $0xab8] sm:$0xff]
    %v461 = vld [vmem:[%s1 + $0xac0] sm:$0xf]
    %v462 = vld [vmem:[%s1 + $0xac4] sm:$0xff]
    %v463 = vld [vmem:[%s1 + $0xacc] sm:$0xff]
    %v464 = vld [vmem:[%s1 + $0xad4] sm:$0xff]
    %v465 = vld [vmem:[%s1 + $0xadc] sm:$0xff]
    %v466 = vld [vmem:[%s1 + $0xae4] sm:$0xff]
    %v467 = vld [vmem:[%s1 + $0xaec] sm:$0xff]
    %v468 = vld [vmem:[%s1 + $0xaf4] sm:$0xf]
    %v469 = vld [vmem:[%s1 + $0xaf8] sm:$0xff]
    %v470 = vld [vmem:[%s1 + $0xb00] sm:$0xff]
    %v471 = vld [vmem:[%s1 + $0xb08] sm:$0xff]
    %v472 = vld [vmem:[%s1 + $0xb10] sm:$0xff]
    %v473 = vld [vmem:[%s1 + $0xb18] sm:$0xff]
    %v474 = vld [vmem:[%s1 + $0xb20] sm:$0xff]
    %v475 = vld [vmem:[%s1 + $0xb28] sm:$0xf]
    %v476 = vld [vmem:[%s1 + $0xb2c] sm:$0xff]
    %v477 = vld [vmem:[%s1 + $0xb34] sm:$0xff]
    %v478 = vld [vmem:[%s1 + $0xb3c] sm:$0xff]
    %v479 = vld [vmem:[%s1 + $0xb44] sm:$0xff]
    %v480 = vld [vmem:[%s1 + $0xb4c] sm:$0xff]
    %v481 = vld [vmem:[%s1 + $0xb54] sm:$0xff]
    %v482 = vld [vmem:[%s1 + $0xb5c] sm:$0xf]
    %v483 = vld [vmem:[%s1 + $0xb60] sm:$0xff]
    %v484 = vld [vmem:[%s1 + $0xb68] sm:$0xff]
    %v485 = vld [vmem:[%s1 + $0xb70] sm:$0xff]
    %v486 = vld [vmem:[%s1 + $0xb78] sm:$0xff]
    %v487 = vld [vmem:[%s1 + $0xb80] sm:$0xff]
    %v488 = vld [vmem:[%s1 + $0xb88] sm:$0xff]
    %v489 = vld [vmem:[%s1 + $0xb90] sm:$0xf]
    %v490 = vld [vmem:[%s1 + $0xb94] sm:$0xff]
    %v491 = vld [vmem:[%s1 + $0xb9c] sm:$0xff]
    %v492 = vld [vmem:[%s1 + $0xba4] sm:$0xff]
    %v493 = vld [vmem:[%s1 + $0xbac] sm:$0xff]
    %v494 = vld [vmem:[%s1 + $0xbb4] sm:$0xff]
    %v495 = vld [vmem:[%s1 + $0xbbc] sm:$0xff]
    %v496 = vld [vmem:[%s1 + $0xbc4] sm:$0xf]
    %v497 = vld [vmem:[%s1 + $0xbc8] sm:$0xff]
    %v498 = vld [vmem:[%s1 + $0xbd0] sm:$0xff]
    %v499 = vld [vmem:[%s1 + $0xbd8] sm:$0xff]
    %v500 = vld [vmem:[%s1 + $0xbe0] sm:$0xff]
    %v501 = vld [vmem:[%s1 + $0xbe8] sm:$0xff]
    %v502 = vld [vmem:[%s1 + $0xbf0] sm:$0xff]
    %v503 = vld [vmem:[%s1 + $0xbf8] sm:$0xf]
    %v504 = vld [vmem:[%s1 + $0xbfc] sm:$0xff]
    %v505 = vld [vmem:[%s1 + $0xc04] sm:$0xff]
    %v506 = vld [vmem:[%s1 + $0xc0c] sm:$0xff]
    %v507 = vld [vmem:[%s1 + $0xc14] sm:$0xff]
    %v508 = vld [vmem:[%s1 + $0xc1c] sm:$0xff]
    %v509 = vld [vmem:[%s1 + $0xc24] sm:$0xff]
    %v510 = vld [vmem:[%s1 + $0xc2c] sm:$0xf]
    %v511 = vld [vmem:[%s1 + $0xc30] sm:$0xff]
    %v512 = vld [vmem:[%s1 + $0xc38] sm:$0xff]
    %v513 = vld [vmem:[%s1 + $0xc40] sm:$0xff]
    %v514 = vld [vmem:[%s1 + $0xc48] sm:$0xff]
    %v515 = vld [vmem:[%s1 + $0xc50] sm:$0xff]
    %v516 = vld [vmem:[%s1 + $0xc58] sm:$0xff]
    %v517 = vld [vmem:[%s1 + $0xc60] sm:$0xf]
    %v518 = vld [vmem:[%s1 + $0xc64] sm:$0xff]
    %v519 = vld [vmem:[%s1 + $0xc6c] sm:$0xff]
    %v520 = vld [vmem:[%s1 + $0xc74] sm:$0xff]
    %v521 = vld [vmem:[%s1 + $0xc7c] sm:$0xff]
    %v522 = vld [vmem:[%s1 + $0xc84] sm:$0xff]
    %v523 = vld [vmem:[%s1 + $0xc8c] sm:$0xff]
    %v524 = vld [vmem:[%s1 + $0xc94] sm:$0xf]
    %v525 = vld [vmem:[%s1 + $0xc98] sm:$0xff]
    %v526 = vld [vmem:[%s1 + $0xca0] sm:$0xff]
    %v527 = vld [vmem:[%s1 + $0xca8] sm:$0xff]
    %v528 = vld [vmem:[%s1 + $0xcb0] sm:$0xff]
    %v529 = vld [vmem:[%s1 + $0xcb8] sm:$0xff]
    %v530 = vld [vmem:[%s1 + $0xcc0] sm:$0xff]
    %v531 = vld [vmem:[%s1 + $0xcc8] sm:$0xf]
    %v532 = vld [vmem:[%s1 + $0xccc] sm:$0xff]
    %v533 = vld [vmem:[%s1 + $0xcd4] sm:$0xff]
    %v534 = vld [vmem:[%s1 + $0xcdc] sm:$0xff]
    %v535 = vld [vmem:[%s1 + $0xce4] sm:$0xff]
    %v536 = vld [vmem:[%s1 + $0xcec] sm:$0xff]
    %v537 = vld [vmem:[%s1 + $0xcf4] sm:$0xff]
    %v538 = vld [vmem:[%s1 + $0xcfc] sm:$0xf]
    %v539 = vld [vmem:[%s1 + $0xd00] sm:$0xff]
    %v540 = vld [vmem:[%s1 + $0xd08] sm:$0xff]
    %v541 = vld [vmem:[%s1 + $0xd10] sm:$0xff]
    %v542 = vld [vmem:[%s1 + $0xd18] sm:$0xff]
    %v543 = vld [vmem:[%s1 + $0xd20] sm:$0xff]
    %v544 = vld [vmem:[%s1 + $0xd28] sm:$0xff]
    %v545 = vld [vmem:[%s1 + $0xd30] sm:$0xf]
    %v546 = vld [vmem:[%s1 + $0xd34] sm:$0xff]
    %v547 = vld [vmem:[%s1 + $0xd3c] sm:$0xff]
    %v548 = vld [vmem:[%s1 + $0xd44] sm:$0xff]
    %v549 = vld [vmem:[%s1 + $0xd4c] sm:$0xff]
    %v550 = vld [vmem:[%s1 + $0xd54] sm:$0xff]
    %v551 = vld [vmem:[%s1 + $0xd5c] sm:$0xff]
    %v552 = vld [vmem:[%s1 + $0xd64] sm:$0xf]
    %v553 = vld [vmem:[%s1 + $0xd68] sm:$0xff]
    %v554 = vld [vmem:[%s1 + $0xd70] sm:$0xff]
    %v555 = vld [vmem:[%s1 + $0xd78] sm:$0xff]
    %v556 = vld [vmem:[%s1 + $0xd80] sm:$0xff]
    %v557 = vld [vmem:[%s1 + $0xd88] sm:$0xff]
    %v558 = vld [vmem:[%s1 + $0xd90] sm:$0xff]
    %v559 = vld [vmem:[%s1 + $0xd98] sm:$0xf]
    %v560 = vld [vmem:[%s1 + $0xd9c] sm:$0xff]
    %v561 = vld [vmem:[%s1 + $0xda4] sm:$0xff]
    %v562 = vld [vmem:[%s1 + $0xdac] sm:$0xff]
    %v563 = vld [vmem:[%s1 + $0xdb4] sm:$0xff]
    %v564 = vld [vmem:[%s1 + $0xdbc] sm:$0xff]
    %v565 = vld [vmem:[%s1 + $0xdc4] sm:$0xff]
    %v566 = vld [vmem:[%s1 + $0xdcc] sm:$0xf]
    %v567 = vld [vmem:[%s1 + $0xdd0] sm:$0xff]
    %v568 = vld [vmem:[%s1 + $0xdd8] sm:$0xff]
    %v569 = vld [vmem:[%s1 + $0xde0] sm:$0xff]
    %v570 = vld [vmem:[%s1 + $0xde8] sm:$0xff]
    %v571 = vld [vmem:[%s1 + $0xdf0] sm:$0xff]
    %v572 = vld [vmem:[%s1 + $0xdf8] sm:$0xff]
    %v573 = vld [vmem:[%s1 + $0xe00] sm:$0xf]
    %v574 = vld [vmem:[%s1 + $0xe04] sm:$0xff]
    %v575 = vld [vmem:[%s1 + $0xe0c] sm:$0xff]
    %v576 = vld [vmem:[%s1 + $0xe14] sm:$0xff]
    %v577 = vld [vmem:[%s1 + $0xe1c] sm:$0xff]
    %v578 = vld [vmem:[%s1 + $0xe24] sm:$0xff]
    %v579 = vld [vmem:[%s1 + $0xe2c] sm:$0xff]
    %v580 = vld [vmem:[%s1 + $0xe34] sm:$0xf]
    %v581 = vld [vmem:[%s1 + $0xe38] sm:$0xff]
    %v582 = vld [vmem:[%s1 + $0xe40] sm:$0xff]
    %v583 = vld [vmem:[%s1 + $0xe48] sm:$0xff]
    %v584 = vld [vmem:[%s1 + $0xe50] sm:$0xff]
    %v585 = vld [vmem:[%s1 + $0xe58] sm:$0xff]
    %v586 = vld [vmem:[%s1 + $0xe60] sm:$0xff]
    %v587 = vld [vmem:[%s1 + $0xe68] sm:$0xf]
    %v588 = vld [vmem:[%s1 + $0xe6c] sm:$0xff]
    %v589 = vld [vmem:[%s1 + $0xe74] sm:$0xff]
    %v590 = vld [vmem:[%s1 + $0xe7c] sm:$0xff]
    %v591 = vld [vmem:[%s1 + $0xe84] sm:$0xff]
    %v592 = vld [vmem:[%s1 + $0xe8c] sm:$0xff]
    %v593 = vld [vmem:[%s1 + $0xe94] sm:$0xff]
    %v594 = vld [vmem:[%s1 + $0xe9c] sm:$0xf]
    %v595 = vld [vmem:[%s1 + $0xea0] sm:$0xff]
    %v596 = vld [vmem:[%s1 + $0xea8] sm:$0xff]
    %v597 = vld [vmem:[%s1 + $0xeb0] sm:$0xff]
    %v598 = vld [vmem:[%s1 + $0xeb8] sm:$0xff]
    %v599 = vld [vmem:[%s1 + $0xec0] sm:$0xff]
    %v600 = vld [vmem:[%s1 + $0xec8] sm:$0xff]
    %v601 = vld [vmem:[%s1 + $0xed0] sm:$0xf]
    %v602 = vld [vmem:[%s1 + $0xed4] sm:$0xff]
    %v603 = vld [vmem:[%s1 + $0xedc] sm:$0xff]
    %v604 = vld [vmem:[%s1 + $0xee4] sm:$0xff]
    %v605 = vld [vmem:[%s1 + $0xeec] sm:$0xff]
    %v606 = vld [vmem:[%s1 + $0xef4] sm:$0xff]
    %v607 = vld [vmem:[%s1 + $0xefc] sm:$0xff]
    %v608 = vld [vmem:[%s1 + $0xf04] sm:$0xf]
    %v609 = vld [vmem:[%s1 + $0xf08] sm:$0xff]
    %v610 = vld [vmem:[%s1 + $0xf10] sm:$0xff]
    %v611 = vld [vmem:[%s1 + $0xf18] sm:$0xff]
    %v612 = vld [vmem:[%s1 + $0xf20] sm:$0xff]
    %v613 = vld [vmem:[%s1 + $0xf28] sm:$0xff]
    %v614 = vld [vmem:[%s1 + $0xf30] sm:$0xff]
    %v615 = vld [vmem:[%s1 + $0xf38] sm:$0xf]
    %v616 = vld [vmem:[%s1 + $0xf3c] sm:$0xff]
    %v617 = vld [vmem:[%s1 + $0xf44] sm:$0xff]
    %v618 = vld [vmem:[%s1 + $0xf4c] sm:$0xff]
    %v619 = vld [vmem:[%s1 + $0xf54] sm:$0xff]
    %v620 = vld [vmem:[%s1 + $0xf5c] sm:$0xff]
    %v621 = vld [vmem:[%s1 + $0xf64] sm:$0xff]
    %v622 = vld [vmem:[%s1 + $0xf6c] sm:$0xf]
    %v623 = vld [vmem:[%s1 + $0xf70] sm:$0xff]
    %v624 = vld [vmem:[%s1 + $0xf78] sm:$0xff]
    %v625 = vld [vmem:[%s1 + $0xf80] sm:$0xff]
    %v626 = vld [vmem:[%s1 + $0xf88] sm:$0xff]
    %v627 = vld [vmem:[%s1 + $0xf90] sm:$0xff]
    %v628 = vld [vmem:[%s1 + $0xf98] sm:$0xff]
    %v629 = vld [vmem:[%s1 + $0xfa0] sm:$0xf]
    %v630 = vld [vmem:[%s1 + $0xfa4] sm:$0xff]
    %v631 = vld [vmem:[%s1 + $0xfac] sm:$0xff]
    %v632 = vld [vmem:[%s1 + $0xfb4] sm:$0xff]
    %v633 = vld [vmem:[%s1 + $0xfbc] sm:$0xff]
    %v634 = vld [vmem:[%s1 + $0xfc4] sm:$0xff]
    %v635 = vld [vmem:[%s1 + $0xfcc] sm:$0xff]
    %v636 = vld [vmem:[%s1 + $0xfd4] sm:$0xf]
    %v637 = vld [vmem:[%s1 + $0xfd8] sm:$0xff]
    %v638 = vld [vmem:[%s1 + $0xfe0] sm:$0xff]
    %v639 = vld [vmem:[%s1 + $0xfe8] sm:$0xff]
    %v640 = vld [vmem:[%s1 + $0xff0] sm:$0xff]
    %v641 = vld [vmem:[%s1 + $0xff8] sm:$0xff]
    %v642 = vld [vmem:[%s1 + $0x1000] sm:$0xff]
    %v643 = vld [vmem:[%s1 + $0x1008] sm:$0xf]
    %v644 = vld [vmem:[%s1 + $0x100c] sm:$0xff]
    %v645 = vld [vmem:[%s1 + $0x1014] sm:$0xff]
    %v646 = vld [vmem:[%s1 + $0x101c] sm:$0xff]
    %v647 = vld [vmem:[%s1 + $0x1024] sm:$0xff]
    %v648 = vld [vmem:[%s1 + $0x102c] sm:$0xff]
    %v649 = vld [vmem:[%s1 + $0x1034] sm:$0xff]
    %v650 = vld [vmem:[%s1 + $0x103c] sm:$0xf]
    %v651 = vld [vmem:[%s1 + $0x1040] sm:$0xff]
    %v652 = vld [vmem:[%s1 + $0x1048] sm:$0xff]
    %v653 = vld [vmem:[%s1 + $0x1050] sm:$0xff]
    %v654 = vld [vmem:[%s1 + $0x1058] sm:$0xff]
    %v655 = vld [vmem:[%s1 + $0x1060] sm:$0xff]
    %v656 = vld [vmem:[%s1 + $0x1068] sm:$0xff]
    %v657 = vld [vmem:[%s1 + $0x1070] sm:$0xf]
    %v658 = vld [vmem:[%s1 + $0x1074] sm:$0xff]
    %v659 = vld [vmem:[%s1 + $0x107c] sm:$0xff]
    %v660 = vld [vmem:[%s1 + $0x1084] sm:$0xff]
    %v661 = vld [vmem:[%s1 + $0x108c] sm:$0xff]
    %v662 = vld [vmem:[%s1 + $0x1094] sm:$0xff]
    %v663 = vld [vmem:[%s1 + $0x109c] sm:$0xff]
    %v664 = vld [vmem:[%s1 + $0x10a4] sm:$0xf]
    %v665 = vld [vmem:[%s1 + $0x10a8] sm:$0xff]
    %v666 = vld [vmem:[%s1 + $0x10b0] sm:$0xff]
    %v667 = vld [vmem:[%s1 + $0x10b8] sm:$0xff]
    %v668 = vld [vmem:[%s1 + $0x10c0] sm:$0xff]
    %v669 = vld [vmem:[%s1 + $0x10c8] sm:$0xff]
    %v670 = vld [vmem:[%s1 + $0x10d0] sm:$0xff]
    %v671 = vld [vmem:[%s1 + $0x10d8] sm:$0xf]
    %v672 = vld [vmem:[%s1 + $0x10dc] sm:$0xff]
    %v673 = vld [vmem:[%s1 + $0x10e4] sm:$0xff]
    %v674 = vld [vmem:[%s1 + $0x10ec] sm:$0xff]
    %v675 = vld [vmem:[%s1 + $0x10f4] sm:$0xff]
    %v676 = vld [vmem:[%s1 + $0x10fc] sm:$0xff]
    %v677 = vld [vmem:[%s1 + $0x1104] sm:$0xff]
    %v678 = vld [vmem:[%s1 + $0x110c] sm:$0xf]
    %v679 = vld [vmem:[%s1 + $0x1110] sm:$0xff]
    %v680 = vld [vmem:[%s1 + $0x1118] sm:$0xff]
    %v681 = vld [vmem:[%s1 + $0x1120] sm:$0xff]
    %v682 = vld [vmem:[%s1 + $0x1128] sm:$0xff]
    %v683 = vld [vmem:[%s1 + $0x1130] sm:$0xff]
    %v684 = vld [vmem:[%s1 + $0x1138] sm:$0xff]
    %v685 = vld [vmem:[%s1 + $0x1140] sm:$0xf]
    %v686 = vld [vmem:[%s1 + $0x1144] sm:$0xff]
    %v687 = vld [vmem:[%s1 + $0x114c] sm:$0xff]
    %v688 = vld [vmem:[%s1 + $0x1154] sm:$0xff]
    %v689 = vld [vmem:[%s1 + $0x115c] sm:$0xff]
    %v690 = vld [vmem:[%s1 + $0x1164] sm:$0xff]
    %v691 = vld [vmem:[%s1 + $0x116c] sm:$0xff]
    %v692 = vld [vmem:[%s1 + $0x1174] sm:$0xf]
    %v693 = vld [vmem:[%s1 + $0x1178] sm:$0xff]
    %v694 = vld [vmem:[%s1 + $0x1180] sm:$0xff]
    %v695 = vld [vmem:[%s1 + $0x1188] sm:$0xff]
    %v696 = vld [vmem:[%s1 + $0x1190] sm:$0xff]
    %v697 = vld [vmem:[%s1 + $0x1198] sm:$0xff]
    %v698 = vld [vmem:[%s1 + $0x11a0] sm:$0xff]
    %v699 = vld [vmem:[%s1 + $0x11a8] sm:$0xf]
    %v700 = vld [vmem:[%s1 + $0x11ac] sm:$0xff]
    %v701 = vld [vmem:[%s1 + $0x11b4] sm:$0xff]
    %v702 = vld [vmem:[%s1 + $0x11bc] sm:$0xff]
    %v703 = vld [vmem:[%s1 + $0x11c4] sm:$0xff]
    %v704 = vld [vmem:[%s1 + $0x11cc] sm:$0xff]
    %v705 = vld [vmem:[%s1 + $0x11d4] sm:$0xff]
    %v706 = vld [vmem:[%s1 + $0x11dc] sm:$0xf]
    %v707 = vld [vmem:[%s1 + $0x11e0] sm:$0xff]
    %v708 = vld [vmem:[%s1 + $0x11e8] sm:$0xff]
    %v709 = vld [vmem:[%s1 + $0x11f0] sm:$0xff]
    %v710 = vld [vmem:[%s1 + $0x11f8] sm:$0xff]
    %v711 = vld [vmem:[%s1 + $0x1200] sm:$0xff]
    %v712 = vld [vmem:[%s1 + $0x1208] sm:$0xff]
    %v713 = vld [vmem:[%s1 + $0x1210] sm:$0xf]
    %v714 = vld [vmem:[%s1 + $0x1214] sm:$0xff]
    %v715 = vld [vmem:[%s1 + $0x121c] sm:$0xff]
    %v716 = vld [vmem:[%s1 + $0x1224] sm:$0xff]
    %v717 = vld [vmem:[%s1 + $0x122c] sm:$0xff]
    %v718 = vld [vmem:[%s1 + $0x1234] sm:$0xff]
    %v719 = vld [vmem:[%s1 + $0x123c] sm:$0xff]
    %v720 = vld [vmem:[%s1 + $0x1244] sm:$0xf]
    %v721 = vld [vmem:[%s1 + $0x1248] sm:$0xff]
    %v722 = vld [vmem:[%s1 + $0x1250] sm:$0xff]
    %v723 = vld [vmem:[%s1 + $0x1258] sm:$0xff]
    %v724 = vld [vmem:[%s1 + $0x1260] sm:$0xff]
    %v725 = vld [vmem:[%s1 + $0x1268] sm:$0xff]
    %v726 = vld [vmem:[%s1 + $0x1270] sm:$0xff]
    %v727 = vld [vmem:[%s1 + $0x1278] sm:$0xf]
    %v728 = vld [vmem:[%s1 + $0x127c] sm:$0xff]
    %v729 = vld [vmem:[%s1 + $0x1284] sm:$0xff]
    %v730 = vld [vmem:[%s1 + $0x128c] sm:$0xff]
    %v731 = vld [vmem:[%s1 + $0x1294] sm:$0xff]
    %v732 = vld [vmem:[%s1 + $0x129c] sm:$0xff]
    %v733 = vld [vmem:[%s1 + $0x12a4] sm:$0xff]
    %v734 = vld [vmem:[%s1 + $0x12ac] sm:$0xf]
    %v735 = vld [vmem:[%s1 + $0x12b0] sm:$0xff]
    %v736 = vld [vmem:[%s1 + $0x12b8] sm:$0xff]
    %v737 = vld [vmem:[%s1 + $0x12c0] sm:$0xff]
    %v738 = vld [vmem:[%s1 + $0x12c8] sm:$0xff]
    %v739 = vld [vmem:[%s1 + $0x12d0] sm:$0xff]
    %v740 = vld [vmem:[%s1 + $0x12d8] sm:$0xff]
    %v741 = vld [vmem:[%s1 + $0x12e0] sm:$0xf]
    %v742 = vld [vmem:[%s1 + $0x12e4] sm:$0xff]
    %v743 = vld [vmem:[%s1 + $0x12ec] sm:$0xff]
    %v744 = vld [vmem:[%s1 + $0x12f4] sm:$0xff]
    %v745 = vld [vmem:[%s1 + $0x12fc] sm:$0xff]
    %v746 = vld [vmem:[%s1 + $0x1304] sm:$0xff]
    %v747 = vld [vmem:[%s1 + $0x130c] sm:$0xff]
    %v748 = vld [vmem:[%s1 + $0x1314] sm:$0xf]
    %v749 = vld [vmem:[%s1 + $0x1318] sm:$0xff]
    %v750 = vld [vmem:[%s1 + $0x1320] sm:$0xff]
    %v751 = vld [vmem:[%s1 + $0x1328] sm:$0xff]
    %v752 = vld [vmem:[%s1 + $0x1330] sm:$0xff]
    %v753 = vld [vmem:[%s1 + $0x1338] sm:$0xff]
    %v754 = vld [vmem:[%s1 + $0x1340] sm:$0xff]
    %v755 = vld [vmem:[%s1 + $0x1348] sm:$0xf]
    %v756 = vld [vmem:[%s1 + $0x134c] sm:$0xff]
    %v757 = vld [vmem:[%s1 + $0x1354] sm:$0xff]
    %v758 = vld [vmem:[%s1 + $0x135c] sm:$0xff]
    %v759 = vld [vmem:[%s1 + $0x1364] sm:$0xff]
    %v760 = vld [vmem:[%s1 + $0x136c] sm:$0xff]
    %v761 = vld [vmem:[%s1 + $0x1374] sm:$0xff]
    %v762 = vld [vmem:[%s1 + $0x137c] sm:$0xf]
    %v763 = vld [vmem:[%s1 + $0x1380] sm:$0xff]
    %v764 = vld [vmem:[%s1 + $0x1388] sm:$0xff]
    %v765 = vld [vmem:[%s1 + $0x1390] sm:$0xff]
    %v766 = vld [vmem:[%s1 + $0x1398] sm:$0xff]
    %v767 = vld [vmem:[%s1 + $0x13a0] sm:$0xff]
    %v768 = vld [vmem:[%s1 + $0x13a8] sm:$0xff]
    %v769 = vld [vmem:[%s1 + $0x13b0] sm:$0xf]
    %v770 = vld [vmem:[%s1 + $0x13b4] sm:$0xff]
    %v771 = vld [vmem:[%s1 + $0x13bc] sm:$0xff]
    %v772 = vld [vmem:[%s1 + $0x13c4] sm:$0xff]
    %v773 = vld [vmem:[%s1 + $0x13cc] sm:$0xff]
    %v774 = vld [vmem:[%s1 + $0x13d4] sm:$0xff]
    %v775 = vld [vmem:[%s1 + $0x13dc] sm:$0xff]
    %v776 = vld [vmem:[%s1 + $0x13e4] sm:$0xf]
    %v777 = vld [vmem:[%s2] sm:$0xff]
    %v778 = vld [vmem:[%s2 + $0x8] sm:$0x1f]
    %v781 = vlaneseq
    %v782 = vshrl.u32 %v781, 7
    %v783 = vsub.s32 0, %v782
    %v784 = vrot.slane %v777, %v783
    %v785 = vlaneseq
    %v786 = vshrl.u32 %v785, 7
    %v787 = vsub.s32 1, %v786
    %v788 = vrot.slane %v777, %v787
    %v789 = vlaneseq
    %v790 = vshrl.u32 %v789, 7
    %v791 = vsub.s32 2, %v790
    %v792 = vrot.slane %v777, %v791
    %v793 = vlaneseq
    %v794 = vshrl.u32 %v793, 7
    %v795 = vsub.s32 3, %v794
    %v796 = vrot.slane %v777, %v795
    %v797 = vlaneseq
    %v798 = vshrl.u32 %v797, 7
    %v799 = vsub.s32 4, %v798
    %v800 = vrot.slane %v777, %v799
    %v801 = vlaneseq
    %v802 = vshrl.u32 %v801, 7
    %v803 = vsub.s32 5, %v802
    %v804 = vrot.slane %v777, %v803
    %v805 = vlaneseq
    %v806 = vshrl.u32 %v805, 7
    %v807 = vsub.s32 6, %v806
    %v808 = vrot.slane %v777, %v807
    %v809 = vlaneseq
    %v810 = vshrl.u32 %v809, 7
    %v811 = vsub.s32 7, %v810
    %v812 = vrot.slane %v777, %v811
    %v813 = vlaneseq
    %v814 = vshrl.u32 %v813, 7
    %v815 = vsub.s32 0, %v814
    %v816 = vrot.slane %v778, %v815
    %v817 = vlaneseq
    %v818 = vshrl.u32 %v817, 7
    %v819 = vsub.s32 1, %v818
    %v820 = vrot.slane %v778, %v819
    %v821 = vlaneseq
    %v822 = vshrl.u32 %v821, 7
    %v823 = vsub.s32 2, %v822
    %v824 = vrot.slane %v778, %v823
    %v825 = vlaneseq
    %v826 = vshrl.u32 %v825, 7
    %v827 = vsub.s32 3, %v826
    %v828 = vrot.slane %v778, %v827
    %v829 = vlaneseq
    %v830 = vshrl.u32 %v829, 7
    %v831 = vsub.s32 4, %v830
    %v832 = vrot.slane %v778, %v831
    %v1532 = vunpack.c.l.b16 %v91
    %v1533 = vunpack.c.h.b16 %v91
    %v1534 = vunpack.c.l.b16 %v92
    %v1535 = vunpack.c.h.b16 %v92
    %v1536 = vunpack.c.l.b16 %v93
    %v1537 = vunpack.c.h.b16 %v93
    %v1538 = vunpack.c.l.b16 %v94
    %v1539 = vunpack.c.h.b16 %v94
    %v1540 = vunpack.c.l.b16 %v95
    %v1541 = vunpack.c.h.b16 %v95
    %v1542 = vunpack.c.l.b16 %v96
    %v1543 = vunpack.c.h.b16 %v96
    %v1544 = vunpack.c.l.b16 %v97
    %v1545 = vunpack.c.l.b16 %v98
    %v1546 = vunpack.c.h.b16 %v98
    %v1547 = vunpack.c.l.b16 %v99
    %v1548 = vunpack.c.h.b16 %v99
    %v1549 = vunpack.c.l.b16 %v100
    %v1550 = vunpack.c.h.b16 %v100
    %v1551 = vunpack.c.l.b16 %v101
    %v1552 = vunpack.c.h.b16 %v101
    %v1553 = vunpack.c.l.b16 %v102
    %v1554 = vunpack.c.h.b16 %v102
    %v1555 = vunpack.c.l.b16 %v103
    %v1556 = vunpack.c.h.b16 %v103
    %v1557 = vunpack.c.l.b16 %v104
    %v1558 = vunpack.c.l.b16 %v105
    %v1559 = vunpack.c.h.b16 %v105
    %v1560 = vunpack.c.l.b16 %v106
    %v1561 = vunpack.c.h.b16 %v106
    %v1562 = vunpack.c.l.b16 %v107
    %v1563 = vunpack.c.h.b16 %v107
    %v1564 = vunpack.c.l.b16 %v108
    %v1565 = vunpack.c.h.b16 %v108
    %v1566 = vunpack.c.l.b16 %v109
    %v1567 = vunpack.c.h.b16 %v109
    %v1568 = vunpack.c.l.b16 %v110
    %v1569 = vunpack.c.h.b16 %v110
    %v1570 = vunpack.c.l.b16 %v111
    %v1571 = vunpack.c.l.b16 %v112
    %v1572 = vunpack.c.h.b16 %v112
    %v1573 = vunpack.c.l.b16 %v113
    %v1574 = vunpack.c.h.b16 %v113
    %v1575 = vunpack.c.l.b16 %v114
    %v1576 = vunpack.c.h.b16 %v114
    %v1577 = vunpack.c.l.b16 %v115
    %v1578 = vunpack.c.h.b16 %v115
    %v1579 = vunpack.c.l.b16 %v116
    %v1580 = vunpack.c.h.b16 %v116
    %v1581 = vunpack.c.l.b16 %v117
    %v1582 = vunpack.c.h.b16 %v117
    %v1583 = vunpack.c.l.b16 %v118
    %v1584 = vunpack.c.l.b16 %v119
    %v1585 = vunpack.c.h.b16 %v119
    %v1586 = vunpack.c.l.b16 %v120
    %v1587 = vunpack.c.h.b16 %v120
    %v1588 = vunpack.c.l.b16 %v121
    %v1589 = vunpack.c.h.b16 %v121
    %v1590 = vunpack.c.l.b16 %v122
    %v1591 = vunpack.c.h.b16 %v122
    %v1592 = vunpack.c.l.b16 %v123
    %v1593 = vunpack.c.h.b16 %v123
    %v1594 = vunpack.c.l.b16 %v124
    %v1595 = vunpack.c.h.b16 %v124
    %v1596 = vunpack.c.l.b16 %v125
    %v1597 = vunpack.c.l.b16 %v126
    %v1598 = vunpack.c.h.b16 %v126
    %v1599 = vunpack.c.l.b16 %v127
    %v1600 = vunpack.c.h.b16 %v127
    %v1601 = vunpack.c.l.b16 %v128
    %v1602 = vunpack.c.h.b16 %v128
    %v1603 = vunpack.c.l.b16 %v129
    %v1604 = vunpack.c.h.b16 %v129
    %v1605 = vunpack.c.l.b16 %v130
    %v1606 = vunpack.c.h.b16 %v130
    %v1607 = vunpack.c.l.b16 %v131
    %v1608 = vunpack.c.h.b16 %v131
    %v1609 = vunpack.c.l.b16 %v132
    %v1610 = vunpack.c.l.b16 %v133
    %v1611 = vunpack.c.h.b16 %v133
    %v1612 = vunpack.c.l.b16 %v134
    %v1613 = vunpack.c.h.b16 %v134
    %v1614 = vunpack.c.l.b16 %v135
    %v1615 = vunpack.c.h.b16 %v135
    %v1616 = vunpack.c.l.b16 %v136
    %v1617 = vunpack.c.h.b16 %v136
    %v1618 = vunpack.c.l.b16 %v137
    %v1619 = vunpack.c.h.b16 %v137
    %v1620 = vunpack.c.l.b16 %v138
    %v1621 = vunpack.c.h.b16 %v138
    %v1622 = vunpack.c.l.b16 %v139
    %v1623 = vunpack.c.l.b16 %v140
    %v1624 = vunpack.c.h.b16 %v140
    %v1625 = vunpack.c.l.b16 %v141
    %v1626 = vunpack.c.h.b16 %v141
    %v1627 = vunpack.c.l.b16 %v142
    %v1628 = vunpack.c.h.b16 %v142
    %v1629 = vunpack.c.l.b16 %v143
    %v1630 = vunpack.c.h.b16 %v143
    %v1631 = vunpack.c.l.b16 %v144
    %v1632 = vunpack.c.h.b16 %v144
    %v1633 = vunpack.c.l.b16 %v145
    %v1634 = vunpack.c.h.b16 %v145
    %v1635 = vunpack.c.l.b16 %v146
    %v1636 = vunpack.c.l.b16 %v147
    %v1637 = vunpack.c.h.b16 %v147
    %v1638 = vunpack.c.l.b16 %v148
    %v1639 = vunpack.c.h.b16 %v148
    %v1640 = vunpack.c.l.b16 %v149
    %v1641 = vunpack.c.h.b16 %v149
    %v1642 = vunpack.c.l.b16 %v150
    %v1643 = vunpack.c.h.b16 %v150
    %v1644 = vunpack.c.l.b16 %v151
    %v1645 = vunpack.c.h.b16 %v151
    %v1646 = vunpack.c.l.b16 %v152
    %v1647 = vunpack.c.h.b16 %v152
    %v1648 = vunpack.c.l.b16 %v153
    %v1649 = vunpack.c.l.b16 %v154
    %v1650 = vunpack.c.h.b16 %v154
    %v1651 = vunpack.c.l.b16 %v155
    %v1652 = vunpack.c.h.b16 %v155
    %v1653 = vunpack.c.l.b16 %v156
    %v1654 = vunpack.c.h.b16 %v156
    %v1655 = vunpack.c.l.b16 %v157
    %v1656 = vunpack.c.h.b16 %v157
    %v1657 = vunpack.c.l.b16 %v158
    %v1658 = vunpack.c.h.b16 %v158
    %v1659 = vunpack.c.l.b16 %v159
    %v1660 = vunpack.c.h.b16 %v159
    %v1661 = vunpack.c.l.b16 %v160
    %v1662 = vunpack.c.l.b16 %v161
    %v1663 = vunpack.c.h.b16 %v161
    %v1664 = vunpack.c.l.b16 %v162
    %v1665 = vunpack.c.h.b16 %v162
    %v1666 = vunpack.c.l.b16 %v163
    %v1667 = vunpack.c.h.b16 %v163
    %v1668 = vunpack.c.l.b16 %v164
    %v1669 = vunpack.c.h.b16 %v164
    %v1670 = vunpack.c.l.b16 %v165
    %v1671 = vunpack.c.h.b16 %v165
    %v1672 = vunpack.c.l.b16 %v166
    %v1673 = vunpack.c.h.b16 %v166
    %v1674 = vunpack.c.l.b16 %v167
    %v1675 = vunpack.c.l.b16 %v168
    %v1676 = vunpack.c.h.b16 %v168
    %v1677 = vunpack.c.l.b16 %v169
    %v1678 = vunpack.c.h.b16 %v169
    %v1679 = vunpack.c.l.b16 %v170
    %v1680 = vunpack.c.h.b16 %v170
    %v1681 = vunpack.c.l.b16 %v171
    %v1682 = vunpack.c.h.b16 %v171
    %v1683 = vunpack.c.l.b16 %v172
    %v1684 = vunpack.c.h.b16 %v172
    %v1685 = vunpack.c.l.b16 %v173
    %v1686 = vunpack.c.h.b16 %v173
    %v1687 = vunpack.c.l.b16 %v174
    %v1688 = vunpack.c.l.b16 %v175
    %v1689 = vunpack.c.h.b16 %v175
    %v1690 = vunpack.c.l.b16 %v176
    %v1691 = vunpack.c.h.b16 %v176
    %v1692 = vunpack.c.l.b16 %v177
    %v1693 = vunpack.c.h.b16 %v177
    %v1694 = vunpack.c.l.b16 %v178
    %v1695 = vunpack.c.h.b16 %v178
    %v1696 = vunpack.c.l.b16 %v179
    %v1697 = vunpack.c.h.b16 %v179
    %v1698 = vunpack.c.l.b16 %v180
    %v1699 = vunpack.c.h.b16 %v180
    %v1700 = vunpack.c.l.b16 %v181
    %v1701 = vunpack.c.l.b16 %v182
    %v1702 = vunpack.c.h.b16 %v182
    %v1703 = vunpack.c.l.b16 %v183
    %v1704 = vunpack.c.h.b16 %v183
    %v1705 = vunpack.c.l.b16 %v184
    %v1706 = vunpack.c.h.b16 %v184
    %v1707 = vunpack.c.l.b16 %v185
    %v1708 = vunpack.c.h.b16 %v185
    %v1709 = vunpack.c.l.b16 %v186
    %v1710 = vunpack.c.h.b16 %v186
    %v1711 = vunpack.c.l.b16 %v187
    %v1712 = vunpack.c.h.b16 %v187
    %v1713 = vunpack.c.l.b16 %v188
    %v1714 = vunpack.c.l.b16 %v189
    %v1715 = vunpack.c.h.b16 %v189
    %v1716 = vunpack.c.l.b16 %v190
    %v1717 = vunpack.c.h.b16 %v190
    %v1718 = vunpack.c.l.b16 %v191
    %v1719 = vunpack.c.h.b16 %v191
    %v1720 = vunpack.c.l.b16 %v192
    %v1721 = vunpack.c.h.b16 %v192
    %v1722 = vunpack.c.l.b16 %v193
    %v1723 = vunpack.c.h.b16 %v193
    %v1724 = vunpack.c.l.b16 %v194
    %v1725 = vunpack.c.h.b16 %v194
    %v1726 = vunpack.c.l.b16 %v195
    %v1727 = vunpack.c.l.b16 %v196
    %v1728 = vunpack.c.h.b16 %v196
    %v1729 = vunpack.c.l.b16 %v197
    %v1730 = vunpack.c.h.b16 %v197
    %v1731 = vunpack.c.l.b16 %v198
    %v1732 = vunpack.c.h.b16 %v198
    %v1733 = vunpack.c.l.b16 %v199
    %v1734 = vunpack.c.h.b16 %v199
    %v1735 = vunpack.c.l.b16 %v200
    %v1736 = vunpack.c.h.b16 %v200
    %v1737 = vunpack.c.l.b16 %v201
    %v1738 = vunpack.c.h.b16 %v201
    %v1739 = vunpack.c.l.b16 %v202
    %v1740 = vunpack.c.l.b16 %v203
    %v1741 = vunpack.c.h.b16 %v203
    %v1742 = vunpack.c.l.b16 %v204
    %v1743 = vunpack.c.h.b16 %v204
    %v1744 = vunpack.c.l.b16 %v205
    %v1745 = vunpack.c.h.b16 %v205
    %v1746 = vunpack.c.l.b16 %v206
    %v1747 = vunpack.c.h.b16 %v206
    %v1748 = vunpack.c.l.b16 %v207
    %v1749 = vunpack.c.h.b16 %v207
    %v1750 = vunpack.c.l.b16 %v208
    %v1751 = vunpack.c.h.b16 %v208
    %v1752 = vunpack.c.l.b16 %v209
    %v1753 = vunpack.c.l.b16 %v210
    %v1754 = vunpack.c.h.b16 %v210
    %v1755 = vunpack.c.l.b16 %v211
    %v1756 = vunpack.c.h.b16 %v211
    %v1757 = vunpack.c.l.b16 %v212
    %v1758 = vunpack.c.h.b16 %v212
    %v1759 = vunpack.c.l.b16 %v213
    %v1760 = vunpack.c.h.b16 %v213
    %v1761 = vunpack.c.l.b16 %v214
    %v1762 = vunpack.c.h.b16 %v214
    %v1763 = vunpack.c.l.b16 %v215
    %v1764 = vunpack.c.h.b16 %v215
    %v1765 = vunpack.c.l.b16 %v216
    %v1766 = vunpack.c.l.b16 %v217
    %v1767 = vunpack.c.h.b16 %v217
    %v1768 = vunpack.c.l.b16 %v218
    %v1769 = vunpack.c.h.b16 %v218
    %v1770 = vunpack.c.l.b16 %v219
    %v1771 = vunpack.c.h.b16 %v219
    %v1772 = vunpack.c.l.b16 %v220
    %v1773 = vunpack.c.h.b16 %v220
    %v1774 = vunpack.c.l.b16 %v221
    %v1775 = vunpack.c.h.b16 %v221
    %v1776 = vunpack.c.l.b16 %v222
    %v1777 = vunpack.c.h.b16 %v222
    %v1778 = vunpack.c.l.b16 %v223
    %v1779 = vunpack.c.l.b16 %v224
    %v1780 = vunpack.c.h.b16 %v224
    %v1781 = vunpack.c.l.b16 %v225
    %v1782 = vunpack.c.h.b16 %v225
    %v1783 = vunpack.c.l.b16 %v226
    %v1784 = vunpack.c.h.b16 %v226
    %v1785 = vunpack.c.l.b16 %v227
    %v1786 = vunpack.c.h.b16 %v227
    %v1787 = vunpack.c.l.b16 %v228
    %v1788 = vunpack.c.h.b16 %v228
    %v1789 = vunpack.c.l.b16 %v229
    %v1790 = vunpack.c.h.b16 %v229
    %v1791 = vunpack.c.l.b16 %v230
    %v1792 = vunpack.c.l.b16 %v231
    %v1793 = vunpack.c.h.b16 %v231
    %v1794 = vunpack.c.l.b16 %v232
    %v1795 = vunpack.c.h.b16 %v232
    %v1796 = vunpack.c.l.b16 %v233
    %v1797 = vunpack.c.h.b16 %v233
    %v1798 = vunpack.c.l.b16 %v234
    %v1799 = vunpack.c.h.b16 %v234
    %v1800 = vunpack.c.l.b16 %v235
    %v1801 = vunpack.c.h.b16 %v235
    %v1802 = vunpack.c.l.b16 %v236
    %v1803 = vunpack.c.h.b16 %v236
    %v1804 = vunpack.c.l.b16 %v237
    %v1805 = vunpack.c.l.b16 %v238
    %v1806 = vunpack.c.h.b16 %v238
    %v1807 = vunpack.c.l.b16 %v239
    %v1808 = vunpack.c.h.b16 %v239
    %v1809 = vunpack.c.l.b16 %v240
    %v1810 = vunpack.c.h.b16 %v240
    %v1811 = vunpack.c.l.b16 %v241
    %v1812 = vunpack.c.h.b16 %v241
    %v1813 = vunpack.c.l.b16 %v242
    %v1814 = vunpack.c.h.b16 %v242
    %v1815 = vunpack.c.l.b16 %v243
    %v1816 = vunpack.c.h.b16 %v243
    %v1817 = vunpack.c.l.b16 %v244
    %v1818 = vunpack.c.l.b16 %v245
    %v1819 = vunpack.c.h.b16 %v245
    %v1820 = vunpack.c.l.b16 %v246
    %v1821 = vunpack.c.h.b16 %v246
    %v1822 = vunpack.c.l.b16 %v247
    %v1823 = vunpack.c.h.b16 %v247
    %v1824 = vunpack.c.l.b16 %v248
    %v1825 = vunpack.c.h.b16 %v248
    %v1826 = vunpack.c.l.b16 %v249
    %v1827 = vunpack.c.h.b16 %v249
    %v1828 = vunpack.c.l.b16 %v250
    %v1829 = vunpack.c.h.b16 %v250
    %v1830 = vunpack.c.l.b16 %v251
    %v1831 = vunpack.c.l.b16 %v252
    %v1832 = vunpack.c.h.b16 %v252
    %v1833 = vunpack.c.l.b16 %v253
    %v1834 = vunpack.c.h.b16 %v253
    %v1835 = vunpack.c.l.b16 %v254
    %v1836 = vunpack.c.h.b16 %v254
    %v1837 = vunpack.c.l.b16 %v255
    %v1838 = vunpack.c.h.b16 %v255
    %v1839 = vunpack.c.l.b16 %v256
    %v1840 = vunpack.c.h.b16 %v256
    %v1841 = vunpack.c.l.b16 %v257
    %v1842 = vunpack.c.h.b16 %v257
    %v1843 = vunpack.c.l.b16 %v258
    %v1844 = vunpack.c.l.b16 %v259
    %v1845 = vunpack.c.h.b16 %v259
    %v1846 = vunpack.c.l.b16 %v260
    %v1847 = vunpack.c.h.b16 %v260
    %v1848 = vunpack.c.l.b16 %v261
    %v1849 = vunpack.c.h.b16 %v261
    %v1850 = vunpack.c.l.b16 %v262
    %v1851 = vunpack.c.h.b16 %v262
    %v1852 = vunpack.c.l.b16 %v263
    %v1853 = vunpack.c.h.b16 %v263
    %v1854 = vunpack.c.l.b16 %v264
    %v1855 = vunpack.c.h.b16 %v264
    %v1856 = vunpack.c.l.b16 %v265
    %v1857 = vunpack.c.l.b16 %v266
    %v1858 = vunpack.c.h.b16 %v266
    %v1859 = vunpack.c.l.b16 %v267
    %v1860 = vunpack.c.h.b16 %v267
    %v1861 = vunpack.c.l.b16 %v268
    %v1862 = vunpack.c.h.b16 %v268
    %v1863 = vunpack.c.l.b16 %v269
    %v1864 = vunpack.c.h.b16 %v269
    %v1865 = vunpack.c.l.b16 %v270
    %v1866 = vunpack.c.h.b16 %v270
    %v1867 = vunpack.c.l.b16 %v271
    %v1868 = vunpack.c.h.b16 %v271
    %v1869 = vunpack.c.l.b16 %v272
    %v1870 = vunpack.c.l.b16 %v273
    %v1871 = vunpack.c.h.b16 %v273
    %v1872 = vunpack.c.l.b16 %v274
    %v1873 = vunpack.c.h.b16 %v274
    %v1874 = vunpack.c.l.b16 %v275
    %v1875 = vunpack.c.h.b16 %v275
    %v1876 = vunpack.c.l.b16 %v276
    %v1877 = vunpack.c.h.b16 %v276
    %v1878 = vunpack.c.l.b16 %v277
    %v1879 = vunpack.c.h.b16 %v277
    %v1880 = vunpack.c.l.b16 %v278
    %v1881 = vunpack.c.h.b16 %v278
    %v1882 = vunpack.c.l.b16 %v279
    %v1883 = vunpack.c.l.b16 %v280
    %v1884 = vunpack.c.h.b16 %v280
    %v1885 = vunpack.c.l.b16 %v281
    %v1886 = vunpack.c.h.b16 %v281
    %v1887 = vunpack.c.l.b16 %v282
    %v1888 = vunpack.c.h.b16 %v282
    %v1889 = vunpack.c.l.b16 %v283
    %v1890 = vunpack.c.h.b16 %v283
    %v1891 = vunpack.c.l.b16 %v284
    %v1892 = vunpack.c.h.b16 %v284
    %v1893 = vunpack.c.l.b16 %v285
    %v1894 = vunpack.c.h.b16 %v285
    %v1895 = vunpack.c.l.b16 %v286
    %v1896 = vunpack.c.l.b16 %v287
    %v1897 = vunpack.c.h.b16 %v287
    %v1898 = vunpack.c.l.b16 %v288
    %v1899 = vunpack.c.h.b16 %v288
    %v1900 = vunpack.c.l.b16 %v289
    %v1901 = vunpack.c.h.b16 %v289
    %v1902 = vunpack.c.l.b16 %v290
    %v1903 = vunpack.c.h.b16 %v290
    %v1904 = vunpack.c.l.b16 %v291
    %v1905 = vunpack.c.h.b16 %v291
    %v1906 = vunpack.c.l.b16 %v292
    %v1907 = vunpack.c.h.b16 %v292
    %v1908 = vunpack.c.l.b16 %v293
    %v1909 = vunpack.c.l.b16 %v294
    %v1910 = vunpack.c.h.b16 %v294
    %v1911 = vunpack.c.l.b16 %v295
    %v1912 = vunpack.c.h.b16 %v295
    %v1913 = vunpack.c.l.b16 %v296
    %v1914 = vunpack.c.h.b16 %v296
    %v1915 = vunpack.c.l.b16 %v297
    %v1916 = vunpack.c.h.b16 %v297
    %v1917 = vunpack.c.l.b16 %v298
    %v1918 = vunpack.c.h.b16 %v298
    %v1919 = vunpack.c.l.b16 %v299
    %v1920 = vunpack.c.h.b16 %v299
    %v1921 = vunpack.c.l.b16 %v300
    %v1922 = vunpack.c.l.b16 %v301
    %v1923 = vunpack.c.h.b16 %v301
    %v1924 = vunpack.c.l.b16 %v302
    %v1925 = vunpack.c.h.b16 %v302
    %v1926 = vunpack.c.l.b16 %v303
    %v1927 = vunpack.c.h.b16 %v303
    %v1928 = vunpack.c.l.b16 %v304
    %v1929 = vunpack.c.h.b16 %v304
    %v1930 = vunpack.c.l.b16 %v305
    %v1931 = vunpack.c.h.b16 %v305
    %v1932 = vunpack.c.l.b16 %v306
    %v1933 = vunpack.c.h.b16 %v306
    %v1934 = vunpack.c.l.b16 %v307
    %v1935 = vunpack.c.l.b16 %v308
    %v1936 = vunpack.c.h.b16 %v308
    %v1937 = vunpack.c.l.b16 %v309
    %v1938 = vunpack.c.h.b16 %v309
    %v1939 = vunpack.c.l.b16 %v310
    %v1940 = vunpack.c.h.b16 %v310
    %v1941 = vunpack.c.l.b16 %v311
    %v1942 = vunpack.c.h.b16 %v311
    %v1943 = vunpack.c.l.b16 %v312
    %v1944 = vunpack.c.h.b16 %v312
    %v1945 = vunpack.c.l.b16 %v313
    %v1946 = vunpack.c.h.b16 %v313
    %v1947 = vunpack.c.l.b16 %v314
    %v1948 = vunpack.c.l.b16 %v315
    %v1949 = vunpack.c.h.b16 %v315
    %v1950 = vunpack.c.l.b16 %v316
    %v1951 = vunpack.c.h.b16 %v316
    %v1952 = vunpack.c.l.b16 %v317
    %v1953 = vunpack.c.h.b16 %v317
    %v1954 = vunpack.c.l.b16 %v318
    %v1955 = vunpack.c.h.b16 %v318
    %v1956 = vunpack.c.l.b16 %v319
    %v1957 = vunpack.c.h.b16 %v319
    %v1958 = vunpack.c.l.b16 %v320
    %v1959 = vunpack.c.h.b16 %v320
    %v1960 = vunpack.c.l.b16 %v321
    %v1961 = vunpack.c.l.b16 %v322
    %v1962 = vunpack.c.h.b16 %v322
    %v1963 = vunpack.c.l.b16 %v323
    %v1964 = vunpack.c.h.b16 %v323
    %v1965 = vunpack.c.l.b16 %v324
    %v1966 = vunpack.c.h.b16 %v324
    %v1967 = vunpack.c.l.b16 %v325
    %v1968 = vunpack.c.h.b16 %v325
    %v1969 = vunpack.c.l.b16 %v326
    %v1970 = vunpack.c.h.b16 %v326
    %v1971 = vunpack.c.l.b16 %v327
    %v1972 = vunpack.c.h.b16 %v327
    %v1973 = vunpack.c.l.b16 %v328
    %v1974 = vunpack.c.l.b16 %v329
    %v1975 = vunpack.c.h.b16 %v329
    %v1976 = vunpack.c.l.b16 %v330
    %v1977 = vunpack.c.h.b16 %v330
    %v1978 = vunpack.c.l.b16 %v331
    %v1979 = vunpack.c.h.b16 %v331
    %v1980 = vunpack.c.l.b16 %v332
    %v1981 = vunpack.c.h.b16 %v332
    %v1982 = vunpack.c.l.b16 %v333
    %v1983 = vunpack.c.h.b16 %v333
    %v1984 = vunpack.c.l.b16 %v334
    %v1985 = vunpack.c.h.b16 %v334
    %v1986 = vunpack.c.l.b16 %v335
    %v1987 = vunpack.c.l.b16 %v336
    %v1988 = vunpack.c.h.b16 %v336
    %v1989 = vunpack.c.l.b16 %v337
    %v1990 = vunpack.c.h.b16 %v337
    %v1991 = vunpack.c.l.b16 %v338
    %v1992 = vunpack.c.h.b16 %v338
    %v1993 = vunpack.c.l.b16 %v339
    %v1994 = vunpack.c.h.b16 %v339
    %v1995 = vunpack.c.l.b16 %v340
    %v1996 = vunpack.c.h.b16 %v340
    %v1997 = vunpack.c.l.b16 %v341
    %v1998 = vunpack.c.h.b16 %v341
    %v1999 = vunpack.c.l.b16 %v342
    %v2000 = vunpack.c.l.b16 %v343
    %v2001 = vunpack.c.h.b16 %v343
    %v2002 = vunpack.c.l.b16 %v344
    %v2003 = vunpack.c.h.b16 %v344
    %v2004 = vunpack.c.l.b16 %v345
    %v2005 = vunpack.c.h.b16 %v345
    %v2006 = vunpack.c.l.b16 %v346
    %v2007 = vunpack.c.h.b16 %v346
    %v2008 = vunpack.c.l.b16 %v347
    %v2009 = vunpack.c.h.b16 %v347
    %v2010 = vunpack.c.l.b16 %v348
    %v2011 = vunpack.c.h.b16 %v348
    %v2012 = vunpack.c.l.b16 %v349
    %v2013 = vunpack.c.l.b16 %v350
    %v2014 = vunpack.c.h.b16 %v350
    %v2015 = vunpack.c.l.b16 %v351
    %v2016 = vunpack.c.h.b16 %v351
    %v2017 = vunpack.c.l.b16 %v352
    %v2018 = vunpack.c.h.b16 %v352
    %v2019 = vunpack.c.l.b16 %v353
    %v2020 = vunpack.c.h.b16 %v353
    %v2021 = vunpack.c.l.b16 %v354
    %v2022 = vunpack.c.h.b16 %v354
    %v2023 = vunpack.c.l.b16 %v355
    %v2024 = vunpack.c.h.b16 %v355
    %v2025 = vunpack.c.l.b16 %v356
    %v2026 = vunpack.c.l.b16 %v357
    %v2027 = vunpack.c.h.b16 %v357
    %v2028 = vunpack.c.l.b16 %v358
    %v2029 = vunpack.c.h.b16 %v358
    %v2030 = vunpack.c.l.b16 %v359
    %v2031 = vunpack.c.h.b16 %v359
    %v2032 = vunpack.c.l.b16 %v360
    %v2033 = vunpack.c.h.b16 %v360
    %v2034 = vunpack.c.l.b16 %v361
    %v2035 = vunpack.c.h.b16 %v361
    %v2036 = vunpack.c.l.b16 %v362
    %v2037 = vunpack.c.h.b16 %v362
    %v2038 = vunpack.c.l.b16 %v363
    %v2039 = vunpack.c.l.b16 %v364
    %v2040 = vunpack.c.h.b16 %v364
    %v2041 = vunpack.c.l.b16 %v365
    %v2042 = vunpack.c.h.b16 %v365
    %v2043 = vunpack.c.l.b16 %v366
    %v2044 = vunpack.c.h.b16 %v366
    %v2045 = vunpack.c.l.b16 %v367
    %v2046 = vunpack.c.h.b16 %v367
    %v2047 = vunpack.c.l.b16 %v368
    %v2048 = vunpack.c.h.b16 %v368
    %v2049 = vunpack.c.l.b16 %v369
    %v2050 = vunpack.c.h.b16 %v369
    %v2051 = vunpack.c.l.b16 %v370
    %v2052 = vunpack.c.l.b16 %v371
    %v2053 = vunpack.c.h.b16 %v371
    %v2054 = vunpack.c.l.b16 %v372
    %v2055 = vunpack.c.h.b16 %v372
    %v2056 = vunpack.c.l.b16 %v373
    %v2057 = vunpack.c.h.b16 %v373
    %v2058 = vunpack.c.l.b16 %v374
    %v2059 = vunpack.c.h.b16 %v374
    %v2060 = vunpack.c.l.b16 %v375
    %v2061 = vunpack.c.h.b16 %v375
    %v2062 = vunpack.c.l.b16 %v376
    %v2063 = vunpack.c.h.b16 %v376
    %v2064 = vunpack.c.l.b16 %v377
    %v2065 = vunpack.c.l.b16 %v378
    %v2066 = vunpack.c.h.b16 %v378
    %v2067 = vunpack.c.l.b16 %v379
    %v2068 = vunpack.c.h.b16 %v379
    %v2069 = vunpack.c.l.b16 %v380
    %v2070 = vunpack.c.h.b16 %v380
    %v2071 = vunpack.c.l.b16 %v381
    %v2072 = vunpack.c.h.b16 %v381
    %v2073 = vunpack.c.l.b16 %v382
    %v2074 = vunpack.c.h.b16 %v382
    %v2075 = vunpack.c.l.b16 %v383
    %v2076 = vunpack.c.h.b16 %v383
    %v2077 = vunpack.c.l.b16 %v384
    %v2078 = vunpack.c.l.b16 %v385
    %v2079 = vunpack.c.h.b16 %v385
    %v2080 = vunpack.c.l.b16 %v386
    %v2081 = vunpack.c.h.b16 %v386
    %v2082 = vunpack.c.l.b16 %v387
    %v2083 = vunpack.c.h.b16 %v387
    %v2084 = vunpack.c.l.b16 %v388
    %v2085 = vunpack.c.h.b16 %v388
    %v2086 = vunpack.c.l.b16 %v389
    %v2087 = vunpack.c.h.b16 %v389
    %v2088 = vunpack.c.l.b16 %v390
    %v2089 = vunpack.c.h.b16 %v390
    %v2090 = vunpack.c.l.b16 %v391
    %v2091 = vunpack.c.l.b16 %v392
    %v2092 = vunpack.c.h.b16 %v392
    %v2093 = vunpack.c.l.b16 %v393
    %v2094 = vunpack.c.h.b16 %v393
    %v2095 = vunpack.c.l.b16 %v394
    %v2096 = vunpack.c.h.b16 %v394
    %v2097 = vunpack.c.l.b16 %v395
    %v2098 = vunpack.c.h.b16 %v395
    %v2099 = vunpack.c.l.b16 %v396
    %v2100 = vunpack.c.h.b16 %v396
    %v2101 = vunpack.c.l.b16 %v397
    %v2102 = vunpack.c.h.b16 %v397
    %v2103 = vunpack.c.l.b16 %v398
    %v2104 = vunpack.c.l.b16 %v399
    %v2105 = vunpack.c.h.b16 %v399
    %v2106 = vunpack.c.l.b16 %v400
    %v2107 = vunpack.c.h.b16 %v400
    %v2108 = vunpack.c.l.b16 %v401
    %v2109 = vunpack.c.h.b16 %v401
    %v2110 = vunpack.c.l.b16 %v402
    %v2111 = vunpack.c.h.b16 %v402
    %v2112 = vunpack.c.l.b16 %v403
    %v2113 = vunpack.c.h.b16 %v403
    %v2114 = vunpack.c.l.b16 %v404
    %v2115 = vunpack.c.h.b16 %v404
    %v2116 = vunpack.c.l.b16 %v405
    %v2117 = vunpack.c.l.b16 %v406
    %v2118 = vunpack.c.h.b16 %v406
    %v2119 = vunpack.c.l.b16 %v407
    %v2120 = vunpack.c.h.b16 %v407
    %v2121 = vunpack.c.l.b16 %v408
    %v2122 = vunpack.c.h.b16 %v408
    %v2123 = vunpack.c.l.b16 %v409
    %v2124 = vunpack.c.h.b16 %v409
    %v2125 = vunpack.c.l.b16 %v410
    %v2126 = vunpack.c.h.b16 %v410
    %v2127 = vunpack.c.l.b16 %v411
    %v2128 = vunpack.c.h.b16 %v411
    %v2129 = vunpack.c.l.b16 %v412
    %v2130 = vunpack.c.l.b16 %v413
    %v2131 = vunpack.c.h.b16 %v413
    %v2132 = vunpack.c.l.b16 %v414
    %v2133 = vunpack.c.h.b16 %v414
    %v2134 = vunpack.c.l.b16 %v415
    %v2135 = vunpack.c.h.b16 %v415
    %v2136 = vunpack.c.l.b16 %v416
    %v2137 = vunpack.c.h.b16 %v416
    %v2138 = vunpack.c.l.b16 %v417
    %v2139 = vunpack.c.h.b16 %v417
    %v2140 = vunpack.c.l.b16 %v418
    %v2141 = vunpack.c.h.b16 %v418
    %v2142 = vunpack.c.l.b16 %v419
    %v2143 = vunpack.c.l.b16 %v420
    %v2144 = vunpack.c.h.b16 %v420
    %v2145 = vunpack.c.l.b16 %v421
    %v2146 = vunpack.c.h.b16 %v421
    %v2147 = vunpack.c.l.b16 %v422
    %v2148 = vunpack.c.h.b16 %v422
    %v2149 = vunpack.c.l.b16 %v423
    %v2150 = vunpack.c.h.b16 %v423
    %v2151 = vunpack.c.l.b16 %v424
    %v2152 = vunpack.c.h.b16 %v424
    %v2153 = vunpack.c.l.b16 %v425
    %v2154 = vunpack.c.h.b16 %v425
    %v2155 = vunpack.c.l.b16 %v426
    %v2156 = vunpack.c.l.b16 %v427
    %v2157 = vunpack.c.h.b16 %v427
    %v2158 = vunpack.c.l.b16 %v428
    %v2159 = vunpack.c.h.b16 %v428
    %v2160 = vunpack.c.l.b16 %v429
    %v2161 = vunpack.c.h.b16 %v429
    %v2162 = vunpack.c.l.b16 %v430
    %v2163 = vunpack.c.h.b16 %v430
    %v2164 = vunpack.c.l.b16 %v431
    %v2165 = vunpack.c.h.b16 %v431
    %v2166 = vunpack.c.l.b16 %v432
    %v2167 = vunpack.c.h.b16 %v432
    %v2168 = vunpack.c.l.b16 %v433
    %v2169 = vunpack.c.l.b16 %v434
    %v2170 = vunpack.c.h.b16 %v434
    %v2171 = vunpack.c.l.b16 %v435
    %v2172 = vunpack.c.h.b16 %v435
    %v2173 = vunpack.c.l.b16 %v436
    %v2174 = vunpack.c.h.b16 %v436
    %v2175 = vunpack.c.l.b16 %v437
    %v2176 = vunpack.c.h.b16 %v437
    %v2177 = vunpack.c.l.b16 %v438
    %v2178 = vunpack.c.h.b16 %v438
    %v2179 = vunpack.c.l.b16 %v439
    %v2180 = vunpack.c.h.b16 %v439
    %v2181 = vunpack.c.l.b16 %v440
    %v2182 = vunpack.c.l.b16 %v441
    %v2183 = vunpack.c.h.b16 %v441
    %v2184 = vunpack.c.l.b16 %v442
    %v2185 = vunpack.c.h.b16 %v442
    %v2186 = vunpack.c.l.b16 %v443
    %v2187 = vunpack.c.h.b16 %v443
    %v2188 = vunpack.c.l.b16 %v444
    %v2189 = vunpack.c.h.b16 %v444
    %v2190 = vunpack.c.l.b16 %v445
    %v2191 = vunpack.c.h.b16 %v445
    %v2192 = vunpack.c.l.b16 %v446
    %v2193 = vunpack.c.h.b16 %v446
    %v2194 = vunpack.c.l.b16 %v447
    %v2195 = vunpack.c.l.b16 %v448
    %v2196 = vunpack.c.h.b16 %v448
    %v2197 = vunpack.c.l.b16 %v449
    %v2198 = vunpack.c.h.b16 %v449
    %v2199 = vunpack.c.l.b16 %v450
    %v2200 = vunpack.c.h.b16 %v450
    %v2201 = vunpack.c.l.b16 %v451
    %v2202 = vunpack.c.h.b16 %v451
    %v2203 = vunpack.c.l.b16 %v452
    %v2204 = vunpack.c.h.b16 %v452
    %v2205 = vunpack.c.l.b16 %v453
    %v2206 = vunpack.c.h.b16 %v453
    %v2207 = vunpack.c.l.b16 %v454
    %v2208 = vunpack.c.l.b16 %v455
    %v2209 = vunpack.c.h.b16 %v455
    %v2210 = vunpack.c.l.b16 %v456
    %v2211 = vunpack.c.h.b16 %v456
    %v2212 = vunpack.c.l.b16 %v457
    %v2213 = vunpack.c.h.b16 %v457
    %v2214 = vunpack.c.l.b16 %v458
    %v2215 = vunpack.c.h.b16 %v458
    %v2216 = vunpack.c.l.b16 %v459
    %v2217 = vunpack.c.h.b16 %v459
    %v2218 = vunpack.c.l.b16 %v460
    %v2219 = vunpack.c.h.b16 %v460
    %v2220 = vunpack.c.l.b16 %v461
    %v2221 = vunpack.c.l.b16 %v462
    %v2222 = vunpack.c.h.b16 %v462
    %v2223 = vunpack.c.l.b16 %v463
    %v2224 = vunpack.c.h.b16 %v463
    %v2225 = vunpack.c.l.b16 %v464
    %v2226 = vunpack.c.h.b16 %v464
    %v2227 = vunpack.c.l.b16 %v465
    %v2228 = vunpack.c.h.b16 %v465
    %v2229 = vunpack.c.l.b16 %v466
    %v2230 = vunpack.c.h.b16 %v466
    %v2231 = vunpack.c.l.b16 %v467
    %v2232 = vunpack.c.h.b16 %v467
    %v2233 = vunpack.c.l.b16 %v468
    %v2234 = vunpack.c.l.b16 %v469
    %v2235 = vunpack.c.h.b16 %v469
    %v2236 = vunpack.c.l.b16 %v470
    %v2237 = vunpack.c.h.b16 %v470
    %v2238 = vunpack.c.l.b16 %v471
    %v2239 = vunpack.c.h.b16 %v471
    %v2240 = vunpack.c.l.b16 %v472
    %v2241 = vunpack.c.h.b16 %v472
    %v2242 = vunpack.c.l.b16 %v473
    %v2243 = vunpack.c.h.b16 %v473
    %v2244 = vunpack.c.l.b16 %v474
    %v2245 = vunpack.c.h.b16 %v474
    %v2246 = vunpack.c.l.b16 %v475
    %v2247 = vunpack.c.l.b16 %v476
    %v2248 = vunpack.c.h.b16 %v476
    %v2249 = vunpack.c.l.b16 %v477
    %v2250 = vunpack.c.h.b16 %v477
    %v2251 = vunpack.c.l.b16 %v478
    %v2252 = vunpack.c.h.b16 %v478
    %v2253 = vunpack.c.l.b16 %v479
    %v2254 = vunpack.c.h.b16 %v479
    %v2255 = vunpack.c.l.b16 %v480
    %v2256 = vunpack.c.h.b16 %v480
    %v2257 = vunpack.c.l.b16 %v481
    %v2258 = vunpack.c.h.b16 %v481
    %v2259 = vunpack.c.l.b16 %v482
    %v2260 = vunpack.c.l.b16 %v483
    %v2261 = vunpack.c.h.b16 %v483
    %v2262 = vunpack.c.l.b16 %v484
    %v2263 = vunpack.c.h.b16 %v484
    %v2264 = vunpack.c.l.b16 %v485
    %v2265 = vunpack.c.h.b16 %v485
    %v2266 = vunpack.c.l.b16 %v486
    %v2267 = vunpack.c.h.b16 %v486
    %v2268 = vunpack.c.l.b16 %v487
    %v2269 = vunpack.c.h.b16 %v487
    %v2270 = vunpack.c.l.b16 %v488
    %v2271 = vunpack.c.h.b16 %v488
    %v2272 = vunpack.c.l.b16 %v489
    %v2273 = vunpack.c.l.b16 %v490
    %v2274 = vunpack.c.h.b16 %v490
    %v2275 = vunpack.c.l.b16 %v491
    %v2276 = vunpack.c.h.b16 %v491
    %v2277 = vunpack.c.l.b16 %v492
    %v2278 = vunpack.c.h.b16 %v492
    %v2279 = vunpack.c.l.b16 %v493
    %v2280 = vunpack.c.h.b16 %v493
    %v2281 = vunpack.c.l.b16 %v494
    %v2282 = vunpack.c.h.b16 %v494
    %v2283 = vunpack.c.l.b16 %v495
    %v2284 = vunpack.c.h.b16 %v495
    %v2285 = vunpack.c.l.b16 %v496
    %v2286 = vunpack.c.l.b16 %v497
    %v2287 = vunpack.c.h.b16 %v497
    %v2288 = vunpack.c.l.b16 %v498
    %v2289 = vunpack.c.h.b16 %v498
    %v2290 = vunpack.c.l.b16 %v499
    %v2291 = vunpack.c.h.b16 %v499
    %v2292 = vunpack.c.l.b16 %v500
    %v2293 = vunpack.c.h.b16 %v500
    %v2294 = vunpack.c.l.b16 %v501
    %v2295 = vunpack.c.h.b16 %v501
    %v2296 = vunpack.c.l.b16 %v502
    %v2297 = vunpack.c.h.b16 %v502
    %v2298 = vunpack.c.l.b16 %v503
    %v2299 = vunpack.c.l.b16 %v504
    %v2300 = vunpack.c.h.b16 %v504
    %v2301 = vunpack.c.l.b16 %v505
    %v2302 = vunpack.c.h.b16 %v505
    %v2303 = vunpack.c.l.b16 %v506
    %v2304 = vunpack.c.h.b16 %v506
    %v2305 = vunpack.c.l.b16 %v507
    %v2306 = vunpack.c.h.b16 %v507
    %v2307 = vunpack.c.l.b16 %v508
    %v2308 = vunpack.c.h.b16 %v508
    %v2309 = vunpack.c.l.b16 %v509
    %v2310 = vunpack.c.h.b16 %v509
    %v2311 = vunpack.c.l.b16 %v510
    %v2312 = vunpack.c.l.b16 %v511
    %v2313 = vunpack.c.h.b16 %v511
    %v2314 = vunpack.c.l.b16 %v512
    %v2315 = vunpack.c.h.b16 %v512
    %v2316 = vunpack.c.l.b16 %v513
    %v2317 = vunpack.c.h.b16 %v513
    %v2318 = vunpack.c.l.b16 %v514
    %v2319 = vunpack.c.h.b16 %v514
    %v2320 = vunpack.c.l.b16 %v515
    %v2321 = vunpack.c.h.b16 %v515
    %v2322 = vunpack.c.l.b16 %v516
    %v2323 = vunpack.c.h.b16 %v516
    %v2324 = vunpack.c.l.b16 %v517
    %v2325 = vunpack.c.l.b16 %v518
    %v2326 = vunpack.c.h.b16 %v518
    %v2327 = vunpack.c.l.b16 %v519
    %v2328 = vunpack.c.h.b16 %v519
    %v2329 = vunpack.c.l.b16 %v520
    %v2330 = vunpack.c.h.b16 %v520
    %v2331 = vunpack.c.l.b16 %v521
    %v2332 = vunpack.c.h.b16 %v521
    %v2333 = vunpack.c.l.b16 %v522
    %v2334 = vunpack.c.h.b16 %v522
    %v2335 = vunpack.c.l.b16 %v523
    %v2336 = vunpack.c.h.b16 %v523
    %v2337 = vunpack.c.l.b16 %v524
    %v2338 = vunpack.c.l.b16 %v525
    %v2339 = vunpack.c.h.b16 %v525
    %v2340 = vunpack.c.l.b16 %v526
    %v2341 = vunpack.c.h.b16 %v526
    %v2342 = vunpack.c.l.b16 %v527
    %v2343 = vunpack.c.h.b16 %v527
    %v2344 = vunpack.c.l.b16 %v528
    %v2345 = vunpack.c.h.b16 %v528
    %v2346 = vunpack.c.l.b16 %v529
    %v2347 = vunpack.c.h.b16 %v529
    %v2348 = vunpack.c.l.b16 %v530
    %v2349 = vunpack.c.h.b16 %v530
    %v2350 = vunpack.c.l.b16 %v531
    %v2351 = vunpack.c.l.b16 %v532
    %v2352 = vunpack.c.h.b16 %v532
    %v2353 = vunpack.c.l.b16 %v533
    %v2354 = vunpack.c.h.b16 %v533
    %v2355 = vunpack.c.l.b16 %v534
    %v2356 = vunpack.c.h.b16 %v534
    %v2357 = vunpack.c.l.b16 %v535
    %v2358 = vunpack.c.h.b16 %v535
    %v2359 = vunpack.c.l.b16 %v536
    %v2360 = vunpack.c.h.b16 %v536
    %v2361 = vunpack.c.l.b16 %v537
    %v2362 = vunpack.c.h.b16 %v537
    %v2363 = vunpack.c.l.b16 %v538
    %v2364 = vunpack.c.l.b16 %v539
    %v2365 = vunpack.c.h.b16 %v539
    %v2366 = vunpack.c.l.b16 %v540
    %v2367 = vunpack.c.h.b16 %v540
    %v2368 = vunpack.c.l.b16 %v541
    %v2369 = vunpack.c.h.b16 %v541
    %v2370 = vunpack.c.l.b16 %v542
    %v2371 = vunpack.c.h.b16 %v542
    %v2372 = vunpack.c.l.b16 %v543
    %v2373 = vunpack.c.h.b16 %v543
    %v2374 = vunpack.c.l.b16 %v544
    %v2375 = vunpack.c.h.b16 %v544
    %v2376 = vunpack.c.l.b16 %v545
    %v2377 = vunpack.c.l.b16 %v546
    %v2378 = vunpack.c.h.b16 %v546
    %v2379 = vunpack.c.l.b16 %v547
    %v2380 = vunpack.c.h.b16 %v547
    %v2381 = vunpack.c.l.b16 %v548
    %v2382 = vunpack.c.h.b16 %v548
    %v2383 = vunpack.c.l.b16 %v549
    %v2384 = vunpack.c.h.b16 %v549
    %v2385 = vunpack.c.l.b16 %v550
    %v2386 = vunpack.c.h.b16 %v550
    %v2387 = vunpack.c.l.b16 %v551
    %v2388 = vunpack.c.h.b16 %v551
    %v2389 = vunpack.c.l.b16 %v552
    %v2390 = vunpack.c.l.b16 %v553
    %v2391 = vunpack.c.h.b16 %v553
    %v2392 = vunpack.c.l.b16 %v554
    %v2393 = vunpack.c.h.b16 %v554
    %v2394 = vunpack.c.l.b16 %v555
    %v2395 = vunpack.c.h.b16 %v555
    %v2396 = vunpack.c.l.b16 %v556
    %v2397 = vunpack.c.h.b16 %v556
    %v2398 = vunpack.c.l.b16 %v557
    %v2399 = vunpack.c.h.b16 %v557
    %v2400 = vunpack.c.l.b16 %v558
    %v2401 = vunpack.c.h.b16 %v558
    %v2402 = vunpack.c.l.b16 %v559
    %v2403 = vunpack.c.l.b16 %v560
    %v2404 = vunpack.c.h.b16 %v560
    %v2405 = vunpack.c.l.b16 %v561
    %v2406 = vunpack.c.h.b16 %v561
    %v2407 = vunpack.c.l.b16 %v562
    %v2408 = vunpack.c.h.b16 %v562
    %v2409 = vunpack.c.l.b16 %v563
    %v2410 = vunpack.c.h.b16 %v563
    %v2411 = vunpack.c.l.b16 %v564
    %v2412 = vunpack.c.h.b16 %v564
    %v2413 = vunpack.c.l.b16 %v565
    %v2414 = vunpack.c.h.b16 %v565
    %v2415 = vunpack.c.l.b16 %v566
    %v2416 = vunpack.c.l.b16 %v567
    %v2417 = vunpack.c.h.b16 %v567
    %v2418 = vunpack.c.l.b16 %v568
    %v2419 = vunpack.c.h.b16 %v568
    %v2420 = vunpack.c.l.b16 %v569
    %v2421 = vunpack.c.h.b16 %v569
    %v2422 = vunpack.c.l.b16 %v570
    %v2423 = vunpack.c.h.b16 %v570
    %v2424 = vunpack.c.l.b16 %v571
    %v2425 = vunpack.c.h.b16 %v571
    %v2426 = vunpack.c.l.b16 %v572
    %v2427 = vunpack.c.h.b16 %v572
    %v2428 = vunpack.c.l.b16 %v573
    %v2429 = vunpack.c.l.b16 %v574
    %v2430 = vunpack.c.h.b16 %v574
    %v2431 = vunpack.c.l.b16 %v575
    %v2432 = vunpack.c.h.b16 %v575
    %v2433 = vunpack.c.l.b16 %v576
    %v2434 = vunpack.c.h.b16 %v576
    %v2435 = vunpack.c.l.b16 %v577
    %v2436 = vunpack.c.h.b16 %v577
    %v2437 = vunpack.c.l.b16 %v578
    %v2438 = vunpack.c.h.b16 %v578
    %v2439 = vunpack.c.l.b16 %v579
    %v2440 = vunpack.c.h.b16 %v579
    %v2441 = vunpack.c.l.b16 %v580
    %v2442 = vunpack.c.l.b16 %v581
    %v2443 = vunpack.c.h.b16 %v581
    %v2444 = vunpack.c.l.b16 %v582
    %v2445 = vunpack.c.h.b16 %v582
    %v2446 = vunpack.c.l.b16 %v583
    %v2447 = vunpack.c.h.b16 %v583
    %v2448 = vunpack.c.l.b16 %v584
    %v2449 = vunpack.c.h.b16 %v584
    %v2450 = vunpack.c.l.b16 %v585
    %v2451 = vunpack.c.h.b16 %v585
    %v2452 = vunpack.c.l.b16 %v586
    %v2453 = vunpack.c.h.b16 %v586
    %v2454 = vunpack.c.l.b16 %v587
    %v2455 = vunpack.c.l.b16 %v588
    %v2456 = vunpack.c.h.b16 %v588
    %v2457 = vunpack.c.l.b16 %v589
    %v2458 = vunpack.c.h.b16 %v589
    %v2459 = vunpack.c.l.b16 %v590
    %v2460 = vunpack.c.h.b16 %v590
    %v2461 = vunpack.c.l.b16 %v591
    %v2462 = vunpack.c.h.b16 %v591
    %v2463 = vunpack.c.l.b16 %v592
    %v2464 = vunpack.c.h.b16 %v592
    %v2465 = vunpack.c.l.b16 %v593
    %v2466 = vunpack.c.h.b16 %v593
    %v2467 = vunpack.c.l.b16 %v594
    %v2468 = vunpack.c.l.b16 %v595
    %v2469 = vunpack.c.h.b16 %v595
    %v2470 = vunpack.c.l.b16 %v596
    %v2471 = vunpack.c.h.b16 %v596
    %v2472 = vunpack.c.l.b16 %v597
    %v2473 = vunpack.c.h.b16 %v597
    %v2474 = vunpack.c.l.b16 %v598
    %v2475 = vunpack.c.h.b16 %v598
    %v2476 = vunpack.c.l.b16 %v599
    %v2477 = vunpack.c.h.b16 %v599
    %v2478 = vunpack.c.l.b16 %v600
    %v2479 = vunpack.c.h.b16 %v600
    %v2480 = vunpack.c.l.b16 %v601
    %v2481 = vunpack.c.l.b16 %v602
    %v2482 = vunpack.c.h.b16 %v602
    %v2483 = vunpack.c.l.b16 %v603
    %v2484 = vunpack.c.h.b16 %v603
    %v2485 = vunpack.c.l.b16 %v604
    %v2486 = vunpack.c.h.b16 %v604
    %v2487 = vunpack.c.l.b16 %v605
    %v2488 = vunpack.c.h.b16 %v605
    %v2489 = vunpack.c.l.b16 %v606
    %v2490 = vunpack.c.h.b16 %v606
    %v2491 = vunpack.c.l.b16 %v607
    %v2492 = vunpack.c.h.b16 %v607
    %v2493 = vunpack.c.l.b16 %v608
    %v2494 = vunpack.c.l.b16 %v609
    %v2495 = vunpack.c.h.b16 %v609
    %v2496 = vunpack.c.l.b16 %v610
    %v2497 = vunpack.c.h.b16 %v610
    %v2498 = vunpack.c.l.b16 %v611
    %v2499 = vunpack.c.h.b16 %v611
    %v2500 = vunpack.c.l.b16 %v612
    %v2501 = vunpack.c.h.b16 %v612
    %v2502 = vunpack.c.l.b16 %v613
    %v2503 = vunpack.c.h.b16 %v613
    %v2504 = vunpack.c.l.b16 %v614
    %v2505 = vunpack.c.h.b16 %v614
    %v2506 = vunpack.c.l.b16 %v615
    %v2507 = vunpack.c.l.b16 %v616
    %v2508 = vunpack.c.h.b16 %v616
    %v2509 = vunpack.c.l.b16 %v617
    %v2510 = vunpack.c.h.b16 %v617
    %v2511 = vunpack.c.l.b16 %v618
    %v2512 = vunpack.c.h.b16 %v618
    %v2513 = vunpack.c.l.b16 %v619
    %v2514 = vunpack.c.h.b16 %v619
    %v2515 = vunpack.c.l.b16 %v620
    %v2516 = vunpack.c.h.b16 %v620
    %v2517 = vunpack.c.l.b16 %v621
    %v2518 = vunpack.c.h.b16 %v621
    %v2519 = vunpack.c.l.b16 %v622
    %v2520 = vunpack.c.l.b16 %v623
    %v2521 = vunpack.c.h.b16 %v623
    %v2522 = vunpack.c.l.b16 %v624
    %v2523 = vunpack.c.h.b16 %v624
    %v2524 = vunpack.c.l.b16 %v625
    %v2525 = vunpack.c.h.b16 %v625
    %v2526 = vunpack.c.l.b16 %v626
    %v2527 = vunpack.c.h.b16 %v626
    %v2528 = vunpack.c.l.b16 %v627
    %v2529 = vunpack.c.h.b16 %v627
    %v2530 = vunpack.c.l.b16 %v628
    %v2531 = vunpack.c.h.b16 %v628
    %v2532 = vunpack.c.l.b16 %v629
    %v2533 = vunpack.c.l.b16 %v630
    %v2534 = vunpack.c.h.b16 %v630
    %v2535 = vunpack.c.l.b16 %v631
    %v2536 = vunpack.c.h.b16 %v631
    %v2537 = vunpack.c.l.b16 %v632
    %v2538 = vunpack.c.h.b16 %v632
    %v2539 = vunpack.c.l.b16 %v633
    %v2540 = vunpack.c.h.b16 %v633
    %v2541 = vunpack.c.l.b16 %v634
    %v2542 = vunpack.c.h.b16 %v634
    %v2543 = vunpack.c.l.b16 %v635
    %v2544 = vunpack.c.h.b16 %v635
    %v2545 = vunpack.c.l.b16 %v636
    %v2546 = vunpack.c.l.b16 %v637
    %v2547 = vunpack.c.h.b16 %v637
    %v2548 = vunpack.c.l.b16 %v638
    %v2549 = vunpack.c.h.b16 %v638
    %v2550 = vunpack.c.l.b16 %v639
    %v2551 = vunpack.c.h.b16 %v639
    %v2552 = vunpack.c.l.b16 %v640
    %v2553 = vunpack.c.h.b16 %v640
    %v2554 = vunpack.c.l.b16 %v641
    %v2555 = vunpack.c.h.b16 %v641
    %v2556 = vunpack.c.l.b16 %v642
    %v2557 = vunpack.c.h.b16 %v642
    %v2558 = vunpack.c.l.b16 %v643
    %v2559 = vunpack.c.l.b16 %v644
    %v2560 = vunpack.c.h.b16 %v644
    %v2561 = vunpack.c.l.b16 %v645
    %v2562 = vunpack.c.h.b16 %v645
    %v2563 = vunpack.c.l.b16 %v646
    %v2564 = vunpack.c.h.b16 %v646
    %v2565 = vunpack.c.l.b16 %v647
    %v2566 = vunpack.c.h.b16 %v647
    %v2567 = vunpack.c.l.b16 %v648
    %v2568 = vunpack.c.h.b16 %v648
    %v2569 = vunpack.c.l.b16 %v649
    %v2570 = vunpack.c.h.b16 %v649
    %v2571 = vunpack.c.l.b16 %v650
    %v2572 = vunpack.c.l.b16 %v651
    %v2573 = vunpack.c.h.b16 %v651
    %v2574 = vunpack.c.l.b16 %v652
    %v2575 = vunpack.c.h.b16 %v652
    %v2576 = vunpack.c.l.b16 %v653
    %v2577 = vunpack.c.h.b16 %v653
    %v2578 = vunpack.c.l.b16 %v654
    %v2579 = vunpack.c.h.b16 %v654
    %v2580 = vunpack.c.l.b16 %v655
    %v2581 = vunpack.c.h.b16 %v655
    %v2582 = vunpack.c.l.b16 %v656
    %v2583 = vunpack.c.h.b16 %v656
    %v2584 = vunpack.c.l.b16 %v657
    %v2585 = vunpack.c.l.b16 %v658
    %v2586 = vunpack.c.h.b16 %v658
    %v2587 = vunpack.c.l.b16 %v659
    %v2588 = vunpack.c.h.b16 %v659
    %v2589 = vunpack.c.l.b16 %v660
    %v2590 = vunpack.c.h.b16 %v660
    %v2591 = vunpack.c.l.b16 %v661
    %v2592 = vunpack.c.h.b16 %v661
    %v2593 = vunpack.c.l.b16 %v662
    %v2594 = vunpack.c.h.b16 %v662
    %v2595 = vunpack.c.l.b16 %v663
    %v2596 = vunpack.c.h.b16 %v663
    %v2597 = vunpack.c.l.b16 %v664
    %v2598 = vunpack.c.l.b16 %v665
    %v2599 = vunpack.c.h.b16 %v665
    %v2600 = vunpack.c.l.b16 %v666
    %v2601 = vunpack.c.h.b16 %v666
    %v2602 = vunpack.c.l.b16 %v667
    %v2603 = vunpack.c.h.b16 %v667
    %v2604 = vunpack.c.l.b16 %v668
    %v2605 = vunpack.c.h.b16 %v668
    %v2606 = vunpack.c.l.b16 %v669
    %v2607 = vunpack.c.h.b16 %v669
    %v2608 = vunpack.c.l.b16 %v670
    %v2609 = vunpack.c.h.b16 %v670
    %v2610 = vunpack.c.l.b16 %v671
    %v2611 = vunpack.c.l.b16 %v672
    %v2612 = vunpack.c.h.b16 %v672
    %v2613 = vunpack.c.l.b16 %v673
    %v2614 = vunpack.c.h.b16 %v673
    %v2615 = vunpack.c.l.b16 %v674
    %v2616 = vunpack.c.h.b16 %v674
    %v2617 = vunpack.c.l.b16 %v675
    %v2618 = vunpack.c.h.b16 %v675
    %v2619 = vunpack.c.l.b16 %v676
    %v2620 = vunpack.c.h.b16 %v676
    %v2621 = vunpack.c.l.b16 %v677
    %v2622 = vunpack.c.h.b16 %v677
    %v2623 = vunpack.c.l.b16 %v678
    %v2624 = vunpack.c.l.b16 %v679
    %v2625 = vunpack.c.h.b16 %v679
    %v2626 = vunpack.c.l.b16 %v680
    %v2627 = vunpack.c.h.b16 %v680
    %v2628 = vunpack.c.l.b16 %v681
    %v2629 = vunpack.c.h.b16 %v681
    %v2630 = vunpack.c.l.b16 %v682
    %v2631 = vunpack.c.h.b16 %v682
    %v2632 = vunpack.c.l.b16 %v683
    %v2633 = vunpack.c.h.b16 %v683
    %v2634 = vunpack.c.l.b16 %v684
    %v2635 = vunpack.c.h.b16 %v684
    %v2636 = vunpack.c.l.b16 %v685
    %v2637 = vunpack.c.l.b16 %v686
    %v2638 = vunpack.c.h.b16 %v686
    %v2639 = vunpack.c.l.b16 %v687
    %v2640 = vunpack.c.h.b16 %v687
    %v2641 = vunpack.c.l.b16 %v688
    %v2642 = vunpack.c.h.b16 %v688
    %v2643 = vunpack.c.l.b16 %v689
    %v2644 = vunpack.c.h.b16 %v689
    %v2645 = vunpack.c.l.b16 %v690
    %v2646 = vunpack.c.h.b16 %v690
    %v2647 = vunpack.c.l.b16 %v691
    %v2648 = vunpack.c.h.b16 %v691
    %v2649 = vunpack.c.l.b16 %v692
    %v2650 = vunpack.c.l.b16 %v693
    %v2651 = vunpack.c.h.b16 %v693
    %v2652 = vunpack.c.l.b16 %v694
    %v2653 = vunpack.c.h.b16 %v694
    %v2654 = vunpack.c.l.b16 %v695
    %v2655 = vunpack.c.h.b16 %v695
    %v2656 = vunpack.c.l.b16 %v696
    %v2657 = vunpack.c.h.b16 %v696
    %v2658 = vunpack.c.l.b16 %v697
    %v2659 = vunpack.c.h.b16 %v697
    %v2660 = vunpack.c.l.b16 %v698
    %v2661 = vunpack.c.h.b16 %v698
    %v2662 = vunpack.c.l.b16 %v699
    %v2663 = vunpack.c.l.b16 %v700
    %v2664 = vunpack.c.h.b16 %v700
    %v2665 = vunpack.c.l.b16 %v701
    %v2666 = vunpack.c.h.b16 %v701
    %v2667 = vunpack.c.l.b16 %v702
    %v2668 = vunpack.c.h.b16 %v702
    %v2669 = vunpack.c.l.b16 %v703
    %v2670 = vunpack.c.h.b16 %v703
    %v2671 = vunpack.c.l.b16 %v704
    %v2672 = vunpack.c.h.b16 %v704
    %v2673 = vunpack.c.l.b16 %v705
    %v2674 = vunpack.c.h.b16 %v705
    %v2675 = vunpack.c.l.b16 %v706
    %v2676 = vunpack.c.l.b16 %v707
    %v2677 = vunpack.c.h.b16 %v707
    %v2678 = vunpack.c.l.b16 %v708
    %v2679 = vunpack.c.h.b16 %v708
    %v2680 = vunpack.c.l.b16 %v709
    %v2681 = vunpack.c.h.b16 %v709
    %v2682 = vunpack.c.l.b16 %v710
    %v2683 = vunpack.c.h.b16 %v710
    %v2684 = vunpack.c.l.b16 %v711
    %v2685 = vunpack.c.h.b16 %v711
    %v2686 = vunpack.c.l.b16 %v712
    %v2687 = vunpack.c.h.b16 %v712
    %v2688 = vunpack.c.l.b16 %v713
    %v2689 = vunpack.c.l.b16 %v714
    %v2690 = vunpack.c.h.b16 %v714
    %v2691 = vunpack.c.l.b16 %v715
    %v2692 = vunpack.c.h.b16 %v715
    %v2693 = vunpack.c.l.b16 %v716
    %v2694 = vunpack.c.h.b16 %v716
    %v2695 = vunpack.c.l.b16 %v717
    %v2696 = vunpack.c.h.b16 %v717
    %v2697 = vunpack.c.l.b16 %v718
    %v2698 = vunpack.c.h.b16 %v718
    %v2699 = vunpack.c.l.b16 %v719
    %v2700 = vunpack.c.h.b16 %v719
    %v2701 = vunpack.c.l.b16 %v720
    %v2702 = vunpack.c.l.b16 %v721
    %v2703 = vunpack.c.h.b16 %v721
    %v2704 = vunpack.c.l.b16 %v722
    %v2705 = vunpack.c.h.b16 %v722
    %v2706 = vunpack.c.l.b16 %v723
    %v2707 = vunpack.c.h.b16 %v723
    %v2708 = vunpack.c.l.b16 %v724
    %v2709 = vunpack.c.h.b16 %v724
    %v2710 = vunpack.c.l.b16 %v725
    %v2711 = vunpack.c.h.b16 %v725
    %v2712 = vunpack.c.l.b16 %v726
    %v2713 = vunpack.c.h.b16 %v726
    %v2714 = vunpack.c.l.b16 %v727
    %v2715 = vunpack.c.l.b16 %v728
    %v2716 = vunpack.c.h.b16 %v728
    %v2717 = vunpack.c.l.b16 %v729
    %v2718 = vunpack.c.h.b16 %v729
    %v2719 = vunpack.c.l.b16 %v730
    %v2720 = vunpack.c.h.b16 %v730
    %v2721 = vunpack.c.l.b16 %v731
    %v2722 = vunpack.c.h.b16 %v731
    %v2723 = vunpack.c.l.b16 %v732
    %v2724 = vunpack.c.h.b16 %v732
    %v2725 = vunpack.c.l.b16 %v733
    %v2726 = vunpack.c.h.b16 %v733
    %v2727 = vunpack.c.l.b16 %v734
    %v2728 = vunpack.c.l.b16 %v735
    %v2729 = vunpack.c.h.b16 %v735
    %v2730 = vunpack.c.l.b16 %v736
    %v2731 = vunpack.c.h.b16 %v736
    %v2732 = vunpack.c.l.b16 %v737
    %v2733 = vunpack.c.h.b16 %v737
    %v2734 = vunpack.c.l.b16 %v738
    %v2735 = vunpack.c.h.b16 %v738
    %v2736 = vunpack.c.l.b16 %v739
    %v2737 = vunpack.c.h.b16 %v739
    %v2738 = vunpack.c.l.b16 %v740
    %v2739 = vunpack.c.h.b16 %v740
    %v2740 = vunpack.c.l.b16 %v741
    %v2741 = vunpack.c.l.b16 %v742
    %v2742 = vunpack.c.h.b16 %v742
    %v2743 = vunpack.c.l.b16 %v743
    %v2744 = vunpack.c.h.b16 %v743
    %v2745 = vunpack.c.l.b16 %v744
    %v2746 = vunpack.c.h.b16 %v744
    %v2747 = vunpack.c.l.b16 %v745
    %v2748 = vunpack.c.h.b16 %v745
    %v2749 = vunpack.c.l.b16 %v746
    %v2750 = vunpack.c.h.b16 %v746
    %v2751 = vunpack.c.l.b16 %v747
    %v2752 = vunpack.c.h.b16 %v747
    %v2753 = vunpack.c.l.b16 %v748
    %v2754 = vunpack.c.l.b16 %v749
    %v2755 = vunpack.c.h.b16 %v749
    %v2756 = vunpack.c.l.b16 %v750
    %v2757 = vunpack.c.h.b16 %v750
    %v2758 = vunpack.c.l.b16 %v751
    %v2759 = vunpack.c.h.b16 %v751
    %v2760 = vunpack.c.l.b16 %v752
    %v2761 = vunpack.c.h.b16 %v752
    %v2762 = vunpack.c.l.b16 %v753
    %v2763 = vunpack.c.h.b16 %v753
    %v2764 = vunpack.c.l.b16 %v754
    %v2765 = vunpack.c.h.b16 %v754
    %v2766 = vunpack.c.l.b16 %v755
    %v2767 = vunpack.c.l.b16 %v756
    %v2768 = vunpack.c.h.b16 %v756
    %v2769 = vunpack.c.l.b16 %v757
    %v2770 = vunpack.c.h.b16 %v757
    %v2771 = vunpack.c.l.b16 %v758
    %v2772 = vunpack.c.h.b16 %v758
    %v2773 = vunpack.c.l.b16 %v759
    %v2774 = vunpack.c.h.b16 %v759
    %v2775 = vunpack.c.l.b16 %v760
    %v2776 = vunpack.c.h.b16 %v760
    %v2777 = vunpack.c.l.b16 %v761
    %v2778 = vunpack.c.h.b16 %v761
    %v2779 = vunpack.c.l.b16 %v762
    %v2780 = vunpack.c.l.b16 %v763
    %v2781 = vunpack.c.h.b16 %v763
    %v2782 = vunpack.c.l.b16 %v764
    %v2783 = vunpack.c.h.b16 %v764
    %v2784 = vunpack.c.l.b16 %v765
    %v2785 = vunpack.c.h.b16 %v765
    %v2786 = vunpack.c.l.b16 %v766
    %v2787 = vunpack.c.h.b16 %v766
    %v2788 = vunpack.c.l.b16 %v767
    %v2789 = vunpack.c.h.b16 %v767
    %v2790 = vunpack.c.l.b16 %v768
    %v2791 = vunpack.c.h.b16 %v768
    %v2792 = vunpack.c.l.b16 %v769
    %v2793 = vunpack.c.l.b16 %v770
    %v2794 = vunpack.c.h.b16 %v770
    %v2795 = vunpack.c.l.b16 %v771
    %v2796 = vunpack.c.h.b16 %v771
    %v2797 = vunpack.c.l.b16 %v772
    %v2798 = vunpack.c.h.b16 %v772
    %v2799 = vunpack.c.l.b16 %v773
    %v2800 = vunpack.c.h.b16 %v773
    %v2801 = vunpack.c.l.b16 %v774
    %v2802 = vunpack.c.h.b16 %v774
    %v2803 = vunpack.c.l.b16 %v775
    %v2804 = vunpack.c.h.b16 %v775
    %v2805 = vunpack.c.l.b16 %v776
    %v2806 = vpack.c.b16 %v1545, %v1532
    %v2807 = vpack.c.b16 %v1546, %v1533
    %v2808 = vpack.c.b16 %v1547, %v1534
    %v2809 = vpack.c.b16 %v1548, %v1535
    %v2810 = vpack.c.b16 %v1549, %v1536
    %v2811 = vpack.c.b16 %v1550, %v1537
    %v2812 = vpack.c.b16 %v1551, %v1538
    %v2813 = vpack.c.b16 %v1552, %v1539
    %v2814 = vpack.c.b16 %v1553, %v1540
    %v2815 = vpack.c.b16 %v1554, %v1541
    %v2816 = vpack.c.b16 %v1555, %v1542
    %v2817 = vpack.c.b16 %v1556, %v1543
    %v2818 = vpack.c.b16 %v1557, %v1544
    %v2819 = vpack.c.b16 %v1571, %v1558
    %v2820 = vpack.c.b16 %v1572, %v1559
    %v2821 = vpack.c.b16 %v1573, %v1560
    %v2822 = vpack.c.b16 %v1574, %v1561
    %v2823 = vpack.c.b16 %v1575, %v1562
    %v2824 = vpack.c.b16 %v1576, %v1563
    %v2825 = vpack.c.b16 %v1577, %v1564
    %v2826 = vpack.c.b16 %v1578, %v1565
    %v2827 = vpack.c.b16 %v1579, %v1566
    %v2828 = vpack.c.b16 %v1580, %v1567
    %v2829 = vpack.c.b16 %v1581, %v1568
    %v2830 = vpack.c.b16 %v1582, %v1569
    %v2831 = vpack.c.b16 %v1583, %v1570
    %v2832 = vpack.c.b16 %v1597, %v1584
    %v2833 = vpack.c.b16 %v1598, %v1585
    %v2834 = vpack.c.b16 %v1599, %v1586
    %v2835 = vpack.c.b16 %v1600, %v1587
    %v2836 = vpack.c.b16 %v1601, %v1588
    %v2837 = vpack.c.b16 %v1602, %v1589
    %v2838 = vpack.c.b16 %v1603, %v1590
    %v2839 = vpack.c.b16 %v1604, %v1591
    %v2840 = vpack.c.b16 %v1605, %v1592
    %v2841 = vpack.c.b16 %v1606, %v1593
    %v2842 = vpack.c.b16 %v1607, %v1594
    %v2843 = vpack.c.b16 %v1608, %v1595
    %v2844 = vpack.c.b16 %v1609, %v1596
    %v2845 = vpack.c.b16 %v1623, %v1610
    %v2846 = vpack.c.b16 %v1624, %v1611
    %v2847 = vpack.c.b16 %v1625, %v1612
    %v2848 = vpack.c.b16 %v1626, %v1613
    %v2849 = vpack.c.b16 %v1627, %v1614
    %v2850 = vpack.c.b16 %v1628, %v1615
    %v2851 = vpack.c.b16 %v1629, %v1616
    %v2852 = vpack.c.b16 %v1630, %v1617
    %v2853 = vpack.c.b16 %v1631, %v1618
    %v2854 = vpack.c.b16 %v1632, %v1619
    %v2855 = vpack.c.b16 %v1633, %v1620
    %v2856 = vpack.c.b16 %v1634, %v1621
    %v2857 = vpack.c.b16 %v1635, %v1622
    %v2858 = vpack.c.b16 %v1649, %v1636
    %v2859 = vpack.c.b16 %v1650, %v1637
    %v2860 = vpack.c.b16 %v1651, %v1638
    %v2861 = vpack.c.b16 %v1652, %v1639
    %v2862 = vpack.c.b16 %v1653, %v1640
    %v2863 = vpack.c.b16 %v1654, %v1641
    %v2864 = vpack.c.b16 %v1655, %v1642
    %v2865 = vpack.c.b16 %v1656, %v1643
    %v2866 = vpack.c.b16 %v1657, %v1644
    %v2867 = vpack.c.b16 %v1658, %v1645
    %v2868 = vpack.c.b16 %v1659, %v1646
    %v2869 = vpack.c.b16 %v1660, %v1647
    %v2870 = vpack.c.b16 %v1661, %v1648
    %v2871 = vpack.c.b16 %v1675, %v1662
    %v2872 = vpack.c.b16 %v1676, %v1663
    %v2873 = vpack.c.b16 %v1677, %v1664
    %v2874 = vpack.c.b16 %v1678, %v1665
    %v2875 = vpack.c.b16 %v1679, %v1666
    %v2876 = vpack.c.b16 %v1680, %v1667
    %v2877 = vpack.c.b16 %v1681, %v1668
    %v2878 = vpack.c.b16 %v1682, %v1669
    %v2879 = vpack.c.b16 %v1683, %v1670
    %v2880 = vpack.c.b16 %v1684, %v1671
    %v2881 = vpack.c.b16 %v1685, %v1672
    %v2882 = vpack.c.b16 %v1686, %v1673
    %v2883 = vpack.c.b16 %v1687, %v1674
    %v2884 = vpack.c.b16 %v1701, %v1688
    %v2885 = vpack.c.b16 %v1702, %v1689
    %v2886 = vpack.c.b16 %v1703, %v1690
    %v2887 = vpack.c.b16 %v1704, %v1691
    %v2888 = vpack.c.b16 %v1705, %v1692
    %v2889 = vpack.c.b16 %v1706, %v1693
    %v2890 = vpack.c.b16 %v1707, %v1694
    %v2891 = vpack.c.b16 %v1708, %v1695
    %v2892 = vpack.c.b16 %v1709, %v1696
    %v2893 = vpack.c.b16 %v1710, %v1697
    %v2894 = vpack.c.b16 %v1711, %v1698
    %v2895 = vpack.c.b16 %v1712, %v1699
    %v2896 = vpack.c.b16 %v1713, %v1700
    %v2897 = vpack.c.b16 %v1727, %v1714
    %v2898 = vpack.c.b16 %v1728, %v1715
    %v2899 = vpack.c.b16 %v1729, %v1716
    %v2900 = vpack.c.b16 %v1730, %v1717
    %v2901 = vpack.c.b16 %v1731, %v1718
    %v2902 = vpack.c.b16 %v1732, %v1719
    %v2903 = vpack.c.b16 %v1733, %v1720
    %v2904 = vpack.c.b16 %v1734, %v1721
    %v2905 = vpack.c.b16 %v1735, %v1722
    %v2906 = vpack.c.b16 %v1736, %v1723
    %v2907 = vpack.c.b16 %v1737, %v1724
    %v2908 = vpack.c.b16 %v1738, %v1725
    %v2909 = vpack.c.b16 %v1739, %v1726
    %v2910 = vpack.c.b16 %v1753, %v1740
    %v2911 = vpack.c.b16 %v1754, %v1741
    %v2912 = vpack.c.b16 %v1755, %v1742
    %v2913 = vpack.c.b16 %v1756, %v1743
    %v2914 = vpack.c.b16 %v1757, %v1744
    %v2915 = vpack.c.b16 %v1758, %v1745
    %v2916 = vpack.c.b16 %v1759, %v1746
    %v2917 = vpack.c.b16 %v1760, %v1747
    %v2918 = vpack.c.b16 %v1761, %v1748
    %v2919 = vpack.c.b16 %v1762, %v1749
    %v2920 = vpack.c.b16 %v1763, %v1750
    %v2921 = vpack.c.b16 %v1764, %v1751
    %v2922 = vpack.c.b16 %v1765, %v1752
    %v2923 = vpack.c.b16 %v1779, %v1766
    %v2924 = vpack.c.b16 %v1780, %v1767
    %v2925 = vpack.c.b16 %v1781, %v1768
    %v2926 = vpack.c.b16 %v1782, %v1769
    %v2927 = vpack.c.b16 %v1783, %v1770
    %v2928 = vpack.c.b16 %v1784, %v1771
    %v2929 = vpack.c.b16 %v1785, %v1772
    %v2930 = vpack.c.b16 %v1786, %v1773
    %v2931 = vpack.c.b16 %v1787, %v1774
    %v2932 = vpack.c.b16 %v1788, %v1775
    %v2933 = vpack.c.b16 %v1789, %v1776
    %v2934 = vpack.c.b16 %v1790, %v1777
    %v2935 = vpack.c.b16 %v1791, %v1778
    %v2936 = vpack.c.b16 %v1805, %v1792
    %v2937 = vpack.c.b16 %v1806, %v1793
    %v2938 = vpack.c.b16 %v1807, %v1794
    %v2939 = vpack.c.b16 %v1808, %v1795
    %v2940 = vpack.c.b16 %v1809, %v1796
    %v2941 = vpack.c.b16 %v1810, %v1797
    %v2942 = vpack.c.b16 %v1811, %v1798
    %v2943 = vpack.c.b16 %v1812, %v1799
    %v2944 = vpack.c.b16 %v1813, %v1800
    %v2945 = vpack.c.b16 %v1814, %v1801
    %v2946 = vpack.c.b16 %v1815, %v1802
    %v2947 = vpack.c.b16 %v1816, %v1803
    %v2948 = vpack.c.b16 %v1817, %v1804
    %v2949 = vpack.c.b16 %v1831, %v1818
    %v2950 = vpack.c.b16 %v1832, %v1819
    %v2951 = vpack.c.b16 %v1833, %v1820
    %v2952 = vpack.c.b16 %v1834, %v1821
    %v2953 = vpack.c.b16 %v1835, %v1822
    %v2954 = vpack.c.b16 %v1836, %v1823
    %v2955 = vpack.c.b16 %v1837, %v1824
    %v2956 = vpack.c.b16 %v1838, %v1825
    %v2957 = vpack.c.b16 %v1839, %v1826
    %v2958 = vpack.c.b16 %v1840, %v1827
    %v2959 = vpack.c.b16 %v1841, %v1828
    %v2960 = vpack.c.b16 %v1842, %v1829
    %v2961 = vpack.c.b16 %v1843, %v1830
    %v2962 = vpack.c.b16 %v1857, %v1844
    %v2963 = vpack.c.b16 %v1858, %v1845
    %v2964 = vpack.c.b16 %v1859, %v1846
    %v2965 = vpack.c.b16 %v1860, %v1847
    %v2966 = vpack.c.b16 %v1861, %v1848
    %v2967 = vpack.c.b16 %v1862, %v1849
    %v2968 = vpack.c.b16 %v1863, %v1850
    %v2969 = vpack.c.b16 %v1864, %v1851
    %v2970 = vpack.c.b16 %v1865, %v1852
    %v2971 = vpack.c.b16 %v1866, %v1853
    %v2972 = vpack.c.b16 %v1867, %v1854
    %v2973 = vpack.c.b16 %v1868, %v1855
    %v2974 = vpack.c.b16 %v1869, %v1856
    %v2975 = vpack.c.b16 %v1883, %v1870
    %v2976 = vpack.c.b16 %v1884, %v1871
    %v2977 = vpack.c.b16 %v1885, %v1872
    %v2978 = vpack.c.b16 %v1886, %v1873
    %v2979 = vpack.c.b16 %v1887, %v1874
    %v2980 = vpack.c.b16 %v1888, %v1875
    %v2981 = vpack.c.b16 %v1889, %v1876
    %v2982 = vpack.c.b16 %v1890, %v1877
    %v2983 = vpack.c.b16 %v1891, %v1878
    %v2984 = vpack.c.b16 %v1892, %v1879
    %v2985 = vpack.c.b16 %v1893, %v1880
    %v2986 = vpack.c.b16 %v1894, %v1881
    %v2987 = vpack.c.b16 %v1895, %v1882
    %v2988 = vpack.c.b16 %v1909, %v1896
    %v2989 = vpack.c.b16 %v1910, %v1897
    %v2990 = vpack.c.b16 %v1911, %v1898
    %v2991 = vpack.c.b16 %v1912, %v1899
    %v2992 = vpack.c.b16 %v1913, %v1900
    %v2993 = vpack.c.b16 %v1914, %v1901
    %v2994 = vpack.c.b16 %v1915, %v1902
    %v2995 = vpack.c.b16 %v1916, %v1903
    %v2996 = vpack.c.b16 %v1917, %v1904
    %v2997 = vpack.c.b16 %v1918, %v1905
    %v2998 = vpack.c.b16 %v1919, %v1906
    %v2999 = vpack.c.b16 %v1920, %v1907
    %v3000 = vpack.c.b16 %v1921, %v1908
    %v3001 = vpack.c.b16 %v1935, %v1922
    %v3002 = vpack.c.b16 %v1936, %v1923
    %v3003 = vpack.c.b16 %v1937, %v1924
    %v3004 = vpack.c.b16 %v1938, %v1925
    %v3005 = vpack.c.b16 %v1939, %v1926
    %v3006 = vpack.c.b16 %v1940, %v1927
    %v3007 = vpack.c.b16 %v1941, %v1928
    %v3008 = vpack.c.b16 %v1942, %v1929
    %v3009 = vpack.c.b16 %v1943, %v1930
    %v3010 = vpack.c.b16 %v1944, %v1931
    %v3011 = vpack.c.b16 %v1945, %v1932
    %v3012 = vpack.c.b16 %v1946, %v1933
    %v3013 = vpack.c.b16 %v1947, %v1934
    %v3014 = vpack.c.b16 %v1961, %v1948
    %v3015 = vpack.c.b16 %v1962, %v1949
    %v3016 = vpack.c.b16 %v1963, %v1950
    %v3017 = vpack.c.b16 %v1964, %v1951
    %v3018 = vpack.c.b16 %v1965, %v1952
    %v3019 = vpack.c.b16 %v1966, %v1953
    %v3020 = vpack.c.b16 %v1967, %v1954
    %v3021 = vpack.c.b16 %v1968, %v1955
    %v3022 = vpack.c.b16 %v1969, %v1956
    %v3023 = vpack.c.b16 %v1970, %v1957
    %v3024 = vpack.c.b16 %v1971, %v1958
    %v3025 = vpack.c.b16 %v1972, %v1959
    %v3026 = vpack.c.b16 %v1973, %v1960
    %v3027 = vpack.c.b16 %v1987, %v1974
    %v3028 = vpack.c.b16 %v1988, %v1975
    %v3029 = vpack.c.b16 %v1989, %v1976
    %v3030 = vpack.c.b16 %v1990, %v1977
    %v3031 = vpack.c.b16 %v1991, %v1978
    %v3032 = vpack.c.b16 %v1992, %v1979
    %v3033 = vpack.c.b16 %v1993, %v1980
    %v3034 = vpack.c.b16 %v1994, %v1981
    %v3035 = vpack.c.b16 %v1995, %v1982
    %v3036 = vpack.c.b16 %v1996, %v1983
    %v3037 = vpack.c.b16 %v1997, %v1984
    %v3038 = vpack.c.b16 %v1998, %v1985
    %v3039 = vpack.c.b16 %v1999, %v1986
    %v3040 = vpack.c.b16 %v2013, %v2000
    %v3041 = vpack.c.b16 %v2014, %v2001
    %v3042 = vpack.c.b16 %v2015, %v2002
    %v3043 = vpack.c.b16 %v2016, %v2003
    %v3044 = vpack.c.b16 %v2017, %v2004
    %v3045 = vpack.c.b16 %v2018, %v2005
    %v3046 = vpack.c.b16 %v2019, %v2006
    %v3047 = vpack.c.b16 %v2020, %v2007
    %v3048 = vpack.c.b16 %v2021, %v2008
    %v3049 = vpack.c.b16 %v2022, %v2009
    %v3050 = vpack.c.b16 %v2023, %v2010
    %v3051 = vpack.c.b16 %v2024, %v2011
    %v3052 = vpack.c.b16 %v2025, %v2012
    %v3053 = vpack.c.b16 %v2039, %v2026
    %v3054 = vpack.c.b16 %v2040, %v2027
    %v3055 = vpack.c.b16 %v2041, %v2028
    %v3056 = vpack.c.b16 %v2042, %v2029
    %v3057 = vpack.c.b16 %v2043, %v2030
    %v3058 = vpack.c.b16 %v2044, %v2031
    %v3059 = vpack.c.b16 %v2045, %v2032
    %v3060 = vpack.c.b16 %v2046, %v2033
    %v3061 = vpack.c.b16 %v2047, %v2034
    %v3062 = vpack.c.b16 %v2048, %v2035
    %v3063 = vpack.c.b16 %v2049, %v2036
    %v3064 = vpack.c.b16 %v2050, %v2037
    %v3065 = vpack.c.b16 %v2051, %v2038
    %v3066 = vpack.c.b16 %v2065, %v2052
    %v3067 = vpack.c.b16 %v2066, %v2053
    %v3068 = vpack.c.b16 %v2067, %v2054
    %v3069 = vpack.c.b16 %v2068, %v2055
    %v3070 = vpack.c.b16 %v2069, %v2056
    %v3071 = vpack.c.b16 %v2070, %v2057
    %v3072 = vpack.c.b16 %v2071, %v2058
    %v3073 = vpack.c.b16 %v2072, %v2059
    %v3074 = vpack.c.b16 %v2073, %v2060
    %v3075 = vpack.c.b16 %v2074, %v2061
    %v3076 = vpack.c.b16 %v2075, %v2062
    %v3077 = vpack.c.b16 %v2076, %v2063
    %v3078 = vpack.c.b16 %v2077, %v2064
    %v3079 = vpack.c.b16 %v2091, %v2078
    %v3080 = vpack.c.b16 %v2092, %v2079
    %v3081 = vpack.c.b16 %v2093, %v2080
    %v3082 = vpack.c.b16 %v2094, %v2081
    %v3083 = vpack.c.b16 %v2095, %v2082
    %v3084 = vpack.c.b16 %v2096, %v2083
    %v3085 = vpack.c.b16 %v2097, %v2084
    %v3086 = vpack.c.b16 %v2098, %v2085
    %v3087 = vpack.c.b16 %v2099, %v2086
    %v3088 = vpack.c.b16 %v2100, %v2087
    %v3089 = vpack.c.b16 %v2101, %v2088
    %v3090 = vpack.c.b16 %v2102, %v2089
    %v3091 = vpack.c.b16 %v2103, %v2090
    %v3092 = vpack.c.b16 %v2117, %v2104
    %v3093 = vpack.c.b16 %v2118, %v2105
    %v3094 = vpack.c.b16 %v2119, %v2106
    %v3095 = vpack.c.b16 %v2120, %v2107
    %v3096 = vpack.c.b16 %v2121, %v2108
    %v3097 = vpack.c.b16 %v2122, %v2109
    %v3098 = vpack.c.b16 %v2123, %v2110
    %v3099 = vpack.c.b16 %v2124, %v2111
    %v3100 = vpack.c.b16 %v2125, %v2112
    %v3101 = vpack.c.b16 %v2126, %v2113
    %v3102 = vpack.c.b16 %v2127, %v2114
    %v3103 = vpack.c.b16 %v2128, %v2115
    %v3104 = vpack.c.b16 %v2129, %v2116
    %v3105 = vpack.c.b16 %v2143, %v2130
    %v3106 = vpack.c.b16 %v2144, %v2131
    %v3107 = vpack.c.b16 %v2145, %v2132
    %v3108 = vpack.c.b16 %v2146, %v2133
    %v3109 = vpack.c.b16 %v2147, %v2134
    %v3110 = vpack.c.b16 %v2148, %v2135
    %v3111 = vpack.c.b16 %v2149, %v2136
    %v3112 = vpack.c.b16 %v2150, %v2137
    %v3113 = vpack.c.b16 %v2151, %v2138
    %v3114 = vpack.c.b16 %v2152, %v2139
    %v3115 = vpack.c.b16 %v2153, %v2140
    %v3116 = vpack.c.b16 %v2154, %v2141
    %v3117 = vpack.c.b16 %v2155, %v2142
    %v3118 = vpack.c.b16 %v2169, %v2156
    %v3119 = vpack.c.b16 %v2170, %v2157
    %v3120 = vpack.c.b16 %v2171, %v2158
    %v3121 = vpack.c.b16 %v2172, %v2159
    %v3122 = vpack.c.b16 %v2173, %v2160
    %v3123 = vpack.c.b16 %v2174, %v2161
    %v3124 = vpack.c.b16 %v2175, %v2162
    %v3125 = vpack.c.b16 %v2176, %v2163
    %v3126 = vpack.c.b16 %v2177, %v2164
    %v3127 = vpack.c.b16 %v2178, %v2165
    %v3128 = vpack.c.b16 %v2179, %v2166
    %v3129 = vpack.c.b16 %v2180, %v2167
    %v3130 = vpack.c.b16 %v2181, %v2168
    %v3131 = vpack.c.b16 %v2195, %v2182
    %v3132 = vpack.c.b16 %v2196, %v2183
    %v3133 = vpack.c.b16 %v2197, %v2184
    %v3134 = vpack.c.b16 %v2198, %v2185
    %v3135 = vpack.c.b16 %v2199, %v2186
    %v3136 = vpack.c.b16 %v2200, %v2187
    %v3137 = vpack.c.b16 %v2201, %v2188
    %v3138 = vpack.c.b16 %v2202, %v2189
    %v3139 = vpack.c.b16 %v2203, %v2190
    %v3140 = vpack.c.b16 %v2204, %v2191
    %v3141 = vpack.c.b16 %v2205, %v2192
    %v3142 = vpack.c.b16 %v2206, %v2193
    %v3143 = vpack.c.b16 %v2207, %v2194
    %v3144 = vpack.c.b16 %v2221, %v2208
    %v3145 = vpack.c.b16 %v2222, %v2209
    %v3146 = vpack.c.b16 %v2223, %v2210
    %v3147 = vpack.c.b16 %v2224, %v2211
    %v3148 = vpack.c.b16 %v2225, %v2212
    %v3149 = vpack.c.b16 %v2226, %v2213
    %v3150 = vpack.c.b16 %v2227, %v2214
    %v3151 = vpack.c.b16 %v2228, %v2215
    %v3152 = vpack.c.b16 %v2229, %v2216
    %v3153 = vpack.c.b16 %v2230, %v2217
    %v3154 = vpack.c.b16 %v2231, %v2218
    %v3155 = vpack.c.b16 %v2232, %v2219
    %v3156 = vpack.c.b16 %v2233, %v2220
    %v3157 = vpack.c.b16 %v2247, %v2234
    %v3158 = vpack.c.b16 %v2248, %v2235
    %v3159 = vpack.c.b16 %v2249, %v2236
    %v3160 = vpack.c.b16 %v2250, %v2237
    %v3161 = vpack.c.b16 %v2251, %v2238
    %v3162 = vpack.c.b16 %v2252, %v2239
    %v3163 = vpack.c.b16 %v2253, %v2240
    %v3164 = vpack.c.b16 %v2254, %v2241
    %v3165 = vpack.c.b16 %v2255, %v2242
    %v3166 = vpack.c.b16 %v2256, %v2243
    %v3167 = vpack.c.b16 %v2257, %v2244
    %v3168 = vpack.c.b16 %v2258, %v2245
    %v3169 = vpack.c.b16 %v2259, %v2246
    %v3170 = vpack.c.b16 %v2273, %v2260
    %v3171 = vpack.c.b16 %v2274, %v2261
    %v3172 = vpack.c.b16 %v2275, %v2262
    %v3173 = vpack.c.b16 %v2276, %v2263
    %v3174 = vpack.c.b16 %v2277, %v2264
    %v3175 = vpack.c.b16 %v2278, %v2265
    %v3176 = vpack.c.b16 %v2279, %v2266
    %v3177 = vpack.c.b16 %v2280, %v2267
    %v3178 = vpack.c.b16 %v2281, %v2268
    %v3179 = vpack.c.b16 %v2282, %v2269
    %v3180 = vpack.c.b16 %v2283, %v2270
    %v3181 = vpack.c.b16 %v2284, %v2271
    %v3182 = vpack.c.b16 %v2285, %v2272
    %v3183 = vpack.c.b16 %v2299, %v2286
    %v3184 = vpack.c.b16 %v2300, %v2287
    %v3185 = vpack.c.b16 %v2301, %v2288
    %v3186 = vpack.c.b16 %v2302, %v2289
    %v3187 = vpack.c.b16 %v2303, %v2290
    %v3188 = vpack.c.b16 %v2304, %v2291
    %v3189 = vpack.c.b16 %v2305, %v2292
    %v3190 = vpack.c.b16 %v2306, %v2293
    %v3191 = vpack.c.b16 %v2307, %v2294
    %v3192 = vpack.c.b16 %v2308, %v2295
    %v3193 = vpack.c.b16 %v2309, %v2296
    %v3194 = vpack.c.b16 %v2310, %v2297
    %v3195 = vpack.c.b16 %v2311, %v2298
    %v3196 = vpack.c.b16 %v2325, %v2312
    %v3197 = vpack.c.b16 %v2326, %v2313
    %v3198 = vpack.c.b16 %v2327, %v2314
    %v3199 = vpack.c.b16 %v2328, %v2315
    %v3200 = vpack.c.b16 %v2329, %v2316
    %v3201 = vpack.c.b16 %v2330, %v2317
    %v3202 = vpack.c.b16 %v2331, %v2318
    %v3203 = vpack.c.b16 %v2332, %v2319
    %v3204 = vpack.c.b16 %v2333, %v2320
    %v3205 = vpack.c.b16 %v2334, %v2321
    %v3206 = vpack.c.b16 %v2335, %v2322
    %v3207 = vpack.c.b16 %v2336, %v2323
    %v3208 = vpack.c.b16 %v2337, %v2324
    %v3209 = vpack.c.b16 %v2351, %v2338
    %v3210 = vpack.c.b16 %v2352, %v2339
    %v3211 = vpack.c.b16 %v2353, %v2340
    %v3212 = vpack.c.b16 %v2354, %v2341
    %v3213 = vpack.c.b16 %v2355, %v2342
    %v3214 = vpack.c.b16 %v2356, %v2343
    %v3215 = vpack.c.b16 %v2357, %v2344
    %v3216 = vpack.c.b16 %v2358, %v2345
    %v3217 = vpack.c.b16 %v2359, %v2346
    %v3218 = vpack.c.b16 %v2360, %v2347
    %v3219 = vpack.c.b16 %v2361, %v2348
    %v3220 = vpack.c.b16 %v2362, %v2349
    %v3221 = vpack.c.b16 %v2363, %v2350
    %v3222 = vpack.c.b16 %v2377, %v2364
    %v3223 = vpack.c.b16 %v2378, %v2365
    %v3224 = vpack.c.b16 %v2379, %v2366
    %v3225 = vpack.c.b16 %v2380, %v2367
    %v3226 = vpack.c.b16 %v2381, %v2368
    %v3227 = vpack.c.b16 %v2382, %v2369
    %v3228 = vpack.c.b16 %v2383, %v2370
    %v3229 = vpack.c.b16 %v2384, %v2371
    %v3230 = vpack.c.b16 %v2385, %v2372
    %v3231 = vpack.c.b16 %v2386, %v2373
    %v3232 = vpack.c.b16 %v2387, %v2374
    %v3233 = vpack.c.b16 %v2388, %v2375
    %v3234 = vpack.c.b16 %v2389, %v2376
    %v3235 = vpack.c.b16 %v2403, %v2390
    %v3236 = vpack.c.b16 %v2404, %v2391
    %v3237 = vpack.c.b16 %v2405, %v2392
    %v3238 = vpack.c.b16 %v2406, %v2393
    %v3239 = vpack.c.b16 %v2407, %v2394
    %v3240 = vpack.c.b16 %v2408, %v2395
    %v3241 = vpack.c.b16 %v2409, %v2396
    %v3242 = vpack.c.b16 %v2410, %v2397
    %v3243 = vpack.c.b16 %v2411, %v2398
    %v3244 = vpack.c.b16 %v2412, %v2399
    %v3245 = vpack.c.b16 %v2413, %v2400
    %v3246 = vpack.c.b16 %v2414, %v2401
    %v3247 = vpack.c.b16 %v2415, %v2402
    %v3248 = vpack.c.b16 %v2429, %v2416
    %v3249 = vpack.c.b16 %v2430, %v2417
    %v3250 = vpack.c.b16 %v2431, %v2418
    %v3251 = vpack.c.b16 %v2432, %v2419
    %v3252 = vpack.c.b16 %v2433, %v2420
    %v3253 = vpack.c.b16 %v2434, %v2421
    %v3254 = vpack.c.b16 %v2435, %v2422
    %v3255 = vpack.c.b16 %v2436, %v2423
    %v3256 = vpack.c.b16 %v2437, %v2424
    %v3257 = vpack.c.b16 %v2438, %v2425
    %v3258 = vpack.c.b16 %v2439, %v2426
    %v3259 = vpack.c.b16 %v2440, %v2427
    %v3260 = vpack.c.b16 %v2441, %v2428
    %v3261 = vpack.c.b16 %v2455, %v2442
    %v3262 = vpack.c.b16 %v2456, %v2443
    %v3263 = vpack.c.b16 %v2457, %v2444
    %v3264 = vpack.c.b16 %v2458, %v2445
    %v3265 = vpack.c.b16 %v2459, %v2446
    %v3266 = vpack.c.b16 %v2460, %v2447
    %v3267 = vpack.c.b16 %v2461, %v2448
    %v3268 = vpack.c.b16 %v2462, %v2449
    %v3269 = vpack.c.b16 %v2463, %v2450
    %v3270 = vpack.c.b16 %v2464, %v2451
    %v3271 = vpack.c.b16 %v2465, %v2452
    %v3272 = vpack.c.b16 %v2466, %v2453
    %v3273 = vpack.c.b16 %v2467, %v2454
    %v3274 = vpack.c.b16 %v2481, %v2468
    %v3275 = vpack.c.b16 %v2482, %v2469
    %v3276 = vpack.c.b16 %v2483, %v2470
    %v3277 = vpack.c.b16 %v2484, %v2471
    %v3278 = vpack.c.b16 %v2485, %v2472
    %v3279 = vpack.c.b16 %v2486, %v2473
    %v3280 = vpack.c.b16 %v2487, %v2474
    %v3281 = vpack.c.b16 %v2488, %v2475
    %v3282 = vpack.c.b16 %v2489, %v2476
    %v3283 = vpack.c.b16 %v2490, %v2477
    %v3284 = vpack.c.b16 %v2491, %v2478
    %v3285 = vpack.c.b16 %v2492, %v2479
    %v3286 = vpack.c.b16 %v2493, %v2480
    %v3287 = vpack.c.b16 %v2507, %v2494
    %v3288 = vpack.c.b16 %v2508, %v2495
    %v3289 = vpack.c.b16 %v2509, %v2496
    %v3290 = vpack.c.b16 %v2510, %v2497
    %v3291 = vpack.c.b16 %v2511, %v2498
    %v3292 = vpack.c.b16 %v2512, %v2499
    %v3293 = vpack.c.b16 %v2513, %v2500
    %v3294 = vpack.c.b16 %v2514, %v2501
    %v3295 = vpack.c.b16 %v2515, %v2502
    %v3296 = vpack.c.b16 %v2516, %v2503
    %v3297 = vpack.c.b16 %v2517, %v2504
    %v3298 = vpack.c.b16 %v2518, %v2505
    %v3299 = vpack.c.b16 %v2519, %v2506
    %v3300 = vpack.c.b16 %v2533, %v2520
    %v3301 = vpack.c.b16 %v2534, %v2521
    %v3302 = vpack.c.b16 %v2535, %v2522
    %v3303 = vpack.c.b16 %v2536, %v2523
    %v3304 = vpack.c.b16 %v2537, %v2524
    %v3305 = vpack.c.b16 %v2538, %v2525
    %v3306 = vpack.c.b16 %v2539, %v2526
    %v3307 = vpack.c.b16 %v2540, %v2527
    %v3308 = vpack.c.b16 %v2541, %v2528
    %v3309 = vpack.c.b16 %v2542, %v2529
    %v3310 = vpack.c.b16 %v2543, %v2530
    %v3311 = vpack.c.b16 %v2544, %v2531
    %v3312 = vpack.c.b16 %v2545, %v2532
    %v3313 = vpack.c.b16 %v2559, %v2546
    %v3314 = vpack.c.b16 %v2560, %v2547
    %v3315 = vpack.c.b16 %v2561, %v2548
    %v3316 = vpack.c.b16 %v2562, %v2549
    %v3317 = vpack.c.b16 %v2563, %v2550
    %v3318 = vpack.c.b16 %v2564, %v2551
    %v3319 = vpack.c.b16 %v2565, %v2552
    %v3320 = vpack.c.b16 %v2566, %v2553
    %v3321 = vpack.c.b16 %v2567, %v2554
    %v3322 = vpack.c.b16 %v2568, %v2555
    %v3323 = vpack.c.b16 %v2569, %v2556
    %v3324 = vpack.c.b16 %v2570, %v2557
    %v3325 = vpack.c.b16 %v2571, %v2558
    %v3326 = vpack.c.b16 %v2585, %v2572
    %v3327 = vpack.c.b16 %v2586, %v2573
    %v3328 = vpack.c.b16 %v2587, %v2574
    %v3329 = vpack.c.b16 %v2588, %v2575
    %v3330 = vpack.c.b16 %v2589, %v2576
    %v3331 = vpack.c.b16 %v2590, %v2577
    %v3332 = vpack.c.b16 %v2591, %v2578
    %v3333 = vpack.c.b16 %v2592, %v2579
    %v3334 = vpack.c.b16 %v2593, %v2580
    %v3335 = vpack.c.b16 %v2594, %v2581
    %v3336 = vpack.c.b16 %v2595, %v2582
    %v3337 = vpack.c.b16 %v2596, %v2583
    %v3338 = vpack.c.b16 %v2597, %v2584
    %v3339 = vpack.c.b16 %v2611, %v2598
    %v3340 = vpack.c.b16 %v2612, %v2599
    %v3341 = vpack.c.b16 %v2613, %v2600
    %v3342 = vpack.c.b16 %v2614, %v2601
    %v3343 = vpack.c.b16 %v2615, %v2602
    %v3344 = vpack.c.b16 %v2616, %v2603
    %v3345 = vpack.c.b16 %v2617, %v2604
    %v3346 = vpack.c.b16 %v2618, %v2605
    %v3347 = vpack.c.b16 %v2619, %v2606
    %v3348 = vpack.c.b16 %v2620, %v2607
    %v3349 = vpack.c.b16 %v2621, %v2608
    %v3350 = vpack.c.b16 %v2622, %v2609
    %v3351 = vpack.c.b16 %v2623, %v2610
    %v3352 = vpack.c.b16 %v2637, %v2624
    %v3353 = vpack.c.b16 %v2638, %v2625
    %v3354 = vpack.c.b16 %v2639, %v2626
    %v3355 = vpack.c.b16 %v2640, %v2627
    %v3356 = vpack.c.b16 %v2641, %v2628
    %v3357 = vpack.c.b16 %v2642, %v2629
    %v3358 = vpack.c.b16 %v2643, %v2630
    %v3359 = vpack.c.b16 %v2644, %v2631
    %v3360 = vpack.c.b16 %v2645, %v2632
    %v3361 = vpack.c.b16 %v2646, %v2633
    %v3362 = vpack.c.b16 %v2647, %v2634
    %v3363 = vpack.c.b16 %v2648, %v2635
    %v3364 = vpack.c.b16 %v2649, %v2636
    %v3365 = vpack.c.b16 %v2663, %v2650
    %v3366 = vpack.c.b16 %v2664, %v2651
    %v3367 = vpack.c.b16 %v2665, %v2652
    %v3368 = vpack.c.b16 %v2666, %v2653
    %v3369 = vpack.c.b16 %v2667, %v2654
    %v3370 = vpack.c.b16 %v2668, %v2655
    %v3371 = vpack.c.b16 %v2669, %v2656
    %v3372 = vpack.c.b16 %v2670, %v2657
    %v3373 = vpack.c.b16 %v2671, %v2658
    %v3374 = vpack.c.b16 %v2672, %v2659
    %v3375 = vpack.c.b16 %v2673, %v2660
    %v3376 = vpack.c.b16 %v2674, %v2661
    %v3377 = vpack.c.b16 %v2675, %v2662
    %v3378 = vpack.c.b16 %v2689, %v2676
    %v3379 = vpack.c.b16 %v2690, %v2677
    %v3380 = vpack.c.b16 %v2691, %v2678
    %v3381 = vpack.c.b16 %v2692, %v2679
    %v3382 = vpack.c.b16 %v2693, %v2680
    %v3383 = vpack.c.b16 %v2694, %v2681
    %v3384 = vpack.c.b16 %v2695, %v2682
    %v3385 = vpack.c.b16 %v2696, %v2683
    %v3386 = vpack.c.b16 %v2697, %v2684
    %v3387 = vpack.c.b16 %v2698, %v2685
    %v3388 = vpack.c.b16 %v2699, %v2686
    %v3389 = vpack.c.b16 %v2700, %v2687
    %v3390 = vpack.c.b16 %v2701, %v2688
    %v3391 = vpack.c.b16 %v2715, %v2702
    %v3392 = vpack.c.b16 %v2716, %v2703
    %v3393 = vpack.c.b16 %v2717, %v2704
    %v3394 = vpack.c.b16 %v2718, %v2705
    %v3395 = vpack.c.b16 %v2719, %v2706
    %v3396 = vpack.c.b16 %v2720, %v2707
    %v3397 = vpack.c.b16 %v2721, %v2708
    %v3398 = vpack.c.b16 %v2722, %v2709
    %v3399 = vpack.c.b16 %v2723, %v2710
    %v3400 = vpack.c.b16 %v2724, %v2711
    %v3401 = vpack.c.b16 %v2725, %v2712
    %v3402 = vpack.c.b16 %v2726, %v2713
    %v3403 = vpack.c.b16 %v2727, %v2714
    %v3404 = vpack.c.b16 %v2741, %v2728
    %v3405 = vpack.c.b16 %v2742, %v2729
    %v3406 = vpack.c.b16 %v2743, %v2730
    %v3407 = vpack.c.b16 %v2744, %v2731
    %v3408 = vpack.c.b16 %v2745, %v2732
    %v3409 = vpack.c.b16 %v2746, %v2733
    %v3410 = vpack.c.b16 %v2747, %v2734
    %v3411 = vpack.c.b16 %v2748, %v2735
    %v3412 = vpack.c.b16 %v2749, %v2736
    %v3413 = vpack.c.b16 %v2750, %v2737
    %v3414 = vpack.c.b16 %v2751, %v2738
    %v3415 = vpack.c.b16 %v2752, %v2739
    %v3416 = vpack.c.b16 %v2753, %v2740
    %v3417 = vpack.c.b16 %v2767, %v2754
    %v3418 = vpack.c.b16 %v2768, %v2755
    %v3419 = vpack.c.b16 %v2769, %v2756
    %v3420 = vpack.c.b16 %v2770, %v2757
    %v3421 = vpack.c.b16 %v2771, %v2758
    %v3422 = vpack.c.b16 %v2772, %v2759
    %v3423 = vpack.c.b16 %v2773, %v2760
    %v3424 = vpack.c.b16 %v2774, %v2761
    %v3425 = vpack.c.b16 %v2775, %v2762
    %v3426 = vpack.c.b16 %v2776, %v2763
    %v3427 = vpack.c.b16 %v2777, %v2764
    %v3428 = vpack.c.b16 %v2778, %v2765
    %v3429 = vpack.c.b16 %v2779, %v2766
    %v3430 = vpack.c.b16 %v2793, %v2780
    %v3431 = vpack.c.b16 %v2794, %v2781
    %v3432 = vpack.c.b16 %v2795, %v2782
    %v3433 = vpack.c.b16 %v2796, %v2783
    %v3434 = vpack.c.b16 %v2797, %v2784
    %v3435 = vpack.c.b16 %v2798, %v2785
    %v3436 = vpack.c.b16 %v2799, %v2786
    %v3437 = vpack.c.b16 %v2800, %v2787
    %v3438 = vpack.c.b16 %v2801, %v2788
    %v3439 = vpack.c.b16 %v2802, %v2789
    %v3440 = vpack.c.b16 %v2803, %v2790
    %v3441 = vpack.c.b16 %v2804, %v2791
    %v3442 = vpack.c.b16 %v2805, %v2792
    %vm4080 = vcmask 130048
    %v4082 = vsel %vm4080, %v90, 0
    %4084 = vmatprep.subr.bf16.mxu0 %v2807
    %4085 = vmatpush1.bf16.msra.mxu0 %v2806
    %4086 = vmatprep.subr.bf16.mxu0 %v2820
    %4087 = vmatpush1.bf16.msra.mxu0 %v2819
    %4088 = vmatprep.subr.bf16.mxu0 %v2833
    %4089 = vmatpush1.bf16.msra.mxu0 %v2832
    %4090 = vmatprep.subr.bf16.mxu0 %v2846
    %4091 = vmatpush1.bf16.msra.mxu0 %v2845
    %4092 = vmatprep.subr.bf16.mxu0 %v2859
    %4093 = vmatpush1.bf16.msra.mxu0 %v2858
    %4094 = vmatprep.subr.bf16.mxu0 %v2872
    %4095 = vmatpush1.bf16.msra.mxu0 %v2871
    %4096 = vmatprep.subr.bf16.mxu0 %v2885
    %4097 = vmatpush1.bf16.msra.mxu0 %v2884
    %4098 = vmatprep.subr.bf16.mxu0 %v2898
    %4099 = vmatpush1.bf16.msra.mxu0 %v2897
    %4100 = vmatprep.subr.bf16.mxu0 %v2911
    %4101 = vmatpush1.bf16.msra.mxu0 %v2910
    %4102 = vmatprep.subr.bf16.mxu0 %v2924
    %4103 = vmatpush1.bf16.msra.mxu0 %v2923
    %4104 = vmatprep.subr.bf16.mxu0 %v2937
    %4105 = vmatpush1.bf16.msra.mxu0 %v2936
    %4106 = vmatprep.subr.bf16.mxu0 %v2950
    %4107 = vmatpush1.bf16.msra.mxu0 %v2949
    %4108 = vmatprep.subr.bf16.mxu0 %v2963
    %4109 = vmatpush1.bf16.msra.mxu0 %v2962
    %4110 = vmatprep.subr.bf16.mxu0 %v2976
    %4111 = vmatpush1.bf16.msra.mxu0 %v2975
    %4112 = vmatprep.subr.bf16.mxu0 %v2989
    %4113 = vmatpush1.bf16.msra.mxu0 %v2988
    %4114 = vmatprep.subr.bf16.mxu0 %v3002
    %4115 = vmatpush1.bf16.msra.mxu0 %v3001
    %4116 = vmatprep.mubr.bf16.mxu0 %v85
    %4117 = vmatmul.mubr.bf16.gmra.mrb[0].mxu0 %v84
    %v4118 = vpop.f32.mrb[0].mxu0
    %v4119 = vadd.f32 %v784, %v4118
    %v4120 = vpop.f32.mrb[0].mxu0
    %v4121 = vadd.f32 %v788, %v4120
    %v4122 = vpop.f32.mrb[0].mxu0
    %v4123 = vpop.f32.mrb[0].mxu0
    %4124 = vdwg.mxu0
    %4125 = vmatprep.subr.bf16.mxu0 %v3015
    %4126 = vmatpush1.bf16.msra.mxu0 %v3014
    %4127 = vmatprep.subr.bf16.mxu0 %v3028
    %4128 = vmatpush1.bf16.msra.mxu0 %v3027
    %4129 = vmatprep.subr.bf16.mxu0 %v3041
    %4130 = vmatpush1.bf16.msra.mxu0 %v3040
    %4131 = vmatprep.subr.bf16.mxu0 %v3054
    %4132 = vmatpush1.bf16.msra.mxu0 %v3053
    %4133 = vmatprep.subr.bf16.mxu0 %v3067
    %4134 = vmatpush1.bf16.msra.mxu0 %v3066
    %4135 = vmatprep.subr.bf16.mxu0 %v3080
    %4136 = vmatpush1.bf16.msra.mxu0 %v3079
    %4137 = vmatprep.subr.bf16.mxu0 %v3093
    %4138 = vmatpush1.bf16.msra.mxu0 %v3092
    %4139 = vmatprep.subr.bf16.mxu0 %v3106
    %4140 = vmatpush1.bf16.msra.mxu0 %v3105
    %4141 = vmatprep.subr.bf16.mxu0 %v3119
    %4142 = vmatpush1.bf16.msra.mxu0 %v3118
    %4143 = vmatprep.subr.bf16.mxu0 %v3132
    %4144 = vmatpush1.bf16.msra.mxu0 %v3131
    %4145 = vmatprep.subr.bf16.mxu0 %v3145
    %4146 = vmatpush1.bf16.msra.mxu0 %v3144
    %4147 = vmatprep.subr.bf16.mxu0 %v3158
    %4148 = vmatpush1.bf16.msra.mxu0 %v3157
    %4149 = vmatprep.subr.bf16.mxu0 %v3171
    %4150 = vmatpush1.bf16.msra.mxu0 %v3170
    %4151 = vmatprep.subr.bf16.mxu0 %v3184
    %4152 = vmatpush1.bf16.msra.mxu0 %v3183
    %4153 = vmatprep.subr.bf16.mxu0 %v3197
    %4154 = vmatpush1.bf16.msra.mxu0 %v3196
    %4155 = vmatprep.subr.bf16.mxu0 %v3210
    %4156 = vmatpush1.bf16.msra.mxu0 %v3209
    %4157 = vmatprep.mubr.bf16.mxu0 %v87
    %4158 = vmatmul.mubr.bf16.gmra.mrb[0].mxu0 %v86
    %v4159 = vpop.f32.mrb[0].mxu0
    %v4160 = vadd.f32 %v4119, %v4159
    %v4161 = vpop.f32.mrb[0].mxu0
    %v4162 = vadd.f32 %v4121, %v4161
    %v4163 = vpop.f32.mrb[0].mxu0
    %v4164 = vpop.f32.mrb[0].mxu0
    %4165 = vdwg.mxu0
    %4166 = vmatprep.subr.bf16.mxu0 %v3223
    %4167 = vmatpush1.bf16.msra.mxu0 %v3222
    %4168 = vmatprep.subr.bf16.mxu0 %v3236
    %4169 = vmatpush1.bf16.msra.mxu0 %v3235
    %4170 = vmatprep.subr.bf16.mxu0 %v3249
    %4171 = vmatpush1.bf16.msra.mxu0 %v3248
    %4172 = vmatprep.subr.bf16.mxu0 %v3262
    %4173 = vmatpush1.bf16.msra.mxu0 %v3261
    %4174 = vmatprep.subr.bf16.mxu0 %v3275
    %4175 = vmatpush1.bf16.msra.mxu0 %v3274
    %4176 = vmatprep.subr.bf16.mxu0 %v3288
    %4177 = vmatpush1.bf16.msra.mxu0 %v3287
    %4178 = vmatprep.subr.bf16.mxu0 %v3301
    %4179 = vmatpush1.bf16.msra.mxu0 %v3300
    %4180 = vmatprep.subr.bf16.mxu0 %v3314
    %4181 = vmatpush1.bf16.msra.mxu0 %v3313
    %4182 = vmatprep.subr.bf16.mxu0 %v3327
    %4183 = vmatpush1.bf16.msra.mxu0 %v3326
    %4184 = vmatprep.subr.bf16.mxu0 %v3340
    %4185 = vmatpush1.bf16.msra.mxu0 %v3339
    %4186 = vmatprep.subr.bf16.mxu0 %v3353
    %4187 = vmatpush1.bf16.msra.mxu0 %v3352
    %4188 = vmatprep.subr.bf16.mxu0 %v3366
    %4189 = vmatpush1.bf16.msra.mxu0 %v3365
    %4190 = vmatprep.subr.bf16.mxu0 %v3379
    %4191 = vmatpush1.bf16.msra.mxu0 %v3378
    %4192 = vmatprep.subr.bf16.mxu0 %v3392
    %4193 = vmatpush1.bf16.msra.mxu0 %v3391
    %4194 = vmatprep.subr.bf16.mxu0 %v3405
    %4195 = vmatpush1.bf16.msra.mxu0 %v3404
    %4196 = vmatprep.subr.bf16.mxu0 %v3418
    %4197 = vmatpush1.bf16.msra.mxu0 %v3417
    %4198 = vmatprep.mubr.bf16.mxu0 %v89
    %4199 = vmatmul.mubr.bf16.gmra.mrb[0].mxu0 %v88
    %v4200 = vpop.f32.mrb[0].mxu0
    %v4201 = vadd.f32 %v4160, %v4200
    %v4202 = vpop.f32.mrb[0].mxu0
    %v4203 = vadd.f32 %v4162, %v4202
    %v4204 = vpop.f32.mrb[0].mxu0
    %v4205 = vpop.f32.mrb[0].mxu0
    %4206 = vdwg.mxu0
    %4207 = vmatprep.subr.bf16.mxu0 %v3431
    %4208 = vmatpush1.bf16.msra.mxu0 %v3430
    %4209 = vmatprep.subr.bf16.mxu0 0
    %4210 = vmatpush1.bf16.msra.mxu0 0
    %4211 = vmatprep.subr.bf16.mxu0 0
    %4212 = vmatpush1.bf16.msra.mxu0 0
    %4213 = vmatprep.subr.bf16.mxu0 0
    %4214 = vmatpush1.bf16.msra.mxu0 0
    %4215 = vmatprep.subr.bf16.mxu0 0
    %4216 = vmatpush1.bf16.msra.mxu0 0
    %4217 = vmatprep.subr.bf16.mxu0 0
    %4218 = vmatpush1.bf16.msra.mxu0 0
    %4219 = vmatprep.subr.bf16.mxu0 0
    %4220 = vmatpush1.bf16.msra.mxu0 0
    %4221 = vmatprep.subr.bf16.mxu0 0
    %4222 = vmatpush1.bf16.msra.mxu0 0
    %4223 = vmatprep.subr.bf16.mxu0 0
    %4224 = vmatpush1.bf16.msra.mxu0 0
    %4225 = vmatprep.subr.bf16.mxu0 0
    %4226 = vmatpush1.bf16.msra.mxu0 0
    %4227 = vmatprep.subr.bf16.mxu0 0
    %4228 = vmatpush1.bf16.msra.mxu0 0
    %4229 = vmatprep.subr.bf16.mxu0 0
    %4230 = vmatpush1.bf16.msra.mxu0 0
    %4231 = vmatprep.subr.bf16.mxu0 0
    %4232 = vmatpush1.bf16.msra.mxu0 0
    %4233 = vmatprep.subr.bf16.mxu0 0
    %4234 = vmatpush1.bf16.msra.mxu0 0
    %4235 = vmatprep.subr.bf16.mxu0 0
    %4236 = vmatpush1.bf16.msra.mxu0 0
    %4237 = vmatprep.subr.bf16.mxu0 0
    %4238 = vmatpush1.bf16.msra.mxu0 0
    %4239 = vmatprep.mubr.bf16.mxu0 0
    %4240 = vmatmul.mubr.bf16.gmra.mrb[0].mxu0 %v4082
    %v4241 = vpop.f32.mrb[0].mxu0
    %v4242 = vadd.f32 %v4201, %v4241
    %v4243 = vpop.f32.mrb[0].mxu0
    %v4244 = vadd.f32 %v4203, %v4243
    %v4245 = vpop.f32.mrb[0].mxu0
    %v4246 = vpop.f32.mrb[0].mxu0
    %4247 = vdwg.mxu0
    %4248 = vmatprep.subr.bf16.mxu0 %v2809
    %4249 = vmatpush1.bf16.msra.mxu0 %v2808
    %4250 = vmatprep.subr.bf16.mxu0 %v2822
    %4251 = vmatpush1.bf16.msra.mxu0 %v2821
    %4252 = vmatprep.subr.bf16.mxu0 %v2835
    %4253 = vmatpush1.bf16.msra.mxu0 %v2834
    %4254 = vmatprep.subr.bf16.mxu0 %v2848
    %4255 = vmatpush1.bf16.msra.mxu0 %v2847
    %4256 = vmatprep.subr.bf16.mxu0 %v2861
    %4257 = vmatpush1.bf16.msra.mxu0 %v2860
    %4258 = vmatprep.subr.bf16.mxu0 %v2874
    %4259 = vmatpush1.bf16.msra.mxu0 %v2873
    %4260 = vmatprep.subr.bf16.mxu0 %v2887
    %4261 = vmatpush1.bf16.msra.mxu0 %v2886
    %4262 = vmatprep.subr.bf16.mxu0 %v2900
    %4263 = vmatpush1.bf16.msra.mxu0 %v2899
    %4264 = vmatprep.subr.bf16.mxu0 %v2913
    %4265 = vmatpush1.bf16.msra.mxu0 %v2912
    %4266 = vmatprep.subr.bf16.mxu0 %v2926
    %4267 = vmatpush1.bf16.msra.mxu0 %v2925
    %4268 = vmatprep.subr.bf16.mxu0 %v2939
    %4269 = vmatpush1.bf16.msra.mxu0 %v2938
    %4270 = vmatprep.subr.bf16.mxu0 %v2952
    %4271 = vmatpush1.bf16.msra.mxu0 %v2951
    %4272 = vmatprep.subr.bf16.mxu0 %v2965
    %4273 = vmatpush1.bf16.msra.mxu0 %v2964
    %4274 = vmatprep.subr.bf16.mxu0 %v2978
    %4275 = vmatpush1.bf16.msra.mxu0 %v2977
    %4276 = vmatprep.subr.bf16.mxu0 %v2991
    %4277 = vmatpush1.bf16.msra.mxu0 %v2990
    %4278 = vmatprep.subr.bf16.mxu0 %v3004
    %4279 = vmatpush1.bf16.msra.mxu0 %v3003
    %4280 = vmatprep.mubr.bf16.mxu0 %v85
    %4281 = vmatmul.mubr.bf16.gmra.mrb[0].mxu0 %v84
    %v4282 = vpop.f32.mrb[0].mxu0
    %v4283 = vadd.f32 %v792, %v4282
    %v4284 = vpop.f32.mrb[0].mxu0
    %v4285 = vadd.f32 %v796, %v4284
    %v4286 = vpop.f32.mrb[0].mxu0
    %v4287 = vpop.f32.mrb[0].mxu0
    %4288 = vdwg.mxu0
    %4289 = vmatprep.subr.bf16.mxu0 %v3017
    %4290 = vmatpush1.bf16.msra.mxu0 %v3016
    %4291 = vmatprep.subr.bf16.mxu0 %v3030
    %4292 = vmatpush1.bf16.msra.mxu0 %v3029
    %4293 = vmatprep.subr.bf16.mxu0 %v3043
    %4294 = vmatpush1.bf16.msra.mxu0 %v3042
    %4295 = vmatprep.subr.bf16.mxu0 %v3056
    %4296 = vmatpush1.bf16.msra.mxu0 %v3055
    %4297 = vmatprep.subr.bf16.mxu0 %v3069
    %4298 = vmatpush1.bf16.msra.mxu0 %v3068
    %4299 = vmatprep.subr.bf16.mxu0 %v3082
    %4300 = vmatpush1.bf16.msra.mxu0 %v3081
    %4301 = vmatprep.subr.bf16.mxu0 %v3095
    %4302 = vmatpush1.bf16.msra.mxu0 %v3094
    %4303 = vmatprep.subr.bf16.mxu0 %v3108
    %4304 = vmatpush1.bf16.msra.mxu0 %v3107
    %4305 = vmatprep.subr.bf16.mxu0 %v3121
    %4306 = vmatpush1.bf16.msra.mxu0 %v3120
    %4307 = vmatprep.subr.bf16.mxu0 %v3134
    %4308 = vmatpush1.bf16.msra.mxu0 %v3133
    %4309 = vmatprep.subr.bf16.mxu0 %v3147
    %4310 = vmatpush1.bf16.msra.mxu0 %v3146
    %4311 = vmatprep.subr.bf16.mxu0 %v3160
    %4312 = vmatpush1.bf16.msra.mxu0 %v3159
    %4313 = vmatprep.subr.bf16.mxu0 %v3173
    %4314 = vmatpush1.bf16.msra.mxu0 %v3172
    %4315 = vmatprep.subr.bf16.mxu0 %v3186
    %4316 = vmatpush1.bf16.msra.mxu0 %v3185
    %4317 = vmatprep.subr.bf16.mxu0 %v3199
    %4318 = vmatpush1.bf16.msra.mxu0 %v3198
    %4319 = vmatprep.subr.bf16.mxu0 %v3212
    %4320 = vmatpush1.bf16.msra.mxu0 %v3211
    %4321 = vmatprep.mubr.bf16.mxu0 %v87
    %4322 = vmatmul.mubr.bf16.gmra.mrb[0].mxu0 %v86
    %v4323 = vpop.f32.mrb[0].mxu0
    %v4324 = vadd.f32 %v4283, %v4323
    %v4325 = vpop.f32.mrb[0].mxu0
    %v4326 = vadd.f32 %v4285, %v4325
    %v4327 = vpop.f32.mrb[0].mxu0
    %v4328 = vpop.f32.mrb[0].mxu0
    %4329 = vdwg.mxu0
    %4330 = vmatprep.subr.bf16.mxu0 %v3225
    %4331 = vmatpush1.bf16.msra.mxu0 %v3224
    %4332 = vmatprep.subr.bf16.mxu0 %v3238
    %4333 = vmatpush1.bf16.msra.mxu0 %v3237
    %4334 = vmatprep.subr.bf16.mxu0 %v3251
    %4335 = vmatpush1.bf16.msra.mxu0 %v3250
    %4336 = vmatprep.subr.bf16.mxu0 %v3264
    %4337 = vmatpush1.bf16.msra.mxu0 %v3263
    %4338 = vmatprep.subr.bf16.mxu0 %v3277
    %4339 = vmatpush1.bf16.msra.mxu0 %v3276
    %4340 = vmatprep.subr.bf16.mxu0 %v3290
    %4341 = vmatpush1.bf16.msra.mxu0 %v3289
    %4342 = vmatprep.subr.bf16.mxu0 %v3303
    %4343 = vmatpush1.bf16.msra.mxu0 %v3302
    %4344 = vmatprep.subr.bf16.mxu0 %v3316
    %4345 = vmatpush1.bf16.msra.mxu0 %v3315
    %4346 = vmatprep.subr.bf16.mxu0 %v3329
    %4347 = vmatpush1.bf16.msra.mxu0 %v3328
    %4348 = vmatprep.subr.bf16.mxu0 %v3342
    %4349 = vmatpush1.bf16.msra.mxu0 %v3341
    %4350 = vmatprep.subr.bf16.mxu0 %v3355
    %4351 = vmatpush1.bf16.msra.mxu0 %v3354
    %4352 = vmatprep.subr.bf16.mxu0 %v3368
    %4353 = vmatpush1.bf16.msra.mxu0 %v3367
    %4354 = vmatprep.subr.bf16.mxu0 %v3381
    %4355 = vmatpush1.bf16.msra.mxu0 %v3380
    %4356 = vmatprep.subr.bf16.mxu0 %v3394
    %4357 = vmatpush1.bf16.msra.mxu0 %v3393
    %4358 = vmatprep.subr.bf16.mxu0 %v3407
    %4359 = vmatpush1.bf16.msra.mxu0 %v3406
    %4360 = vmatprep.subr.bf16.mxu0 %v3420
    %4361 = vmatpush1.bf16.msra.mxu0 %v3419
    %4362 = vmatprep.mubr.bf16.mxu0 %v89
    %4363 = vmatmul.mubr.bf16.gmra.mrb[0].mxu0 %v88
    %v4364 = vpop.f32.mrb[0].mxu0
    %v4365 = vadd.f32 %v4324, %v4364
    %v4366 = vpop.f32.mrb[0].mxu0
    %v4367 = vadd.f32 %v4326, %v4366
    %v4368 = vpop.f32.mrb[0].mxu0
    %v4369 = vpop.f32.mrb[0].mxu0
    %4370 = vdwg.mxu0
    %4371 = vmatprep.subr.bf16.mxu0 %v3433
    %4372 = vmatpush1.bf16.msra.mxu0 %v3432
    %4373 = vmatprep.subr.bf16.mxu0 0
    %4374 = vmatpush1.bf16.msra.mxu0 0
    %4375 = vmatprep.subr.bf16.mxu0 0
    %4376 = vmatpush1.bf16.msra.mxu0 0
    %4377 = vmatprep.subr.bf16.mxu0 0
    %4378 = vmatpush1.bf16.msra.mxu0 0
    %4379 = vmatprep.subr.bf16.mxu0 0
    %4380 = vmatpush1.bf16.msra.mxu0 0
    %4381 = vmatprep.subr.bf16.mxu0 0
    %4382 = vmatpush1.bf16.msra.mxu0 0
    %4383 = vmatprep.subr.bf16.mxu0 0
    %4384 = vmatpush1.bf16.msra.mxu0 0
    %4385 = vmatprep.subr.bf16.mxu0 0
    %4386 = vmatpush1.bf16.msra.mxu0 0
    %4387 = vmatprep.subr.bf16.mxu0 0
    %4388 = vmatpush1.bf16.msra.mxu0 0
    %4389 = vmatprep.subr.bf16.mxu0 0
    %4390 = vmatpush1.bf16.msra.mxu0 0
    %4391 = vmatprep.subr.bf16.mxu0 0
    %4392 = vmatpush1.bf16.msra.mxu0 0
    %4393 = vmatprep.subr.bf16.mxu0 0
    %4394 = vmatpush1.bf16.msra.mxu0 0
    %4395 = vmatprep.subr.bf16.mxu0 0
    %4396 = vmatpush1.bf16.msra.mxu0 0
    %4397 = vmatprep.subr.bf16.mxu0 0
    %4398 = vmatpush1.bf16.msra.mxu0 0
    %4399 = vmatprep.subr.bf16.mxu0 0
    %4400 = vmatpush1.bf16.msra.mxu0 0
    %4401 = vmatprep.subr.bf16.mxu0 0
    %4402 = vmatpush1.bf16.msra.mxu0 0
    %4403 = vmatprep.mubr.bf16.mxu0 0
    %4404 = vmatmul.mubr.bf16.gmra.mrb[0].mxu0 %v4082
    %v4405 = vpop.f32.mrb[0].mxu0
    %v4406 = vadd.f32 %v4365, %v4405
    %v4407 = vpop.f32.mrb[0].mxu0
    %v4408 = vadd.f32 %v4367, %v4407
    %v4409 = vpop.f32.mrb[0].mxu0
    %v4410 = vpop.f32.mrb[0].mxu0
    %4411 = vdwg.mxu0
    %4412 = vmatprep.subr.bf16.mxu0 %v2811
    %4413 = vmatpush1.bf16.msra.mxu0 %v2810
    %4414 = vmatprep.subr.bf16.mxu0 %v2824
    %4415 = vmatpush1.bf16.msra.mxu0 %v2823
    %4416 = vmatprep.subr.bf16.mxu0 %v2837
    %4417 = vmatpush1.bf16.msra.mxu0 %v2836
    %4418 = vmatprep.subr.bf16.mxu0 %v2850
    %4419 = vmatpush1.bf16.msra.mxu0 %v2849
    %4420 = vmatprep.subr.bf16.mxu0 %v2863
    %4421 = vmatpush1.bf16.msra.mxu0 %v2862
    %4422 = vmatprep.subr.bf16.mxu0 %v2876
    %4423 = vmatpush1.bf16.msra.mxu0 %v2875
    %4424 = vmatprep.subr.bf16.mxu0 %v2889
    %4425 = vmatpush1.bf16.msra.mxu0 %v2888
    %4426 = vmatprep.subr.bf16.mxu0 %v2902
    %4427 = vmatpush1.bf16.msra.mxu0 %v2901
    %4428 = vmatprep.subr.bf16.mxu0 %v2915
    %4429 = vmatpush1.bf16.msra.mxu0 %v2914
    %4430 = vmatprep.subr.bf16.mxu0 %v2928
    %4431 = vmatpush1.bf16.msra.mxu0 %v2927
    %4432 = vmatprep.subr.bf16.mxu0 %v2941
    %4433 = vmatpush1.bf16.msra.mxu0 %v2940
    %4434 = vmatprep.subr.bf16.mxu0 %v2954
    %4435 = vmatpush1.bf16.msra.mxu0 %v2953
    %4436 = vmatprep.subr.bf16.mxu0 %v2967
    %4437 = vmatpush1.bf16.msra.mxu0 %v2966
    %4438 = vmatprep.subr.bf16.mxu0 %v2980
    %4439 = vmatpush1.bf16.msra.mxu0 %v2979
    %4440 = vmatprep.subr.bf16.mxu0 %v2993
    %4441 = vmatpush1.bf16.msra.mxu0 %v2992
    %4442 = vmatprep.subr.bf16.mxu0 %v3006
    %4443 = vmatpush1.bf16.msra.mxu0 %v3005
    %4444 = vmatprep.mubr.bf16.mxu0 %v85
    %4445 = vmatmul.mubr.bf16.gmra.mrb[0].mxu0 %v84
    %v4446 = vpop.f32.mrb[0].mxu0
    %v4447 = vadd.f32 %v800, %v4446
    %v4448 = vpop.f32.mrb[0].mxu0
    %v4449 = vadd.f32 %v804, %v4448
    %v4450 = vpop.f32.mrb[0].mxu0
    %v4451 = vpop.f32.mrb[0].mxu0
    %4452 = vdwg.mxu0
    %4453 = vmatprep.subr.bf16.mxu0 %v3019
    %4454 = vmatpush1.bf16.msra.mxu0 %v3018
    %4455 = vmatprep.subr.bf16.mxu0 %v3032
    %4456 = vmatpush1.bf16.msra.mxu0 %v3031
    %4457 = vmatprep.subr.bf16.mxu0 %v3045
    %4458 = vmatpush1.bf16.msra.mxu0 %v3044
    %4459 = vmatprep.subr.bf16.mxu0 %v3058
    %4460 = vmatpush1.bf16.msra.mxu0 %v3057
    %4461 = vmatprep.subr.bf16.mxu0 %v3071
    %4462 = vmatpush1.bf16.msra.mxu0 %v3070
    %4463 = vmatprep.subr.bf16.mxu0 %v3084
    %4464 = vmatpush1.bf16.msra.mxu0 %v3083
    %4465 = vmatprep.subr.bf16.mxu0 %v3097
    %4466 = vmatpush1.bf16.msra.mxu0 %v3096
    %4467 = vmatprep.subr.bf16.mxu0 %v3110
    %4468 = vmatpush1.bf16.msra.mxu0 %v3109
    %4469 = vmatprep.subr.bf16.mxu0 %v3123
    %4470 = vmatpush1.bf16.msra.mxu0 %v3122
    %4471 = vmatprep.subr.bf16.mxu0 %v3136
    %4472 = vmatpush1.bf16.msra.mxu0 %v3135
    %4473 = vmatprep.subr.bf16.mxu0 %v3149
    %4474 = vmatpush1.bf16.msra.mxu0 %v3148
    %4475 = vmatprep.subr.bf16.mxu0 %v3162
    %4476 = vmatpush1.bf16.msra.mxu0 %v3161
    %4477 = vmatprep.subr.bf16.mxu0 %v3175
    %4478 = vmatpush1.bf16.msra.mxu0 %v3174
    %4479 = vmatprep.subr.bf16.mxu0 %v3188
    %4480 = vmatpush1.bf16.msra.mxu0 %v3187
    %4481 = vmatprep.subr.bf16.mxu0 %v3201
    %4482 = vmatpush1.bf16.msra.mxu0 %v3200
    %4483 = vmatprep.subr.bf16.mxu0 %v3214
    %4484 = vmatpush1.bf16.msra.mxu0 %v3213
    %4485 = vmatprep.mubr.bf16.mxu0 %v87
    %4486 = vmatmul.mubr.bf16.gmra.mrb[0].mxu0 %v86
    %v4487 = vpop.f32.mrb[0].mxu0
    %v4488 = vadd.f32 %v4447, %v4487
    %v4489 = vpop.f32.mrb[0].mxu0
    %v4490 = vadd.f32 %v4449, %v4489
    %v4491 = vpop.f32.mrb[0].mxu0
    %v4492 = vpop.f32.mrb[0].mxu0
    %4493 = vdwg.mxu0
    %4494 = vmatprep.subr.bf16.mxu0 %v3227
    %4495 = vmatpush1.bf16.msra.mxu0 %v3226
    %4496 = vmatprep.subr.bf16.mxu0 %v3240
    %4497 = vmatpush1.bf16.msra.mxu0 %v3239
    %4498 = vmatprep.subr.bf16.mxu0 %v3253
    %4499 = vmatpush1.bf16.msra.mxu0 %v3252
    %4500 = vmatprep.subr.bf16.mxu0 %v3266
    %4501 = vmatpush1.bf16.msra.mxu0 %v3265
    %4502 = vmatprep.subr.bf16.mxu0 %v3279
    %4503 = vmatpush1.bf16.msra.mxu0 %v3278
    %4504 = vmatprep.subr.bf16.mxu0 %v3292
    %4505 = vmatpush1.bf16.msra.mxu0 %v3291
    %4506 = vmatprep.subr.bf16.mxu0 %v3305
    %4507 = vmatpush1.bf16.msra.mxu0 %v3304
    %4508 = vmatprep.subr.bf16.mxu0 %v3318
    %4509 = vmatpush1.bf16.msra.mxu0 %v3317
    %4510 = vmatprep.subr.bf16.mxu0 %v3331
    %4511 = vmatpush1.bf16.msra.mxu0 %v3330
    %4512 = vmatprep.subr.bf16.mxu0 %v3344
    %4513 = vmatpush1.bf16.msra.mxu0 %v3343
    %4514 = vmatprep.subr.bf16.mxu0 %v3357
    %4515 = vmatpush1.bf16.msra.mxu0 %v3356
    %4516 = vmatprep.subr.bf16.mxu0 %v3370
    %4517 = vmatpush1.bf16.msra.mxu0 %v3369
    %4518 = vmatprep.subr.bf16.mxu0 %v3383
    %4519 = vmatpush1.bf16.msra.mxu0 %v3382
    %4520 = vmatprep.subr.bf16.mxu0 %v3396
    %4521 = vmatpush1.bf16.msra.mxu0 %v3395
    %4522 = vmatprep.subr.bf16.mxu0 %v3409
    %4523 = vmatpush1.bf16.msra.mxu0 %v3408
    %4524 = vmatprep.subr.bf16.mxu0 %v3422
    %4525 = vmatpush1.bf16.msra.mxu0 %v3421
    %4526 = vmatprep.mubr.bf16.mxu0 %v89
    %4527 = vmatmul.mubr.bf16.gmra.mrb[0].mxu0 %v88
    %v4528 = vpop.f32.mrb[0].mxu0
    %v4529 = vadd.f32 %v4488, %v4528
    %v4530 = vpop.f32.mrb[0].mxu0
    %v4531 = vadd.f32 %v4490, %v4530
    %v4532 = vpop.f32.mrb[0].mxu0
    %v4533 = vpop.f32.mrb[0].mxu0
    %4534 = vdwg.mxu0
    %4535 = vmatprep.subr.bf16.mxu0 %v3435
    %4536 = vmatpush1.bf16.msra.mxu0 %v3434
    %4537 = vmatprep.subr.bf16.mxu0 0
    %4538 = vmatpush1.bf16.msra.mxu0 0
    %4539 = vmatprep.subr.bf16.mxu0 0
    %4540 = vmatpush1.bf16.msra.mxu0 0
    %4541 = vmatprep.subr.bf16.mxu0 0
    %4542 = vmatpush1.bf16.msra.mxu0 0
    %4543 = vmatprep.subr.bf16.mxu0 0
    %4544 = vmatpush1.bf16.msra.mxu0 0
    %4545 = vmatprep.subr.bf16.mxu0 0
    %4546 = vmatpush1.bf16.msra.mxu0 0
    %4547 = vmatprep.subr.bf16.mxu0 0
    %4548 = vmatpush1.bf16.msra.mxu0 0
    %4549 = vmatprep.subr.bf16.mxu0 0
    %4550 = vmatpush1.bf16.msra.mxu0 0
    %4551 = vmatprep.subr.bf16.mxu0 0
    %4552 = vmatpush1.bf16.msra.mxu0 0
    %4553 = vmatprep.subr.bf16.mxu0 0
    %4554 = vmatpush1.bf16.msra.mxu0 0
    %4555 = vmatprep.subr.bf16.mxu0 0
    %4556 = vmatpush1.bf16.msra.mxu0 0
    %4557 = vmatprep.subr.bf16.mxu0 0
    %4558 = vmatpush1.bf16.msra.mxu0 0
    %4559 = vmatprep.subr.bf16.mxu0 0
    %4560 = vmatpush1.bf16.msra.mxu0 0
    %4561 = vmatprep.subr.bf16.mxu0 0
    %4562 = vmatpush1.bf16.msra.mxu0 0
    %4563 = vmatprep.subr.bf16.mxu0 0
    %4564 = vmatpush1.bf16.msra.mxu0 0
    %4565 = vmatprep.subr.bf16.mxu0 0
    %4566 = vmatpush1.bf16.msra.mxu0 0
    %4567 = vmatprep.mubr.bf16.mxu0 0
    %4568 = vmatmul.mubr.bf16.gmra.mrb[0].mxu0 %v4082
    %v4569 = vpop.f32.mrb[0].mxu0
    %v4570 = vadd.f32 %v4529, %v4569
    %v4571 = vpop.f32.mrb[0].mxu0
    %v4572 = vadd.f32 %v4531, %v4571
    %v4573 = vpop.f32.mrb[0].mxu0
    %v4574 = vpop.f32.mrb[0].mxu0
    %4575 = vdwg.mxu0
    %4576 = vmatprep.subr.bf16.mxu0 %v2813
    %4577 = vmatpush1.bf16.msra.mxu0 %v2812
    %4578 = vmatprep.subr.bf16.mxu0 %v2826
    %4579 = vmatpush1.bf16.msra.mxu0 %v2825
    %4580 = vmatprep.subr.bf16.mxu0 %v2839
    %4581 = vmatpush1.bf16.msra.mxu0 %v2838
    %4582 = vmatprep.subr.bf16.mxu0 %v2852
    %4583 = vmatpush1.bf16.msra.mxu0 %v2851
    %4584 = vmatprep.subr.bf16.mxu0 %v2865
    %4585 = vmatpush1.bf16.msra.mxu0 %v2864
    %4586 = vmatprep.subr.bf16.mxu0 %v2878
    %4587 = vmatpush1.bf16.msra.mxu0 %v2877
    %4588 = vmatprep.subr.bf16.mxu0 %v2891
    %4589 = vmatpush1.bf16.msra.mxu0 %v2890
    %4590 = vmatprep.subr.bf16.mxu0 %v2904
    %4591 = vmatpush1.bf16.msra.mxu0 %v2903
    %4592 = vmatprep.subr.bf16.mxu0 %v2917
    %4593 = vmatpush1.bf16.msra.mxu0 %v2916
    %4594 = vmatprep.subr.bf16.mxu0 %v2930
    %4595 = vmatpush1.bf16.msra.mxu0 %v2929
    %4596 = vmatprep.subr.bf16.mxu0 %v2943
    %4597 = vmatpush1.bf16.msra.mxu0 %v2942
    %4598 = vmatprep.subr.bf16.mxu0 %v2956
    %4599 = vmatpush1.bf16.msra.mxu0 %v2955
    %4600 = vmatprep.subr.bf16.mxu0 %v2969
    %4601 = vmatpush1.bf16.msra.mxu0 %v2968
    %4602 = vmatprep.subr.bf16.mxu0 %v2982
    %4603 = vmatpush1.bf16.msra.mxu0 %v2981
    %4604 = vmatprep.subr.bf16.mxu0 %v2995
    %4605 = vmatpush1.bf16.msra.mxu0 %v2994
    %4606 = vmatprep.subr.bf16.mxu0 %v3008
    %4607 = vmatpush1.bf16.msra.mxu0 %v3007
    %4608 = vmatprep.mubr.bf16.mxu0 %v85
    %4609 = vmatmul.mubr.bf16.gmra.mrb[0].mxu0 %v84
    %v4610 = vpop.f32.mrb[0].mxu0
    %v4611 = vadd.f32 %v808, %v4610
    %v4612 = vpop.f32.mrb[0].mxu0
    %v4613 = vadd.f32 %v812, %v4612
    %v4614 = vpop.f32.mrb[0].mxu0
    %v4615 = vpop.f32.mrb[0].mxu0
    %4616 = vdwg.mxu0
    %4617 = vmatprep.subr.bf16.mxu0 %v3021
    %4618 = vmatpush1.bf16.msra.mxu0 %v3020
    %4619 = vmatprep.subr.bf16.mxu0 %v3034
    %4620 = vmatpush1.bf16.msra.mxu0 %v3033
    %4621 = vmatprep.subr.bf16.mxu0 %v3047
    %4622 = vmatpush1.bf16.msra.mxu0 %v3046
    %4623 = vmatprep.subr.bf16.mxu0 %v3060
    %4624 = vmatpush1.bf16.msra.mxu0 %v3059
    %4625 = vmatprep.subr.bf16.mxu0 %v3073
    %4626 = vmatpush1.bf16.msra.mxu0 %v3072
    %4627 = vmatprep.subr.bf16.mxu0 %v3086
    %4628 = vmatpush1.bf16.msra.mxu0 %v3085
    %4629 = vmatprep.subr.bf16.mxu0 %v3099
    %4630 = vmatpush1.bf16.msra.mxu0 %v3098
    %4631 = vmatprep.subr.bf16.mxu0 %v3112
    %4632 = vmatpush1.bf16.msra.mxu0 %v3111
    %4633 = vmatprep.subr.bf16.mxu0 %v3125
    %4634 = vmatpush1.bf16.msra.mxu0 %v3124
    %4635 = vmatprep.subr.bf16.mxu0 %v3138
    %4636 = vmatpush1.bf16.msra.mxu0 %v3137
    %4637 = vmatprep.subr.bf16.mxu0 %v3151
    %4638 = vmatpush1.bf16.msra.mxu0 %v3150
    %4639 = vmatprep.subr.bf16.mxu0 %v3164
    %4640 = vmatpush1.bf16.msra.mxu0 %v3163
    %4641 = vmatprep.subr.bf16.mxu0 %v3177
    %4642 = vmatpush1.bf16.msra.mxu0 %v3176
    %4643 = vmatprep.subr.bf16.mxu0 %v3190
    %4644 = vmatpush1.bf16.msra.mxu0 %v3189
    %4645 = vmatprep.subr.bf16.mxu0 %v3203
    %4646 = vmatpush1.bf16.msra.mxu0 %v3202
    %4647 = vmatprep.subr.bf16.mxu0 %v3216
    %4648 = vmatpush1.bf16.msra.mxu0 %v3215
    %4649 = vmatprep.mubr.bf16.mxu0 %v87
    %4650 = vmatmul.mubr.bf16.gmra.mrb[0].mxu0 %v86
    %v4651 = vpop.f32.mrb[0].mxu0
    %v4652 = vadd.f32 %v4611, %v4651
    %v4653 = vpop.f32.mrb[0].mxu0
    %v4654 = vadd.f32 %v4613, %v4653
    %v4655 = vpop.f32.mrb[0].mxu0
    %v4656 = vpop.f32.mrb[0].mxu0
    %4657 = vdwg.mxu0
    %4658 = vmatprep.subr.bf16.mxu0 %v3229
    %4659 = vmatpush1.bf16.msra.mxu0 %v3228
    %4660 = vmatprep.subr.bf16.mxu0 %v3242
    %4661 = vmatpush1.bf16.msra.mxu0 %v3241
    %4662 = vmatprep.subr.bf16.mxu0 %v3255
    %4663 = vmatpush1.bf16.msra.mxu0 %v3254
    %4664 = vmatprep.subr.bf16.mxu0 %v3268
    %4665 = vmatpush1.bf16.msra.mxu0 %v3267
    %4666 = vmatprep.subr.bf16.mxu0 %v3281
    %4667 = vmatpush1.bf16.msra.mxu0 %v3280
    %4668 = vmatprep.subr.bf16.mxu0 %v3294
    %4669 = vmatpush1.bf16.msra.mxu0 %v3293
    %4670 = vmatprep.subr.bf16.mxu0 %v3307
    %4671 = vmatpush1.bf16.msra.mxu0 %v3306
    %4672 = vmatprep.subr.bf16.mxu0 %v3320
    %4673 = vmatpush1.bf16.msra.mxu0 %v3319
    %4674 = vmatprep.subr.bf16.mxu0 %v3333
    %4675 = vmatpush1.bf16.msra.mxu0 %v3332
    %4676 = vmatprep.subr.bf16.mxu0 %v3346
    %4677 = vmatpush1.bf16.msra.mxu0 %v3345
    %4678 = vmatprep.subr.bf16.mxu0 %v3359
    %4679 = vmatpush1.bf16.msra.mxu0 %v3358
    %4680 = vmatprep.subr.bf16.mxu0 %v3372
    %4681 = vmatpush1.bf16.msra.mxu0 %v3371
    %4682 = vmatprep.subr.bf16.mxu0 %v3385
    %4683 = vmatpush1.bf16.msra.mxu0 %v3384
    %4684 = vmatprep.subr.bf16.mxu0 %v3398
    %4685 = vmatpush1.bf16.msra.mxu0 %v3397
    %4686 = vmatprep.subr.bf16.mxu0 %v3411
    %4687 = vmatpush1.bf16.msra.mxu0 %v3410
    %4688 = vmatprep.subr.bf16.mxu0 %v3424
    %4689 = vmatpush1.bf16.msra.mxu0 %v3423
    %4690 = vmatprep.mubr.bf16.mxu0 %v89
    %4691 = vmatmul.mubr.bf16.gmra.mrb[0].mxu0 %v88
    %v4692 = vpop.f32.mrb[0].mxu0
    %v4693 = vadd.f32 %v4652, %v4692
    %v4694 = vpop.f32.mrb[0].mxu0
    %v4695 = vadd.f32 %v4654, %v4694
    %v4696 = vpop.f32.mrb[0].mxu0
    %v4697 = vpop.f32.mrb[0].mxu0
    %4698 = vdwg.mxu0
    %4699 = vmatprep.subr.bf16.mxu0 %v3437
    %4700 = vmatpush1.bf16.msra.mxu0 %v3436
    %4701 = vmatprep.subr.bf16.mxu0 0
    %4702 = vmatpush1.bf16.msra.mxu0 0
    %4703 = vmatprep.subr.bf16.mxu0 0
    %4704 = vmatpush1.bf16.msra.mxu0 0
    %4705 = vmatprep.subr.bf16.mxu0 0
    %4706 = vmatpush1.bf16.msra.mxu0 0
    %4707 = vmatprep.subr.bf16.mxu0 0
    %4708 = vmatpush1.bf16.msra.mxu0 0
    %4709 = vmatprep.subr.bf16.mxu0 0
    %4710 = vmatpush1.bf16.msra.mxu0 0
    %4711 = vmatprep.subr.bf16.mxu0 0
    %4712 = vmatpush1.bf16.msra.mxu0 0
    %4713 = vmatprep.subr.bf16.mxu0 0
    %4714 = vmatpush1.bf16.msra.mxu0 0
    %4715 = vmatprep.subr.bf16.mxu0 0
    %4716 = vmatpush1.bf16.msra.mxu0 0
    %4717 = vmatprep.subr.bf16.mxu0 0
    %4718 = vmatpush1.bf16.msra.mxu0 0
    %4719 = vmatprep.subr.bf16.mxu0 0
    %4720 = vmatpush1.bf16.msra.mxu0 0
    %4721 = vmatprep.subr.bf16.mxu0 0
    %4722 = vmatpush1.bf16.msra.mxu0 0
    %4723 = vmatprep.subr.bf16.mxu0 0
    %4724 = vmatpush1.bf16.msra.mxu0 0
    %4725 = vmatprep.subr.bf16.mxu0 0
    %4726 = vmatpush1.bf16.msra.mxu0 0
    %4727 = vmatprep.subr.bf16.mxu0 0
    %4728 = vmatpush1.bf16.msra.mxu0 0
    %4729 = vmatprep.subr.bf16.mxu0 0
    %4730 = vmatpush1.bf16.msra.mxu0 0
    %4731 = vmatprep.mubr.bf16.mxu0 0
    %4732 = vmatmul.mubr.bf16.gmra.mrb[0].mxu0 %v4082
    %v4733 = vpop.f32.mrb[0].mxu0
    %v4734 = vadd.f32 %v4693, %v4733
    %v4735 = vpop.f32.mrb[0].mxu0
    %v4736 = vadd.f32 %v4695, %v4735
    %v4737 = vpop.f32.mrb[0].mxu0
    %v4738 = vpop.f32.mrb[0].mxu0
    %4739 = vdwg.mxu0
    %4740 = vmatprep.subr.bf16.mxu0 %v2815
    %4741 = vmatpush1.bf16.msra.mxu0 %v2814
    %4742 = vmatprep.subr.bf16.mxu0 %v2828
    %4743 = vmatpush1.bf16.msra.mxu0 %v2827
    %4744 = vmatprep.subr.bf16.mxu0 %v2841
    %4745 = vmatpush1.bf16.msra.mxu0 %v2840
    %4746 = vmatprep.subr.bf16.mxu0 %v2854
    %4747 = vmatpush1.bf16.msra.mxu0 %v2853
    %4748 = vmatprep.subr.bf16.mxu0 %v2867
    %4749 = vmatpush1.bf16.msra.mxu0 %v2866
    %4750 = vmatprep.subr.bf16.mxu0 %v2880
    %4751 = vmatpush1.bf16.msra.mxu0 %v2879
    %4752 = vmatprep.subr.bf16.mxu0 %v2893
    %4753 = vmatpush1.bf16.msra.mxu0 %v2892
    %4754 = vmatprep.subr.bf16.mxu0 %v2906
    %4755 = vmatpush1.bf16.msra.mxu0 %v2905
    %4756 = vmatprep.subr.bf16.mxu0 %v2919
    %4757 = vmatpush1.bf16.msra.mxu0 %v2918
    %4758 = vmatprep.subr.bf16.mxu0 %v2932
    %4759 = vmatpush1.bf16.msra.mxu0 %v2931
    %4760 = vmatprep.subr.bf16.mxu0 %v2945
    %4761 = vmatpush1.bf16.msra.mxu0 %v2944
    %4762 = vmatprep.subr.bf16.mxu0 %v2958
    %4763 = vmatpush1.bf16.msra.mxu0 %v2957
    %4764 = vmatprep.subr.bf16.mxu0 %v2971
    %4765 = vmatpush1.bf16.msra.mxu0 %v2970
    %4766 = vmatprep.subr.bf16.mxu0 %v2984
    %4767 = vmatpush1.bf16.msra.mxu0 %v2983
    %4768 = vmatprep.subr.bf16.mxu0 %v2997
    %4769 = vmatpush1.bf16.msra.mxu0 %v2996
    %4770 = vmatprep.subr.bf16.mxu0 %v3010
    %4771 = vmatpush1.bf16.msra.mxu0 %v3009
    %4772 = vmatprep.mubr.bf16.mxu0 %v85
    %4773 = vmatmul.mubr.bf16.gmra.mrb[0].mxu0 %v84
    %v4774 = vpop.f32.mrb[0].mxu0
    %v4775 = vadd.f32 %v816, %v4774
    %v4776 = vpop.f32.mrb[0].mxu0
    %v4777 = vadd.f32 %v820, %v4776
    %v4778 = vpop.f32.mrb[0].mxu0
    %v4779 = vpop.f32.mrb[0].mxu0
    %4780 = vdwg.mxu0
    %4781 = vmatprep.subr.bf16.mxu0 %v3023
    %4782 = vmatpush1.bf16.msra.mxu0 %v3022
    %4783 = vmatprep.subr.bf16.mxu0 %v3036
    %4784 = vmatpush1.bf16.msra.mxu0 %v3035
    %4785 = vmatprep.subr.bf16.mxu0 %v3049
    %4786 = vmatpush1.bf16.msra.mxu0 %v3048
    %4787 = vmatprep.subr.bf16.mxu0 %v3062
    %4788 = vmatpush1.bf16.msra.mxu0 %v3061
    %4789 = vmatprep.subr.bf16.mxu0 %v3075
    %4790 = vmatpush1.bf16.msra.mxu0 %v3074
    %4791 = vmatprep.subr.bf16.mxu0 %v3088
    %4792 = vmatpush1.bf16.msra.mxu0 %v3087
    %4793 = vmatprep.subr.bf16.mxu0 %v3101
    %4794 = vmatpush1.bf16.msra.mxu0 %v3100
    %4795 = vmatprep.subr.bf16.mxu0 %v3114
    %4796 = vmatpush1.bf16.msra.mxu0 %v3113
    %4797 = vmatprep.subr.bf16.mxu0 %v3127
    %4798 = vmatpush1.bf16.msra.mxu0 %v3126
    %4799 = vmatprep.subr.bf16.mxu0 %v3140
    %4800 = vmatpush1.bf16.msra.mxu0 %v3139
    %4801 = vmatprep.subr.bf16.mxu0 %v3153
    %4802 = vmatpush1.bf16.msra.mxu0 %v3152
    %4803 = vmatprep.subr.bf16.mxu0 %v3166
    %4804 = vmatpush1.bf16.msra.mxu0 %v3165
    %4805 = vmatprep.subr.bf16.mxu0 %v3179
    %4806 = vmatpush1.bf16.msra.mxu0 %v3178
    %4807 = vmatprep.subr.bf16.mxu0 %v3192
    %4808 = vmatpush1.bf16.msra.mxu0 %v3191
    %4809 = vmatprep.subr.bf16.mxu0 %v3205
    %4810 = vmatpush1.bf16.msra.mxu0 %v3204
    %4811 = vmatprep.subr.bf16.mxu0 %v3218
    %4812 = vmatpush1.bf16.msra.mxu0 %v3217
    %4813 = vmatprep.mubr.bf16.mxu0 %v87
    %4814 = vmatmul.mubr.bf16.gmra.mrb[0].mxu0 %v86
    %v4815 = vpop.f32.mrb[0].mxu0
    %v4816 = vadd.f32 %v4775, %v4815
    %v4817 = vpop.f32.mrb[0].mxu0
    %v4818 = vadd.f32 %v4777, %v4817
    %v4819 = vpop.f32.mrb[0].mxu0
    %v4820 = vpop.f32.mrb[0].mxu0
    %4821 = vdwg.mxu0
    %4822 = vmatprep.subr.bf16.mxu0 %v3231
    %4823 = vmatpush1.bf16.msra.mxu0 %v3230
    %4824 = vmatprep.subr.bf16.mxu0 %v3244
    %4825 = vmatpush1.bf16.msra.mxu0 %v3243
    %4826 = vmatprep.subr.bf16.mxu0 %v3257
    %4827 = vmatpush1.bf16.msra.mxu0 %v3256
    %4828 = vmatprep.subr.bf16.mxu0 %v3270
    %4829 = vmatpush1.bf16.msra.mxu0 %v3269
    %4830 = vmatprep.subr.bf16.mxu0 %v3283
    %4831 = vmatpush1.bf16.msra.mxu0 %v3282
    %4832 = vmatprep.subr.bf16.mxu0 %v3296
    %4833 = vmatpush1.bf16.msra.mxu0 %v3295
    %4834 = vmatprep.subr.bf16.mxu0 %v3309
    %4835 = vmatpush1.bf16.msra.mxu0 %v3308
    %4836 = vmatprep.subr.bf16.mxu0 %v3322
    %4837 = vmatpush1.bf16.msra.mxu0 %v3321
    %4838 = vmatprep.subr.bf16.mxu0 %v3335
    %4839 = vmatpush1.bf16.msra.mxu0 %v3334
    %4840 = vmatprep.subr.bf16.mxu0 %v3348
    %4841 = vmatpush1.bf16.msra.mxu0 %v3347
    %4842 = vmatprep.subr.bf16.mxu0 %v3361
    %4843 = vmatpush1.bf16.msra.mxu0 %v3360
    %4844 = vmatprep.subr.bf16.mxu0 %v3374
    %4845 = vmatpush1.bf16.msra.mxu0 %v3373
    %4846 = vmatprep.subr.bf16.mxu0 %v3387
    %4847 = vmatpush1.bf16.msra.mxu0 %v3386
    %4848 = vmatprep.subr.bf16.mxu0 %v3400
    %4849 = vmatpush1.bf16.msra.mxu0 %v3399
    %4850 = vmatprep.subr.bf16.mxu0 %v3413
    %4851 = vmatpush1.bf16.msra.mxu0 %v3412
    %4852 = vmatprep.subr.bf16.mxu0 %v3426
    %4853 = vmatpush1.bf16.msra.mxu0 %v3425
    %4854 = vmatprep.mubr.bf16.mxu0 %v89
    %4855 = vmatmul.mubr.bf16.gmra.mrb[0].mxu0 %v88
    %v4856 = vpop.f32.mrb[0].mxu0
    %v4857 = vadd.f32 %v4816, %v4856
    %v4858 = vpop.f32.mrb[0].mxu0
    %v4859 = vadd.f32 %v4818, %v4858
    %v4860 = vpop.f32.mrb[0].mxu0
    %v4861 = vpop.f32.mrb[0].mxu0
    %4862 = vdwg.mxu0
    %4863 = vmatprep.subr.bf16.mxu0 %v3439
    %4864 = vmatpush1.bf16.msra.mxu0 %v3438
    %4865 = vmatprep.subr.bf16.mxu0 0
    %4866 = vmatpush1.bf16.msra.mxu0 0
    %4867 = vmatprep.subr.bf16.mxu0 0
    %4868 = vmatpush1.bf16.msra.mxu0 0
    %4869 = vmatprep.subr.bf16.mxu0 0
    %4870 = vmatpush1.bf16.msra.mxu0 0
    %4871 = vmatprep.subr.bf16.mxu0 0
    %4872 = vmatpush1.bf16.msra.mxu0 0
    %4873 = vmatprep.subr.bf16.mxu0 0
    %4874 = vmatpush1.bf16.msra.mxu0 0
    %4875 = vmatprep.subr.bf16.mxu0 0
    %4876 = vmatpush1.bf16.msra.mxu0 0
    %4877 = vmatprep.subr.bf16.mxu0 0
    %4878 = vmatpush1.bf16.msra.mxu0 0
    %4879 = vmatprep.subr.bf16.mxu0 0
    %4880 = vmatpush1.bf16.msra.mxu0 0
    %4881 = vmatprep.subr.bf16.mxu0 0
    %4882 = vmatpush1.bf16.msra.mxu0 0
    %4883 = vmatprep.subr.bf16.mxu0 0
    %4884 = vmatpush1.bf16.msra.mxu0 0
    %4885 = vmatprep.subr.bf16.mxu0 0
    %4886 = vmatpush1.bf16.msra.mxu0 0
    %4887 = vmatprep.subr.bf16.mxu0 0
    %4888 = vmatpush1.bf16.msra.mxu0 0
    %4889 = vmatprep.subr.bf16.mxu0 0
    %4890 = vmatpush1.bf16.msra.mxu0 0
    %4891 = vmatprep.subr.bf16.mxu0 0
    %4892 = vmatpush1.bf16.msra.mxu0 0
    %4893 = vmatprep.subr.bf16.mxu0 0
    %4894 = vmatpush1.bf16.msra.mxu0 0
    %4895 = vmatprep.mubr.bf16.mxu0 0
    %4896 = vmatmul.mubr.bf16.gmra.mrb[0].mxu0 %v4082
    %v4897 = vpop.f32.mrb[0].mxu0
    %v4898 = vadd.f32 %v4857, %v4897
    %v4899 = vpop.f32.mrb[0].mxu0
    %v4900 = vadd.f32 %v4859, %v4899
    %v4901 = vpop.f32.mrb[0].mxu0
    %v4902 = vpop.f32.mrb[0].mxu0
    %4903 = vdwg.mxu0
    %4904 = vmatprep.subr.bf16.mxu0 %v2817
    %4905 = vmatpush1.bf16.msra.mxu0 %v2816
    %4906 = vmatprep.subr.bf16.mxu0 %v2830
    %4907 = vmatpush1.bf16.msra.mxu0 %v2829
    %4908 = vmatprep.subr.bf16.mxu0 %v2843
    %4909 = vmatpush1.bf16.msra.mxu0 %v2842
    %4910 = vmatprep.subr.bf16.mxu0 %v2856
    %4911 = vmatpush1.bf16.msra.mxu0 %v2855
    %4912 = vmatprep.subr.bf16.mxu0 %v2869
    %4913 = vmatpush1.bf16.msra.mxu0 %v2868
    %4914 = vmatprep.subr.bf16.mxu0 %v2882
    %4915 = vmatpush1.bf16.msra.mxu0 %v2881
    %4916 = vmatprep.subr.bf16.mxu0 %v2895
    %4917 = vmatpush1.bf16.msra.mxu0 %v2894
    %4918 = vmatprep.subr.bf16.mxu0 %v2908
    %4919 = vmatpush1.bf16.msra.mxu0 %v2907
    %4920 = vmatprep.subr.bf16.mxu0 %v2921
    %4921 = vmatpush1.bf16.msra.mxu0 %v2920
    %4922 = vmatprep.subr.bf16.mxu0 %v2934
    %4923 = vmatpush1.bf16.msra.mxu0 %v2933
    %4924 = vmatprep.subr.bf16.mxu0 %v2947
    %4925 = vmatpush1.bf16.msra.mxu0 %v2946
    %4926 = vmatprep.subr.bf16.mxu0 %v2960
    %4927 = vmatpush1.bf16.msra.mxu0 %v2959
    %4928 = vmatprep.subr.bf16.mxu0 %v2973
    %4929 = vmatpush1.bf16.msra.mxu0 %v2972
    %4930 = vmatprep.subr.bf16.mxu0 %v2986
    %4931 = vmatpush1.bf16.msra.mxu0 %v2985
    %4932 = vmatprep.subr.bf16.mxu0 %v2999
    %4933 = vmatpush1.bf16.msra.mxu0 %v2998
    %4934 = vmatprep.subr.bf16.mxu0 %v3012
    %4935 = vmatpush1.bf16.msra.mxu0 %v3011
    %4936 = vmatprep.mubr.bf16.mxu0 %v85
    %4937 = vmatmul.mubr.bf16.gmra.mrb[0].mxu0 %v84
    %v4938 = vpop.f32.mrb[0].mxu0
    %v4939 = vadd.f32 %v824, %v4938
    %v4940 = vpop.f32.mrb[0].mxu0
    %v4941 = vadd.f32 %v828, %v4940
    %v4942 = vpop.f32.mrb[0].mxu0
    %v4943 = vpop.f32.mrb[0].mxu0
    %4944 = vdwg.mxu0
    %4945 = vmatprep.subr.bf16.mxu0 %v3025
    %4946 = vmatpush1.bf16.msra.mxu0 %v3024
    %4947 = vmatprep.subr.bf16.mxu0 %v3038
    %4948 = vmatpush1.bf16.msra.mxu0 %v3037
    %4949 = vmatprep.subr.bf16.mxu0 %v3051
    %4950 = vmatpush1.bf16.msra.mxu0 %v3050
    %4951 = vmatprep.subr.bf16.mxu0 %v3064
    %4952 = vmatpush1.bf16.msra.mxu0 %v3063
    %4953 = vmatprep.subr.bf16.mxu0 %v3077
    %4954 = vmatpush1.bf16.msra.mxu0 %v3076
    %4955 = vmatprep.subr.bf16.mxu0 %v3090
    %4956 = vmatpush1.bf16.msra.mxu0 %v3089
    %4957 = vmatprep.subr.bf16.mxu0 %v3103
    %4958 = vmatpush1.bf16.msra.mxu0 %v3102
    %4959 = vmatprep.subr.bf16.mxu0 %v3116
    %4960 = vmatpush1.bf16.msra.mxu0 %v3115
    %4961 = vmatprep.subr.bf16.mxu0 %v3129
    %4962 = vmatpush1.bf16.msra.mxu0 %v3128
    %4963 = vmatprep.subr.bf16.mxu0 %v3142
    %4964 = vmatpush1.bf16.msra.mxu0 %v3141
    %4965 = vmatprep.subr.bf16.mxu0 %v3155
    %4966 = vmatpush1.bf16.msra.mxu0 %v3154
    %4967 = vmatprep.subr.bf16.mxu0 %v3168
    %4968 = vmatpush1.bf16.msra.mxu0 %v3167
    %4969 = vmatprep.subr.bf16.mxu0 %v3181
    %4970 = vmatpush1.bf16.msra.mxu0 %v3180
    %4971 = vmatprep.subr.bf16.mxu0 %v3194
    %4972 = vmatpush1.bf16.msra.mxu0 %v3193
    %4973 = vmatprep.subr.bf16.mxu0 %v3207
    %4974 = vmatpush1.bf16.msra.mxu0 %v3206
    %4975 = vmatprep.subr.bf16.mxu0 %v3220
    %4976 = vmatpush1.bf16.msra.mxu0 %v3219
    %4977 = vmatprep.mubr.bf16.mxu0 %v87
    %4978 = vmatmul.mubr.bf16.gmra.mrb[0].mxu0 %v86
    %v4979 = vpop.f32.mrb[0].mxu0
    %v4980 = vadd.f32 %v4939, %v4979
    %v4981 = vpop.f32.mrb[0].mxu0
    %v4982 = vadd.f32 %v4941, %v4981
    %v4983 = vpop.f32.mrb[0].mxu0
    %v4984 = vpop.f32.mrb[0].mxu0
    %4985 = vdwg.mxu0
    %4986 = vmatprep.subr.bf16.mxu0 %v3233
    %4987 = vmatpush1.bf16.msra.mxu0 %v3232
    %4988 = vmatprep.subr.bf16.mxu0 %v3246
    %4989 = vmatpush1.bf16.msra.mxu0 %v3245
    %4990 = vmatprep.subr.bf16.mxu0 %v3259
    %4991 = vmatpush1.bf16.msra.mxu0 %v3258
    %4992 = vmatprep.subr.bf16.mxu0 %v3272
    %4993 = vmatpush1.bf16.msra.mxu0 %v3271
    %4994 = vmatprep.subr.bf16.mxu0 %v3285
    %4995 = vmatpush1.bf16.msra.mxu0 %v3284
    %4996 = vmatprep.subr.bf16.mxu0 %v3298
    %4997 = vmatpush1.bf16.msra.mxu0 %v3297
    %4998 = vmatprep.subr.bf16.mxu0 %v3311
    %4999 = vmatpush1.bf16.msra.mxu0 %v3310
    %5000 = vmatprep.subr.bf16.mxu0 %v3324
    %5001 = vmatpush1.bf16.msra.mxu0 %v3323
    %5002 = vmatprep.subr.bf16.mxu0 %v3337
    %5003 = vmatpush1.bf16.msra.mxu0 %v3336
    %5004 = vmatprep.subr.bf16.mxu0 %v3350
    %5005 = vmatpush1.bf16.msra.mxu0 %v3349
    %5006 = vmatprep.subr.bf16.mxu0 %v3363
    %5007 = vmatpush1.bf16.msra.mxu0 %v3362
    %5008 = vmatprep.subr.bf16.mxu0 %v3376
    %5009 = vmatpush1.bf16.msra.mxu0 %v3375
    %5010 = vmatprep.subr.bf16.mxu0 %v3389
    %5011 = vmatpush1.bf16.msra.mxu0 %v3388
    %5012 = vmatprep.subr.bf16.mxu0 %v3402
    %5013 = vmatpush1.bf16.msra.mxu0 %v3401
    %5014 = vmatprep.subr.bf16.mxu0 %v3415
    %5015 = vmatpush1.bf16.msra.mxu0 %v3414
    %5016 = vmatprep.subr.bf16.mxu0 %v3428
    %5017 = vmatpush1.bf16.msra.mxu0 %v3427
    %5018 = vmatprep.mubr.bf16.mxu0 %v89
    %5019 = vmatmul.mubr.bf16.gmra.mrb[0].mxu0 %v88
    %v5020 = vpop.f32.mrb[0].mxu0
    %v5021 = vadd.f32 %v4980, %v5020
    %v5022 = vpop.f32.mrb[0].mxu0
    %v5023 = vadd.f32 %v4982, %v5022
    %v5024 = vpop.f32.mrb[0].mxu0
    %v5025 = vpop.f32.mrb[0].mxu0
    %5026 = vdwg.mxu0
    %5027 = vmatprep.subr.bf16.mxu0 %v3441
    %5028 = vmatpush1.bf16.msra.mxu0 %v3440
    %5029 = vmatprep.subr.bf16.mxu0 0
    %5030 = vmatpush1.bf16.msra.mxu0 0
    %5031 = vmatprep.subr.bf16.mxu0 0
    %5032 = vmatpush1.bf16.msra.mxu0 0
    %5033 = vmatprep.subr.bf16.mxu0 0
    %5034 = vmatpush1.bf16.msra.mxu0 0
    %5035 = vmatprep.subr.bf16.mxu0 0
    %5036 = vmatpush1.bf16.msra.mxu0 0
    %5037 = vmatprep.subr.bf16.mxu0 0
    %5038 = vmatpush1.bf16.msra.mxu0 0
    %5039 = vmatprep.subr.bf16.mxu0 0
    %5040 = vmatpush1.bf16.msra.mxu0 0
    %5041 = vmatprep.subr.bf16.mxu0 0
    %5042 = vmatpush1.bf16.msra.mxu0 0
    %5043 = vmatprep.subr.bf16.mxu0 0
    %5044 = vmatpush1.bf16.msra.mxu0 0
    %5045 = vmatprep.subr.bf16.mxu0 0
    %5046 = vmatpush1.bf16.msra.mxu0 0
    %5047 = vmatprep.subr.bf16.mxu0 0
    %5048 = vmatpush1.bf16.msra.mxu0 0
    %5049 = vmatprep.subr.bf16.mxu0 0
    %5050 = vmatpush1.bf16.msra.mxu0 0
    %5051 = vmatprep.subr.bf16.mxu0 0
    %5052 = vmatpush1.bf16.msra.mxu0 0
    %5053 = vmatprep.subr.bf16.mxu0 0
    %5054 = vmatpush1.bf16.msra.mxu0 0
    %5055 = vmatprep.subr.bf16.mxu0 0
    %5056 = vmatpush1.bf16.msra.mxu0 0
    %5057 = vmatprep.subr.bf16.mxu0 0
    %5058 = vmatpush1.bf16.msra.mxu0 0
    %5059 = vmatprep.mubr.bf16.mxu0 0
    %5060 = vmatmul.mubr.bf16.gmra.mrb[0].mxu0 %v4082
    %v5061 = vpop.f32.mrb[0].mxu0
    %v5062 = vadd.f32 %v5021, %v5061
    %v5063 = vpop.f32.mrb[0].mxu0
    %v5064 = vadd.f32 %v5023, %v5063
    %v5065 = vpop.f32.mrb[0].mxu0
    %v5066 = vpop.f32.mrb[0].mxu0
    %5067 = vdwg.mxu0
    %5068 = vmatprep.subr.bf16.mxu0 0
    %5069 = vmatpush1.bf16.msra.mxu0 %v2818
    %5070 = vmatprep.subr.bf16.mxu0 0
    %5071 = vmatpush1.bf16.msra.mxu0 %v2831
    %5072 = vmatprep.subr.bf16.mxu0 0
    %5073 = vmatpush1.bf16.msra.mxu0 %v2844
    %5074 = vmatprep.subr.bf16.mxu0 0
    %5075 = vmatpush1.bf16.msra.mxu0 %v2857
    %5076 = vmatprep.subr.bf16.mxu0 0
    %5077 = vmatpush1.bf16.msra.mxu0 %v2870
    %5078 = vmatprep.subr.bf16.mxu0 0
    %5079 = vmatpush1.bf16.msra.mxu0 %v2883
    %5080 = vmatprep.subr.bf16.mxu0 0
    %5081 = vmatpush1.bf16.msra.mxu0 %v2896
    %5082 = vmatprep.subr.bf16.mxu0 0
    %5083 = vmatpush1.bf16.msra.mxu0 %v2909
    %5084 = vmatprep.subr.bf16.mxu0 0
    %5085 = vmatpush1.bf16.msra.mxu0 %v2922
    %5086 = vmatprep.subr.bf16.mxu0 0
    %5087 = vmatpush1.bf16.msra.mxu0 %v2935
    %5088 = vmatprep.subr.bf16.mxu0 0
    %5089 = vmatpush1.bf16.msra.mxu0 %v2948
    %5090 = vmatprep.subr.bf16.mxu0 0
    %5091 = vmatpush1.bf16.msra.mxu0 %v2961
    %5092 = vmatprep.subr.bf16.mxu0 0
    %5093 = vmatpush1.bf16.msra.mxu0 %v2974
    %5094 = vmatprep.subr.bf16.mxu0 0
    %5095 = vmatpush1.bf16.msra.mxu0 %v2987
    %5096 = vmatprep.subr.bf16.mxu0 0
    %5097 = vmatpush1.bf16.msra.mxu0 %v3000
    %5098 = vmatprep.subr.bf16.mxu0 0
    %5099 = vmatpush1.bf16.msra.mxu0 %v3013
    %5100 = vmatprep.mubr.bf16.mxu0 %v85
    %5101 = vmatmul.mubr.bf16.gmra.mrb[0].mxu0 %v84
    %v5102 = vpop.f32.mrb[0].mxu0
    %v5103 = vadd.f32 %v832, %v5102
    %v5104 = vpop.f32.mrb[0].mxu0
    %v5105 = vpop.f32.mrb[0].mxu0
    %v5106 = vpop.f32.mrb[0].mxu0
    %5107 = vdwg.mxu0
    %5108 = vmatprep.subr.bf16.mxu0 0
    %5109 = vmatpush1.bf16.msra.mxu0 %v3026
    %5110 = vmatprep.subr.bf16.mxu0 0
    %5111 = vmatpush1.bf16.msra.mxu0 %v3039
    %5112 = vmatprep.subr.bf16.mxu0 0
    %5113 = vmatpush1.bf16.msra.mxu0 %v3052
    %5114 = vmatprep.subr.bf16.mxu0 0
    %5115 = vmatpush1.bf16.msra.mxu0 %v3065
    %5116 = vmatprep.subr.bf16.mxu0 0
    %5117 = vmatpush1.bf16.msra.mxu0 %v3078
    %5118 = vmatprep.subr.bf16.mxu0 0
    %5119 = vmatpush1.bf16.msra.mxu0 %v3091
    %5120 = vmatprep.subr.bf16.mxu0 0
    %5121 = vmatpush1.bf16.msra.mxu0 %v3104
    %5122 = vmatprep.subr.bf16.mxu0 0
    %5123 = vmatpush1.bf16.msra.mxu0 %v3117
    %5124 = vmatprep.subr.bf16.mxu0 0
    %5125 = vmatpush1.bf16.msra.mxu0 %v3130
    %5126 = vmatprep.subr.bf16.mxu0 0
    %5127 = vmatpush1.bf16.msra.mxu0 %v3143
    %5128 = vmatprep.subr.bf16.mxu0 0
    %5129 = vmatpush1.bf16.msra.mxu0 %v3156
    %5130 = vmatprep.subr.bf16.mxu0 0
    %5131 = vmatpush1.bf16.msra.mxu0 %v3169
    %5132 = vmatprep.subr.bf16.mxu0 0
    %5133 = vmatpush1.bf16.msra.mxu0 %v3182
    %5134 = vmatprep.subr.bf16.mxu0 0
    %5135 = vmatpush1.bf16.msra.mxu0 %v3195
    %5136 = vmatprep.subr.bf16.mxu0 0
    %5137 = vmatpush1.bf16.msra.mxu0 %v3208
    %5138 = vmatprep.subr.bf16.mxu0 0
    %5139 = vmatpush1.bf16.msra.mxu0 %v3221
    %5140 = vmatprep.mubr.bf16.mxu0 %v87
    %5141 = vmatmul.mubr.bf16.gmra.mrb[0].mxu0 %v86
    %v5142 = vpop.f32.mrb[0].mxu0
    %v5143 = vadd.f32 %v5103, %v5142
    %v5144 = vpop.f32.mrb[0].mxu0
    %v5145 = vpop.f32.mrb[0].mxu0
    %v5146 = vpop.f32.mrb[0].mxu0
    %5147 = vdwg.mxu0
    %5148 = vmatprep.subr.bf16.mxu0 0
    %5149 = vmatpush1.bf16.msra.mxu0 %v3234
    %5150 = vmatprep.subr.bf16.mxu0 0
    %5151 = vmatpush1.bf16.msra.mxu0 %v3247
    %5152 = vmatprep.subr.bf16.mxu0 0
    %5153 = vmatpush1.bf16.msra.mxu0 %v3260
    %5154 = vmatprep.subr.bf16.mxu0 0
    %5155 = vmatpush1.bf16.msra.mxu0 %v3273
    %5156 = vmatprep.subr.bf16.mxu0 0
    %5157 = vmatpush1.bf16.msra.mxu0 %v3286
    %5158 = vmatprep.subr.bf16.mxu0 0
    %5159 = vmatpush1.bf16.msra.mxu0 %v3299
    %5160 = vmatprep.subr.bf16.mxu0 0
    %5161 = vmatpush1.bf16.msra.mxu0 %v3312
    %5162 = vmatprep.subr.bf16.mxu0 0
    %5163 = vmatpush1.bf16.msra.mxu0 %v3325
    %5164 = vmatprep.subr.bf16.mxu0 0
    %5165 = vmatpush1.bf16.msra.mxu0 %v3338
    %5166 = vmatprep.subr.bf16.mxu0 0
    %5167 = vmatpush1.bf16.msra.mxu0 %v3351
    %5168 = vmatprep.subr.bf16.mxu0 0
    %5169 = vmatpush1.bf16.msra.mxu0 %v3364
    %5170 = vmatprep.subr.bf16.mxu0 0
    %5171 = vmatpush1.bf16.msra.mxu0 %v3377
    %5172 = vmatprep.subr.bf16.mxu0 0
    %5173 = vmatpush1.bf16.msra.mxu0 %v3390
    %5174 = vmatprep.subr.bf16.mxu0 0
    %5175 = vmatpush1.bf16.msra.mxu0 %v3403
    %5176 = vmatprep.subr.bf16.mxu0 0
    %5177 = vmatpush1.bf16.msra.mxu0 %v3416
    %5178 = vmatprep.subr.bf16.mxu0 0
    %5179 = vmatpush1.bf16.msra.mxu0 %v3429
    %5180 = vmatprep.mubr.bf16.mxu0 %v89
    %5181 = vmatmul.mubr.bf16.gmra.mrb[0].mxu0 %v88
    %v5182 = vpop.f32.mrb[0].mxu0
    %v5183 = vadd.f32 %v5143, %v5182
    %v5184 = vpop.f32.mrb[0].mxu0
    %v5185 = vpop.f32.mrb[0].mxu0
    %v5186 = vpop.f32.mrb[0].mxu0
    %5187 = vdwg.mxu0
    %5188 = vmatprep.subr.bf16.mxu0 0
    %5189 = vmatpush1.bf16.msra.mxu0 %v3442
    %5190 = vmatprep.subr.bf16.mxu0 0
    %5191 = vmatpush1.bf16.msra.mxu0 0
    %5192 = vmatprep.subr.bf16.mxu0 0
    %5193 = vmatpush1.bf16.msra.mxu0 0
    %5194 = vmatprep.subr.bf16.mxu0 0
    %5195 = vmatpush1.bf16.msra.mxu0 0
    %5196 = vmatprep.subr.bf16.mxu0 0
    %5197 = vmatpush1.bf16.msra.mxu0 0
    %5198 = vmatprep.subr.bf16.mxu0 0
    %5199 = vmatpush1.bf16.msra.mxu0 0
    %5200 = vmatprep.subr.bf16.mxu0 0
    %5201 = vmatpush1.bf16.msra.mxu0 0
    %5202 = vmatprep.subr.bf16.mxu0 0
    %5203 = vmatpush1.bf16.msra.mxu0 0
    %5204 = vmatprep.subr.bf16.mxu0 0
    %5205 = vmatpush1.bf16.msra.mxu0 0
    %5206 = vmatprep.subr.bf16.mxu0 0
    %5207 = vmatpush1.bf16.msra.mxu0 0
    %5208 = vmatprep.subr.bf16.mxu0 0
    %5209 = vmatpush1.bf16.msra.mxu0 0
    %5210 = vmatprep.subr.bf16.mxu0 0
    %5211 = vmatpush1.bf16.msra.mxu0 0
    %5212 = vmatprep.subr.bf16.mxu0 0
    %5213 = vmatpush1.bf16.msra.mxu0 0
    %5214 = vmatprep.subr.bf16.mxu0 0
    %5215 = vmatpush1.bf16.msra.mxu0 0
    %5216 = vmatprep.subr.bf16.mxu0 0
    %5217 = vmatpush1.bf16.msra.mxu0 0
    %5218 = vmatprep.subr.bf16.mxu0 0
    %5219 = vmatpush1.bf16.msra.mxu0 0
    %5220 = vmatprep.mubr.bf16.mxu0 0
    %5221 = vmatmul.mubr.bf16.gmra.mrb[0].mxu0 %v4082
    %v5222 = vpop.f32.mrb[0].mxu0
    %v5223 = vadd.f32 %v5183, %v5222
    %v5224 = vpop.f32.mrb[0].mxu0
    %v5225 = vpop.f32.mrb[0].mxu0
    %v5226 = vpop.f32.mrb[0].mxu0
    %5227 = vdwg.mxu0
    %v5228 = vmax.f32 %v4242, 0.0
    %v5229 = vmax.f32 %v4244, 0.0
    %v5230 = vmax.f32 %v4406, 0.0
    %v5231 = vmax.f32 %v4408, 0.0
    %v5232 = vmax.f32 %v4570, 0.0
    %v5233 = vmax.f32 %v4572, 0.0
    %v5234 = vmax.f32 %v4734, 0.0
    %v5235 = vmax.f32 %v4736, 0.0
    %v5236 = vmax.f32 %v4898, 0.0
    %v5237 = vmax.f32 %v4900, 0.0
    %v5238 = vmax.f32 %v5062, 0.0
    %v5239 = vmax.f32 %v5064, 0.0
    %v5240 = vmax.f32 %v5223, 0.0
    %v5241 = vpack.c.bf16 %v5228, %v5228
    %v5242 = vpack.c.bf16 %v5229, %v5229
    %v5243 = vpack.c.bf16 %v5230, %v5230
    %v5244 = vpack.c.bf16 %v5231, %v5231
    %v5245 = vpack.c.bf16 %v5232, %v5232
    %v5246 = vpack.c.bf16 %v5233, %v5233
    %v5247 = vpack.c.bf16 %v5234, %v5234
    %v5248 = vpack.c.bf16 %v5235, %v5235
    %v5249 = vpack.c.bf16 %v5236, %v5236
    %v5250 = vpack.c.bf16 %v5237, %v5237
    %v5251 = vpack.c.bf16 %v5238, %v5238
    %v5252 = vpack.c.bf16 %v5239, %v5239
    %v5253 = vpack.c.bf16 %v5240, %v5240
    %v5254 = vld [vmem:[%s3] sm:$0xff]
    %v5255 = vld [vmem:[%s3 + $0x8] sm:$0xff]
    %v5256 = vld [vmem:[%s3 + $0x10] sm:$0xff]
    %v5257 = vld [vmem:[%s3 + $0x18] sm:$0xf]
    %v5258 = vld [vmem:[%s3 + $0x1c] sm:$0xff]
    %v5259 = vld [vmem:[%s3 + $0x24] sm:$0xff]
    %v5260 = vld [vmem:[%s3 + $0x2c] sm:$0xff]
    %v5261 = vld [vmem:[%s3 + $0x34] sm:$0xf]
    %v5262 = vld [vmem:[%s3 + $0x38] sm:$0xff]
    %v5263 = vld [vmem:[%s3 + $0x40] sm:$0xff]
    %v5264 = vld [vmem:[%s3 + $0x48] sm:$0xff]
    %v5265 = vld [vmem:[%s3 + $0x50] sm:$0xf]
    %v5266 = vld [vmem:[%s3 + $0x54] sm:$0xff]
    %v5267 = vld [vmem:[%s3 + $0x5c] sm:$0xff]
    %v5268 = vld [vmem:[%s3 + $0x64] sm:$0xff]
    %v5269 = vld [vmem:[%s3 + $0x6c] sm:$0xf]
    %v5270 = vld [vmem:[%s3 + $0x70] sm:$0xff]
    %v5271 = vld [vmem:[%s3 + $0x78] sm:$0xff]
    %v5272 = vld [vmem:[%s3 + $0x80] sm:$0xff]
    %v5273 = vld [vmem:[%s3 + $0x88] sm:$0xf]
    %v5274 = vld [vmem:[%s3 + $0x8c] sm:$0xff]
    %v5275 = vld [vmem:[%s3 + $0x94] sm:$0xff]
    %v5276 = vld [vmem:[%s3 + $0x9c] sm:$0xff]
    %v5277 = vld [vmem:[%s3 + $0xa4] sm:$0xf]
    %v5278 = vld [vmem:[%s3 + $0xa8] sm:$0xff]
    %v5279 = vld [vmem:[%s3 + $0xb0] sm:$0xff]
    %v5280 = vld [vmem:[%s3 + $0xb8] sm:$0xff]
    %v5281 = vld [vmem:[%s3 + $0xc0] sm:$0xf]
    %v5282 = vld [vmem:[%s3 + $0xc4] sm:$0xff]
    %v5283 = vld [vmem:[%s3 + $0xcc] sm:$0xff]
    %v5284 = vld [vmem:[%s3 + $0xd4] sm:$0xff]
    %v5285 = vld [vmem:[%s3 + $0xdc] sm:$0xf]
    %v5286 = vld [vmem:[%s3 + $0xe0] sm:$0xff]
    %v5287 = vld [vmem:[%s3 + $0xe8] sm:$0xff]
    %v5288 = vld [vmem:[%s3 + $0xf0] sm:$0xff]
    %v5289 = vld [vmem:[%s3 + $0xf8] sm:$0xf]
    %v5290 = vld [vmem:[%s3 + $0xfc] sm:$0xff]
    %v5291 = vld [vmem:[%s3 + $0x104] sm:$0xff]
    %v5292 = vld [vmem:[%s3 + $0x10c] sm:$0xff]
    %v5293 = vld [vmem:[%s3 + $0x114] sm:$0xf]
    %v5294 = vld [vmem:[%s3 + $0x118] sm:$0xff]
    %v5295 = vld [vmem:[%s3 + $0x120] sm:$0xff]
    %v5296 = vld [vmem:[%s3 + $0x128] sm:$0xff]
    %v5297 = vld [vmem:[%s3 + $0x130] sm:$0xf]
    %v5298 = vld [vmem:[%s3 + $0x134] sm:$0xff]
    %v5299 = vld [vmem:[%s3 + $0x13c] sm:$0xff]
    %v5300 = vld [vmem:[%s3 + $0x144] sm:$0xff]
    %v5301 = vld [vmem:[%s3 + $0x14c] sm:$0xf]
    %v5302 = vld [vmem:[%s3 + $0x150] sm:$0xff]
    %v5303 = vld [vmem:[%s3 + $0x158] sm:$0xff]
    %v5304 = vld [vmem:[%s3 + $0x160] sm:$0xff]
    %v5305 = vld [vmem:[%s3 + $0x168] sm:$0xf]
    %v5306 = vld [vmem:[%s3 + $0x16c] sm:$0xff]
    %v5307 = vld [vmem:[%s3 + $0x174] sm:$0xff]
    %v5308 = vld [vmem:[%s3 + $0x17c] sm:$0xff]
    %v5309 = vld [vmem:[%s3 + $0x184] sm:$0xf]
    %v5310 = vld [vmem:[%s3 + $0x188] sm:$0xff]
    %v5311 = vld [vmem:[%s3 + $0x190] sm:$0xff]
    %v5312 = vld [vmem:[%s3 + $0x198] sm:$0xff]
    %v5313 = vld [vmem:[%s3 + $0x1a0] sm:$0xf]
    %v5314 = vld [vmem:[%s3 + $0x1a4] sm:$0xff]
    %v5315 = vld [vmem:[%s3 + $0x1ac] sm:$0xff]
    %v5316 = vld [vmem:[%s3 + $0x1b4] sm:$0xff]
    %v5317 = vld [vmem:[%s3 + $0x1bc] sm:$0xf]
    %v5318 = vld [vmem:[%s3 + $0x1c0] sm:$0xff]
    %v5319 = vld [vmem:[%s3 + $0x1c8] sm:$0xff]
    %v5320 = vld [vmem:[%s3 + $0x1d0] sm:$0xff]
    %v5321 = vld [vmem:[%s3 + $0x1d8] sm:$0xf]
    %v5322 = vld [vmem:[%s3 + $0x1dc] sm:$0xff]
    %v5323 = vld [vmem:[%s3 + $0x1e4] sm:$0xff]
    %v5324 = vld [vmem:[%s3 + $0x1ec] sm:$0xff]
    %v5325 = vld [vmem:[%s3 + $0x1f4] sm:$0xf]
    %v5326 = vld [vmem:[%s3 + $0x1f8] sm:$0xff]
    %v5327 = vld [vmem:[%s3 + $0x200] sm:$0xff]
    %v5328 = vld [vmem:[%s3 + $0x208] sm:$0xff]
    %v5329 = vld [vmem:[%s3 + $0x210] sm:$0xf]
    %v5330 = vld [vmem:[%s3 + $0x214] sm:$0xff]
    %v5331 = vld [vmem:[%s3 + $0x21c] sm:$0xff]
    %v5332 = vld [vmem:[%s3 + $0x224] sm:$0xff]
    %v5333 = vld [vmem:[%s3 + $0x22c] sm:$0xf]
    %v5334 = vld [vmem:[%s3 + $0x230] sm:$0xff]
    %v5335 = vld [vmem:[%s3 + $0x238] sm:$0xff]
    %v5336 = vld [vmem:[%s3 + $0x240] sm:$0xff]
    %v5337 = vld [vmem:[%s3 + $0x248] sm:$0xf]
    %v5338 = vld [vmem:[%s3 + $0x24c] sm:$0xff]
    %v5339 = vld [vmem:[%s3 + $0x254] sm:$0xff]
    %v5340 = vld [vmem:[%s3 + $0x25c] sm:$0xff]
    %v5341 = vld [vmem:[%s3 + $0x264] sm:$0xf]
    %v5342 = vld [vmem:[%s3 + $0x268] sm:$0xff]
    %v5343 = vld [vmem:[%s3 + $0x270] sm:$0xff]
    %v5344 = vld [vmem:[%s3 + $0x278] sm:$0xff]
    %v5345 = vld [vmem:[%s3 + $0x280] sm:$0xf]
    %v5346 = vld [vmem:[%s3 + $0x284] sm:$0xff]
    %v5347 = vld [vmem:[%s3 + $0x28c] sm:$0xff]
    %v5348 = vld [vmem:[%s3 + $0x294] sm:$0xff]
    %v5349 = vld [vmem:[%s3 + $0x29c] sm:$0xf]
    %v5350 = vld [vmem:[%s3 + $0x2a0] sm:$0xff]
    %v5351 = vld [vmem:[%s3 + $0x2a8] sm:$0xff]
    %v5352 = vld [vmem:[%s3 + $0x2b0] sm:$0xff]
    %v5353 = vld [vmem:[%s3 + $0x2b8] sm:$0xf]
    %v5354 = vld [vmem:[%s3 + $0x2bc] sm:$0xff]
    %v5355 = vld [vmem:[%s3 + $0x2c4] sm:$0xff]
    %v5356 = vld [vmem:[%s3 + $0x2cc] sm:$0xff]
    %v5357 = vld [vmem:[%s3 + $0x2d4] sm:$0xf]
    %v5358 = vld [vmem:[%s3 + $0x2d8] sm:$0xff]
    %v5359 = vld [vmem:[%s3 + $0x2e0] sm:$0xff]
    %v5360 = vld [vmem:[%s3 + $0x2e8] sm:$0xff]
    %v5361 = vld [vmem:[%s3 + $0x2f0] sm:$0xf]
    %v5362 = vld [vmem:[%s3 + $0x2f4] sm:$0xff]
    %v5363 = vld [vmem:[%s3 + $0x2fc] sm:$0xff]
    %v5364 = vld [vmem:[%s3 + $0x304] sm:$0xff]
    %v5365 = vld [vmem:[%s3 + $0x30c] sm:$0xf]
    %v5366 = vld [vmem:[%s3 + $0x310] sm:$0xff]
    %v5367 = vld [vmem:[%s3 + $0x318] sm:$0xff]
    %v5368 = vld [vmem:[%s3 + $0x320] sm:$0xff]
    %v5369 = vld [vmem:[%s3 + $0x328] sm:$0xf]
    %v5370 = vld [vmem:[%s3 + $0x32c] sm:$0xff]
    %v5371 = vld [vmem:[%s3 + $0x334] sm:$0xff]
    %v5372 = vld [vmem:[%s3 + $0x33c] sm:$0xff]
    %v5373 = vld [vmem:[%s3 + $0x344] sm:$0xf]
    %v5374 = vld [vmem:[%s3 + $0x348] sm:$0xff]
    %v5375 = vld [vmem:[%s3 + $0x350] sm:$0xff]
    %v5376 = vld [vmem:[%s3 + $0x358] sm:$0xff]
    %v5377 = vld [vmem:[%s3 + $0x360] sm:$0xf]
    %v5378 = vld [vmem:[%s3 + $0x364] sm:$0xff]
    %v5379 = vld [vmem:[%s3 + $0x36c] sm:$0xff]
    %v5380 = vld [vmem:[%s3 + $0x374] sm:$0xff]
    %v5381 = vld [vmem:[%s3 + $0x37c] sm:$0xf]
    %v5382 = vld [vmem:[%s3 + $0x380] sm:$0xff]
    %v5383 = vld [vmem:[%s3 + $0x388] sm:$0xff]
    %v5384 = vld [vmem:[%s3 + $0x390] sm:$0xff]
    %v5385 = vld [vmem:[%s3 + $0x398] sm:$0xf]
    %v5386 = vld [vmem:[%s3 + $0x39c] sm:$0xff]
    %v5387 = vld [vmem:[%s3 + $0x3a4] sm:$0xff]
    %v5388 = vld [vmem:[%s3 + $0x3ac] sm:$0xff]
    %v5389 = vld [vmem:[%s3 + $0x3b4] sm:$0xf]
    %v5390 = vld [vmem:[%s3 + $0x3b8] sm:$0xff]
    %v5391 = vld [vmem:[%s3 + $0x3c0] sm:$0xff]
    %v5392 = vld [vmem:[%s3 + $0x3c8] sm:$0xff]
    %v5393 = vld [vmem:[%s3 + $0x3d0] sm:$0xf]
    %v5394 = vld [vmem:[%s3 + $0x3d4] sm:$0xff]
    %v5395 = vld [vmem:[%s3 + $0x3dc] sm:$0xff]
    %v5396 = vld [vmem:[%s3 + $0x3e4] sm:$0xff]
    %v5397 = vld [vmem:[%s3 + $0x3ec] sm:$0xf]
    %v5398 = vld [vmem:[%s3 + $0x3f0] sm:$0xff]
    %v5399 = vld [vmem:[%s3 + $0x3f8] sm:$0xff]
    %v5400 = vld [vmem:[%s3 + $0x400] sm:$0xff]
    %v5401 = vld [vmem:[%s3 + $0x408] sm:$0xf]
    %v5402 = vld [vmem:[%s3 + $0x40c] sm:$0xff]
    %v5403 = vld [vmem:[%s3 + $0x414] sm:$0xff]
    %v5404 = vld [vmem:[%s3 + $0x41c] sm:$0xff]
    %v5405 = vld [vmem:[%s3 + $0x424] sm:$0xf]
    %v5406 = vld [vmem:[%s3 + $0x428] sm:$0xff]
    %v5407 = vld [vmem:[%s3 + $0x430] sm:$0xff]
    %v5408 = vld [vmem:[%s3 + $0x438] sm:$0xff]
    %v5409 = vld [vmem:[%s3 + $0x440] sm:$0xf]
    %v5410 = vld [vmem:[%s3 + $0x444] sm:$0xff]
    %v5411 = vld [vmem:[%s3 + $0x44c] sm:$0xff]
    %v5412 = vld [vmem:[%s3 + $0x454] sm:$0xff]
    %v5413 = vld [vmem:[%s3 + $0x45c] sm:$0xf]
    %v5414 = vld [vmem:[%s3 + $0x460] sm:$0xff]
    %v5415 = vld [vmem:[%s3 + $0x468] sm:$0xff]
    %v5416 = vld [vmem:[%s3 + $0x470] sm:$0xff]
    %v5417 = vld [vmem:[%s3 + $0x478] sm:$0xf]
    %v5418 = vld [vmem:[%s3 + $0x47c] sm:$0xff]
    %v5419 = vld [vmem:[%s3 + $0x484] sm:$0xff]
    %v5420 = vld [vmem:[%s3 + $0x48c] sm:$0xff]
    %v5421 = vld [vmem:[%s3 + $0x494] sm:$0xf]
    %v5422 = vld [vmem:[%s3 + $0x498] sm:$0xff]
    %v5423 = vld [vmem:[%s3 + $0x4a0] sm:$0xff]
    %v5424 = vld [vmem:[%s3 + $0x4a8] sm:$0xff]
    %v5425 = vld [vmem:[%s3 + $0x4b0] sm:$0xf]
    %v5426 = vld [vmem:[%s3 + $0x4b4] sm:$0xff]
    %v5427 = vld [vmem:[%s3 + $0x4bc] sm:$0xff]
    %v5428 = vld [vmem:[%s3 + $0x4c4] sm:$0xff]
    %v5429 = vld [vmem:[%s3 + $0x4cc] sm:$0xf]
    %v5430 = vld [vmem:[%s3 + $0x4d0] sm:$0xff]
    %v5431 = vld [vmem:[%s3 + $0x4d8] sm:$0xff]
    %v5432 = vld [vmem:[%s3 + $0x4e0] sm:$0xff]
    %v5433 = vld [vmem:[%s3 + $0x4e8] sm:$0xf]
    %v5434 = vld [vmem:[%s3 + $0x4ec] sm:$0xff]
    %v5435 = vld [vmem:[%s3 + $0x4f4] sm:$0xff]
    %v5436 = vld [vmem:[%s3 + $0x4fc] sm:$0xff]
    %v5437 = vld [vmem:[%s3 + $0x504] sm:$0xf]
    %v5438 = vld [vmem:[%s3 + $0x508] sm:$0xff]
    %v5439 = vld [vmem:[%s3 + $0x510] sm:$0xff]
    %v5440 = vld [vmem:[%s3 + $0x518] sm:$0xff]
    %v5441 = vld [vmem:[%s3 + $0x520] sm:$0xf]
    %v5442 = vld [vmem:[%s3 + $0x524] sm:$0xff]
    %v5443 = vld [vmem:[%s3 + $0x52c] sm:$0xff]
    %v5444 = vld [vmem:[%s3 + $0x534] sm:$0xff]
    %v5445 = vld [vmem:[%s3 + $0x53c] sm:$0xf]
    %v5446 = vld [vmem:[%s3 + $0x540] sm:$0xff]
    %v5447 = vld [vmem:[%s3 + $0x548] sm:$0xff]
    %v5448 = vld [vmem:[%s3 + $0x550] sm:$0xff]
    %v5449 = vld [vmem:[%s3 + $0x558] sm:$0xf]
    %v5450 = vld [vmem:[%s3 + $0x55c] sm:$0xff]
    %v5451 = vld [vmem:[%s3 + $0x564] sm:$0xff]
    %v5452 = vld [vmem:[%s3 + $0x56c] sm:$0xff]
    %v5453 = vld [vmem:[%s3 + $0x574] sm:$0xf]
    %v5454 = vld [vmem:[%s3 + $0x578] sm:$0xff]
    %v5455 = vld [vmem:[%s3 + $0x580] sm:$0xff]
    %v5456 = vld [vmem:[%s3 + $0x588] sm:$0xff]
    %v5457 = vld [vmem:[%s3 + $0x590] sm:$0xf]
    %v5458 = vld [vmem:[%s3 + $0x594] sm:$0xff]
    %v5459 = vld [vmem:[%s3 + $0x59c] sm:$0xff]
    %v5460 = vld [vmem:[%s3 + $0x5a4] sm:$0xff]
    %v5461 = vld [vmem:[%s3 + $0x5ac] sm:$0xf]
    %v5462 = vld [vmem:[%s3 + $0x5b0] sm:$0xff]
    %v5463 = vld [vmem:[%s3 + $0x5b8] sm:$0xff]
    %v5464 = vld [vmem:[%s3 + $0x5c0] sm:$0xff]
    %v5465 = vld [vmem:[%s3 + $0x5c8] sm:$0xf]
    %v5466 = vld [vmem:[%s3 + $0x5cc] sm:$0xff]
    %v5467 = vld [vmem:[%s3 + $0x5d4] sm:$0xff]
    %v5468 = vld [vmem:[%s3 + $0x5dc] sm:$0xff]
    %v5469 = vld [vmem:[%s3 + $0x5e4] sm:$0xf]
    %v5470 = vld [vmem:[%s3 + $0x5e8] sm:$0xff]
    %v5471 = vld [vmem:[%s3 + $0x5f0] sm:$0xff]
    %v5472 = vld [vmem:[%s3 + $0x5f8] sm:$0xff]
    %v5473 = vld [vmem:[%s3 + $0x600] sm:$0xf]
    %v5474 = vld [vmem:[%s3 + $0x604] sm:$0xff]
    %v5475 = vld [vmem:[%s3 + $0x60c] sm:$0xff]
    %v5476 = vld [vmem:[%s3 + $0x614] sm:$0xff]
    %v5477 = vld [vmem:[%s3 + $0x61c] sm:$0xf]
    %v5478 = vld [vmem:[%s3 + $0x620] sm:$0xff]
    %v5479 = vld [vmem:[%s3 + $0x628] sm:$0xff]
    %v5480 = vld [vmem:[%s3 + $0x630] sm:$0xff]
    %v5481 = vld [vmem:[%s3 + $0x638] sm:$0xf]
    %v5482 = vld [vmem:[%s3 + $0x63c] sm:$0xff]
    %v5483 = vld [vmem:[%s3 + $0x644] sm:$0xff]
    %v5484 = vld [vmem:[%s3 + $0x64c] sm:$0xff]
    %v5485 = vld [vmem:[%s3 + $0x654] sm:$0xf]
    %v5486 = vld [vmem:[%s3 + $0x658] sm:$0xff]
    %v5487 = vld [vmem:[%s3 + $0x660] sm:$0xff]
    %v5488 = vld [vmem:[%s3 + $0x668] sm:$0xff]
    %v5489 = vld [vmem:[%s3 + $0x670] sm:$0xf]
    %v5490 = vld [vmem:[%s3 + $0x674] sm:$0xff]
    %v5491 = vld [vmem:[%s3 + $0x67c] sm:$0xff]
    %v5492 = vld [vmem:[%s3 + $0x684] sm:$0xff]
    %v5493 = vld [vmem:[%s3 + $0x68c] sm:$0xf]
    %v5494 = vld [vmem:[%s3 + $0x690] sm:$0xff]
    %v5495 = vld [vmem:[%s3 + $0x698] sm:$0xff]
    %v5496 = vld [vmem:[%s3 + $0x6a0] sm:$0xff]
    %v5497 = vld [vmem:[%s3 + $0x6a8] sm:$0xf]
    %v5498 = vld [vmem:[%s3 + $0x6ac] sm:$0xff]
    %v5499 = vld [vmem:[%s3 + $0x6b4] sm:$0xff]
    %v5500 = vld [vmem:[%s3 + $0x6bc] sm:$0xff]
    %v5501 = vld [vmem:[%s3 + $0x6c4] sm:$0xf]
    %v5502 = vld [vmem:[%s3 + $0x6c8] sm:$0xff]
    %v5503 = vld [vmem:[%s3 + $0x6d0] sm:$0xff]
    %v5504 = vld [vmem:[%s3 + $0x6d8] sm:$0xff]
    %v5505 = vld [vmem:[%s3 + $0x6e0] sm:$0xf]
    %v5506 = vld [vmem:[%s3 + $0x6e4] sm:$0xff]
    %v5507 = vld [vmem:[%s3 + $0x6ec] sm:$0xff]
    %v5508 = vld [vmem:[%s3 + $0x6f4] sm:$0xff]
    %v5509 = vld [vmem:[%s3 + $0x6fc] sm:$0xf]
    %v5510 = vld [vmem:[%s3 + $0x700] sm:$0xff]
    %v5511 = vld [vmem:[%s3 + $0x708] sm:$0xff]
    %v5512 = vld [vmem:[%s3 + $0x710] sm:$0xff]
    %v5513 = vld [vmem:[%s3 + $0x718] sm:$0xf]
    %v5514 = vld [vmem:[%s3 + $0x71c] sm:$0xff]
    %v5515 = vld [vmem:[%s3 + $0x724] sm:$0xff]
    %v5516 = vld [vmem:[%s3 + $0x72c] sm:$0xff]
    %v5517 = vld [vmem:[%s3 + $0x734] sm:$0xf]
    %v5518 = vld [vmem:[%s3 + $0x738] sm:$0xff]
    %v5519 = vld [vmem:[%s3 + $0x740] sm:$0xff]
    %v5520 = vld [vmem:[%s3 + $0x748] sm:$0xff]
    %v5521 = vld [vmem:[%s3 + $0x750] sm:$0xf]
    %v5522 = vld [vmem:[%s3 + $0x754] sm:$0xff]
    %v5523 = vld [vmem:[%s3 + $0x75c] sm:$0xff]
    %v5524 = vld [vmem:[%s3 + $0x764] sm:$0xff]
    %v5525 = vld [vmem:[%s3 + $0x76c] sm:$0xf]
    %v5526 = vld [vmem:[%s3 + $0x770] sm:$0xff]
    %v5527 = vld [vmem:[%s3 + $0x778] sm:$0xff]
    %v5528 = vld [vmem:[%s3 + $0x780] sm:$0xff]
    %v5529 = vld [vmem:[%s3 + $0x788] sm:$0xf]
    %v5530 = vld [vmem:[%s3 + $0x78c] sm:$0xff]
    %v5531 = vld [vmem:[%s3 + $0x794] sm:$0xff]
    %v5532 = vld [vmem:[%s3 + $0x79c] sm:$0xff]
    %v5533 = vld [vmem:[%s3 + $0x7a4] sm:$0xf]
    %v5534 = vld [vmem:[%s3 + $0x7a8] sm:$0xff]
    %v5535 = vld [vmem:[%s3 + $0x7b0] sm:$0xff]
    %v5536 = vld [vmem:[%s3 + $0x7b8] sm:$0xff]
    %v5537 = vld [vmem:[%s3 + $0x7c0] sm:$0xf]
    %v5538 = vld [vmem:[%s3 + $0x7c4] sm:$0xff]
    %v5539 = vld [vmem:[%s3 + $0x7cc] sm:$0xff]
    %v5540 = vld [vmem:[%s3 + $0x7d4] sm:$0xff]
    %v5541 = vld [vmem:[%s3 + $0x7dc] sm:$0xf]
    %v5542 = vld [vmem:[%s3 + $0x7e0] sm:$0xff]
    %v5543 = vld [vmem:[%s3 + $0x7e8] sm:$0xff]
    %v5544 = vld [vmem:[%s3 + $0x7f0] sm:$0xff]
    %v5545 = vld [vmem:[%s3 + $0x7f8] sm:$0xf]
    %v5546 = vld [vmem:[%s3 + $0x7fc] sm:$0xff]
    %v5547 = vld [vmem:[%s3 + $0x804] sm:$0xff]
    %v5548 = vld [vmem:[%s3 + $0x80c] sm:$0xff]
    %v5549 = vld [vmem:[%s3 + $0x814] sm:$0xf]
    %v5550 = vld [vmem:[%s3 + $0x818] sm:$0xff]
    %v5551 = vld [vmem:[%s3 + $0x820] sm:$0xff]
    %v5552 = vld [vmem:[%s3 + $0x828] sm:$0xff]
    %v5553 = vld [vmem:[%s3 + $0x830] sm:$0xf]
    %v5554 = vld [vmem:[%s3 + $0x834] sm:$0xff]
    %v5555 = vld [vmem:[%s3 + $0x83c] sm:$0xff]
    %v5556 = vld [vmem:[%s3 + $0x844] sm:$0xff]
    %v5557 = vld [vmem:[%s3 + $0x84c] sm:$0xf]
    %v5558 = vld [vmem:[%s3 + $0x850] sm:$0xff]
    %v5559 = vld [vmem:[%s3 + $0x858] sm:$0xff]
    %v5560 = vld [vmem:[%s3 + $0x860] sm:$0xff]
    %v5561 = vld [vmem:[%s3 + $0x868] sm:$0xf]
    %v5562 = vld [vmem:[%s3 + $0x86c] sm:$0xff]
    %v5563 = vld [vmem:[%s3 + $0x874] sm:$0xff]
    %v5564 = vld [vmem:[%s3 + $0x87c] sm:$0xff]
    %v5565 = vld [vmem:[%s3 + $0x884] sm:$0xf]
    %v5566 = vld [vmem:[%s3 + $0x888] sm:$0xff]
    %v5567 = vld [vmem:[%s3 + $0x890] sm:$0xff]
    %v5568 = vld [vmem:[%s3 + $0x898] sm:$0xff]
    %v5569 = vld [vmem:[%s3 + $0x8a0] sm:$0xf]
    %v5570 = vld [vmem:[%s3 + $0x8a4] sm:$0xff]
    %v5571 = vld [vmem:[%s3 + $0x8ac] sm:$0xff]
    %v5572 = vld [vmem:[%s3 + $0x8b4] sm:$0xff]
    %v5573 = vld [vmem:[%s3 + $0x8bc] sm:$0xf]
    %v5574 = vld [vmem:[%s3 + $0x8c0] sm:$0xff]
    %v5575 = vld [vmem:[%s3 + $0x8c8] sm:$0xff]
    %v5576 = vld [vmem:[%s3 + $0x8d0] sm:$0xff]
    %v5577 = vld [vmem:[%s3 + $0x8d8] sm:$0xf]
    %v5578 = vld [vmem:[%s3 + $0x8dc] sm:$0xff]
    %v5579 = vld [vmem:[%s3 + $0x8e4] sm:$0xff]
    %v5580 = vld [vmem:[%s3 + $0x8ec] sm:$0xff]
    %v5581 = vld [vmem:[%s3 + $0x8f4] sm:$0xf]
    %v5582 = vld [vmem:[%s3 + $0x8f8] sm:$0xff]
    %v5583 = vld [vmem:[%s3 + $0x900] sm:$0xff]
    %v5584 = vld [vmem:[%s3 + $0x908] sm:$0xff]
    %v5585 = vld [vmem:[%s3 + $0x910] sm:$0xf]
    %v5586 = vld [vmem:[%s3 + $0x914] sm:$0xff]
    %v5587 = vld [vmem:[%s3 + $0x91c] sm:$0xff]
    %v5588 = vld [vmem:[%s3 + $0x924] sm:$0xff]
    %v5589 = vld [vmem:[%s3 + $0x92c] sm:$0xf]
    %v5590 = vld [vmem:[%s3 + $0x930] sm:$0xff]
    %v5591 = vld [vmem:[%s3 + $0x938] sm:$0xff]
    %v5592 = vld [vmem:[%s3 + $0x940] sm:$0xff]
    %v5593 = vld [vmem:[%s3 + $0x948] sm:$0xf]
    %v5594 = vld [vmem:[%s3 + $0x94c] sm:$0xff]
    %v5595 = vld [vmem:[%s3 + $0x954] sm:$0xff]
    %v5596 = vld [vmem:[%s3 + $0x95c] sm:$0xff]
    %v5597 = vld [vmem:[%s3 + $0x964] sm:$0xf]
    %v5598 = vld [vmem:[%s3 + $0x968] sm:$0xff]
    %v5599 = vld [vmem:[%s3 + $0x970] sm:$0xff]
    %v5600 = vld [vmem:[%s3 + $0x978] sm:$0xff]
    %v5601 = vld [vmem:[%s3 + $0x980] sm:$0xf]
    %v5602 = vld [vmem:[%s3 + $0x984] sm:$0xff]
    %v5603 = vld [vmem:[%s3 + $0x98c] sm:$0xff]
    %v5604 = vld [vmem:[%s3 + $0x994] sm:$0xff]
    %v5605 = vld [vmem:[%s3 + $0x99c] sm:$0xf]
    %v5606 = vld [vmem:[%s3 + $0x9a0] sm:$0xff]
    %v5607 = vld [vmem:[%s3 + $0x9a8] sm:$0xff]
    %v5608 = vld [vmem:[%s3 + $0x9b0] sm:$0xff]
    %v5609 = vld [vmem:[%s3 + $0x9b8] sm:$0xf]
    %v5610 = vld [vmem:[%s3 + $0x9bc] sm:$0xff]
    %v5611 = vld [vmem:[%s3 + $0x9c4] sm:$0xff]
    %v5612 = vld [vmem:[%s3 + $0x9cc] sm:$0xff]
    %v5613 = vld [vmem:[%s3 + $0x9d4] sm:$0xf]
    %v5614 = vld [vmem:[%s3 + $0x9d8] sm:$0xff]
    %v5615 = vld [vmem:[%s3 + $0x9e0] sm:$0xff]
    %v5616 = vld [vmem:[%s3 + $0x9e8] sm:$0xff]
    %v5617 = vld [vmem:[%s3 + $0x9f0] sm:$0xf]
    %v5618 = vld [vmem:[%s3 + $0x9f4] sm:$0xff]
    %v5619 = vld [vmem:[%s3 + $0x9fc] sm:$0xff]
    %v5620 = vld [vmem:[%s3 + $0xa04] sm:$0xff]
    %v5621 = vld [vmem:[%s3 + $0xa0c] sm:$0xf]
    %v5622 = vld [vmem:[%s3 + $0xa10] sm:$0xff]
    %v5623 = vld [vmem:[%s3 + $0xa18] sm:$0xff]
    %v5624 = vld [vmem:[%s3 + $0xa20] sm:$0xff]
    %v5625 = vld [vmem:[%s3 + $0xa28] sm:$0xf]
    %v5626 = vld [vmem:[%s3 + $0xa2c] sm:$0xff]
    %v5627 = vld [vmem:[%s3 + $0xa34] sm:$0xff]
    %v5628 = vld [vmem:[%s3 + $0xa3c] sm:$0xff]
    %v5629 = vld [vmem:[%s3 + $0xa44] sm:$0xf]
    %v5630 = vld [vmem:[%s3 + $0xa48] sm:$0xff]
    %v5631 = vld [vmem:[%s3 + $0xa50] sm:$0xff]
    %v5632 = vld [vmem:[%s3 + $0xa58] sm:$0xff]
    %v5633 = vld [vmem:[%s3 + $0xa60] sm:$0xf]
    %v5634 = vld [vmem:[%s3 + $0xa64] sm:$0xff]
    %v5635 = vld [vmem:[%s3 + $0xa6c] sm:$0xff]
    %v5636 = vld [vmem:[%s3 + $0xa74] sm:$0xff]
    %v5637 = vld [vmem:[%s3 + $0xa7c] sm:$0xf]
    %v5638 = vld [vmem:[%s3 + $0xa80] sm:$0xff]
    %v5639 = vld [vmem:[%s3 + $0xa88] sm:$0xff]
    %v5640 = vld [vmem:[%s3 + $0xa90] sm:$0xff]
    %v5641 = vld [vmem:[%s3 + $0xa98] sm:$0xf]
    %v5642 = vld [vmem:[%s3 + $0xa9c] sm:$0xff]
    %v5643 = vld [vmem:[%s3 + $0xaa4] sm:$0xff]
    %v5644 = vld [vmem:[%s3 + $0xaac] sm:$0xff]
    %v5645 = vld [vmem:[%s3 + $0xab4] sm:$0xf]
    %v5646 = vld [vmem:[%s3 + $0xab8] sm:$0xff]
    %v5647 = vld [vmem:[%s3 + $0xac0] sm:$0xff]
    %v5648 = vld [vmem:[%s3 + $0xac8] sm:$0xff]
    %v5649 = vld [vmem:[%s3 + $0xad0] sm:$0xf]
    %v5650 = vld [vmem:[%s3 + $0xad4] sm:$0xff]
    %v5651 = vld [vmem:[%s3 + $0xadc] sm:$0xff]
    %v5652 = vld [vmem:[%s3 + $0xae4] sm:$0xff]
    %v5653 = vld [vmem:[%s3 + $0xaec] sm:$0xf]
    %v5654 = vld [vmem:[%s3 + $0xaf0] sm:$0xff]
    %v5655 = vld [vmem:[%s3 + $0xaf8] sm:$0xff]
    %v5656 = vld [vmem:[%s3 + $0xb00] sm:$0xff]
    %v5657 = vld [vmem:[%s3 + $0xb08] sm:$0xf]
    %v5658 = vld [vmem:[%s3 + $0xb0c] sm:$0xff]
    %v5659 = vld [vmem:[%s3 + $0xb14] sm:$0xff]
    %v5660 = vld [vmem:[%s3 + $0xb1c] sm:$0xff]
    %v5661 = vld [vmem:[%s3 + $0xb24] sm:$0xf]
    %v5662 = vld [vmem:[%s3 + $0xb28] sm:$0xff]
    %v5663 = vld [vmem:[%s3 + $0xb30] sm:$0xff]
    %v5664 = vld [vmem:[%s3 + $0xb38] sm:$0xff]
    %v5665 = vld [vmem:[%s3 + $0xb40] sm:$0xf]
    %v5666 = vld [vmem:[%s3 + $0xb44] sm:$0xff]
    %v5667 = vld [vmem:[%s3 + $0xb4c] sm:$0xff]
    %v5668 = vld [vmem:[%s3 + $0xb54] sm:$0xff]
    %v5669 = vld [vmem:[%s3 + $0xb5c] sm:$0xf]
    %v5670 = vld [vmem:[%s3 + $0xb60] sm:$0xff]
    %v5671 = vld [vmem:[%s3 + $0xb68] sm:$0xff]
    %v5672 = vld [vmem:[%s3 + $0xb70] sm:$0xff]
    %v5673 = vld [vmem:[%s3 + $0xb78] sm:$0xf]
    %v5674 = vld [vmem:[%s3 + $0xb7c] sm:$0xff]
    %v5675 = vld [vmem:[%s3 + $0xb84] sm:$0xff]
    %v5676 = vld [vmem:[%s3 + $0xb8c] sm:$0xff]
    %v5677 = vld [vmem:[%s3 + $0xb94] sm:$0xf]
    %v5678 = vld [vmem:[%s3 + $0xb98] sm:$0xff]
    %v5679 = vld [vmem:[%s3 + $0xba0] sm:$0xff]
    %v5680 = vld [vmem:[%s3 + $0xba8] sm:$0xff]
    %v5681 = vld [vmem:[%s3 + $0xbb0] sm:$0xf]
    %v5682 = vld [vmem:[%s3 + $0xbb4] sm:$0xff]
    %v5683 = vld [vmem:[%s3 + $0xbbc] sm:$0xff]
    %v5684 = vld [vmem:[%s3 + $0xbc4] sm:$0xff]
    %v5685 = vld [vmem:[%s3 + $0xbcc] sm:$0xf]
    %v5686 = vld [vmem:[%s3 + $0xbd0] sm:$0xff]
    %v5687 = vld [vmem:[%s3 + $0xbd8] sm:$0xff]
    %v5688 = vld [vmem:[%s3 + $0xbe0] sm:$0xff]
    %v5689 = vld [vmem:[%s3 + $0xbe8] sm:$0xf]
    %v5690 = vld [vmem:[%s3 + $0xbec] sm:$0xff]
    %v5691 = vld [vmem:[%s3 + $0xbf4] sm:$0xff]
    %v5692 = vld [vmem:[%s3 + $0xbfc] sm:$0xff]
    %v5693 = vld [vmem:[%s3 + $0xc04] sm:$0xf]
    %v5694 = vld [vmem:[%s3 + $0xc08] sm:$0xff]
    %v5695 = vld [vmem:[%s3 + $0xc10] sm:$0xff]
    %v5696 = vld [vmem:[%s3 + $0xc18] sm:$0xff]
    %v5697 = vld [vmem:[%s3 + $0xc20] sm:$0xf]
    %v5698 = vld [vmem:[%s3 + $0xc24] sm:$0xff]
    %v5699 = vld [vmem:[%s3 + $0xc2c] sm:$0xff]
    %v5700 = vld [vmem:[%s3 + $0xc34] sm:$0xff]
    %v5701 = vld [vmem:[%s3 + $0xc3c] sm:$0xf]
    %v5702 = vld [vmem:[%s3 + $0xc40] sm:$0xff]
    %v5703 = vld [vmem:[%s3 + $0xc48] sm:$0xff]
    %v5704 = vld [vmem:[%s3 + $0xc50] sm:$0xff]
    %v5705 = vld [vmem:[%s3 + $0xc58] sm:$0xf]
    %v5706 = vld [vmem:[%s3 + $0xc5c] sm:$0xff]
    %v5707 = vld [vmem:[%s3 + $0xc64] sm:$0xff]
    %v5708 = vld [vmem:[%s3 + $0xc6c] sm:$0xff]
    %v5709 = vld [vmem:[%s3 + $0xc74] sm:$0xf]
    %v5710 = vld [vmem:[%s3 + $0xc78] sm:$0xff]
    %v5711 = vld [vmem:[%s3 + $0xc80] sm:$0xff]
    %v5712 = vld [vmem:[%s3 + $0xc88] sm:$0xff]
    %v5713 = vld [vmem:[%s3 + $0xc90] sm:$0xf]
    %v5714 = vld [vmem:[%s3 + $0xc94] sm:$0xff]
    %v5715 = vld [vmem:[%s3 + $0xc9c] sm:$0xff]
    %v5716 = vld [vmem:[%s3 + $0xca4] sm:$0xff]
    %v5717 = vld [vmem:[%s3 + $0xcac] sm:$0xf]
    %v5718 = vld [vmem:[%s3 + $0xcb0] sm:$0xff]
    %v5719 = vld [vmem:[%s3 + $0xcb8] sm:$0xff]
    %v5720 = vld [vmem:[%s3 + $0xcc0] sm:$0xff]
    %v5721 = vld [vmem:[%s3 + $0xcc8] sm:$0xf]
    %v5722 = vld [vmem:[%s3 + $0xccc] sm:$0xff]
    %v5723 = vld [vmem:[%s3 + $0xcd4] sm:$0xff]
    %v5724 = vld [vmem:[%s3 + $0xcdc] sm:$0xff]
    %v5725 = vld [vmem:[%s3 + $0xce4] sm:$0xf]
    %v5726 = vld [vmem:[%s3 + $0xce8] sm:$0xff]
    %v5727 = vld [vmem:[%s3 + $0xcf0] sm:$0xff]
    %v5728 = vld [vmem:[%s3 + $0xcf8] sm:$0xff]
    %v5729 = vld [vmem:[%s3 + $0xd00] sm:$0xf]
    %v5730 = vld [vmem:[%s3 + $0xd04] sm:$0xff]
    %v5731 = vld [vmem:[%s3 + $0xd0c] sm:$0xff]
    %v5732 = vld [vmem:[%s3 + $0xd14] sm:$0xff]
    %v5733 = vld [vmem:[%s3 + $0xd1c] sm:$0xf]
    %v5734 = vld [vmem:[%s3 + $0xd20] sm:$0xff]
    %v5735 = vld [vmem:[%s3 + $0xd28] sm:$0xff]
    %v5736 = vld [vmem:[%s3 + $0xd30] sm:$0xff]
    %v5737 = vld [vmem:[%s3 + $0xd38] sm:$0xf]
    %v5738 = vld [vmem:[%s3 + $0xd3c] sm:$0xff]
    %v5739 = vld [vmem:[%s3 + $0xd44] sm:$0xff]
    %v5740 = vld [vmem:[%s3 + $0xd4c] sm:$0xff]
    %v5741 = vld [vmem:[%s3 + $0xd54] sm:$0xf]
    %v5742 = vld [vmem:[%s3 + $0xd58] sm:$0xff]
    %v5743 = vld [vmem:[%s3 + $0xd60] sm:$0xff]
    %v5744 = vld [vmem:[%s3 + $0xd68] sm:$0xff]
    %v5745 = vld [vmem:[%s3 + $0xd70] sm:$0xf]
    %v5746 = vld [vmem:[%s3 + $0xd74] sm:$0xff]
    %v5747 = vld [vmem:[%s3 + $0xd7c] sm:$0xff]
    %v5748 = vld [vmem:[%s3 + $0xd84] sm:$0xff]
    %v5749 = vld [vmem:[%s3 + $0xd8c] sm:$0xf]
    %v5750 = vld [vmem:[%s3 + $0xd90] sm:$0xff]
    %v5751 = vld [vmem:[%s3 + $0xd98] sm:$0xff]
    %v5752 = vld [vmem:[%s3 + $0xda0] sm:$0xff]
    %v5753 = vld [vmem:[%s3 + $0xda8] sm:$0xf]
    %v5754 = vld [vmem:[%s3 + $0xdac] sm:$0xff]
    %v5755 = vld [vmem:[%s3 + $0xdb4] sm:$0xff]
    %v5756 = vld [vmem:[%s3 + $0xdbc] sm:$0xff]
    %v5757 = vld [vmem:[%s3 + $0xdc4] sm:$0xf]
    %v5758 = vld [vmem:[%s3 + $0xdc8] sm:$0xff]
    %v5759 = vld [vmem:[%s3 + $0xdd0] sm:$0xff]
    %v5760 = vld [vmem:[%s3 + $0xdd8] sm:$0xff]
    %v5761 = vld [vmem:[%s3 + $0xde0] sm:$0xf]
    %v5762 = vld [vmem:[%s3 + $0xde4] sm:$0xff]
    %v5763 = vld [vmem:[%s3 + $0xdec] sm:$0xff]
    %v5764 = vld [vmem:[%s3 + $0xdf4] sm:$0xff]
    %v5765 = vld [vmem:[%s3 + $0xdfc] sm:$0xf]
    %v5766 = vld [vmem:[%s3 + $0xe00] sm:$0xff]
    %v5767 = vld [vmem:[%s3 + $0xe08] sm:$0xff]
    %v5768 = vld [vmem:[%s3 + $0xe10] sm:$0xff]
    %v5769 = vld [vmem:[%s3 + $0xe18] sm:$0xf]
    %v5770 = vld [vmem:[%s3 + $0xe1c] sm:$0xff]
    %v5771 = vld [vmem:[%s3 + $0xe24] sm:$0xff]
    %v5772 = vld [vmem:[%s3 + $0xe2c] sm:$0xff]
    %v5773 = vld [vmem:[%s3 + $0xe34] sm:$0xf]
    %v5774 = vld [vmem:[%s3 + $0xe38] sm:$0xff]
    %v5775 = vld [vmem:[%s3 + $0xe40] sm:$0xff]
    %v5776 = vld [vmem:[%s3 + $0xe48] sm:$0xff]
    %v5777 = vld [vmem:[%s3 + $0xe50] sm:$0xf]
    %v5778 = vld [vmem:[%s3 + $0xe54] sm:$0xff]
    %v5779 = vld [vmem:[%s3 + $0xe5c] sm:$0xff]
    %v5780 = vld [vmem:[%s3 + $0xe64] sm:$0xff]
    %v5781 = vld [vmem:[%s3 + $0xe6c] sm:$0xf]
    %v5782 = vld [vmem:[%s3 + $0xe70] sm:$0xff]
    %v5783 = vld [vmem:[%s3 + $0xe78] sm:$0xff]
    %v5784 = vld [vmem:[%s3 + $0xe80] sm:$0xff]
    %v5785 = vld [vmem:[%s3 + $0xe88] sm:$0xf]
    %v5786 = vld [vmem:[%s3 + $0xe8c] sm:$0xff]
    %v5787 = vld [vmem:[%s3 + $0xe94] sm:$0xff]
    %v5788 = vld [vmem:[%s3 + $0xe9c] sm:$0xff]
    %v5789 = vld [vmem:[%s3 + $0xea4] sm:$0xf]
    %v5790 = vld [vmem:[%s3 + $0xea8] sm:$0xff]
    %v5791 = vld [vmem:[%s3 + $0xeb0] sm:$0xff]
    %v5792 = vld [vmem:[%s3 + $0xeb8] sm:$0xff]
    %v5793 = vld [vmem:[%s3 + $0xec0] sm:$0xf]
    %v5794 = vld [vmem:[%s3 + $0xec4] sm:$0xff]
    %v5795 = vld [vmem:[%s3 + $0xecc] sm:$0xff]
    %v5796 = vld [vmem:[%s3 + $0xed4] sm:$0xff]
    %v5797 = vld [vmem:[%s3 + $0xedc] sm:$0xf]
    %v5798 = vld [vmem:[%s3 + $0xee0] sm:$0xff]
    %v5799 = vld [vmem:[%s3 + $0xee8] sm:$0xff]
    %v5800 = vld [vmem:[%s3 + $0xef0] sm:$0xff]
    %v5801 = vld [vmem:[%s3 + $0xef8] sm:$0xf]
    %v5802 = vld [vmem:[%s3 + $0xefc] sm:$0xff]
    %v5803 = vld [vmem:[%s3 + $0xf04] sm:$0xff]
    %v5804 = vld [vmem:[%s3 + $0xf0c] sm:$0xff]
    %v5805 = vld [vmem:[%s3 + $0xf14] sm:$0xf]
    %v5806 = vld [vmem:[%s3 + $0xf18] sm:$0xff]
    %v5807 = vld [vmem:[%s3 + $0xf20] sm:$0xff]
    %v5808 = vld [vmem:[%s3 + $0xf28] sm:$0xff]
    %v5809 = vld [vmem:[%s3 + $0xf30] sm:$0xf]
    %v5810 = vld [vmem:[%s3 + $0xf34] sm:$0xff]
    %v5811 = vld [vmem:[%s3 + $0xf3c] sm:$0xff]
    %v5812 = vld [vmem:[%s3 + $0xf44] sm:$0xff]
    %v5813 = vld [vmem:[%s3 + $0xf4c] sm:$0xf]
    %v5814 = vld [vmem:[%s3 + $0xf50] sm:$0xff]
    %v5815 = vld [vmem:[%s3 + $0xf58] sm:$0xff]
    %v5816 = vld [vmem:[%s3 + $0xf60] sm:$0xff]
    %v5817 = vld [vmem:[%s3 + $0xf68] sm:$0xf]
    %v5818 = vld [vmem:[%s3 + $0xf6c] sm:$0xff]
    %v5819 = vld [vmem:[%s3 + $0xf74] sm:$0xff]
    %v5820 = vld [vmem:[%s3 + $0xf7c] sm:$0xff]
    %v5821 = vld [vmem:[%s3 + $0xf84] sm:$0xf]
    %v5822 = vld [vmem:[%s3 + $0xf88] sm:$0xff]
    %v5823 = vld [vmem:[%s3 + $0xf90] sm:$0xff]
    %v5824 = vld [vmem:[%s3 + $0xf98] sm:$0xff]
    %v5825 = vld [vmem:[%s3 + $0xfa0] sm:$0xf]
    %v5826 = vld [vmem:[%s3 + $0xfa4] sm:$0xff]
    %v5827 = vld [vmem:[%s3 + $0xfac] sm:$0xff]
    %v5828 = vld [vmem:[%s3 + $0xfb4] sm:$0xff]
    %v5829 = vld [vmem:[%s3 + $0xfbc] sm:$0xf]
    %v5830 = vld [vmem:[%s3 + $0xfc0] sm:$0xff]
    %v5831 = vld [vmem:[%s3 + $0xfc8] sm:$0xff]
    %v5832 = vld [vmem:[%s3 + $0xfd0] sm:$0xff]
    %v5833 = vld [vmem:[%s3 + $0xfd8] sm:$0xf]
    %v5834 = vld [vmem:[%s3 + $0xfdc] sm:$0xff]
    %v5835 = vld [vmem:[%s3 + $0xfe4] sm:$0xff]
    %v5836 = vld [vmem:[%s3 + $0xfec] sm:$0xff]
    %v5837 = vld [vmem:[%s3 + $0xff4] sm:$0xf]
    %v5838 = vld [vmem:[%s3 + $0xff8] sm:$0xff]
    %v5839 = vld [vmem:[%s3 + $0x1000] sm:$0xff]
    %v5840 = vld [vmem:[%s3 + $0x1008] sm:$0xff]
    %v5841 = vld [vmem:[%s3 + $0x1010] sm:$0xf]
    %v5842 = vld [vmem:[%s3 + $0x1014] sm:$0xff]
    %v5843 = vld [vmem:[%s3 + $0x101c] sm:$0xff]
    %v5844 = vld [vmem:[%s3 + $0x1024] sm:$0xff]
    %v5845 = vld [vmem:[%s3 + $0x102c] sm:$0xf]
    %v5846 = vld [vmem:[%s3 + $0x1030] sm:$0xff]
    %v5847 = vld [vmem:[%s3 + $0x1038] sm:$0xff]
    %v5848 = vld [vmem:[%s3 + $0x1040] sm:$0xff]
    %v5849 = vld [vmem:[%s3 + $0x1048] sm:$0xf]
    %v5850 = vld [vmem:[%s3 + $0x104c] sm:$0xff]
    %v5851 = vld [vmem:[%s3 + $0x1054] sm:$0xff]
    %v5852 = vld [vmem:[%s3 + $0x105c] sm:$0xff]
    %v5853 = vld [vmem:[%s3 + $0x1064] sm:$0xf]
    %v5854 = vld [vmem:[%s3 + $0x1068] sm:$0xff]
    %v5855 = vld [vmem:[%s3 + $0x1070] sm:$0xff]
    %v5856 = vld [vmem:[%s3 + $0x1078] sm:$0xff]
    %v5857 = vld [vmem:[%s3 + $0x1080] sm:$0xf]
    %v5858 = vld [vmem:[%s3 + $0x1084] sm:$0xff]
    %v5859 = vld [vmem:[%s3 + $0x108c] sm:$0xff]
    %v5860 = vld [vmem:[%s3 + $0x1094] sm:$0xff]
    %v5861 = vld [vmem:[%s3 + $0x109c] sm:$0xf]
    %v5862 = vld [vmem:[%s3 + $0x10a0] sm:$0xff]
    %v5863 = vld [vmem:[%s3 + $0x10a8] sm:$0xff]
    %v5864 = vld [vmem:[%s3 + $0x10b0] sm:$0xff]
    %v5865 = vld [vmem:[%s3 + $0x10b8] sm:$0xf]
    %v5866 = vld [vmem:[%s3 + $0x10bc] sm:$0xff]
    %v5867 = vld [vmem:[%s3 + $0x10c4] sm:$0xff]
    %v5868 = vld [vmem:[%s3 + $0x10cc] sm:$0xff]
    %v5869 = vld [vmem:[%s3 + $0x10d4] sm:$0xf]
    %v5870 = vld [vmem:[%s3 + $0x10d8] sm:$0xff]
    %v5871 = vld [vmem:[%s3 + $0x10e0] sm:$0xff]
    %v5872 = vld [vmem:[%s3 + $0x10e8] sm:$0xff]
    %v5873 = vld [vmem:[%s3 + $0x10f0] sm:$0xf]
    %v5874 = vld [vmem:[%s3 + $0x10f4] sm:$0xff]
    %v5875 = vld [vmem:[%s3 + $0x10fc] sm:$0xff]
    %v5876 = vld [vmem:[%s3 + $0x1104] sm:$0xff]
    %v5877 = vld [vmem:[%s3 + $0x110c] sm:$0xf]
    %v5878 = vld [vmem:[%s3 + $0x1110] sm:$0xff]
    %v5879 = vld [vmem:[%s3 + $0x1118] sm:$0xff]
    %v5880 = vld [vmem:[%s3 + $0x1120] sm:$0xff]
    %v5881 = vld [vmem:[%s3 + $0x1128] sm:$0xf]
    %v5882 = vld [vmem:[%s3 + $0x112c] sm:$0xff]
    %v5883 = vld [vmem:[%s3 + $0x1134] sm:$0xff]
    %v5884 = vld [vmem:[%s3 + $0x113c] sm:$0xff]
    %v5885 = vld [vmem:[%s3 + $0x1144] sm:$0xf]
    %v5886 = vld [vmem:[%s3 + $0x1148] sm:$0xff]
    %v5887 = vld [vmem:[%s3 + $0x1150] sm:$0xff]
    %v5888 = vld [vmem:[%s3 + $0x1158] sm:$0xff]
    %v5889 = vld [vmem:[%s3 + $0x1160] sm:$0xf]
    %v5890 = vld [vmem:[%s3 + $0x1164] sm:$0xff]
    %v5891 = vld [vmem:[%s3 + $0x116c] sm:$0xff]
    %v5892 = vld [vmem:[%s3 + $0x1174] sm:$0xff]
    %v5893 = vld [vmem:[%s3 + $0x117c] sm:$0xf]
    %v5894 = vld [vmem:[%s3 + $0x1180] sm:$0xff]
    %v5895 = vld [vmem:[%s3 + $0x1188] sm:$0xff]
    %v5896 = vld [vmem:[%s3 + $0x1190] sm:$0xff]
    %v5897 = vld [vmem:[%s3 + $0x1198] sm:$0xf]
    %v5898 = vld [vmem:[%s3 + $0x119c] sm:$0xff]
    %v5899 = vld [vmem:[%s3 + $0x11a4] sm:$0xff]
    %v5900 = vld [vmem:[%s3 + $0x11ac] sm:$0xff]
    %v5901 = vld [vmem:[%s3 + $0x11b4] sm:$0xf]
    %v5902 = vld [vmem:[%s3 + $0x11b8] sm:$0xff]
    %v5903 = vld [vmem:[%s3 + $0x11c0] sm:$0xff]
    %v5904 = vld [vmem:[%s3 + $0x11c8] sm:$0xff]
    %v5905 = vld [vmem:[%s3 + $0x11d0] sm:$0xf]
    %v5906 = vld [vmem:[%s3 + $0x11d4] sm:$0xff]
    %v5907 = vld [vmem:[%s3 + $0x11dc] sm:$0xff]
    %v5908 = vld [vmem:[%s3 + $0x11e4] sm:$0xff]
    %v5909 = vld [vmem:[%s3 + $0x11ec] sm:$0xf]
    %v5910 = vld [vmem:[%s3 + $0x11f0] sm:$0xff]
    %v5911 = vld [vmem:[%s3 + $0x11f8] sm:$0xff]
    %v5912 = vld [vmem:[%s3 + $0x1200] sm:$0xff]
    %v5913 = vld [vmem:[%s3 + $0x1208] sm:$0xf]
    %v5914 = vld [vmem:[%s3 + $0x120c] sm:$0xff]
    %v5915 = vld [vmem:[%s3 + $0x1214] sm:$0xff]
    %v5916 = vld [vmem:[%s3 + $0x121c] sm:$0xff]
    %v5917 = vld [vmem:[%s3 + $0x1224] sm:$0xf]
    %v5918 = vld [vmem:[%s3 + $0x1228] sm:$0xff]
    %v5919 = vld [vmem:[%s3 + $0x1230] sm:$0xff]
    %v5920 = vld [vmem:[%s3 + $0x1238] sm:$0xff]
    %v5921 = vld [vmem:[%s3 + $0x1240] sm:$0xf]
    %v5922 = vld [vmem:[%s3 + $0x1244] sm:$0xff]
    %v5923 = vld [vmem:[%s3 + $0x124c] sm:$0xff]
    %v5924 = vld [vmem:[%s3 + $0x1254] sm:$0xff]
    %v5925 = vld [vmem:[%s3 + $0x125c] sm:$0xf]
    %v5926 = vld [vmem:[%s3 + $0x1260] sm:$0xff]
    %v5927 = vld [vmem:[%s3 + $0x1268] sm:$0xff]
    %v5928 = vld [vmem:[%s3 + $0x1270] sm:$0xff]
    %v5929 = vld [vmem:[%s3 + $0x1278] sm:$0xf]
    %v5930 = vld [vmem:[%s3 + $0x127c] sm:$0xff]
    %v5931 = vld [vmem:[%s3 + $0x1284] sm:$0xff]
    %v5932 = vld [vmem:[%s3 + $0x128c] sm:$0xff]
    %v5933 = vld [vmem:[%s3 + $0x1294] sm:$0xf]
    %v5934 = vld [vmem:[%s3 + $0x1298] sm:$0xff]
    %v5935 = vld [vmem:[%s3 + $0x12a0] sm:$0xff]
    %v5936 = vld [vmem:[%s3 + $0x12a8] sm:$0xff]
    %v5937 = vld [vmem:[%s3 + $0x12b0] sm:$0xf]
    %v5938 = vld [vmem:[%s3 + $0x12b4] sm:$0xff]
    %v5939 = vld [vmem:[%s3 + $0x12bc] sm:$0xff]
    %v5940 = vld [vmem:[%s3 + $0x12c4] sm:$0xff]
    %v5941 = vld [vmem:[%s3 + $0x12cc] sm:$0xf]
    %v5942 = vld [vmem:[%s3 + $0x12d0] sm:$0xff]
    %v5943 = vld [vmem:[%s3 + $0x12d8] sm:$0xff]
    %v5944 = vld [vmem:[%s3 + $0x12e0] sm:$0xff]
    %v5945 = vld [vmem:[%s3 + $0x12e8] sm:$0xf]
    %v5946 = vld [vmem:[%s3 + $0x12ec] sm:$0xff]
    %v5947 = vld [vmem:[%s3 + $0x12f4] sm:$0xff]
    %v5948 = vld [vmem:[%s3 + $0x12fc] sm:$0xff]
    %v5949 = vld [vmem:[%s3 + $0x1304] sm:$0xf]
    %v5950 = vld [vmem:[%s3 + $0x1308] sm:$0xff]
    %v5951 = vld [vmem:[%s3 + $0x1310] sm:$0xff]
    %v5952 = vld [vmem:[%s3 + $0x1318] sm:$0xff]
    %v5953 = vld [vmem:[%s3 + $0x1320] sm:$0xf]
    %v5954 = vld [vmem:[%s3 + $0x1324] sm:$0xff]
    %v5955 = vld [vmem:[%s3 + $0x132c] sm:$0xff]
    %v5956 = vld [vmem:[%s3 + $0x1334] sm:$0xff]
    %v5957 = vld [vmem:[%s3 + $0x133c] sm:$0xf]
    %v5958 = vld [vmem:[%s3 + $0x1340] sm:$0xff]
    %v5959 = vld [vmem:[%s3 + $0x1348] sm:$0xff]
    %v5960 = vld [vmem:[%s3 + $0x1350] sm:$0xff]
    %v5961 = vld [vmem:[%s3 + $0x1358] sm:$0xf]
    %v5962 = vld [vmem:[%s3 + $0x135c] sm:$0xff]
    %v5963 = vld [vmem:[%s3 + $0x1364] sm:$0xff]
    %v5964 = vld [vmem:[%s3 + $0x136c] sm:$0xff]
    %v5965 = vld [vmem:[%s3 + $0x1374] sm:$0xf]
    %v5966 = vld [vmem:[%s3 + $0x1378] sm:$0xff]
    %v5967 = vld [vmem:[%s3 + $0x1380] sm:$0xff]
    %v5968 = vld [vmem:[%s3 + $0x1388] sm:$0xff]
    %v5969 = vld [vmem:[%s3 + $0x1390] sm:$0xf]
    %v5970 = vld [vmem:[%s3 + $0x1394] sm:$0xff]
    %v5971 = vld [vmem:[%s3 + $0x139c] sm:$0xff]
    %v5972 = vld [vmem:[%s3 + $0x13a4] sm:$0xff]
    %v5973 = vld [vmem:[%s3 + $0x13ac] sm:$0xf]
    %v5974 = vld [vmem:[%s3 + $0x13b0] sm:$0xff]
    %v5975 = vld [vmem:[%s3 + $0x13b8] sm:$0xff]
    %v5976 = vld [vmem:[%s3 + $0x13c0] sm:$0xff]
    %v5977 = vld [vmem:[%s3 + $0x13c8] sm:$0xf]
    %v5978 = vld [vmem:[%s3 + $0x13cc] sm:$0xff]
    %v5979 = vld [vmem:[%s3 + $0x13d4] sm:$0xff]
    %v5980 = vld [vmem:[%s3 + $0x13dc] sm:$0xff]
    %v5981 = vld [vmem:[%s3 + $0x13e4] sm:$0xf]
    %v5982 = vld [vmem:[%s3 + $0x13e8] sm:$0xff]
    %v5983 = vld [vmem:[%s3 + $0x13f0] sm:$0xff]
    %v5984 = vld [vmem:[%s3 + $0x13f8] sm:$0xff]
    %v5985 = vld [vmem:[%s3 + $0x1400] sm:$0xf]
    %v5986 = vld [vmem:[%s3 + $0x1404] sm:$0xff]
    %v5987 = vld [vmem:[%s3 + $0x140c] sm:$0xff]
    %v5988 = vld [vmem:[%s3 + $0x1414] sm:$0xff]
    %v5989 = vld [vmem:[%s3 + $0x141c] sm:$0xf]
    %v5990 = vld [vmem:[%s3 + $0x1420] sm:$0xff]
    %v5991 = vld [vmem:[%s3 + $0x1428] sm:$0xff]
    %v5992 = vld [vmem:[%s3 + $0x1430] sm:$0xff]
    %v5993 = vld [vmem:[%s3 + $0x1438] sm:$0xf]
    %v5994 = vld [vmem:[%s3 + $0x143c] sm:$0xff]
    %v5995 = vld [vmem:[%s3 + $0x1444] sm:$0xff]
    %v5996 = vld [vmem:[%s3 + $0x144c] sm:$0xff]
    %v5997 = vld [vmem:[%s3 + $0x1454] sm:$0xf]
    %v5998 = vld [vmem:[%s3 + $0x1458] sm:$0xff]
    %v5999 = vld [vmem:[%s3 + $0x1460] sm:$0xff]
    %v6000 = vld [vmem:[%s3 + $0x1468] sm:$0xff]
    %v6001 = vld [vmem:[%s3 + $0x1470] sm:$0xf]
    %v6002 = vld [vmem:[%s3 + $0x1474] sm:$0xff]
    %v6003 = vld [vmem:[%s3 + $0x147c] sm:$0xff]
    %v6004 = vld [vmem:[%s3 + $0x1484] sm:$0xff]
    %v6005 = vld [vmem:[%s3 + $0x148c] sm:$0xf]
    %v6006 = vld [vmem:[%s3 + $0x1490] sm:$0xff]
    %v6007 = vld [vmem:[%s3 + $0x1498] sm:$0xff]
    %v6008 = vld [vmem:[%s3 + $0x14a0] sm:$0xff]
    %v6009 = vld [vmem:[%s3 + $0x14a8] sm:$0xf]
    %v6010 = vld [vmem:[%s3 + $0x14ac] sm:$0xff]
    %v6011 = vld [vmem:[%s3 + $0x14b4] sm:$0xff]
    %v6012 = vld [vmem:[%s3 + $0x14bc] sm:$0xff]
    %v6013 = vld [vmem:[%s3 + $0x14c4] sm:$0xf]
    %v6014 = vld [vmem:[%s3 + $0x14c8] sm:$0xff]
    %v6015 = vld [vmem:[%s3 + $0x14d0] sm:$0xff]
    %v6016 = vld [vmem:[%s3 + $0x14d8] sm:$0xff]
    %v6017 = vld [vmem:[%s3 + $0x14e0] sm:$0xf]
    %v6018 = vld [vmem:[%s3 + $0x14e4] sm:$0xff]
    %v6019 = vld [vmem:[%s3 + $0x14ec] sm:$0xff]
    %v6020 = vld [vmem:[%s3 + $0x14f4] sm:$0xff]
    %v6021 = vld [vmem:[%s3 + $0x14fc] sm:$0xf]
    %v6022 = vld [vmem:[%s3 + $0x1500] sm:$0xff]
    %v6023 = vld [vmem:[%s3 + $0x1508] sm:$0xff]
    %v6024 = vld [vmem:[%s3 + $0x1510] sm:$0xff]
    %v6025 = vld [vmem:[%s3 + $0x1518] sm:$0xf]
    %v6026 = vld [vmem:[%s3 + $0x151c] sm:$0xff]
    %v6027 = vld [vmem:[%s3 + $0x1524] sm:$0xff]
    %v6028 = vld [vmem:[%s3 + $0x152c] sm:$0xff]
    %v6029 = vld [vmem:[%s3 + $0x1534] sm:$0xf]
    %v6030 = vld [vmem:[%s3 + $0x1538] sm:$0xff]
    %v6031 = vld [vmem:[%s3 + $0x1540] sm:$0xff]
    %v6032 = vld [vmem:[%s3 + $0x1548] sm:$0xff]
    %v6033 = vld [vmem:[%s3 + $0x1550] sm:$0xf]
    %v6034 = vld [vmem:[%s3 + $0x1554] sm:$0xff]
    %v6035 = vld [vmem:[%s3 + $0x155c] sm:$0xff]
    %v6036 = vld [vmem:[%s3 + $0x1564] sm:$0xff]
    %v6037 = vld [vmem:[%s3 + $0x156c] sm:$0xf]
    %v6038 = vld [vmem:[%s4] sm:$0x7f]
    %v6040 = vlaneseq
    %v6041 = vshrl.u32 %v6040, 7
    %v6042 = vsub.s32 0, %v6041
    %v6043 = vrot.slane %v6038, %v6042
    %v6044 = vlaneseq
    %v6045 = vshrl.u32 %v6044, 7
    %v6046 = vsub.s32 1, %v6045
    %v6047 = vrot.slane %v6038, %v6046
    %v6048 = vlaneseq
    %v6049 = vshrl.u32 %v6048, 7
    %v6050 = vsub.s32 2, %v6049
    %v6051 = vrot.slane %v6038, %v6050
    %v6052 = vlaneseq
    %v6053 = vshrl.u32 %v6052, 7
    %v6054 = vsub.s32 3, %v6053
    %v6055 = vrot.slane %v6038, %v6054
    %v6056 = vlaneseq
    %v6057 = vshrl.u32 %v6056, 7
    %v6058 = vsub.s32 4, %v6057
    %v6059 = vrot.slane %v6038, %v6058
    %v6060 = vlaneseq
    %v6061 = vshrl.u32 %v6060, 7
    %v6062 = vsub.s32 5, %v6061
    %v6063 = vrot.slane %v6038, %v6062
    %v6064 = vlaneseq
    %v6065 = vshrl.u32 %v6064, 7
    %v6066 = vsub.s32 6, %v6065
    %v6067 = vrot.slane %v6038, %v6066
    %v6859 = vunpack.c.l.b16 %v5254
    %v6860 = vunpack.c.h.b16 %v5254
    %v6861 = vunpack.c.l.b16 %v5255
    %v6862 = vunpack.c.h.b16 %v5255
    %v6863 = vunpack.c.l.b16 %v5256
    %v6864 = vunpack.c.h.b16 %v5256
    %v6865 = vunpack.c.l.b16 %v5257
    %v6866 = vunpack.c.l.b16 %v5258
    %v6867 = vunpack.c.h.b16 %v5258
    %v6868 = vunpack.c.l.b16 %v5259
    %v6869 = vunpack.c.h.b16 %v5259
    %v6870 = vunpack.c.l.b16 %v5260
    %v6871 = vunpack.c.h.b16 %v5260
    %v6872 = vunpack.c.l.b16 %v5261
    %v6873 = vunpack.c.l.b16 %v5262
    %v6874 = vunpack.c.h.b16 %v5262
    %v6875 = vunpack.c.l.b16 %v5263
    %v6876 = vunpack.c.h.b16 %v5263
    %v6877 = vunpack.c.l.b16 %v5264
    %v6878 = vunpack.c.h.b16 %v5264
    %v6879 = vunpack.c.l.b16 %v5265
    %v6880 = vunpack.c.l.b16 %v5266
    %v6881 = vunpack.c.h.b16 %v5266
    %v6882 = vunpack.c.l.b16 %v5267
    %v6883 = vunpack.c.h.b16 %v5267
    %v6884 = vunpack.c.l.b16 %v5268
    %v6885 = vunpack.c.h.b16 %v5268
    %v6886 = vunpack.c.l.b16 %v5269
    %v6887 = vunpack.c.l.b16 %v5270
    %v6888 = vunpack.c.h.b16 %v5270
    %v6889 = vunpack.c.l.b16 %v5271
    %v6890 = vunpack.c.h.b16 %v5271
    %v6891 = vunpack.c.l.b16 %v5272
    %v6892 = vunpack.c.h.b16 %v5272
    %v6893 = vunpack.c.l.b16 %v5273
    %v6894 = vunpack.c.l.b16 %v5274
    %v6895 = vunpack.c.h.b16 %v5274
    %v6896 = vunpack.c.l.b16 %v5275
    %v6897 = vunpack.c.h.b16 %v5275
    %v6898 = vunpack.c.l.b16 %v5276
    %v6899 = vunpack.c.h.b16 %v5276
    %v6900 = vunpack.c.l.b16 %v5277
    %v6901 = vunpack.c.l.b16 %v5278
    %v6902 = vunpack.c.h.b16 %v5278
    %v6903 = vunpack.c.l.b16 %v5279
    %v6904 = vunpack.c.h.b16 %v5279
    %v6905 = vunpack.c.l.b16 %v5280
    %v6906 = vunpack.c.h.b16 %v5280
    %v6907 = vunpack.c.l.b16 %v5281
    %v6908 = vunpack.c.l.b16 %v5282
    %v6909 = vunpack.c.h.b16 %v5282
    %v6910 = vunpack.c.l.b16 %v5283
    %v6911 = vunpack.c.h.b16 %v5283
    %v6912 = vunpack.c.l.b16 %v5284
    %v6913 = vunpack.c.h.b16 %v5284
    %v6914 = vunpack.c.l.b16 %v5285
    %v6915 = vunpack.c.l.b16 %v5286
    %v6916 = vunpack.c.h.b16 %v5286
    %v6917 = vunpack.c.l.b16 %v5287
    %v6918 = vunpack.c.h.b16 %v5287
    %v6919 = vunpack.c.l.b16 %v5288
    %v6920 = vunpack.c.h.b16 %v5288
    %v6921 = vunpack.c.l.b16 %v5289
    %v6922 = vunpack.c.l.b16 %v5290
    %v6923 = vunpack.c.h.b16 %v5290
    %v6924 = vunpack.c.l.b16 %v5291
    %v6925 = vunpack.c.h.b16 %v5291
    %v6926 = vunpack.c.l.b16 %v5292
    %v6927 = vunpack.c.h.b16 %v5292
    %v6928 = vunpack.c.l.b16 %v5293
    %v6929 = vunpack.c.l.b16 %v5294
    %v6930 = vunpack.c.h.b16 %v5294
    %v6931 = vunpack.c.l.b16 %v5295
    %v6932 = vunpack.c.h.b16 %v5295
    %v6933 = vunpack.c.l.b16 %v5296
    %v6934 = vunpack.c.h.b16 %v5296
    %v6935 = vunpack.c.l.b16 %v5297
    %v6936 = vunpack.c.l.b16 %v5298
    %v6937 = vunpack.c.h.b16 %v5298
    %v6938 = vunpack.c.l.b16 %v5299
    %v6939 = vunpack.c.h.b16 %v5299
    %v6940 = vunpack.c.l.b16 %v5300
    %v6941 = vunpack.c.h.b16 %v5300
    %v6942 = vunpack.c.l.b16 %v5301
    %v6943 = vunpack.c.l.b16 %v5302
    %v6944 = vunpack.c.h.b16 %v5302
    %v6945 = vunpack.c.l.b16 %v5303
    %v6946 = vunpack.c.h.b16 %v5303
    %v6947 = vunpack.c.l.b16 %v5304
    %v6948 = vunpack.c.h.b16 %v5304
    %v6949 = vunpack.c.l.b16 %v5305
    %v6950 = vunpack.c.l.b16 %v5306
    %v6951 = vunpack.c.h.b16 %v5306
    %v6952 = vunpack.c.l.b16 %v5307
    %v6953 = vunpack.c.h.b16 %v5307
    %v6954 = vunpack.c.l.b16 %v5308
    %v6955 = vunpack.c.h.b16 %v5308
    %v6956 = vunpack.c.l.b16 %v5309
    %v6957 = vunpack.c.l.b16 %v5310
    %v6958 = vunpack.c.h.b16 %v5310
    %v6959 = vunpack.c.l.b16 %v5311
    %v6960 = vunpack.c.h.b16 %v5311
    %v6961 = vunpack.c.l.b16 %v5312
    %v6962 = vunpack.c.h.b16 %v5312
    %v6963 = vunpack.c.l.b16 %v5313
    %v6964 = vunpack.c.l.b16 %v5314
    %v6965 = vunpack.c.h.b16 %v5314
    %v6966 = vunpack.c.l.b16 %v5315
    %v6967 = vunpack.c.h.b16 %v5315
    %v6968 = vunpack.c.l.b16 %v5316
    %v6969 = vunpack.c.h.b16 %v5316
    %v6970 = vunpack.c.l.b16 %v5317
    %v6971 = vunpack.c.l.b16 %v5318
    %v6972 = vunpack.c.h.b16 %v5318
    %v6973 = vunpack.c.l.b16 %v5319
    %v6974 = vunpack.c.h.b16 %v5319
    %v6975 = vunpack.c.l.b16 %v5320
    %v6976 = vunpack.c.h.b16 %v5320
    %v6977 = vunpack.c.l.b16 %v5321
    %v6978 = vunpack.c.l.b16 %v5322
    %v6979 = vunpack.c.h.b16 %v5322
    %v6980 = vunpack.c.l.b16 %v5323
    %v6981 = vunpack.c.h.b16 %v5323
    %v6982 = vunpack.c.l.b16 %v5324
    %v6983 = vunpack.c.h.b16 %v5324
    %v6984 = vunpack.c.l.b16 %v5325
    %v6985 = vunpack.c.l.b16 %v5326
    %v6986 = vunpack.c.h.b16 %v5326
    %v6987 = vunpack.c.l.b16 %v5327
    %v6988 = vunpack.c.h.b16 %v5327
    %v6989 = vunpack.c.l.b16 %v5328
    %v6990 = vunpack.c.h.b16 %v5328
    %v6991 = vunpack.c.l.b16 %v5329
    %v6992 = vunpack.c.l.b16 %v5330
    %v6993 = vunpack.c.h.b16 %v5330
    %v6994 = vunpack.c.l.b16 %v5331
    %v6995 = vunpack.c.h.b16 %v5331
    %v6996 = vunpack.c.l.b16 %v5332
    %v6997 = vunpack.c.h.b16 %v5332
    %v6998 = vunpack.c.l.b16 %v5333
    %v6999 = vunpack.c.l.b16 %v5334
    %v7000 = vunpack.c.h.b16 %v5334
    %v7001 = vunpack.c.l.b16 %v5335
    %v7002 = vunpack.c.h.b16 %v5335
    %v7003 = vunpack.c.l.b16 %v5336
    %v7004 = vunpack.c.h.b16 %v5336
    %v7005 = vunpack.c.l.b16 %v5337
    %v7006 = vunpack.c.l.b16 %v5338
    %v7007 = vunpack.c.h.b16 %v5338
    %v7008 = vunpack.c.l.b16 %v5339
    %v7009 = vunpack.c.h.b16 %v5339
    %v7010 = vunpack.c.l.b16 %v5340
    %v7011 = vunpack.c.h.b16 %v5340
    %v7012 = vunpack.c.l.b16 %v5341
    %v7013 = vunpack.c.l.b16 %v5342
    %v7014 = vunpack.c.h.b16 %v5342
    %v7015 = vunpack.c.l.b16 %v5343
    %v7016 = vunpack.c.h.b16 %v5343
    %v7017 = vunpack.c.l.b16 %v5344
    %v7018 = vunpack.c.h.b16 %v5344
    %v7019 = vunpack.c.l.b16 %v5345
    %v7020 = vunpack.c.l.b16 %v5346
    %v7021 = vunpack.c.h.b16 %v5346
    %v7022 = vunpack.c.l.b16 %v5347
    %v7023 = vunpack.c.h.b16 %v5347
    %v7024 = vunpack.c.l.b16 %v5348
    %v7025 = vunpack.c.h.b16 %v5348
    %v7026 = vunpack.c.l.b16 %v5349
    %v7027 = vunpack.c.l.b16 %v5350
    %v7028 = vunpack.c.h.b16 %v5350
    %v7029 = vunpack.c.l.b16 %v5351
    %v7030 = vunpack.c.h.b16 %v5351
    %v7031 = vunpack.c.l.b16 %v5352
    %v7032 = vunpack.c.h.b16 %v5352
    %v7033 = vunpack.c.l.b16 %v5353
    %v7034 = vunpack.c.l.b16 %v5354
    %v7035 = vunpack.c.h.b16 %v5354
    %v7036 = vunpack.c.l.b16 %v5355
    %v7037 = vunpack.c.h.b16 %v5355
    %v7038 = vunpack.c.l.b16 %v5356
    %v7039 = vunpack.c.h.b16 %v5356
    %v7040 = vunpack.c.l.b16 %v5357
    %v7041 = vunpack.c.l.b16 %v5358
    %v7042 = vunpack.c.h.b16 %v5358
    %v7043 = vunpack.c.l.b16 %v5359
    %v7044 = vunpack.c.h.b16 %v5359
    %v7045 = vunpack.c.l.b16 %v5360
    %v7046 = vunpack.c.h.b16 %v5360
    %v7047 = vunpack.c.l.b16 %v5361
    %v7048 = vunpack.c.l.b16 %v5362
    %v7049 = vunpack.c.h.b16 %v5362
    %v7050 = vunpack.c.l.b16 %v5363
    %v7051 = vunpack.c.h.b16 %v5363
    %v7052 = vunpack.c.l.b16 %v5364
    %v7053 = vunpack.c.h.b16 %v5364
    %v7054 = vunpack.c.l.b16 %v5365
    %v7055 = vunpack.c.l.b16 %v5366
    %v7056 = vunpack.c.h.b16 %v5366
    %v7057 = vunpack.c.l.b16 %v5367
    %v7058 = vunpack.c.h.b16 %v5367
    %v7059 = vunpack.c.l.b16 %v5368
    %v7060 = vunpack.c.h.b16 %v5368
    %v7061 = vunpack.c.l.b16 %v5369
    %v7062 = vunpack.c.l.b16 %v5370
    %v7063 = vunpack.c.h.b16 %v5370
    %v7064 = vunpack.c.l.b16 %v5371
    %v7065 = vunpack.c.h.b16 %v5371
    %v7066 = vunpack.c.l.b16 %v5372
    %v7067 = vunpack.c.h.b16 %v5372
    %v7068 = vunpack.c.l.b16 %v5373
    %v7069 = vunpack.c.l.b16 %v5374
    %v7070 = vunpack.c.h.b16 %v5374
    %v7071 = vunpack.c.l.b16 %v5375
    %v7072 = vunpack.c.h.b16 %v5375
    %v7073 = vunpack.c.l.b16 %v5376
    %v7074 = vunpack.c.h.b16 %v5376
    %v7075 = vunpack.c.l.b16 %v5377
    %v7076 = vunpack.c.l.b16 %v5378
    %v7077 = vunpack.c.h.b16 %v5378
    %v7078 = vunpack.c.l.b16 %v5379
    %v7079 = vunpack.c.h.b16 %v5379
    %v7080 = vunpack.c.l.b16 %v5380
    %v7081 = vunpack.c.h.b16 %v5380
    %v7082 = vunpack.c.l.b16 %v5381
    %v7083 = vunpack.c.l.b16 %v5382
    %v7084 = vunpack.c.h.b16 %v5382
    %v7085 = vunpack.c.l.b16 %v5383
    %v7086 = vunpack.c.h.b16 %v5383
    %v7087 = vunpack.c.l.b16 %v5384
    %v7088 = vunpack.c.h.b16 %v5384
    %v7089 = vunpack.c.l.b16 %v5385
    %v7090 = vunpack.c.l.b16 %v5386
    %v7091 = vunpack.c.h.b16 %v5386
    %v7092 = vunpack.c.l.b16 %v5387
    %v7093 = vunpack.c.h.b16 %v5387
    %v7094 = vunpack.c.l.b16 %v5388
    %v7095 = vunpack.c.h.b16 %v5388
    %v7096 = vunpack.c.l.b16 %v5389
    %v7097 = vunpack.c.l.b16 %v5390
    %v7098 = vunpack.c.h.b16 %v5390
    %v7099 = vunpack.c.l.b16 %v5391
    %v7100 = vunpack.c.h.b16 %v5391
    %v7101 = vunpack.c.l.b16 %v5392
    %v7102 = vunpack.c.h.b16 %v5392
    %v7103 = vunpack.c.l.b16 %v5393
    %v7104 = vunpack.c.l.b16 %v5394
    %v7105 = vunpack.c.h.b16 %v5394
    %v7106 = vunpack.c.l.b16 %v5395
    %v7107 = vunpack.c.h.b16 %v5395
    %v7108 = vunpack.c.l.b16 %v5396
    %v7109 = vunpack.c.h.b16 %v5396
    %v7110 = vunpack.c.l.b16 %v5397
    %v7111 = vunpack.c.l.b16 %v5398
    %v7112 = vunpack.c.h.b16 %v5398
    %v7113 = vunpack.c.l.b16 %v5399
    %v7114 = vunpack.c.h.b16 %v5399
    %v7115 = vunpack.c.l.b16 %v5400
    %v7116 = vunpack.c.h.b16 %v5400
    %v7117 = vunpack.c.l.b16 %v5401
    %v7118 = vunpack.c.l.b16 %v5402
    %v7119 = vunpack.c.h.b16 %v5402
    %v7120 = vunpack.c.l.b16 %v5403
    %v7121 = vunpack.c.h.b16 %v5403
    %v7122 = vunpack.c.l.b16 %v5404
    %v7123 = vunpack.c.h.b16 %v5404
    %v7124 = vunpack.c.l.b16 %v5405
    %v7125 = vunpack.c.l.b16 %v5406
    %v7126 = vunpack.c.h.b16 %v5406
    %v7127 = vunpack.c.l.b16 %v5407
    %v7128 = vunpack.c.h.b16 %v5407
    %v7129 = vunpack.c.l.b16 %v5408
    %v7130 = vunpack.c.h.b16 %v5408
    %v7131 = vunpack.c.l.b16 %v5409
    %v7132 = vunpack.c.l.b16 %v5410
    %v7133 = vunpack.c.h.b16 %v5410
    %v7134 = vunpack.c.l.b16 %v5411
    %v7135 = vunpack.c.h.b16 %v5411
    %v7136 = vunpack.c.l.b16 %v5412
    %v7137 = vunpack.c.h.b16 %v5412
    %v7138 = vunpack.c.l.b16 %v5413
    %v7139 = vunpack.c.l.b16 %v5414
    %v7140 = vunpack.c.h.b16 %v5414
    %v7141 = vunpack.c.l.b16 %v5415
    %v7142 = vunpack.c.h.b16 %v5415
    %v7143 = vunpack.c.l.b16 %v5416
    %v7144 = vunpack.c.h.b16 %v5416
    %v7145 = vunpack.c.l.b16 %v5417
    %v7146 = vunpack.c.l.b16 %v5418
    %v7147 = vunpack.c.h.b16 %v5418
    %v7148 = vunpack.c.l.b16 %v5419
    %v7149 = vunpack.c.h.b16 %v5419
    %v7150 = vunpack.c.l.b16 %v5420
    %v7151 = vunpack.c.h.b16 %v5420
    %v7152 = vunpack.c.l.b16 %v5421
    %v7153 = vunpack.c.l.b16 %v5422
    %v7154 = vunpack.c.h.b16 %v5422
    %v7155 = vunpack.c.l.b16 %v5423
    %v7156 = vunpack.c.h.b16 %v5423
    %v7157 = vunpack.c.l.b16 %v5424
    %v7158 = vunpack.c.h.b16 %v5424
    %v7159 = vunpack.c.l.b16 %v5425
    %v7160 = vunpack.c.l.b16 %v5426
    %v7161 = vunpack.c.h.b16 %v5426
    %v7162 = vunpack.c.l.b16 %v5427
    %v7163 = vunpack.c.h.b16 %v5427
    %v7164 = vunpack.c.l.b16 %v5428
    %v7165 = vunpack.c.h.b16 %v5428
    %v7166 = vunpack.c.l.b16 %v5429
    %v7167 = vunpack.c.l.b16 %v5430
    %v7168 = vunpack.c.h.b16 %v5430
    %v7169 = vunpack.c.l.b16 %v5431
    %v7170 = vunpack.c.h.b16 %v5431
    %v7171 = vunpack.c.l.b16 %v5432
    %v7172 = vunpack.c.h.b16 %v5432
    %v7173 = vunpack.c.l.b16 %v5433
    %v7174 = vunpack.c.l.b16 %v5434
    %v7175 = vunpack.c.h.b16 %v5434
    %v7176 = vunpack.c.l.b16 %v5435
    %v7177 = vunpack.c.h.b16 %v5435
    %v7178 = vunpack.c.l.b16 %v5436
    %v7179 = vunpack.c.h.b16 %v5436
    %v7180 = vunpack.c.l.b16 %v5437
    %v7181 = vunpack.c.l.b16 %v5438
    %v7182 = vunpack.c.h.b16 %v5438
    %v7183 = vunpack.c.l.b16 %v5439
    %v7184 = vunpack.c.h.b16 %v5439
    %v7185 = vunpack.c.l.b16 %v5440
    %v7186 = vunpack.c.h.b16 %v5440
    %v7187 = vunpack.c.l.b16 %v5441
    %v7188 = vunpack.c.l.b16 %v5442
    %v7189 = vunpack.c.h.b16 %v5442
    %v7190 = vunpack.c.l.b16 %v5443
    %v7191 = vunpack.c.h.b16 %v5443
    %v7192 = vunpack.c.l.b16 %v5444
    %v7193 = vunpack.c.h.b16 %v5444
    %v7194 = vunpack.c.l.b16 %v5445
    %v7195 = vunpack.c.l.b16 %v5446
    %v7196 = vunpack.c.h.b16 %v5446
    %v7197 = vunpack.c.l.b16 %v5447
    %v7198 = vunpack.c.h.b16 %v5447
    %v7199 = vunpack.c.l.b16 %v5448
    %v7200 = vunpack.c.h.b16 %v5448
    %v7201 = vunpack.c.l.b16 %v5449
    %v7202 = vunpack.c.l.b16 %v5450
    %v7203 = vunpack.c.h.b16 %v5450
    %v7204 = vunpack.c.l.b16 %v5451
    %v7205 = vunpack.c.h.b16 %v5451
    %v7206 = vunpack.c.l.b16 %v5452
    %v7207 = vunpack.c.h.b16 %v5452
    %v7208 = vunpack.c.l.b16 %v5453
    %v7209 = vunpack.c.l.b16 %v5454
    %v7210 = vunpack.c.h.b16 %v5454
    %v7211 = vunpack.c.l.b16 %v5455
    %v7212 = vunpack.c.h.b16 %v5455
    %v7213 = vunpack.c.l.b16 %v5456
    %v7214 = vunpack.c.h.b16 %v5456
    %v7215 = vunpack.c.l.b16 %v5457
    %v7216 = vunpack.c.l.b16 %v5458
    %v7217 = vunpack.c.h.b16 %v5458
    %v7218 = vunpack.c.l.b16 %v5459
    %v7219 = vunpack.c.h.b16 %v5459
    %v7220 = vunpack.c.l.b16 %v5460
    %v7221 = vunpack.c.h.b16 %v5460
    %v7222 = vunpack.c.l.b16 %v5461
    %v7223 = vunpack.c.l.b16 %v5462
    %v7224 = vunpack.c.h.b16 %v5462
    %v7225 = vunpack.c.l.b16 %v5463
    %v7226 = vunpack.c.h.b16 %v5463
    %v7227 = vunpack.c.l.b16 %v5464
    %v7228 = vunpack.c.h.b16 %v5464
    %v7229 = vunpack.c.l.b16 %v5465
    %v7230 = vunpack.c.l.b16 %v5466
    %v7231 = vunpack.c.h.b16 %v5466
    %v7232 = vunpack.c.l.b16 %v5467
    %v7233 = vunpack.c.h.b16 %v5467
    %v7234 = vunpack.c.l.b16 %v5468
    %v7235 = vunpack.c.h.b16 %v5468
    %v7236 = vunpack.c.l.b16 %v5469
    %v7237 = vunpack.c.l.b16 %v5470
    %v7238 = vunpack.c.h.b16 %v5470
    %v7239 = vunpack.c.l.b16 %v5471
    %v7240 = vunpack.c.h.b16 %v5471
    %v7241 = vunpack.c.l.b16 %v5472
    %v7242 = vunpack.c.h.b16 %v5472
    %v7243 = vunpack.c.l.b16 %v5473
    %v7244 = vunpack.c.l.b16 %v5474
    %v7245 = vunpack.c.h.b16 %v5474
    %v7246 = vunpack.c.l.b16 %v5475
    %v7247 = vunpack.c.h.b16 %v5475
    %v7248 = vunpack.c.l.b16 %v5476
    %v7249 = vunpack.c.h.b16 %v5476
    %v7250 = vunpack.c.l.b16 %v5477
    %v7251 = vunpack.c.l.b16 %v5478
    %v7252 = vunpack.c.h.b16 %v5478
    %v7253 = vunpack.c.l.b16 %v5479
    %v7254 = vunpack.c.h.b16 %v5479
    %v7255 = vunpack.c.l.b16 %v5480
    %v7256 = vunpack.c.h.b16 %v5480
    %v7257 = vunpack.c.l.b16 %v5481
    %v7258 = vunpack.c.l.b16 %v5482
    %v7259 = vunpack.c.h.b16 %v5482
    %v7260 = vunpack.c.l.b16 %v5483
    %v7261 = vunpack.c.h.b16 %v5483
    %v7262 = vunpack.c.l.b16 %v5484
    %v7263 = vunpack.c.h.b16 %v5484
    %v7264 = vunpack.c.l.b16 %v5485
    %v7265 = vunpack.c.l.b16 %v5486
    %v7266 = vunpack.c.h.b16 %v5486
    %v7267 = vunpack.c.l.b16 %v5487
    %v7268 = vunpack.c.h.b16 %v5487
    %v7269 = vunpack.c.l.b16 %v5488
    %v7270 = vunpack.c.h.b16 %v5488
    %v7271 = vunpack.c.l.b16 %v5489
    %v7272 = vunpack.c.l.b16 %v5490
    %v7273 = vunpack.c.h.b16 %v5490
    %v7274 = vunpack.c.l.b16 %v5491
    %v7275 = vunpack.c.h.b16 %v5491
    %v7276 = vunpack.c.l.b16 %v5492
    %v7277 = vunpack.c.h.b16 %v5492
    %v7278 = vunpack.c.l.b16 %v5493
    %v7279 = vunpack.c.l.b16 %v5494
    %v7280 = vunpack.c.h.b16 %v5494
    %v7281 = vunpack.c.l.b16 %v5495
    %v7282 = vunpack.c.h.b16 %v5495
    %v7283 = vunpack.c.l.b16 %v5496
    %v7284 = vunpack.c.h.b16 %v5496
    %v7285 = vunpack.c.l.b16 %v5497
    %v7286 = vunpack.c.l.b16 %v5498
    %v7287 = vunpack.c.h.b16 %v5498
    %v7288 = vunpack.c.l.b16 %v5499
    %v7289 = vunpack.c.h.b16 %v5499
    %v7290 = vunpack.c.l.b16 %v5500
    %v7291 = vunpack.c.h.b16 %v5500
    %v7292 = vunpack.c.l.b16 %v5501
    %v7293 = vunpack.c.l.b16 %v5502
    %v7294 = vunpack.c.h.b16 %v5502
    %v7295 = vunpack.c.l.b16 %v5503
    %v7296 = vunpack.c.h.b16 %v5503
    %v7297 = vunpack.c.l.b16 %v5504
    %v7298 = vunpack.c.h.b16 %v5504
    %v7299 = vunpack.c.l.b16 %v5505
    %v7300 = vunpack.c.l.b16 %v5506
    %v7301 = vunpack.c.h.b16 %v5506
    %v7302 = vunpack.c.l.b16 %v5507
    %v7303 = vunpack.c.h.b16 %v5507
    %v7304 = vunpack.c.l.b16 %v5508
    %v7305 = vunpack.c.h.b16 %v5508
    %v7306 = vunpack.c.l.b16 %v5509
    %v7307 = vunpack.c.l.b16 %v5510
    %v7308 = vunpack.c.h.b16 %v5510
    %v7309 = vunpack.c.l.b16 %v5511
    %v7310 = vunpack.c.h.b16 %v5511
    %v7311 = vunpack.c.l.b16 %v5512
    %v7312 = vunpack.c.h.b16 %v5512
    %v7313 = vunpack.c.l.b16 %v5513
    %v7314 = vunpack.c.l.b16 %v5514
    %v7315 = vunpack.c.h.b16 %v5514
    %v7316 = vunpack.c.l.b16 %v5515
    %v7317 = vunpack.c.h.b16 %v5515
    %v7318 = vunpack.c.l.b16 %v5516
    %v7319 = vunpack.c.h.b16 %v5516
    %v7320 = vunpack.c.l.b16 %v5517
    %v7321 = vunpack.c.l.b16 %v5518
    %v7322 = vunpack.c.h.b16 %v5518
    %v7323 = vunpack.c.l.b16 %v5519
    %v7324 = vunpack.c.h.b16 %v5519
    %v7325 = vunpack.c.l.b16 %v5520
    %v7326 = vunpack.c.h.b16 %v5520
    %v7327 = vunpack.c.l.b16 %v5521
    %v7328 = vunpack.c.l.b16 %v5522
    %v7329 = vunpack.c.h.b16 %v5522
    %v7330 = vunpack.c.l.b16 %v5523
    %v7331 = vunpack.c.h.b16 %v5523
    %v7332 = vunpack.c.l.b16 %v5524
    %v7333 = vunpack.c.h.b16 %v5524
    %v7334 = vunpack.c.l.b16 %v5525
    %v7335 = vunpack.c.l.b16 %v5526
    %v7336 = vunpack.c.h.b16 %v5526
    %v7337 = vunpack.c.l.b16 %v5527
    %v7338 = vunpack.c.h.b16 %v5527
    %v7339 = vunpack.c.l.b16 %v5528
    %v7340 = vunpack.c.h.b16 %v5528
    %v7341 = vunpack.c.l.b16 %v5529
    %v7342 = vunpack.c.l.b16 %v5530
    %v7343 = vunpack.c.h.b16 %v5530
    %v7344 = vunpack.c.l.b16 %v5531
    %v7345 = vunpack.c.h.b16 %v5531
    %v7346 = vunpack.c.l.b16 %v5532
    %v7347 = vunpack.c.h.b16 %v5532
    %v7348 = vunpack.c.l.b16 %v5533
    %v7349 = vunpack.c.l.b16 %v5534
    %v7350 = vunpack.c.h.b16 %v5534
    %v7351 = vunpack.c.l.b16 %v5535
    %v7352 = vunpack.c.h.b16 %v5535
    %v7353 = vunpack.c.l.b16 %v5536
    %v7354 = vunpack.c.h.b16 %v5536
    %v7355 = vunpack.c.l.b16 %v5537
    %v7356 = vunpack.c.l.b16 %v5538
    %v7357 = vunpack.c.h.b16 %v5538
    %v7358 = vunpack.c.l.b16 %v5539
    %v7359 = vunpack.c.h.b16 %v5539
    %v7360 = vunpack.c.l.b16 %v5540
    %v7361 = vunpack.c.h.b16 %v5540
    %v7362 = vunpack.c.l.b16 %v5541
    %v7363 = vunpack.c.l.b16 %v5542
    %v7364 = vunpack.c.h.b16 %v5542
    %v7365 = vunpack.c.l.b16 %v5543
    %v7366 = vunpack.c.h.b16 %v5543
    %v7367 = vunpack.c.l.b16 %v5544
    %v7368 = vunpack.c.h.b16 %v5544
    %v7369 = vunpack.c.l.b16 %v5545
    %v7370 = vunpack.c.l.b16 %v5546
    %v7371 = vunpack.c.h.b16 %v5546
    %v7372 = vunpack.c.l.b16 %v5547
    %v7373 = vunpack.c.h.b16 %v5547
    %v7374 = vunpack.c.l.b16 %v5548
    %v7375 = vunpack.c.h.b16 %v5548
    %v7376 = vunpack.c.l.b16 %v5549
    %v7377 = vunpack.c.l.b16 %v5550
    %v7378 = vunpack.c.h.b16 %v5550
    %v7379 = vunpack.c.l.b16 %v5551
    %v7380 = vunpack.c.h.b16 %v5551
    %v7381 = vunpack.c.l.b16 %v5552
    %v7382 = vunpack.c.h.b16 %v5552
    %v7383 = vunpack.c.l.b16 %v5553
    %v7384 = vunpack.c.l.b16 %v5554
    %v7385 = vunpack.c.h.b16 %v5554
    %v7386 = vunpack.c.l.b16 %v5555
    %v7387 = vunpack.c.h.b16 %v5555
    %v7388 = vunpack.c.l.b16 %v5556
    %v7389 = vunpack.c.h.b16 %v5556
    %v7390 = vunpack.c.l.b16 %v5557
    %v7391 = vunpack.c.l.b16 %v5558
    %v7392 = vunpack.c.h.b16 %v5558
    %v7393 = vunpack.c.l.b16 %v5559
    %v7394 = vunpack.c.h.b16 %v5559
    %v7395 = vunpack.c.l.b16 %v5560
    %v7396 = vunpack.c.h.b16 %v5560
    %v7397 = vunpack.c.l.b16 %v5561
    %v7398 = vunpack.c.l.b16 %v5562
    %v7399 = vunpack.c.h.b16 %v5562
    %v7400 = vunpack.c.l.b16 %v5563
    %v7401 = vunpack.c.h.b16 %v5563
    %v7402 = vunpack.c.l.b16 %v5564
    %v7403 = vunpack.c.h.b16 %v5564
    %v7404 = vunpack.c.l.b16 %v5565
    %v7405 = vunpack.c.l.b16 %v5566
    %v7406 = vunpack.c.h.b16 %v5566
    %v7407 = vunpack.c.l.b16 %v5567
    %v7408 = vunpack.c.h.b16 %v5567
    %v7409 = vunpack.c.l.b16 %v5568
    %v7410 = vunpack.c.h.b16 %v5568
    %v7411 = vunpack.c.l.b16 %v5569
    %v7412 = vunpack.c.l.b16 %v5570
    %v7413 = vunpack.c.h.b16 %v5570
    %v7414 = vunpack.c.l.b16 %v5571
    %v7415 = vunpack.c.h.b16 %v5571
    %v7416 = vunpack.c.l.b16 %v5572
    %v7417 = vunpack.c.h.b16 %v5572
    %v7418 = vunpack.c.l.b16 %v5573
    %v7419 = vunpack.c.l.b16 %v5574
    %v7420 = vunpack.c.h.b16 %v5574
    %v7421 = vunpack.c.l.b16 %v5575
    %v7422 = vunpack.c.h.b16 %v5575
    %v7423 = vunpack.c.l.b16 %v5576
    %v7424 = vunpack.c.h.b16 %v5576
    %v7425 = vunpack.c.l.b16 %v5577
    %v7426 = vunpack.c.l.b16 %v5578
    %v7427 = vunpack.c.h.b16 %v5578
    %v7428 = vunpack.c.l.b16 %v5579
    %v7429 = vunpack.c.h.b16 %v5579
    %v7430 = vunpack.c.l.b16 %v5580
    %v7431 = vunpack.c.h.b16 %v5580
    %v7432 = vunpack.c.l.b16 %v5581
    %v7433 = vunpack.c.l.b16 %v5582
    %v7434 = vunpack.c.h.b16 %v5582
    %v7435 = vunpack.c.l.b16 %v5583
    %v7436 = vunpack.c.h.b16 %v5583
    %v7437 = vunpack.c.l.b16 %v5584
    %v7438 = vunpack.c.h.b16 %v5584
    %v7439 = vunpack.c.l.b16 %v5585
    %v7440 = vunpack.c.l.b16 %v5586
    %v7441 = vunpack.c.h.b16 %v5586
    %v7442 = vunpack.c.l.b16 %v5587
    %v7443 = vunpack.c.h.b16 %v5587
    %v7444 = vunpack.c.l.b16 %v5588
    %v7445 = vunpack.c.h.b16 %v5588
    %v7446 = vunpack.c.l.b16 %v5589
    %v7447 = vunpack.c.l.b16 %v5590
    %v7448 = vunpack.c.h.b16 %v5590
    %v7449 = vunpack.c.l.b16 %v5591
    %v7450 = vunpack.c.h.b16 %v5591
    %v7451 = vunpack.c.l.b16 %v5592
    %v7452 = vunpack.c.h.b16 %v5592
    %v7453 = vunpack.c.l.b16 %v5593
    %v7454 = vunpack.c.l.b16 %v5594
    %v7455 = vunpack.c.h.b16 %v5594
    %v7456 = vunpack.c.l.b16 %v5595
    %v7457 = vunpack.c.h.b16 %v5595
    %v7458 = vunpack.c.l.b16 %v5596
    %v7459 = vunpack.c.h.b16 %v5596
    %v7460 = vunpack.c.l.b16 %v5597
    %v7461 = vunpack.c.l.b16 %v5598
    %v7462 = vunpack.c.h.b16 %v5598
    %v7463 = vunpack.c.l.b16 %v5599
    %v7464 = vunpack.c.h.b16 %v5599
    %v7465 = vunpack.c.l.b16 %v5600
    %v7466 = vunpack.c.h.b16 %v5600
    %v7467 = vunpack.c.l.b16 %v5601
    %v7468 = vunpack.c.l.b16 %v5602
    %v7469 = vunpack.c.h.b16 %v5602
    %v7470 = vunpack.c.l.b16 %v5603
    %v7471 = vunpack.c.h.b16 %v5603
    %v7472 = vunpack.c.l.b16 %v5604
    %v7473 = vunpack.c.h.b16 %v5604
    %v7474 = vunpack.c.l.b16 %v5605
    %v7475 = vunpack.c.l.b16 %v5606
    %v7476 = vunpack.c.h.b16 %v5606
    %v7477 = vunpack.c.l.b16 %v5607
    %v7478 = vunpack.c.h.b16 %v5607
    %v7479 = vunpack.c.l.b16 %v5608
    %v7480 = vunpack.c.h.b16 %v5608
    %v7481 = vunpack.c.l.b16 %v5609
    %v7482 = vunpack.c.l.b16 %v5610
    %v7483 = vunpack.c.h.b16 %v5610
    %v7484 = vunpack.c.l.b16 %v5611
    %v7485 = vunpack.c.h.b16 %v5611
    %v7486 = vunpack.c.l.b16 %v5612
    %v7487 = vunpack.c.h.b16 %v5612
    %v7488 = vunpack.c.l.b16 %v5613
    %v7489 = vunpack.c.l.b16 %v5614
    %v7490 = vunpack.c.h.b16 %v5614
    %v7491 = vunpack.c.l.b16 %v5615
    %v7492 = vunpack.c.h.b16 %v5615
    %v7493 = vunpack.c.l.b16 %v5616
    %v7494 = vunpack.c.h.b16 %v5616
    %v7495 = vunpack.c.l.b16 %v5617
    %v7496 = vunpack.c.l.b16 %v5618
    %v7497 = vunpack.c.h.b16 %v5618
    %v7498 = vunpack.c.l.b16 %v5619
    %v7499 = vunpack.c.h.b16 %v5619
    %v7500 = vunpack.c.l.b16 %v5620
    %v7501 = vunpack.c.h.b16 %v5620
    %v7502 = vunpack.c.l.b16 %v5621
    %v7503 = vunpack.c.l.b16 %v5622
    %v7504 = vunpack.c.h.b16 %v5622
    %v7505 = vunpack.c.l.b16 %v5623
    %v7506 = vunpack.c.h.b16 %v5623
    %v7507 = vunpack.c.l.b16 %v5624
    %v7508 = vunpack.c.h.b16 %v5624
    %v7509 = vunpack.c.l.b16 %v5625
    %v7510 = vunpack.c.l.b16 %v5626
    %v7511 = vunpack.c.h.b16 %v5626
    %v7512 = vunpack.c.l.b16 %v5627
    %v7513 = vunpack.c.h.b16 %v5627
    %v7514 = vunpack.c.l.b16 %v5628
    %v7515 = vunpack.c.h.b16 %v5628
    %v7516 = vunpack.c.l.b16 %v5629
    %v7517 = vunpack.c.l.b16 %v5630
    %v7518 = vunpack.c.h.b16 %v5630
    %v7519 = vunpack.c.l.b16 %v5631
    %v7520 = vunpack.c.h.b16 %v5631
    %v7521 = vunpack.c.l.b16 %v5632
    %v7522 = vunpack.c.h.b16 %v5632
    %v7523 = vunpack.c.l.b16 %v5633
    %v7524 = vunpack.c.l.b16 %v5634
    %v7525 = vunpack.c.h.b16 %v5634
    %v7526 = vunpack.c.l.b16 %v5635
    %v7527 = vunpack.c.h.b16 %v5635
    %v7528 = vunpack.c.l.b16 %v5636
    %v7529 = vunpack.c.h.b16 %v5636
    %v7530 = vunpack.c.l.b16 %v5637
    %v7531 = vunpack.c.l.b16 %v5638
    %v7532 = vunpack.c.h.b16 %v5638
    %v7533 = vunpack.c.l.b16 %v5639
    %v7534 = vunpack.c.h.b16 %v5639
    %v7535 = vunpack.c.l.b16 %v5640
    %v7536 = vunpack.c.h.b16 %v5640
    %v7537 = vunpack.c.l.b16 %v5641
    %v7538 = vunpack.c.l.b16 %v5642
    %v7539 = vunpack.c.h.b16 %v5642
    %v7540 = vunpack.c.l.b16 %v5643
    %v7541 = vunpack.c.h.b16 %v5643
    %v7542 = vunpack.c.l.b16 %v5644
    %v7543 = vunpack.c.h.b16 %v5644
    %v7544 = vunpack.c.l.b16 %v5645
    %v7545 = vunpack.c.l.b16 %v5646
    %v7546 = vunpack.c.h.b16 %v5646
    %v7547 = vunpack.c.l.b16 %v5647
    %v7548 = vunpack.c.h.b16 %v5647
    %v7549 = vunpack.c.l.b16 %v5648
    %v7550 = vunpack.c.h.b16 %v5648
    %v7551 = vunpack.c.l.b16 %v5649
    %v7552 = vunpack.c.l.b16 %v5650
    %v7553 = vunpack.c.h.b16 %v5650
    %v7554 = vunpack.c.l.b16 %v5651
    %v7555 = vunpack.c.h.b16 %v5651
    %v7556 = vunpack.c.l.b16 %v5652
    %v7557 = vunpack.c.h.b16 %v5652
    %v7558 = vunpack.c.l.b16 %v5653
    %v7559 = vunpack.c.l.b16 %v5654
    %v7560 = vunpack.c.h.b16 %v5654
    %v7561 = vunpack.c.l.b16 %v5655
    %v7562 = vunpack.c.h.b16 %v5655
    %v7563 = vunpack.c.l.b16 %v5656
    %v7564 = vunpack.c.h.b16 %v5656
    %v7565 = vunpack.c.l.b16 %v5657
    %v7566 = vunpack.c.l.b16 %v5658
    %v7567 = vunpack.c.h.b16 %v5658
    %v7568 = vunpack.c.l.b16 %v5659
    %v7569 = vunpack.c.h.b16 %v5659
    %v7570 = vunpack.c.l.b16 %v5660
    %v7571 = vunpack.c.h.b16 %v5660
    %v7572 = vunpack.c.l.b16 %v5661
    %v7573 = vunpack.c.l.b16 %v5662
    %v7574 = vunpack.c.h.b16 %v5662
    %v7575 = vunpack.c.l.b16 %v5663
    %v7576 = vunpack.c.h.b16 %v5663
    %v7577 = vunpack.c.l.b16 %v5664
    %v7578 = vunpack.c.h.b16 %v5664
    %v7579 = vunpack.c.l.b16 %v5665
    %v7580 = vunpack.c.l.b16 %v5666
    %v7581 = vunpack.c.h.b16 %v5666
    %v7582 = vunpack.c.l.b16 %v5667
    %v7583 = vunpack.c.h.b16 %v5667
    %v7584 = vunpack.c.l.b16 %v5668
    %v7585 = vunpack.c.h.b16 %v5668
    %v7586 = vunpack.c.l.b16 %v5669
    %v7587 = vunpack.c.l.b16 %v5670
    %v7588 = vunpack.c.h.b16 %v5670
    %v7589 = vunpack.c.l.b16 %v5671
    %v7590 = vunpack.c.h.b16 %v5671
    %v7591 = vunpack.c.l.b16 %v5672
    %v7592 = vunpack.c.h.b16 %v5672
    %v7593 = vunpack.c.l.b16 %v5673
    %v7594 = vunpack.c.l.b16 %v5674
    %v7595 = vunpack.c.h.b16 %v5674
    %v7596 = vunpack.c.l.b16 %v5675
    %v7597 = vunpack.c.h.b16 %v5675
    %v7598 = vunpack.c.l.b16 %v5676
    %v7599 = vunpack.c.h.b16 %v5676
    %v7600 = vunpack.c.l.b16 %v5677
    %v7601 = vunpack.c.l.b16 %v5678
    %v7602 = vunpack.c.h.b16 %v5678
    %v7603 = vunpack.c.l.b16 %v5679
    %v7604 = vunpack.c.h.b16 %v5679
    %v7605 = vunpack.c.l.b16 %v5680
    %v7606 = vunpack.c.h.b16 %v5680
    %v7607 = vunpack.c.l.b16 %v5681
    %v7608 = vunpack.c.l.b16 %v5682
    %v7609 = vunpack.c.h.b16 %v5682
    %v7610 = vunpack.c.l.b16 %v5683
    %v7611 = vunpack.c.h.b16 %v5683
    %v7612 = vunpack.c.l.b16 %v5684
    %v7613 = vunpack.c.h.b16 %v5684
    %v7614 = vunpack.c.l.b16 %v5685
    %v7615 = vunpack.c.l.b16 %v5686
    %v7616 = vunpack.c.h.b16 %v5686
    %v7617 = vunpack.c.l.b16 %v5687
    %v7618 = vunpack.c.h.b16 %v5687
    %v7619 = vunpack.c.l.b16 %v5688
    %v7620 = vunpack.c.h.b16 %v5688
    %v7621 = vunpack.c.l.b16 %v5689
    %v7622 = vunpack.c.l.b16 %v5690
    %v7623 = vunpack.c.h.b16 %v5690
    %v7624 = vunpack.c.l.b16 %v5691
    %v7625 = vunpack.c.h.b16 %v5691
    %v7626 = vunpack.c.l.b16 %v5692
    %v7627 = vunpack.c.h.b16 %v5692
    %v7628 = vunpack.c.l.b16 %v5693
    %v7629 = vunpack.c.l.b16 %v5694
    %v7630 = vunpack.c.h.b16 %v5694
    %v7631 = vunpack.c.l.b16 %v5695
    %v7632 = vunpack.c.h.b16 %v5695
    %v7633 = vunpack.c.l.b16 %v5696
    %v7634 = vunpack.c.h.b16 %v5696
    %v7635 = vunpack.c.l.b16 %v5697
    %v7636 = vunpack.c.l.b16 %v5698
    %v7637 = vunpack.c.h.b16 %v5698
    %v7638 = vunpack.c.l.b16 %v5699
    %v7639 = vunpack.c.h.b16 %v5699
    %v7640 = vunpack.c.l.b16 %v5700
    %v7641 = vunpack.c.h.b16 %v5700
    %v7642 = vunpack.c.l.b16 %v5701
    %v7643 = vunpack.c.l.b16 %v5702
    %v7644 = vunpack.c.h.b16 %v5702
    %v7645 = vunpack.c.l.b16 %v5703
    %v7646 = vunpack.c.h.b16 %v5703
    %v7647 = vunpack.c.l.b16 %v5704
    %v7648 = vunpack.c.h.b16 %v5704
    %v7649 = vunpack.c.l.b16 %v5705
    %v7650 = vunpack.c.l.b16 %v5706
    %v7651 = vunpack.c.h.b16 %v5706
    %v7652 = vunpack.c.l.b16 %v5707
    %v7653 = vunpack.c.h.b16 %v5707
    %v7654 = vunpack.c.l.b16 %v5708
    %v7655 = vunpack.c.h.b16 %v5708
    %v7656 = vunpack.c.l.b16 %v5709
    %v7657 = vunpack.c.l.b16 %v5710
    %v7658 = vunpack.c.h.b16 %v5710
    %v7659 = vunpack.c.l.b16 %v5711
    %v7660 = vunpack.c.h.b16 %v5711
    %v7661 = vunpack.c.l.b16 %v5712
    %v7662 = vunpack.c.h.b16 %v5712
    %v7663 = vunpack.c.l.b16 %v5713
    %v7664 = vunpack.c.l.b16 %v5714
    %v7665 = vunpack.c.h.b16 %v5714
    %v7666 = vunpack.c.l.b16 %v5715
    %v7667 = vunpack.c.h.b16 %v5715
    %v7668 = vunpack.c.l.b16 %v5716
    %v7669 = vunpack.c.h.b16 %v5716
    %v7670 = vunpack.c.l.b16 %v5717
    %v7671 = vunpack.c.l.b16 %v5718
    %v7672 = vunpack.c.h.b16 %v5718
    %v7673 = vunpack.c.l.b16 %v5719
    %v7674 = vunpack.c.h.b16 %v5719
    %v7675 = vunpack.c.l.b16 %v5720
    %v7676 = vunpack.c.h.b16 %v5720
    %v7677 = vunpack.c.l.b16 %v5721
    %v7678 = vunpack.c.l.b16 %v5722
    %v7679 = vunpack.c.h.b16 %v5722
    %v7680 = vunpack.c.l.b16 %v5723
    %v7681 = vunpack.c.h.b16 %v5723
    %v7682 = vunpack.c.l.b16 %v5724
    %v7683 = vunpack.c.h.b16 %v5724
    %v7684 = vunpack.c.l.b16 %v5725
    %v7685 = vunpack.c.l.b16 %v5726
    %v7686 = vunpack.c.h.b16 %v5726
    %v7687 = vunpack.c.l.b16 %v5727
    %v7688 = vunpack.c.h.b16 %v5727
    %v7689 = vunpack.c.l.b16 %v5728
    %v7690 = vunpack.c.h.b16 %v5728
    %v7691 = vunpack.c.l.b16 %v5729
    %v7692 = vunpack.c.l.b16 %v5730
    %v7693 = vunpack.c.h.b16 %v5730
    %v7694 = vunpack.c.l.b16 %v5731
    %v7695 = vunpack.c.h.b16 %v5731
    %v7696 = vunpack.c.l.b16 %v5732
    %v7697 = vunpack.c.h.b16 %v5732
    %v7698 = vunpack.c.l.b16 %v5733
    %v7699 = vunpack.c.l.b16 %v5734
    %v7700 = vunpack.c.h.b16 %v5734
    %v7701 = vunpack.c.l.b16 %v5735
    %v7702 = vunpack.c.h.b16 %v5735
    %v7703 = vunpack.c.l.b16 %v5736
    %v7704 = vunpack.c.h.b16 %v5736
    %v7705 = vunpack.c.l.b16 %v5737
    %v7706 = vunpack.c.l.b16 %v5738
    %v7707 = vunpack.c.h.b16 %v5738
    %v7708 = vunpack.c.l.b16 %v5739
    %v7709 = vunpack.c.h.b16 %v5739
    %v7710 = vunpack.c.l.b16 %v5740
    %v7711 = vunpack.c.h.b16 %v5740
    %v7712 = vunpack.c.l.b16 %v5741
    %v7713 = vunpack.c.l.b16 %v5742
    %v7714 = vunpack.c.h.b16 %v5742
    %v7715 = vunpack.c.l.b16 %v5743
    %v7716 = vunpack.c.h.b16 %v5743
    %v7717 = vunpack.c.l.b16 %v5744
    %v7718 = vunpack.c.h.b16 %v5744
    %v7719 = vunpack.c.l.b16 %v5745
    %v7720 = vunpack.c.l.b16 %v5746
    %v7721 = vunpack.c.h.b16 %v5746
    %v7722 = vunpack.c.l.b16 %v5747
    %v7723 = vunpack.c.h.b16 %v5747
    %v7724 = vunpack.c.l.b16 %v5748
    %v7725 = vunpack.c.h.b16 %v5748
    %v7726 = vunpack.c.l.b16 %v5749
    %v7727 = vunpack.c.l.b16 %v5750
    %v7728 = vunpack.c.h.b16 %v5750
    %v7729 = vunpack.c.l.b16 %v5751
    %v7730 = vunpack.c.h.b16 %v5751
    %v7731 = vunpack.c.l.b16 %v5752
    %v7732 = vunpack.c.h.b16 %v5752
    %v7733 = vunpack.c.l.b16 %v5753
    %v7734 = vunpack.c.l.b16 %v5754
    %v7735 = vunpack.c.h.b16 %v5754
    %v7736 = vunpack.c.l.b16 %v5755
    %v7737 = vunpack.c.h.b16 %v5755
    %v7738 = vunpack.c.l.b16 %v5756
    %v7739 = vunpack.c.h.b16 %v5756
    %v7740 = vunpack.c.l.b16 %v5757
    %v7741 = vunpack.c.l.b16 %v5758
    %v7742 = vunpack.c.h.b16 %v5758
    %v7743 = vunpack.c.l.b16 %v5759
    %v7744 = vunpack.c.h.b16 %v5759
    %v7745 = vunpack.c.l.b16 %v5760
    %v7746 = vunpack.c.h.b16 %v5760
    %v7747 = vunpack.c.l.b16 %v5761
    %v7748 = vunpack.c.l.b16 %v5762
    %v7749 = vunpack.c.h.b16 %v5762
    %v7750 = vunpack.c.l.b16 %v5763
    %v7751 = vunpack.c.h.b16 %v5763
    %v7752 = vunpack.c.l.b16 %v5764
    %v7753 = vunpack.c.h.b16 %v5764
    %v7754 = vunpack.c.l.b16 %v5765
    %v7755 = vunpack.c.l.b16 %v5766
    %v7756 = vunpack.c.h.b16 %v5766
    %v7757 = vunpack.c.l.b16 %v5767
    %v7758 = vunpack.c.h.b16 %v5767
    %v7759 = vunpack.c.l.b16 %v5768
    %v7760 = vunpack.c.h.b16 %v5768
    %v7761 = vunpack.c.l.b16 %v5769
    %v7762 = vunpack.c.l.b16 %v5770
    %v7763 = vunpack.c.h.b16 %v5770
    %v7764 = vunpack.c.l.b16 %v5771
    %v7765 = vunpack.c.h.b16 %v5771
    %v7766 = vunpack.c.l.b16 %v5772
    %v7767 = vunpack.c.h.b16 %v5772
    %v7768 = vunpack.c.l.b16 %v5773
    %v7769 = vunpack.c.l.b16 %v5774
    %v7770 = vunpack.c.h.b16 %v5774
    %v7771 = vunpack.c.l.b16 %v5775
    %v7772 = vunpack.c.h.b16 %v5775
    %v7773 = vunpack.c.l.b16 %v5776
    %v7774 = vunpack.c.h.b16 %v5776
    %v7775 = vunpack.c.l.b16 %v5777
    %v7776 = vunpack.c.l.b16 %v5778
    %v7777 = vunpack.c.h.b16 %v5778
    %v7778 = vunpack.c.l.b16 %v5779
    %v7779 = vunpack.c.h.b16 %v5779
    %v7780 = vunpack.c.l.b16 %v5780
    %v7781 = vunpack.c.h.b16 %v5780
    %v7782 = vunpack.c.l.b16 %v5781
    %v7783 = vunpack.c.l.b16 %v5782
    %v7784 = vunpack.c.h.b16 %v5782
    %v7785 = vunpack.c.l.b16 %v5783
    %v7786 = vunpack.c.h.b16 %v5783
    %v7787 = vunpack.c.l.b16 %v5784
    %v7788 = vunpack.c.h.b16 %v5784
    %v7789 = vunpack.c.l.b16 %v5785
    %v7790 = vunpack.c.l.b16 %v5786
    %v7791 = vunpack.c.h.b16 %v5786
    %v7792 = vunpack.c.l.b16 %v5787
    %v7793 = vunpack.c.h.b16 %v5787
    %v7794 = vunpack.c.l.b16 %v5788
    %v7795 = vunpack.c.h.b16 %v5788
    %v7796 = vunpack.c.l.b16 %v5789
    %v7797 = vunpack.c.l.b16 %v5790
    %v7798 = vunpack.c.h.b16 %v5790
    %v7799 = vunpack.c.l.b16 %v5791
    %v7800 = vunpack.c.h.b16 %v5791
    %v7801 = vunpack.c.l.b16 %v5792
    %v7802 = vunpack.c.h.b16 %v5792
    %v7803 = vunpack.c.l.b16 %v5793
    %v7804 = vunpack.c.l.b16 %v5794
    %v7805 = vunpack.c.h.b16 %v5794
    %v7806 = vunpack.c.l.b16 %v5795
    %v7807 = vunpack.c.h.b16 %v5795
    %v7808 = vunpack.c.l.b16 %v5796
    %v7809 = vunpack.c.h.b16 %v5796
    %v7810 = vunpack.c.l.b16 %v5797
    %v7811 = vunpack.c.l.b16 %v5798
    %v7812 = vunpack.c.h.b16 %v5798
    %v7813 = vunpack.c.l.b16 %v5799
    %v7814 = vunpack.c.h.b16 %v5799
    %v7815 = vunpack.c.l.b16 %v5800
    %v7816 = vunpack.c.h.b16 %v5800
    %v7817 = vunpack.c.l.b16 %v5801
    %v7818 = vunpack.c.l.b16 %v5802
    %v7819 = vunpack.c.h.b16 %v5802
    %v7820 = vunpack.c.l.b16 %v5803
    %v7821 = vunpack.c.h.b16 %v5803
    %v7822 = vunpack.c.l.b16 %v5804
    %v7823 = vunpack.c.h.b16 %v5804
    %v7824 = vunpack.c.l.b16 %v5805
    %v7825 = vunpack.c.l.b16 %v5806
    %v7826 = vunpack.c.h.b16 %v5806
    %v7827 = vunpack.c.l.b16 %v5807
    %v7828 = vunpack.c.h.b16 %v5807
    %v7829 = vunpack.c.l.b16 %v5808
    %v7830 = vunpack.c.h.b16 %v5808
    %v7831 = vunpack.c.l.b16 %v5809
    %v7832 = vunpack.c.l.b16 %v5810
    %v7833 = vunpack.c.h.b16 %v5810
    %v7834 = vunpack.c.l.b16 %v5811
    %v7835 = vunpack.c.h.b16 %v5811
    %v7836 = vunpack.c.l.b16 %v5812
    %v7837 = vunpack.c.h.b16 %v5812
    %v7838 = vunpack.c.l.b16 %v5813
    %v7839 = vunpack.c.l.b16 %v5814
    %v7840 = vunpack.c.h.b16 %v5814
    %v7841 = vunpack.c.l.b16 %v5815
    %v7842 = vunpack.c.h.b16 %v5815
    %v7843 = vunpack.c.l.b16 %v5816
    %v7844 = vunpack.c.h.b16 %v5816
    %v7845 = vunpack.c.l.b16 %v5817
    %v7846 = vunpack.c.l.b16 %v5818
    %v7847 = vunpack.c.h.b16 %v5818
    %v7848 = vunpack.c.l.b16 %v5819
    %v7849 = vunpack.c.h.b16 %v5819
    %v7850 = vunpack.c.l.b16 %v5820
    %v7851 = vunpack.c.h.b16 %v5820
    %v7852 = vunpack.c.l.b16 %v5821
    %v7853 = vunpack.c.l.b16 %v5822
    %v7854 = vunpack.c.h.b16 %v5822
    %v7855 = vunpack.c.l.b16 %v5823
    %v7856 = vunpack.c.h.b16 %v5823
    %v7857 = vunpack.c.l.b16 %v5824
    %v7858 = vunpack.c.h.b16 %v5824
    %v7859 = vunpack.c.l.b16 %v5825
    %v7860 = vunpack.c.l.b16 %v5826
    %v7861 = vunpack.c.h.b16 %v5826
    %v7862 = vunpack.c.l.b16 %v5827
    %v7863 = vunpack.c.h.b16 %v5827
    %v7864 = vunpack.c.l.b16 %v5828
    %v7865 = vunpack.c.h.b16 %v5828
    %v7866 = vunpack.c.l.b16 %v5829
    %v7867 = vunpack.c.l.b16 %v5830
    %v7868 = vunpack.c.h.b16 %v5830
    %v7869 = vunpack.c.l.b16 %v5831
    %v7870 = vunpack.c.h.b16 %v5831
    %v7871 = vunpack.c.l.b16 %v5832
    %v7872 = vunpack.c.h.b16 %v5832
    %v7873 = vunpack.c.l.b16 %v5833
    %v7874 = vunpack.c.l.b16 %v5834
    %v7875 = vunpack.c.h.b16 %v5834
    %v7876 = vunpack.c.l.b16 %v5835
    %v7877 = vunpack.c.h.b16 %v5835
    %v7878 = vunpack.c.l.b16 %v5836
    %v7879 = vunpack.c.h.b16 %v5836
    %v7880 = vunpack.c.l.b16 %v5837
    %v7881 = vunpack.c.l.b16 %v5838
    %v7882 = vunpack.c.h.b16 %v5838
    %v7883 = vunpack.c.l.b16 %v5839
    %v7884 = vunpack.c.h.b16 %v5839
    %v7885 = vunpack.c.l.b16 %v5840
    %v7886 = vunpack.c.h.b16 %v5840
    %v7887 = vunpack.c.l.b16 %v5841
    %v7888 = vunpack.c.l.b16 %v5842
    %v7889 = vunpack.c.h.b16 %v5842
    %v7890 = vunpack.c.l.b16 %v5843
    %v7891 = vunpack.c.h.b16 %v5843
    %v7892 = vunpack.c.l.b16 %v5844
    %v7893 = vunpack.c.h.b16 %v5844
    %v7894 = vunpack.c.l.b16 %v5845
    %v7895 = vunpack.c.l.b16 %v5846
    %v7896 = vunpack.c.h.b16 %v5846
    %v7897 = vunpack.c.l.b16 %v5847
    %v7898 = vunpack.c.h.b16 %v5847
    %v7899 = vunpack.c.l.b16 %v5848
    %v7900 = vunpack.c.h.b16 %v5848
    %v7901 = vunpack.c.l.b16 %v5849
    %v7902 = vunpack.c.l.b16 %v5850
    %v7903 = vunpack.c.h.b16 %v5850
    %v7904 = vunpack.c.l.b16 %v5851
    %v7905 = vunpack.c.h.b16 %v5851
    %v7906 = vunpack.c.l.b16 %v5852
    %v7907 = vunpack.c.h.b16 %v5852
    %v7908 = vunpack.c.l.b16 %v5853
    %v7909 = vunpack.c.l.b16 %v5854
    %v7910 = vunpack.c.h.b16 %v5854
    %v7911 = vunpack.c.l.b16 %v5855
    %v7912 = vunpack.c.h.b16 %v5855
    %v7913 = vunpack.c.l.b16 %v5856
    %v7914 = vunpack.c.h.b16 %v5856
    %v7915 = vunpack.c.l.b16 %v5857
    %v7916 = vunpack.c.l.b16 %v5858
    %v7917 = vunpack.c.h.b16 %v5858
    %v7918 = vunpack.c.l.b16 %v5859
    %v7919 = vunpack.c.h.b16 %v5859
    %v7920 = vunpack.c.l.b16 %v5860
    %v7921 = vunpack.c.h.b16 %v5860
    %v7922 = vunpack.c.l.b16 %v5861
    %v7923 = vunpack.c.l.b16 %v5862
    %v7924 = vunpack.c.h.b16 %v5862
    %v7925 = vunpack.c.l.b16 %v5863
    %v7926 = vunpack.c.h.b16 %v5863
    %v7927 = vunpack.c.l.b16 %v5864
    %v7928 = vunpack.c.h.b16 %v5864
    %v7929 = vunpack.c.l.b16 %v5865
    %v7930 = vunpack.c.l.b16 %v5866
    %v7931 = vunpack.c.h.b16 %v5866
    %v7932 = vunpack.c.l.b16 %v5867
    %v7933 = vunpack.c.h.b16 %v5867
    %v7934 = vunpack.c.l.b16 %v5868
    %v7935 = vunpack.c.h.b16 %v5868
    %v7936 = vunpack.c.l.b16 %v5869
    %v7937 = vunpack.c.l.b16 %v5870
    %v7938 = vunpack.c.h.b16 %v5870
    %v7939 = vunpack.c.l.b16 %v5871
    %v7940 = vunpack.c.h.b16 %v5871
    %v7941 = vunpack.c.l.b16 %v5872
    %v7942 = vunpack.c.h.b16 %v5872
    %v7943 = vunpack.c.l.b16 %v5873
    %v7944 = vunpack.c.l.b16 %v5874
    %v7945 = vunpack.c.h.b16 %v5874
    %v7946 = vunpack.c.l.b16 %v5875
    %v7947 = vunpack.c.h.b16 %v5875
    %v7948 = vunpack.c.l.b16 %v5876
    %v7949 = vunpack.c.h.b16 %v5876
    %v7950 = vunpack.c.l.b16 %v5877
    %v7951 = vunpack.c.l.b16 %v5878
    %v7952 = vunpack.c.h.b16 %v5878
    %v7953 = vunpack.c.l.b16 %v5879
    %v7954 = vunpack.c.h.b16 %v5879
    %v7955 = vunpack.c.l.b16 %v5880
    %v7956 = vunpack.c.h.b16 %v5880
    %v7957 = vunpack.c.l.b16 %v5881
    %v7958 = vunpack.c.l.b16 %v5882
    %v7959 = vunpack.c.h.b16 %v5882
    %v7960 = vunpack.c.l.b16 %v5883
    %v7961 = vunpack.c.h.b16 %v5883
    %v7962 = vunpack.c.l.b16 %v5884
    %v7963 = vunpack.c.h.b16 %v5884
    %v7964 = vunpack.c.l.b16 %v5885
    %v7965 = vunpack.c.l.b16 %v5886
    %v7966 = vunpack.c.h.b16 %v5886
    %v7967 = vunpack.c.l.b16 %v5887
    %v7968 = vunpack.c.h.b16 %v5887
    %v7969 = vunpack.c.l.b16 %v5888
    %v7970 = vunpack.c.h.b16 %v5888
    %v7971 = vunpack.c.l.b16 %v5889
    %v7972 = vunpack.c.l.b16 %v5890
    %v7973 = vunpack.c.h.b16 %v5890
    %v7974 = vunpack.c.l.b16 %v5891
    %v7975 = vunpack.c.h.b16 %v5891
    %v7976 = vunpack.c.l.b16 %v5892
    %v7977 = vunpack.c.h.b16 %v5892
    %v7978 = vunpack.c.l.b16 %v5893
    %v7979 = vunpack.c.l.b16 %v5894
    %v7980 = vunpack.c.h.b16 %v5894
    %v7981 = vunpack.c.l.b16 %v5895
    %v7982 = vunpack.c.h.b16 %v5895
    %v7983 = vunpack.c.l.b16 %v5896
    %v7984 = vunpack.c.h.b16 %v5896
    %v7985 = vunpack.c.l.b16 %v5897
    %v7986 = vunpack.c.l.b16 %v5898
    %v7987 = vunpack.c.h.b16 %v5898
    %v7988 = vunpack.c.l.b16 %v5899
    %v7989 = vunpack.c.h.b16 %v5899
    %v7990 = vunpack.c.l.b16 %v5900
    %v7991 = vunpack.c.h.b16 %v5900
    %v7992 = vunpack.c.l.b16 %v5901
    %v7993 = vunpack.c.l.b16 %v5902
    %v7994 = vunpack.c.h.b16 %v5902
    %v7995 = vunpack.c.l.b16 %v5903
    %v7996 = vunpack.c.h.b16 %v5903
    %v7997 = vunpack.c.l.b16 %v5904
    %v7998 = vunpack.c.h.b16 %v5904
    %v7999 = vunpack.c.l.b16 %v5905
    %v8000 = vunpack.c.l.b16 %v5906
    %v8001 = vunpack.c.h.b16 %v5906
    %v8002 = vunpack.c.l.b16 %v5907
    %v8003 = vunpack.c.h.b16 %v5907
    %v8004 = vunpack.c.l.b16 %v5908
    %v8005 = vunpack.c.h.b16 %v5908
    %v8006 = vunpack.c.l.b16 %v5909
    %v8007 = vunpack.c.l.b16 %v5910
    %v8008 = vunpack.c.h.b16 %v5910
    %v8009 = vunpack.c.l.b16 %v5911
    %v8010 = vunpack.c.h.b16 %v5911
    %v8011 = vunpack.c.l.b16 %v5912
    %v8012 = vunpack.c.h.b16 %v5912
    %v8013 = vunpack.c.l.b16 %v5913
    %v8014 = vunpack.c.l.b16 %v5914
    %v8015 = vunpack.c.h.b16 %v5914
    %v8016 = vunpack.c.l.b16 %v5915
    %v8017 = vunpack.c.h.b16 %v5915
    %v8018 = vunpack.c.l.b16 %v5916
    %v8019 = vunpack.c.h.b16 %v5916
    %v8020 = vunpack.c.l.b16 %v5917
    %v8021 = vunpack.c.l.b16 %v5918
    %v8022 = vunpack.c.h.b16 %v5918
    %v8023 = vunpack.c.l.b16 %v5919
    %v8024 = vunpack.c.h.b16 %v5919
    %v8025 = vunpack.c.l.b16 %v5920
    %v8026 = vunpack.c.h.b16 %v5920
    %v8027 = vunpack.c.l.b16 %v5921
    %v8028 = vunpack.c.l.b16 %v5922
    %v8029 = vunpack.c.h.b16 %v5922
    %v8030 = vunpack.c.l.b16 %v5923
    %v8031 = vunpack.c.h.b16 %v5923
    %v8032 = vunpack.c.l.b16 %v5924
    %v8033 = vunpack.c.h.b16 %v5924
    %v8034 = vunpack.c.l.b16 %v5925
    %v8035 = vunpack.c.l.b16 %v5926
    %v8036 = vunpack.c.h.b16 %v5926
    %v8037 = vunpack.c.l.b16 %v5927
    %v8038 = vunpack.c.h.b16 %v5927
    %v8039 = vunpack.c.l.b16 %v5928
    %v8040 = vunpack.c.h.b16 %v5928
    %v8041 = vunpack.c.l.b16 %v5929
    %v8042 = vunpack.c.l.b16 %v5930
    %v8043 = vunpack.c.h.b16 %v5930
    %v8044 = vunpack.c.l.b16 %v5931
    %v8045 = vunpack.c.h.b16 %v5931
    %v8046 = vunpack.c.l.b16 %v5932
    %v8047 = vunpack.c.h.b16 %v5932
    %v8048 = vunpack.c.l.b16 %v5933
    %v8049 = vunpack.c.l.b16 %v5934
    %v8050 = vunpack.c.h.b16 %v5934
    %v8051 = vunpack.c.l.b16 %v5935
    %v8052 = vunpack.c.h.b16 %v5935
    %v8053 = vunpack.c.l.b16 %v5936
    %v8054 = vunpack.c.h.b16 %v5936
    %v8055 = vunpack.c.l.b16 %v5937
    %v8056 = vunpack.c.l.b16 %v5938
    %v8057 = vunpack.c.h.b16 %v5938
    %v8058 = vunpack.c.l.b16 %v5939
    %v8059 = vunpack.c.h.b16 %v5939
    %v8060 = vunpack.c.l.b16 %v5940
    %v8061 = vunpack.c.h.b16 %v5940
    %v8062 = vunpack.c.l.b16 %v5941
    %v8063 = vunpack.c.l.b16 %v5942
    %v8064 = vunpack.c.h.b16 %v5942
    %v8065 = vunpack.c.l.b16 %v5943
    %v8066 = vunpack.c.h.b16 %v5943
    %v8067 = vunpack.c.l.b16 %v5944
    %v8068 = vunpack.c.h.b16 %v5944
    %v8069 = vunpack.c.l.b16 %v5945
    %v8070 = vunpack.c.l.b16 %v5946
    %v8071 = vunpack.c.h.b16 %v5946
    %v8072 = vunpack.c.l.b16 %v5947
    %v8073 = vunpack.c.h.b16 %v5947
    %v8074 = vunpack.c.l.b16 %v5948
    %v8075 = vunpack.c.h.b16 %v5948
    %v8076 = vunpack.c.l.b16 %v5949
    %v8077 = vunpack.c.l.b16 %v5950
    %v8078 = vunpack.c.h.b16 %v5950
    %v8079 = vunpack.c.l.b16 %v5951
    %v8080 = vunpack.c.h.b16 %v5951
    %v8081 = vunpack.c.l.b16 %v5952
    %v8082 = vunpack.c.h.b16 %v5952
    %v8083 = vunpack.c.l.b16 %v5953
    %v8084 = vunpack.c.l.b16 %v5954
    %v8085 = vunpack.c.h.b16 %v5954
    %v8086 = vunpack.c.l.b16 %v5955
    %v8087 = vunpack.c.h.b16 %v5955
    %v8088 = vunpack.c.l.b16 %v5956
    %v8089 = vunpack.c.h.b16 %v5956
    %v8090 = vunpack.c.l.b16 %v5957
    %v8091 = vunpack.c.l.b16 %v5958
    %v8092 = vunpack.c.h.b16 %v5958
    %v8093 = vunpack.c.l.b16 %v5959
    %v8094 = vunpack.c.h.b16 %v5959
    %v8095 = vunpack.c.l.b16 %v5960
    %v8096 = vunpack.c.h.b16 %v5960
    %v8097 = vunpack.c.l.b16 %v5961
    %v8098 = vunpack.c.l.b16 %v5962
    %v8099 = vunpack.c.h.b16 %v5962
    %v8100 = vunpack.c.l.b16 %v5963
    %v8101 = vunpack.c.h.b16 %v5963
    %v8102 = vunpack.c.l.b16 %v5964
    %v8103 = vunpack.c.h.b16 %v5964
    %v8104 = vunpack.c.l.b16 %v5965
    %v8105 = vunpack.c.l.b16 %v5966
    %v8106 = vunpack.c.h.b16 %v5966
    %v8107 = vunpack.c.l.b16 %v5967
    %v8108 = vunpack.c.h.b16 %v5967
    %v8109 = vunpack.c.l.b16 %v5968
    %v8110 = vunpack.c.h.b16 %v5968
    %v8111 = vunpack.c.l.b16 %v5969
    %v8112 = vunpack.c.l.b16 %v5970
    %v8113 = vunpack.c.h.b16 %v5970
    %v8114 = vunpack.c.l.b16 %v5971
    %v8115 = vunpack.c.h.b16 %v5971
    %v8116 = vunpack.c.l.b16 %v5972
    %v8117 = vunpack.c.h.b16 %v5972
    %v8118 = vunpack.c.l.b16 %v5973
    %v8119 = vunpack.c.l.b16 %v5974
    %v8120 = vunpack.c.h.b16 %v5974
    %v8121 = vunpack.c.l.b16 %v5975
    %v8122 = vunpack.c.h.b16 %v5975
    %v8123 = vunpack.c.l.b16 %v5976
    %v8124 = vunpack.c.h.b16 %v5976
    %v8125 = vunpack.c.l.b16 %v5977
    %v8126 = vunpack.c.l.b16 %v5978
    %v8127 = vunpack.c.h.b16 %v5978
    %v8128 = vunpack.c.l.b16 %v5979
    %v8129 = vunpack.c.h.b16 %v5979
    %v8130 = vunpack.c.l.b16 %v5980
    %v8131 = vunpack.c.h.b16 %v5980
    %v8132 = vunpack.c.l.b16 %v5981
    %v8133 = vunpack.c.l.b16 %v5982
    %v8134 = vunpack.c.h.b16 %v5982
    %v8135 = vunpack.c.l.b16 %v5983
    %v8136 = vunpack.c.h.b16 %v5983
    %v8137 = vunpack.c.l.b16 %v5984
    %v8138 = vunpack.c.h.b16 %v5984
    %v8139 = vunpack.c.l.b16 %v5985
    %v8140 = vunpack.c.l.b16 %v5986
    %v8141 = vunpack.c.h.b16 %v5986
    %v8142 = vunpack.c.l.b16 %v5987
    %v8143 = vunpack.c.h.b16 %v5987
    %v8144 = vunpack.c.l.b16 %v5988
    %v8145 = vunpack.c.h.b16 %v5988
    %v8146 = vunpack.c.l.b16 %v5989
    %v8147 = vunpack.c.l.b16 %v5990
    %v8148 = vunpack.c.h.b16 %v5990
    %v8149 = vunpack.c.l.b16 %v5991
    %v8150 = vunpack.c.h.b16 %v5991
    %v8151 = vunpack.c.l.b16 %v5992
    %v8152 = vunpack.c.h.b16 %v5992
    %v8153 = vunpack.c.l.b16 %v5993
    %v8154 = vunpack.c.l.b16 %v5994
    %v8155 = vunpack.c.h.b16 %v5994
    %v8156 = vunpack.c.l.b16 %v5995
    %v8157 = vunpack.c.h.b16 %v5995
    %v8158 = vunpack.c.l.b16 %v5996
    %v8159 = vunpack.c.h.b16 %v5996
    %v8160 = vunpack.c.l.b16 %v5997
    %v8161 = vunpack.c.l.b16 %v5998
    %v8162 = vunpack.c.h.b16 %v5998
    %v8163 = vunpack.c.l.b16 %v5999
    %v8164 = vunpack.c.h.b16 %v5999
    %v8165 = vunpack.c.l.b16 %v6000
    %v8166 = vunpack.c.h.b16 %v6000
    %v8167 = vunpack.c.l.b16 %v6001
    %v8168 = vunpack.c.l.b16 %v6002
    %v8169 = vunpack.c.h.b16 %v6002
    %v8170 = vunpack.c.l.b16 %v6003
    %v8171 = vunpack.c.h.b16 %v6003
    %v8172 = vunpack.c.l.b16 %v6004
    %v8173 = vunpack.c.h.b16 %v6004
    %v8174 = vunpack.c.l.b16 %v6005
    %v8175 = vunpack.c.l.b16 %v6006
    %v8176 = vunpack.c.h.b16 %v6006
    %v8177 = vunpack.c.l.b16 %v6007
    %v8178 = vunpack.c.h.b16 %v6007
    %v8179 = vunpack.c.l.b16 %v6008
    %v8180 = vunpack.c.h.b16 %v6008
    %v8181 = vunpack.c.l.b16 %v6009
    %v8182 = vunpack.c.l.b16 %v6010
    %v8183 = vunpack.c.h.b16 %v6010
    %v8184 = vunpack.c.l.b16 %v6011
    %v8185 = vunpack.c.h.b16 %v6011
    %v8186 = vunpack.c.l.b16 %v6012
    %v8187 = vunpack.c.h.b16 %v6012
    %v8188 = vunpack.c.l.b16 %v6013
    %v8189 = vunpack.c.l.b16 %v6014
    %v8190 = vunpack.c.h.b16 %v6014
    %v8191 = vunpack.c.l.b16 %v6015
    %v8192 = vunpack.c.h.b16 %v6015
    %v8193 = vunpack.c.l.b16 %v6016
    %v8194 = vunpack.c.h.b16 %v6016
    %v8195 = vunpack.c.l.b16 %v6017
    %v8196 = vunpack.c.l.b16 %v6018
    %v8197 = vunpack.c.h.b16 %v6018
    %v8198 = vunpack.c.l.b16 %v6019
    %v8199 = vunpack.c.h.b16 %v6019
    %v8200 = vunpack.c.l.b16 %v6020
    %v8201 = vunpack.c.h.b16 %v6020
    %v8202 = vunpack.c.l.b16 %v6021
    %v8203 = vunpack.c.l.b16 %v6022
    %v8204 = vunpack.c.h.b16 %v6022
    %v8205 = vunpack.c.l.b16 %v6023
    %v8206 = vunpack.c.h.b16 %v6023
    %v8207 = vunpack.c.l.b16 %v6024
    %v8208 = vunpack.c.h.b16 %v6024
    %v8209 = vunpack.c.l.b16 %v6025
    %v8210 = vunpack.c.l.b16 %v6026
    %v8211 = vunpack.c.h.b16 %v6026
    %v8212 = vunpack.c.l.b16 %v6027
    %v8213 = vunpack.c.h.b16 %v6027
    %v8214 = vunpack.c.l.b16 %v6028
    %v8215 = vunpack.c.h.b16 %v6028
    %v8216 = vunpack.c.l.b16 %v6029
    %v8217 = vunpack.c.l.b16 %v6030
    %v8218 = vunpack.c.h.b16 %v6030
    %v8219 = vunpack.c.l.b16 %v6031
    %v8220 = vunpack.c.h.b16 %v6031
    %v8221 = vunpack.c.l.b16 %v6032
    %v8222 = vunpack.c.h.b16 %v6032
    %v8223 = vunpack.c.l.b16 %v6033
    %v8224 = vunpack.c.l.b16 %v6034
    %v8225 = vunpack.c.h.b16 %v6034
    %v8226 = vunpack.c.l.b16 %v6035
    %v8227 = vunpack.c.h.b16 %v6035
    %v8228 = vunpack.c.l.b16 %v6036
    %v8229 = vunpack.c.h.b16 %v6036
    %v8230 = vunpack.c.l.b16 %v6037
    %v8231 = vpack.c.b16 %v6866, %v6859
    %v8232 = vpack.c.b16 %v6867, %v6860
    %v8233 = vpack.c.b16 %v6868, %v6861
    %v8234 = vpack.c.b16 %v6869, %v6862
    %v8235 = vpack.c.b16 %v6870, %v6863
    %v8236 = vpack.c.b16 %v6871, %v6864
    %v8237 = vpack.c.b16 %v6872, %v6865
    %v8238 = vpack.c.b16 %v6880, %v6873
    %v8239 = vpack.c.b16 %v6881, %v6874
    %v8240 = vpack.c.b16 %v6882, %v6875
    %v8241 = vpack.c.b16 %v6883, %v6876
    %v8242 = vpack.c.b16 %v6884, %v6877
    %v8243 = vpack.c.b16 %v6885, %v6878
    %v8244 = vpack.c.b16 %v6886, %v6879
    %v8245 = vpack.c.b16 %v6894, %v6887
    %v8246 = vpack.c.b16 %v6895, %v6888
    %v8247 = vpack.c.b16 %v6896, %v6889
    %v8248 = vpack.c.b16 %v6897, %v6890
    %v8249 = vpack.c.b16 %v6898, %v6891
    %v8250 = vpack.c.b16 %v6899, %v6892
    %v8251 = vpack.c.b16 %v6900, %v6893
    %v8252 = vpack.c.b16 %v6908, %v6901
    %v8253 = vpack.c.b16 %v6909, %v6902
    %v8254 = vpack.c.b16 %v6910, %v6903
    %v8255 = vpack.c.b16 %v6911, %v6904
    %v8256 = vpack.c.b16 %v6912, %v6905
    %v8257 = vpack.c.b16 %v6913, %v6906
    %v8258 = vpack.c.b16 %v6914, %v6907
    %v8259 = vpack.c.b16 %v6922, %v6915
    %v8260 = vpack.c.b16 %v6923, %v6916
    %v8261 = vpack.c.b16 %v6924, %v6917
    %v8262 = vpack.c.b16 %v6925, %v6918
    %v8263 = vpack.c.b16 %v6926, %v6919
    %v8264 = vpack.c.b16 %v6927, %v6920
    %v8265 = vpack.c.b16 %v6928, %v6921
    %v8266 = vpack.c.b16 %v6936, %v6929
    %v8267 = vpack.c.b16 %v6937, %v6930
    %v8268 = vpack.c.b16 %v6938, %v6931
    %v8269 = vpack.c.b16 %v6939, %v6932
    %v8270 = vpack.c.b16 %v6940, %v6933
    %v8271 = vpack.c.b16 %v6941, %v6934
    %v8272 = vpack.c.b16 %v6942, %v6935
    %v8273 = vpack.c.b16 %v6950, %v6943
    %v8274 = vpack.c.b16 %v6951, %v6944
    %v8275 = vpack.c.b16 %v6952, %v6945
    %v8276 = vpack.c.b16 %v6953, %v6946
    %v8277 = vpack.c.b16 %v6954, %v6947
    %v8278 = vpack.c.b16 %v6955, %v6948
    %v8279 = vpack.c.b16 %v6956, %v6949
    %v8280 = vpack.c.b16 %v6964, %v6957
    %v8281 = vpack.c.b16 %v6965, %v6958
    %v8282 = vpack.c.b16 %v6966, %v6959
    %v8283 = vpack.c.b16 %v6967, %v6960
    %v8284 = vpack.c.b16 %v6968, %v6961
    %v8285 = vpack.c.b16 %v6969, %v6962
    %v8286 = vpack.c.b16 %v6970, %v6963
    %v8287 = vpack.c.b16 %v6978, %v6971
    %v8288 = vpack.c.b16 %v6979, %v6972
    %v8289 = vpack.c.b16 %v6980, %v6973
    %v8290 = vpack.c.b16 %v6981, %v6974
    %v8291 = vpack.c.b16 %v6982, %v6975
    %v8292 = vpack.c.b16 %v6983, %v6976
    %v8293 = vpack.c.b16 %v6984, %v6977
    %v8294 = vpack.c.b16 %v6992, %v6985
    %v8295 = vpack.c.b16 %v6993, %v6986
    %v8296 = vpack.c.b16 %v6994, %v6987
    %v8297 = vpack.c.b16 %v6995, %v6988
    %v8298 = vpack.c.b16 %v6996, %v6989
    %v8299 = vpack.c.b16 %v6997, %v6990
    %v8300 = vpack.c.b16 %v6998, %v6991
    %v8301 = vpack.c.b16 %v7006, %v6999
    %v8302 = vpack.c.b16 %v7007, %v7000
    %v8303 = vpack.c.b16 %v7008, %v7001
    %v8304 = vpack.c.b16 %v7009, %v7002
    %v8305 = vpack.c.b16 %v7010, %v7003
    %v8306 = vpack.c.b16 %v7011, %v7004
    %v8307 = vpack.c.b16 %v7012, %v7005
    %v8308 = vpack.c.b16 %v7020, %v7013
    %v8309 = vpack.c.b16 %v7021, %v7014
    %v8310 = vpack.c.b16 %v7022, %v7015
    %v8311 = vpack.c.b16 %v7023, %v7016
    %v8312 = vpack.c.b16 %v7024, %v7017
    %v8313 = vpack.c.b16 %v7025, %v7018
    %v8314 = vpack.c.b16 %v7026, %v7019
    %v8315 = vpack.c.b16 %v7034, %v7027
    %v8316 = vpack.c.b16 %v7035, %v7028
    %v8317 = vpack.c.b16 %v7036, %v7029
    %v8318 = vpack.c.b16 %v7037, %v7030
    %v8319 = vpack.c.b16 %v7038, %v7031
    %v8320 = vpack.c.b16 %v7039, %v7032
    %v8321 = vpack.c.b16 %v7040, %v7033
    %v8322 = vpack.c.b16 %v7048, %v7041
    %v8323 = vpack.c.b16 %v7049, %v7042
    %v8324 = vpack.c.b16 %v7050, %v7043
    %v8325 = vpack.c.b16 %v7051, %v7044
    %v8326 = vpack.c.b16 %v7052, %v7045
    %v8327 = vpack.c.b16 %v7053, %v7046
    %v8328 = vpack.c.b16 %v7054, %v7047
    %v8329 = vpack.c.b16 %v7062, %v7055
    %v8330 = vpack.c.b16 %v7063, %v7056
    %v8331 = vpack.c.b16 %v7064, %v7057
    %v8332 = vpack.c.b16 %v7065, %v7058
    %v8333 = vpack.c.b16 %v7066, %v7059
    %v8334 = vpack.c.b16 %v7067, %v7060
    %v8335 = vpack.c.b16 %v7068, %v7061
    %v8336 = vpack.c.b16 %v7076, %v7069
    %v8337 = vpack.c.b16 %v7077, %v7070
    %v8338 = vpack.c.b16 %v7078, %v7071
    %v8339 = vpack.c.b16 %v7079, %v7072
    %v8340 = vpack.c.b16 %v7080, %v7073
    %v8341 = vpack.c.b16 %v7081, %v7074
    %v8342 = vpack.c.b16 %v7082, %v7075
    %v8343 = vpack.c.b16 %v7090, %v7083
    %v8344 = vpack.c.b16 %v7091, %v7084
    %v8345 = vpack.c.b16 %v7092, %v7085
    %v8346 = vpack.c.b16 %v7093, %v7086
    %v8347 = vpack.c.b16 %v7094, %v7087
    %v8348 = vpack.c.b16 %v7095, %v7088
    %v8349 = vpack.c.b16 %v7096, %v7089
    %v8350 = vpack.c.b16 %v7104, %v7097
    %v8351 = vpack.c.b16 %v7105, %v7098
    %v8352 = vpack.c.b16 %v7106, %v7099
    %v8353 = vpack.c.b16 %v7107, %v7100
    %v8354 = vpack.c.b16 %v7108, %v7101
    %v8355 = vpack.c.b16 %v7109, %v7102
    %v8356 = vpack.c.b16 %v7110, %v7103
    %v8357 = vpack.c.b16 %v7118, %v7111
    %v8358 = vpack.c.b16 %v7119, %v7112
    %v8359 = vpack.c.b16 %v7120, %v7113
    %v8360 = vpack.c.b16 %v7121, %v7114
    %v8361 = vpack.c.b16 %v7122, %v7115
    %v8362 = vpack.c.b16 %v7123, %v7116
    %v8363 = vpack.c.b16 %v7124, %v7117
    %v8364 = vpack.c.b16 %v7132, %v7125
    %v8365 = vpack.c.b16 %v7133, %v7126
    %v8366 = vpack.c.b16 %v7134, %v7127
    %v8367 = vpack.c.b16 %v7135, %v7128
    %v8368 = vpack.c.b16 %v7136, %v7129
    %v8369 = vpack.c.b16 %v7137, %v7130
    %v8370 = vpack.c.b16 %v7138, %v7131
    %v8371 = vpack.c.b16 %v7146, %v7139
    %v8372 = vpack.c.b16 %v7147, %v7140
    %v8373 = vpack.c.b16 %v7148, %v7141
    %v8374 = vpack.c.b16 %v7149, %v7142
    %v8375 = vpack.c.b16 %v7150, %v7143
    %v8376 = vpack.c.b16 %v7151, %v7144
    %v8377 = vpack.c.b16 %v7152, %v7145
    %v8378 = vpack.c.b16 %v7160, %v7153
    %v8379 = vpack.c.b16 %v7161, %v7154
    %v8380 = vpack.c.b16 %v7162, %v7155
    %v8381 = vpack.c.b16 %v7163, %v7156
    %v8382 = vpack.c.b16 %v7164, %v7157
    %v8383 = vpack.c.b16 %v7165, %v7158
    %v8384 = vpack.c.b16 %v7166, %v7159
    %v8385 = vpack.c.b16 %v7174, %v7167
    %v8386 = vpack.c.b16 %v7175, %v7168
    %v8387 = vpack.c.b16 %v7176, %v7169
    %v8388 = vpack.c.b16 %v7177, %v7170
    %v8389 = vpack.c.b16 %v7178, %v7171
    %v8390 = vpack.c.b16 %v7179, %v7172
    %v8391 = vpack.c.b16 %v7180, %v7173
    %v8392 = vpack.c.b16 %v7188, %v7181
    %v8393 = vpack.c.b16 %v7189, %v7182
    %v8394 = vpack.c.b16 %v7190, %v7183
    %v8395 = vpack.c.b16 %v7191, %v7184
    %v8396 = vpack.c.b16 %v7192, %v7185
    %v8397 = vpack.c.b16 %v7193, %v7186
    %v8398 = vpack.c.b16 %v7194, %v7187
    %v8399 = vpack.c.b16 %v7202, %v7195
    %v8400 = vpack.c.b16 %v7203, %v7196
    %v8401 = vpack.c.b16 %v7204, %v7197
    %v8402 = vpack.c.b16 %v7205, %v7198
    %v8403 = vpack.c.b16 %v7206, %v7199
    %v8404 = vpack.c.b16 %v7207, %v7200
    %v8405 = vpack.c.b16 %v7208, %v7201
    %v8406 = vpack.c.b16 %v7216, %v7209
    %v8407 = vpack.c.b16 %v7217, %v7210
    %v8408 = vpack.c.b16 %v7218, %v7211
    %v8409 = vpack.c.b16 %v7219, %v7212
    %v8410 = vpack.c.b16 %v7220, %v7213
    %v8411 = vpack.c.b16 %v7221, %v7214
    %v8412 = vpack.c.b16 %v7222, %v7215
    %v8413 = vpack.c.b16 %v7230, %v7223
    %v8414 = vpack.c.b16 %v7231, %v7224
    %v8415 = vpack.c.b16 %v7232, %v7225
    %v8416 = vpack.c.b16 %v7233, %v7226
    %v8417 = vpack.c.b16 %v7234, %v7227
    %v8418 = vpack.c.b16 %v7235, %v7228
    %v8419 = vpack.c.b16 %v7236, %v7229
    %v8420 = vpack.c.b16 %v7244, %v7237
    %v8421 = vpack.c.b16 %v7245, %v7238
    %v8422 = vpack.c.b16 %v7246, %v7239
    %v8423 = vpack.c.b16 %v7247, %v7240
    %v8424 = vpack.c.b16 %v7248, %v7241
    %v8425 = vpack.c.b16 %v7249, %v7242
    %v8426 = vpack.c.b16 %v7250, %v7243
    %v8427 = vpack.c.b16 %v7258, %v7251
    %v8428 = vpack.c.b16 %v7259, %v7252
    %v8429 = vpack.c.b16 %v7260, %v7253
    %v8430 = vpack.c.b16 %v7261, %v7254
    %v8431 = vpack.c.b16 %v7262, %v7255
    %v8432 = vpack.c.b16 %v7263, %v7256
    %v8433 = vpack.c.b16 %v7264, %v7257
    %v8434 = vpack.c.b16 %v7272, %v7265
    %v8435 = vpack.c.b16 %v7273, %v7266
    %v8436 = vpack.c.b16 %v7274, %v7267
    %v8437 = vpack.c.b16 %v7275, %v7268
    %v8438 = vpack.c.b16 %v7276, %v7269
    %v8439 = vpack.c.b16 %v7277, %v7270
    %v8440 = vpack.c.b16 %v7278, %v7271
    %v8441 = vpack.c.b16 %v7286, %v7279
    %v8442 = vpack.c.b16 %v7287, %v7280
    %v8443 = vpack.c.b16 %v7288, %v7281
    %v8444 = vpack.c.b16 %v7289, %v7282
    %v8445 = vpack.c.b16 %v7290, %v7283
    %v8446 = vpack.c.b16 %v7291, %v7284
    %v8447 = vpack.c.b16 %v7292, %v7285
    %v8448 = vpack.c.b16 %v7300, %v7293
    %v8449 = vpack.c.b16 %v7301, %v7294
    %v8450 = vpack.c.b16 %v7302, %v7295
    %v8451 = vpack.c.b16 %v7303, %v7296
    %v8452 = vpack.c.b16 %v7304, %v7297
    %v8453 = vpack.c.b16 %v7305, %v7298
    %v8454 = vpack.c.b16 %v7306, %v7299
    %v8455 = vpack.c.b16 %v7314, %v7307
    %v8456 = vpack.c.b16 %v7315, %v7308
    %v8457 = vpack.c.b16 %v7316, %v7309
    %v8458 = vpack.c.b16 %v7317, %v7310
    %v8459 = vpack.c.b16 %v7318, %v7311
    %v8460 = vpack.c.b16 %v7319, %v7312
    %v8461 = vpack.c.b16 %v7320, %v7313
    %v8462 = vpack.c.b16 %v7328, %v7321
    %v8463 = vpack.c.b16 %v7329, %v7322
    %v8464 = vpack.c.b16 %v7330, %v7323
    %v8465 = vpack.c.b16 %v7331, %v7324
    %v8466 = vpack.c.b16 %v7332, %v7325
    %v8467 = vpack.c.b16 %v7333, %v7326
    %v8468 = vpack.c.b16 %v7334, %v7327
    %v8469 = vpack.c.b16 %v7342, %v7335
    %v8470 = vpack.c.b16 %v7343, %v7336
    %v8471 = vpack.c.b16 %v7344, %v7337
    %v8472 = vpack.c.b16 %v7345, %v7338
    %v8473 = vpack.c.b16 %v7346, %v7339
    %v8474 = vpack.c.b16 %v7347, %v7340
    %v8475 = vpack.c.b16 %v7348, %v7341
    %v8476 = vpack.c.b16 %v7356, %v7349
    %v8477 = vpack.c.b16 %v7357, %v7350
    %v8478 = vpack.c.b16 %v7358, %v7351
    %v8479 = vpack.c.b16 %v7359, %v7352
    %v8480 = vpack.c.b16 %v7360, %v7353
    %v8481 = vpack.c.b16 %v7361, %v7354
    %v8482 = vpack.c.b16 %v7362, %v7355
    %v8483 = vpack.c.b16 %v7370, %v7363
    %v8484 = vpack.c.b16 %v7371, %v7364
    %v8485 = vpack.c.b16 %v7372, %v7365
    %v8486 = vpack.c.b16 %v7373, %v7366
    %v8487 = vpack.c.b16 %v7374, %v7367
    %v8488 = vpack.c.b16 %v7375, %v7368
    %v8489 = vpack.c.b16 %v7376, %v7369
    %v8490 = vpack.c.b16 %v7384, %v7377
    %v8491 = vpack.c.b16 %v7385, %v7378
    %v8492 = vpack.c.b16 %v7386, %v7379
    %v8493 = vpack.c.b16 %v7387, %v7380
    %v8494 = vpack.c.b16 %v7388, %v7381
    %v8495 = vpack.c.b16 %v7389, %v7382
    %v8496 = vpack.c.b16 %v7390, %v7383
    %v8497 = vpack.c.b16 %v7398, %v7391
    %v8498 = vpack.c.b16 %v7399, %v7392
    %v8499 = vpack.c.b16 %v7400, %v7393
    %v8500 = vpack.c.b16 %v7401, %v7394
    %v8501 = vpack.c.b16 %v7402, %v7395
    %v8502 = vpack.c.b16 %v7403, %v7396
    %v8503 = vpack.c.b16 %v7404, %v7397
    %v8504 = vpack.c.b16 %v7412, %v7405
    %v8505 = vpack.c.b16 %v7413, %v7406
    %v8506 = vpack.c.b16 %v7414, %v7407
    %v8507 = vpack.c.b16 %v7415, %v7408
    %v8508 = vpack.c.b16 %v7416, %v7409
    %v8509 = vpack.c.b16 %v7417, %v7410
    %v8510 = vpack.c.b16 %v7418, %v7411
    %v8511 = vpack.c.b16 %v7426, %v7419
    %v8512 = vpack.c.b16 %v7427, %v7420
    %v8513 = vpack.c.b16 %v7428, %v7421
    %v8514 = vpack.c.b16 %v7429, %v7422
    %v8515 = vpack.c.b16 %v7430, %v7423
    %v8516 = vpack.c.b16 %v7431, %v7424
    %v8517 = vpack.c.b16 %v7432, %v7425
    %v8518 = vpack.c.b16 %v7440, %v7433
    %v8519 = vpack.c.b16 %v7441, %v7434
    %v8520 = vpack.c.b16 %v7442, %v7435
    %v8521 = vpack.c.b16 %v7443, %v7436
    %v8522 = vpack.c.b16 %v7444, %v7437
    %v8523 = vpack.c.b16 %v7445, %v7438
    %v8524 = vpack.c.b16 %v7446, %v7439
    %v8525 = vpack.c.b16 %v7454, %v7447
    %v8526 = vpack.c.b16 %v7455, %v7448
    %v8527 = vpack.c.b16 %v7456, %v7449
    %v8528 = vpack.c.b16 %v7457, %v7450
    %v8529 = vpack.c.b16 %v7458, %v7451
    %v8530 = vpack.c.b16 %v7459, %v7452
    %v8531 = vpack.c.b16 %v7460, %v7453
    %v8532 = vpack.c.b16 %v7468, %v7461
    %v8533 = vpack.c.b16 %v7469, %v7462
    %v8534 = vpack.c.b16 %v7470, %v7463
    %v8535 = vpack.c.b16 %v7471, %v7464
    %v8536 = vpack.c.b16 %v7472, %v7465
    %v8537 = vpack.c.b16 %v7473, %v7466
    %v8538 = vpack.c.b16 %v7474, %v7467
    %v8539 = vpack.c.b16 %v7482, %v7475
    %v8540 = vpack.c.b16 %v7483, %v7476
    %v8541 = vpack.c.b16 %v7484, %v7477
    %v8542 = vpack.c.b16 %v7485, %v7478
    %v8543 = vpack.c.b16 %v7486, %v7479
    %v8544 = vpack.c.b16 %v7487, %v7480
    %v8545 = vpack.c.b16 %v7488, %v7481
    %v8546 = vpack.c.b16 %v7496, %v7489
    %v8547 = vpack.c.b16 %v7497, %v7490
    %v8548 = vpack.c.b16 %v7498, %v7491
    %v8549 = vpack.c.b16 %v7499, %v7492
    %v8550 = vpack.c.b16 %v7500, %v7493
    %v8551 = vpack.c.b16 %v7501, %v7494
    %v8552 = vpack.c.b16 %v7502, %v7495
    %v8553 = vpack.c.b16 %v7510, %v7503
    %v8554 = vpack.c.b16 %v7511, %v7504
    %v8555 = vpack.c.b16 %v7512, %v7505
    %v8556 = vpack.c.b16 %v7513, %v7506
    %v8557 = vpack.c.b16 %v7514, %v7507
    %v8558 = vpack.c.b16 %v7515, %v7508
    %v8559 = vpack.c.b16 %v7516, %v7509
    %v8560 = vpack.c.b16 %v7524, %v7517
    %v8561 = vpack.c.b16 %v7525, %v7518
    %v8562 = vpack.c.b16 %v7526, %v7519
    %v8563 = vpack.c.b16 %v7527, %v7520
    %v8564 = vpack.c.b16 %v7528, %v7521
    %v8565 = vpack.c.b16 %v7529, %v7522
    %v8566 = vpack.c.b16 %v7530, %v7523
    %v8567 = vpack.c.b16 %v7538, %v7531
    %v8568 = vpack.c.b16 %v7539, %v7532
    %v8569 = vpack.c.b16 %v7540, %v7533
    %v8570 = vpack.c.b16 %v7541, %v7534
    %v8571 = vpack.c.b16 %v7542, %v7535
    %v8572 = vpack.c.b16 %v7543, %v7536
    %v8573 = vpack.c.b16 %v7544, %v7537
    %v8574 = vpack.c.b16 %v7552, %v7545
    %v8575 = vpack.c.b16 %v7553, %v7546
    %v8576 = vpack.c.b16 %v7554, %v7547
    %v8577 = vpack.c.b16 %v7555, %v7548
    %v8578 = vpack.c.b16 %v7556, %v7549
    %v8579 = vpack.c.b16 %v7557, %v7550
    %v8580 = vpack.c.b16 %v7558, %v7551
    %v8581 = vpack.c.b16 %v7566, %v7559
    %v8582 = vpack.c.b16 %v7567, %v7560
    %v8583 = vpack.c.b16 %v7568, %v7561
    %v8584 = vpack.c.b16 %v7569, %v7562
    %v8585 = vpack.c.b16 %v7570, %v7563
    %v8586 = vpack.c.b16 %v7571, %v7564
    %v8587 = vpack.c.b16 %v7572, %v7565
    %v8588 = vpack.c.b16 %v7580, %v7573
    %v8589 = vpack.c.b16 %v7581, %v7574
    %v8590 = vpack.c.b16 %v7582, %v7575
    %v8591 = vpack.c.b16 %v7583, %v7576
    %v8592 = vpack.c.b16 %v7584, %v7577
    %v8593 = vpack.c.b16 %v7585, %v7578
    %v8594 = vpack.c.b16 %v7586, %v7579
    %v8595 = vpack.c.b16 %v7594, %v7587
    %v8596 = vpack.c.b16 %v7595, %v7588
    %v8597 = vpack.c.b16 %v7596, %v7589
    %v8598 = vpack.c.b16 %v7597, %v7590
    %v8599 = vpack.c.b16 %v7598, %v7591
    %v8600 = vpack.c.b16 %v7599, %v7592
    %v8601 = vpack.c.b16 %v7600, %v7593
    %v8602 = vpack.c.b16 %v7608, %v7601
    %v8603 = vpack.c.b16 %v7609, %v7602
    %v8604 = vpack.c.b16 %v7610, %v7603
    %v8605 = vpack.c.b16 %v7611, %v7604
    %v8606 = vpack.c.b16 %v7612, %v7605
    %v8607 = vpack.c.b16 %v7613, %v7606
    %v8608 = vpack.c.b16 %v7614, %v7607
    %v8609 = vpack.c.b16 %v7622, %v7615
    %v8610 = vpack.c.b16 %v7623, %v7616
    %v8611 = vpack.c.b16 %v7624, %v7617
    %v8612 = vpack.c.b16 %v7625, %v7618
    %v8613 = vpack.c.b16 %v7626, %v7619
    %v8614 = vpack.c.b16 %v7627, %v7620
    %v8615 = vpack.c.b16 %v7628, %v7621
    %v8616 = vpack.c.b16 %v7636, %v7629
    %v8617 = vpack.c.b16 %v7637, %v7630
    %v8618 = vpack.c.b16 %v7638, %v7631
    %v8619 = vpack.c.b16 %v7639, %v7632
    %v8620 = vpack.c.b16 %v7640, %v7633
    %v8621 = vpack.c.b16 %v7641, %v7634
    %v8622 = vpack.c.b16 %v7642, %v7635
    %v8623 = vpack.c.b16 %v7650, %v7643
    %v8624 = vpack.c.b16 %v7651, %v7644
    %v8625 = vpack.c.b16 %v7652, %v7645
    %v8626 = vpack.c.b16 %v7653, %v7646
    %v8627 = vpack.c.b16 %v7654, %v7647
    %v8628 = vpack.c.b16 %v7655, %v7648
    %v8629 = vpack.c.b16 %v7656, %v7649
    %v8630 = vpack.c.b16 %v7664, %v7657
    %v8631 = vpack.c.b16 %v7665, %v7658
    %v8632 = vpack.c.b16 %v7666, %v7659
    %v8633 = vpack.c.b16 %v7667, %v7660
    %v8634 = vpack.c.b16 %v7668, %v7661
    %v8635 = vpack.c.b16 %v7669, %v7662
    %v8636 = vpack.c.b16 %v7670, %v7663
    %v8637 = vpack.c.b16 %v7678, %v7671
    %v8638 = vpack.c.b16 %v7679, %v7672
    %v8639 = vpack.c.b16 %v7680, %v7673
    %v8640 = vpack.c.b16 %v7681, %v7674
    %v8641 = vpack.c.b16 %v7682, %v7675
    %v8642 = vpack.c.b16 %v7683, %v7676
    %v8643 = vpack.c.b16 %v7684, %v7677
    %v8644 = vpack.c.b16 %v7692, %v7685
    %v8645 = vpack.c.b16 %v7693, %v7686
    %v8646 = vpack.c.b16 %v7694, %v7687
    %v8647 = vpack.c.b16 %v7695, %v7688
    %v8648 = vpack.c.b16 %v7696, %v7689
    %v8649 = vpack.c.b16 %v7697, %v7690
    %v8650 = vpack.c.b16 %v7698, %v7691
    %v8651 = vpack.c.b16 %v7706, %v7699
    %v8652 = vpack.c.b16 %v7707, %v7700
    %v8653 = vpack.c.b16 %v7708, %v7701
    %v8654 = vpack.c.b16 %v7709, %v7702
    %v8655 = vpack.c.b16 %v7710, %v7703
    %v8656 = vpack.c.b16 %v7711, %v7704
    %v8657 = vpack.c.b16 %v7712, %v7705
    %v8658 = vpack.c.b16 %v7720, %v7713
    %v8659 = vpack.c.b16 %v7721, %v7714
    %v8660 = vpack.c.b16 %v7722, %v7715
    %v8661 = vpack.c.b16 %v7723, %v7716
    %v8662 = vpack.c.b16 %v7724, %v7717
    %v8663 = vpack.c.b16 %v7725, %v7718
    %v8664 = vpack.c.b16 %v7726, %v7719
    %v8665 = vpack.c.b16 %v7734, %v7727
    %v8666 = vpack.c.b16 %v7735, %v7728
    %v8667 = vpack.c.b16 %v7736, %v7729
    %v8668 = vpack.c.b16 %v7737, %v7730
    %v8669 = vpack.c.b16 %v7738, %v7731
    %v8670 = vpack.c.b16 %v7739, %v7732
    %v8671 = vpack.c.b16 %v7740, %v7733
    %v8672 = vpack.c.b16 %v7748, %v7741
    %v8673 = vpack.c.b16 %v7749, %v7742
    %v8674 = vpack.c.b16 %v7750, %v7743
    %v8675 = vpack.c.b16 %v7751, %v7744
    %v8676 = vpack.c.b16 %v7752, %v7745
    %v8677 = vpack.c.b16 %v7753, %v7746
    %v8678 = vpack.c.b16 %v7754, %v7747
    %v8679 = vpack.c.b16 %v7762, %v7755
    %v8680 = vpack.c.b16 %v7763, %v7756
    %v8681 = vpack.c.b16 %v7764, %v7757
    %v8682 = vpack.c.b16 %v7765, %v7758
    %v8683 = vpack.c.b16 %v7766, %v7759
    %v8684 = vpack.c.b16 %v7767, %v7760
    %v8685 = vpack.c.b16 %v7768, %v7761
    %v8686 = vpack.c.b16 %v7776, %v7769
    %v8687 = vpack.c.b16 %v7777, %v7770
    %v8688 = vpack.c.b16 %v7778, %v7771
    %v8689 = vpack.c.b16 %v7779, %v7772
    %v8690 = vpack.c.b16 %v7780, %v7773
    %v8691 = vpack.c.b16 %v7781, %v7774
    %v8692 = vpack.c.b16 %v7782, %v7775
    %v8693 = vpack.c.b16 %v7790, %v7783
    %v8694 = vpack.c.b16 %v7791, %v7784
    %v8695 = vpack.c.b16 %v7792, %v7785
    %v8696 = vpack.c.b16 %v7793, %v7786
    %v8697 = vpack.c.b16 %v7794, %v7787
    %v8698 = vpack.c.b16 %v7795, %v7788
    %v8699 = vpack.c.b16 %v7796, %v7789
    %v8700 = vpack.c.b16 %v7804, %v7797
    %v8701 = vpack.c.b16 %v7805, %v7798
    %v8702 = vpack.c.b16 %v7806, %v7799
    %v8703 = vpack.c.b16 %v7807, %v7800
    %v8704 = vpack.c.b16 %v7808, %v7801
    %v8705 = vpack.c.b16 %v7809, %v7802
    %v8706 = vpack.c.b16 %v7810, %v7803
    %v8707 = vpack.c.b16 %v7818, %v7811
    %v8708 = vpack.c.b16 %v7819, %v7812
    %v8709 = vpack.c.b16 %v7820, %v7813
    %v8710 = vpack.c.b16 %v7821, %v7814
    %v8711 = vpack.c.b16 %v7822, %v7815
    %v8712 = vpack.c.b16 %v7823, %v7816
    %v8713 = vpack.c.b16 %v7824, %v7817
    %v8714 = vpack.c.b16 %v7832, %v7825
    %v8715 = vpack.c.b16 %v7833, %v7826
    %v8716 = vpack.c.b16 %v7834, %v7827
    %v8717 = vpack.c.b16 %v7835, %v7828
    %v8718 = vpack.c.b16 %v7836, %v7829
    %v8719 = vpack.c.b16 %v7837, %v7830
    %v8720 = vpack.c.b16 %v7838, %v7831
    %v8721 = vpack.c.b16 %v7846, %v7839
    %v8722 = vpack.c.b16 %v7847, %v7840
    %v8723 = vpack.c.b16 %v7848, %v7841
    %v8724 = vpack.c.b16 %v7849, %v7842
    %v8725 = vpack.c.b16 %v7850, %v7843
    %v8726 = vpack.c.b16 %v7851, %v7844
    %v8727 = vpack.c.b16 %v7852, %v7845
    %v8728 = vpack.c.b16 %v7860, %v7853
    %v8729 = vpack.c.b16 %v7861, %v7854
    %v8730 = vpack.c.b16 %v7862, %v7855
    %v8731 = vpack.c.b16 %v7863, %v7856
    %v8732 = vpack.c.b16 %v7864, %v7857
    %v8733 = vpack.c.b16 %v7865, %v7858
    %v8734 = vpack.c.b16 %v7866, %v7859
    %v8735 = vpack.c.b16 %v7874, %v7867
    %v8736 = vpack.c.b16 %v7875, %v7868
    %v8737 = vpack.c.b16 %v7876, %v7869
    %v8738 = vpack.c.b16 %v7877, %v7870
    %v8739 = vpack.c.b16 %v7878, %v7871
    %v8740 = vpack.c.b16 %v7879, %v7872
    %v8741 = vpack.c.b16 %v7880, %v7873
    %v8742 = vpack.c.b16 %v7888, %v7881
    %v8743 = vpack.c.b16 %v7889, %v7882
    %v8744 = vpack.c.b16 %v7890, %v7883
    %v8745 = vpack.c.b16 %v7891, %v7884
    %v8746 = vpack.c.b16 %v7892, %v7885
    %v8747 = vpack.c.b16 %v7893, %v7886
    %v8748 = vpack.c.b16 %v7894, %v7887
    %v8749 = vpack.c.b16 %v7902, %v7895
    %v8750 = vpack.c.b16 %v7903, %v7896
    %v8751 = vpack.c.b16 %v7904, %v7897
    %v8752 = vpack.c.b16 %v7905, %v7898
    %v8753 = vpack.c.b16 %v7906, %v7899
    %v8754 = vpack.c.b16 %v7907, %v7900
    %v8755 = vpack.c.b16 %v7908, %v7901
    %v8756 = vpack.c.b16 %v7916, %v7909
    %v8757 = vpack.c.b16 %v7917, %v7910
    %v8758 = vpack.c.b16 %v7918, %v7911
    %v8759 = vpack.c.b16 %v7919, %v7912
    %v8760 = vpack.c.b16 %v7920, %v7913
    %v8761 = vpack.c.b16 %v7921, %v7914
    %v8762 = vpack.c.b16 %v7922, %v7915
    %v8763 = vpack.c.b16 %v7930, %v7923
    %v8764 = vpack.c.b16 %v7931, %v7924
    %v8765 = vpack.c.b16 %v7932, %v7925
    %v8766 = vpack.c.b16 %v7933, %v7926
    %v8767 = vpack.c.b16 %v7934, %v7927
    %v8768 = vpack.c.b16 %v7935, %v7928
    %v8769 = vpack.c.b16 %v7936, %v7929
    %v8770 = vpack.c.b16 %v7944, %v7937
    %v8771 = vpack.c.b16 %v7945, %v7938
    %v8772 = vpack.c.b16 %v7946, %v7939
    %v8773 = vpack.c.b16 %v7947, %v7940
    %v8774 = vpack.c.b16 %v7948, %v7941
    %v8775 = vpack.c.b16 %v7949, %v7942
    %v8776 = vpack.c.b16 %v7950, %v7943
    %v8777 = vpack.c.b16 %v7958, %v7951
    %v8778 = vpack.c.b16 %v7959, %v7952
    %v8779 = vpack.c.b16 %v7960, %v7953
    %v8780 = vpack.c.b16 %v7961, %v7954
    %v8781 = vpack.c.b16 %v7962, %v7955
    %v8782 = vpack.c.b16 %v7963, %v7956
    %v8783 = vpack.c.b16 %v7964, %v7957
    %v8784 = vpack.c.b16 %v7972, %v7965
    %v8785 = vpack.c.b16 %v7973, %v7966
    %v8786 = vpack.c.b16 %v7974, %v7967
    %v8787 = vpack.c.b16 %v7975, %v7968
    %v8788 = vpack.c.b16 %v7976, %v7969
    %v8789 = vpack.c.b16 %v7977, %v7970
    %v8790 = vpack.c.b16 %v7978, %v7971
    %v8791 = vpack.c.b16 %v7986, %v7979
    %v8792 = vpack.c.b16 %v7987, %v7980
    %v8793 = vpack.c.b16 %v7988, %v7981
    %v8794 = vpack.c.b16 %v7989, %v7982
    %v8795 = vpack.c.b16 %v7990, %v7983
    %v8796 = vpack.c.b16 %v7991, %v7984
    %v8797 = vpack.c.b16 %v7992, %v7985
    %v8798 = vpack.c.b16 %v8000, %v7993
    %v8799 = vpack.c.b16 %v8001, %v7994
    %v8800 = vpack.c.b16 %v8002, %v7995
    %v8801 = vpack.c.b16 %v8003, %v7996
    %v8802 = vpack.c.b16 %v8004, %v7997
    %v8803 = vpack.c.b16 %v8005, %v7998
    %v8804 = vpack.c.b16 %v8006, %v7999
    %v8805 = vpack.c.b16 %v8014, %v8007
    %v8806 = vpack.c.b16 %v8015, %v8008
    %v8807 = vpack.c.b16 %v8016, %v8009
    %v8808 = vpack.c.b16 %v8017, %v8010
    %v8809 = vpack.c.b16 %v8018, %v8011
    %v8810 = vpack.c.b16 %v8019, %v8012
    %v8811 = vpack.c.b16 %v8020, %v8013
    %v8812 = vpack.c.b16 %v8028, %v8021
    %v8813 = vpack.c.b16 %v8029, %v8022
    %v8814 = vpack.c.b16 %v8030, %v8023
    %v8815 = vpack.c.b16 %v8031, %v8024
    %v8816 = vpack.c.b16 %v8032, %v8025
    %v8817 = vpack.c.b16 %v8033, %v8026
    %v8818 = vpack.c.b16 %v8034, %v8027
    %v8819 = vpack.c.b16 %v8042, %v8035
    %v8820 = vpack.c.b16 %v8043, %v8036
    %v8821 = vpack.c.b16 %v8044, %v8037
    %v8822 = vpack.c.b16 %v8045, %v8038
    %v8823 = vpack.c.b16 %v8046, %v8039
    %v8824 = vpack.c.b16 %v8047, %v8040
    %v8825 = vpack.c.b16 %v8048, %v8041
    %v8826 = vpack.c.b16 %v8056, %v8049
    %v8827 = vpack.c.b16 %v8057, %v8050
    %v8828 = vpack.c.b16 %v8058, %v8051
    %v8829 = vpack.c.b16 %v8059, %v8052
    %v8830 = vpack.c.b16 %v8060, %v8053
    %v8831 = vpack.c.b16 %v8061, %v8054
    %v8832 = vpack.c.b16 %v8062, %v8055
    %v8833 = vpack.c.b16 %v8070, %v8063
    %v8834 = vpack.c.b16 %v8071, %v8064
    %v8835 = vpack.c.b16 %v8072, %v8065
    %v8836 = vpack.c.b16 %v8073, %v8066
    %v8837 = vpack.c.b16 %v8074, %v8067
    %v8838 = vpack.c.b16 %v8075, %v8068
    %v8839 = vpack.c.b16 %v8076, %v8069
    %v8840 = vpack.c.b16 %v8084, %v8077
    %v8841 = vpack.c.b16 %v8085, %v8078
    %v8842 = vpack.c.b16 %v8086, %v8079
    %v8843 = vpack.c.b16 %v8087, %v8080
    %v8844 = vpack.c.b16 %v8088, %v8081
    %v8845 = vpack.c.b16 %v8089, %v8082
    %v8846 = vpack.c.b16 %v8090, %v8083
    %v8847 = vpack.c.b16 %v8098, %v8091
    %v8848 = vpack.c.b16 %v8099, %v8092
    %v8849 = vpack.c.b16 %v8100, %v8093
    %v8850 = vpack.c.b16 %v8101, %v8094
    %v8851 = vpack.c.b16 %v8102, %v8095
    %v8852 = vpack.c.b16 %v8103, %v8096
    %v8853 = vpack.c.b16 %v8104, %v8097
    %v8854 = vpack.c.b16 %v8112, %v8105
    %v8855 = vpack.c.b16 %v8113, %v8106
    %v8856 = vpack.c.b16 %v8114, %v8107
    %v8857 = vpack.c.b16 %v8115, %v8108
    %v8858 = vpack.c.b16 %v8116, %v8109
    %v8859 = vpack.c.b16 %v8117, %v8110
    %v8860 = vpack.c.b16 %v8118, %v8111
    %v8861 = vpack.c.b16 %v8126, %v8119
    %v8862 = vpack.c.b16 %v8127, %v8120
    %v8863 = vpack.c.b16 %v8128, %v8121
    %v8864 = vpack.c.b16 %v8129, %v8122
    %v8865 = vpack.c.b16 %v8130, %v8123
    %v8866 = vpack.c.b16 %v8131, %v8124
    %v8867 = vpack.c.b16 %v8132, %v8125
    %v8868 = vpack.c.b16 %v8140, %v8133
    %v8869 = vpack.c.b16 %v8141, %v8134
    %v8870 = vpack.c.b16 %v8142, %v8135
    %v8871 = vpack.c.b16 %v8143, %v8136
    %v8872 = vpack.c.b16 %v8144, %v8137
    %v8873 = vpack.c.b16 %v8145, %v8138
    %v8874 = vpack.c.b16 %v8146, %v8139
    %v8875 = vpack.c.b16 %v8154, %v8147
    %v8876 = vpack.c.b16 %v8155, %v8148
    %v8877 = vpack.c.b16 %v8156, %v8149
    %v8878 = vpack.c.b16 %v8157, %v8150
    %v8879 = vpack.c.b16 %v8158, %v8151
    %v8880 = vpack.c.b16 %v8159, %v8152
    %v8881 = vpack.c.b16 %v8160, %v8153
    %v8882 = vpack.c.b16 %v8168, %v8161
    %v8883 = vpack.c.b16 %v8169, %v8162
    %v8884 = vpack.c.b16 %v8170, %v8163
    %v8885 = vpack.c.b16 %v8171, %v8164
    %v8886 = vpack.c.b16 %v8172, %v8165
    %v8887 = vpack.c.b16 %v8173, %v8166
    %v8888 = vpack.c.b16 %v8174, %v8167
    %v8889 = vpack.c.b16 %v8182, %v8175
    %v8890 = vpack.c.b16 %v8183, %v8176
    %v8891 = vpack.c.b16 %v8184, %v8177
    %v8892 = vpack.c.b16 %v8185, %v8178
    %v8893 = vpack.c.b16 %v8186, %v8179
    %v8894 = vpack.c.b16 %v8187, %v8180
    %v8895 = vpack.c.b16 %v8188, %v8181
    %v8896 = vpack.c.b16 %v8196, %v8189
    %v8897 = vpack.c.b16 %v8197, %v8190
    %v8898 = vpack.c.b16 %v8198, %v8191
    %v8899 = vpack.c.b16 %v8199, %v8192
    %v8900 = vpack.c.b16 %v8200, %v8193
    %v8901 = vpack.c.b16 %v8201, %v8194
    %v8902 = vpack.c.b16 %v8202, %v8195
    %v8903 = vpack.c.b16 %v8210, %v8203
    %v8904 = vpack.c.b16 %v8211, %v8204
    %v8905 = vpack.c.b16 %v8212, %v8205
    %v8906 = vpack.c.b16 %v8213, %v8206
    %v8907 = vpack.c.b16 %v8214, %v8207
    %v8908 = vpack.c.b16 %v8215, %v8208
    %v8909 = vpack.c.b16 %v8216, %v8209
    %v8910 = vpack.c.b16 %v8224, %v8217
    %v8911 = vpack.c.b16 %v8225, %v8218
    %v8912 = vpack.c.b16 %v8226, %v8219
    %v8913 = vpack.c.b16 %v8227, %v8220
    %v8914 = vpack.c.b16 %v8228, %v8221
    %v8915 = vpack.c.b16 %v8229, %v8222
    %v8916 = vpack.c.b16 %v8230, %v8223
    %vm9603 = vcmask 261120
    %v9605 = vsel %vm9603, %v5253, 0
    %9607 = vmatprep.subr.bf16.mxu0 %v8232
    %9608 = vmatpush1.bf16.msra.mxu0 %v8231
    %9609 = vmatprep.subr.bf16.mxu0 %v8239
    %9610 = vmatpush1.bf16.msra.mxu0 %v8238
    %9611 = vmatprep.subr.bf16.mxu0 %v8246
    %9612 = vmatpush1.bf16.msra.mxu0 %v8245
    %9613 = vmatprep.subr.bf16.mxu0 %v8253
    %9614 = vmatpush1.bf16.msra.mxu0 %v8252
    %9615 = vmatprep.subr.bf16.mxu0 %v8260
    %9616 = vmatpush1.bf16.msra.mxu0 %v8259
    %9617 = vmatprep.subr.bf16.mxu0 %v8267
    %9618 = vmatpush1.bf16.msra.mxu0 %v8266
    %9619 = vmatprep.subr.bf16.mxu0 %v8274
    %9620 = vmatpush1.bf16.msra.mxu0 %v8273
    %9621 = vmatprep.subr.bf16.mxu0 %v8281
    %9622 = vmatpush1.bf16.msra.mxu0 %v8280
    %9623 = vmatprep.subr.bf16.mxu0 %v8288
    %9624 = vmatpush1.bf16.msra.mxu0 %v8287
    %9625 = vmatprep.subr.bf16.mxu0 %v8295
    %9626 = vmatpush1.bf16.msra.mxu0 %v8294
    %9627 = vmatprep.subr.bf16.mxu0 %v8302
    %9628 = vmatpush1.bf16.msra.mxu0 %v8301
    %9629 = vmatprep.subr.bf16.mxu0 %v8309
    %9630 = vmatpush1.bf16.msra.mxu0 %v8308
    %9631 = vmatprep.subr.bf16.mxu0 %v8316
    %9632 = vmatpush1.bf16.msra.mxu0 %v8315
    %9633 = vmatprep.subr.bf16.mxu0 %v8323
    %9634 = vmatpush1.bf16.msra.mxu0 %v8322
    %9635 = vmatprep.subr.bf16.mxu0 %v8330
    %9636 = vmatpush1.bf16.msra.mxu0 %v8329
    %9637 = vmatprep.subr.bf16.mxu0 %v8337
    %9638 = vmatpush1.bf16.msra.mxu0 %v8336
    %9639 = vmatprep.mubr.bf16.mxu0 %v5242
    %9640 = vmatmul.mubr.bf16.gmra.mrb[0].mxu0 %v5241
    %v9641 = vpop.f32.mrb[0].mxu0
    %v9642 = vadd.f32 %v6043, %v9641
    %v9643 = vpop.f32.mrb[0].mxu0
    %v9644 = vadd.f32 %v6047, %v9643
    %v9645 = vpop.f32.mrb[0].mxu0
    %v9646 = vpop.f32.mrb[0].mxu0
    %9647 = vdwg.mxu0
    %9648 = vmatprep.subr.bf16.mxu0 %v8344
    %9649 = vmatpush1.bf16.msra.mxu0 %v8343
    %9650 = vmatprep.subr.bf16.mxu0 %v8351
    %9651 = vmatpush1.bf16.msra.mxu0 %v8350
    %9652 = vmatprep.subr.bf16.mxu0 %v8358
    %9653 = vmatpush1.bf16.msra.mxu0 %v8357
    %9654 = vmatprep.subr.bf16.mxu0 %v8365
    %9655 = vmatpush1.bf16.msra.mxu0 %v8364
    %9656 = vmatprep.subr.bf16.mxu0 %v8372
    %9657 = vmatpush1.bf16.msra.mxu0 %v8371
    %9658 = vmatprep.subr.bf16.mxu0 %v8379
    %9659 = vmatpush1.bf16.msra.mxu0 %v8378
    %9660 = vmatprep.subr.bf16.mxu0 %v8386
    %9661 = vmatpush1.bf16.msra.mxu0 %v8385
    %9662 = vmatprep.subr.bf16.mxu0 %v8393
    %9663 = vmatpush1.bf16.msra.mxu0 %v8392
    %9664 = vmatprep.subr.bf16.mxu0 %v8400
    %9665 = vmatpush1.bf16.msra.mxu0 %v8399
    %9666 = vmatprep.subr.bf16.mxu0 %v8407
    %9667 = vmatpush1.bf16.msra.mxu0 %v8406
    %9668 = vmatprep.subr.bf16.mxu0 %v8414
    %9669 = vmatpush1.bf16.msra.mxu0 %v8413
    %9670 = vmatprep.subr.bf16.mxu0 %v8421
    %9671 = vmatpush1.bf16.msra.mxu0 %v8420
    %9672 = vmatprep.subr.bf16.mxu0 %v8428
    %9673 = vmatpush1.bf16.msra.mxu0 %v8427
    %9674 = vmatprep.subr.bf16.mxu0 %v8435
    %9675 = vmatpush1.bf16.msra.mxu0 %v8434
    %9676 = vmatprep.subr.bf16.mxu0 %v8442
    %9677 = vmatpush1.bf16.msra.mxu0 %v8441
    %9678 = vmatprep.subr.bf16.mxu0 %v8449
    %9679 = vmatpush1.bf16.msra.mxu0 %v8448
    %9680 = vmatprep.mubr.bf16.mxu0 %v5244
    %9681 = vmatmul.mubr.bf16.gmra.mrb[0].mxu0 %v5243
    %v9682 = vpop.f32.mrb[0].mxu0
    %v9683 = vadd.f32 %v9642, %v9682
    %v9684 = vpop.f32.mrb[0].mxu0
    %v9685 = vadd.f32 %v9644, %v9684
    %v9686 = vpop.f32.mrb[0].mxu0
    %v9687 = vpop.f32.mrb[0].mxu0
    %9688 = vdwg.mxu0
    %9689 = vmatprep.subr.bf16.mxu0 %v8456
    %9690 = vmatpush1.bf16.msra.mxu0 %v8455
    %9691 = vmatprep.subr.bf16.mxu0 %v8463
    %9692 = vmatpush1.bf16.msra.mxu0 %v8462
    %9693 = vmatprep.subr.bf16.mxu0 %v8470
    %9694 = vmatpush1.bf16.msra.mxu0 %v8469
    %9695 = vmatprep.subr.bf16.mxu0 %v8477
    %9696 = vmatpush1.bf16.msra.mxu0 %v8476
    %9697 = vmatprep.subr.bf16.mxu0 %v8484
    %9698 = vmatpush1.bf16.msra.mxu0 %v8483
    %9699 = vmatprep.subr.bf16.mxu0 %v8491
    %9700 = vmatpush1.bf16.msra.mxu0 %v8490
    %9701 = vmatprep.subr.bf16.mxu0 %v8498
    %9702 = vmatpush1.bf16.msra.mxu0 %v8497
    %9703 = vmatprep.subr.bf16.mxu0 %v8505
    %9704 = vmatpush1.bf16.msra.mxu0 %v8504
    %9705 = vmatprep.subr.bf16.mxu0 %v8512
    %9706 = vmatpush1.bf16.msra.mxu0 %v8511
    %9707 = vmatprep.subr.bf16.mxu0 %v8519
    %9708 = vmatpush1.bf16.msra.mxu0 %v8518
    %9709 = vmatprep.subr.bf16.mxu0 %v8526
    %9710 = vmatpush1.bf16.msra.mxu0 %v8525
    %9711 = vmatprep.subr.bf16.mxu0 %v8533
    %9712 = vmatpush1.bf16.msra.mxu0 %v8532
    %9713 = vmatprep.subr.bf16.mxu0 %v8540
    %9714 = vmatpush1.bf16.msra.mxu0 %v8539
    %9715 = vmatprep.subr.bf16.mxu0 %v8547
    %9716 = vmatpush1.bf16.msra.mxu0 %v8546
    %9717 = vmatprep.subr.bf16.mxu0 %v8554
    %9718 = vmatpush1.bf16.msra.mxu0 %v8553
    %9719 = vmatprep.subr.bf16.mxu0 %v8561
    %9720 = vmatpush1.bf16.msra.mxu0 %v8560
    %9721 = vmatprep.mubr.bf16.mxu0 %v5246
    %9722 = vmatmul.mubr.bf16.gmra.mrb[0].mxu0 %v5245
    %v9723 = vpop.f32.mrb[0].mxu0
    %v9724 = vadd.f32 %v9683, %v9723
    %v9725 = vpop.f32.mrb[0].mxu0
    %v9726 = vadd.f32 %v9685, %v9725
    %v9727 = vpop.f32.mrb[0].mxu0
    %v9728 = vpop.f32.mrb[0].mxu0
    %9729 = vdwg.mxu0
    %9730 = vmatprep.subr.bf16.mxu0 %v8568
    %9731 = vmatpush1.bf16.msra.mxu0 %v8567
    %9732 = vmatprep.subr.bf16.mxu0 %v8575
    %9733 = vmatpush1.bf16.msra.mxu0 %v8574
    %9734 = vmatprep.subr.bf16.mxu0 %v8582
    %9735 = vmatpush1.bf16.msra.mxu0 %v8581
    %9736 = vmatprep.subr.bf16.mxu0 %v8589
    %9737 = vmatpush1.bf16.msra.mxu0 %v8588
    %9738 = vmatprep.subr.bf16.mxu0 %v8596
    %9739 = vmatpush1.bf16.msra.mxu0 %v8595
    %9740 = vmatprep.subr.bf16.mxu0 %v8603
    %9741 = vmatpush1.bf16.msra.mxu0 %v8602
    %9742 = vmatprep.subr.bf16.mxu0 %v8610
    %9743 = vmatpush1.bf16.msra.mxu0 %v8609
    %9744 = vmatprep.subr.bf16.mxu0 %v8617
    %9745 = vmatpush1.bf16.msra.mxu0 %v8616
    %9746 = vmatprep.subr.bf16.mxu0 %v8624
    %9747 = vmatpush1.bf16.msra.mxu0 %v8623
    %9748 = vmatprep.subr.bf16.mxu0 %v8631
    %9749 = vmatpush1.bf16.msra.mxu0 %v8630
    %9750 = vmatprep.subr.bf16.mxu0 %v8638
    %9751 = vmatpush1.bf16.msra.mxu0 %v8637
    %9752 = vmatprep.subr.bf16.mxu0 %v8645
    %9753 = vmatpush1.bf16.msra.mxu0 %v8644
    %9754 = vmatprep.subr.bf16.mxu0 %v8652
    %9755 = vmatpush1.bf16.msra.mxu0 %v8651
    %9756 = vmatprep.subr.bf16.mxu0 %v8659
    %9757 = vmatpush1.bf16.msra.mxu0 %v8658
    %9758 = vmatprep.subr.bf16.mxu0 %v8666
    %9759 = vmatpush1.bf16.msra.mxu0 %v8665
    %9760 = vmatprep.subr.bf16.mxu0 %v8673
    %9761 = vmatpush1.bf16.msra.mxu0 %v8672
    %9762 = vmatprep.mubr.bf16.mxu0 %v5248
    %9763 = vmatmul.mubr.bf16.gmra.mrb[0].mxu0 %v5247
    %v9764 = vpop.f32.mrb[0].mxu0
    %v9765 = vadd.f32 %v9724, %v9764
    %v9766 = vpop.f32.mrb[0].mxu0
    %v9767 = vadd.f32 %v9726, %v9766
    %v9768 = vpop.f32.mrb[0].mxu0
    %v9769 = vpop.f32.mrb[0].mxu0
    %9770 = vdwg.mxu0
    %9771 = vmatprep.subr.bf16.mxu0 %v8680
    %9772 = vmatpush1.bf16.msra.mxu0 %v8679
    %9773 = vmatprep.subr.bf16.mxu0 %v8687
    %9774 = vmatpush1.bf16.msra.mxu0 %v8686
    %9775 = vmatprep.subr.bf16.mxu0 %v8694
    %9776 = vmatpush1.bf16.msra.mxu0 %v8693
    %9777 = vmatprep.subr.bf16.mxu0 %v8701
    %9778 = vmatpush1.bf16.msra.mxu0 %v8700
    %9779 = vmatprep.subr.bf16.mxu0 %v8708
    %9780 = vmatpush1.bf16.msra.mxu0 %v8707
    %9781 = vmatprep.subr.bf16.mxu0 %v8715
    %9782 = vmatpush1.bf16.msra.mxu0 %v8714
    %9783 = vmatprep.subr.bf16.mxu0 %v8722
    %9784 = vmatpush1.bf16.msra.mxu0 %v8721
    %9785 = vmatprep.subr.bf16.mxu0 %v8729
    %9786 = vmatpush1.bf16.msra.mxu0 %v8728
    %9787 = vmatprep.subr.bf16.mxu0 %v8736
    %9788 = vmatpush1.bf16.msra.mxu0 %v8735
    %9789 = vmatprep.subr.bf16.mxu0 %v8743
    %9790 = vmatpush1.bf16.msra.mxu0 %v8742
    %9791 = vmatprep.subr.bf16.mxu0 %v8750
    %9792 = vmatpush1.bf16.msra.mxu0 %v8749
    %9793 = vmatprep.subr.bf16.mxu0 %v8757
    %9794 = vmatpush1.bf16.msra.mxu0 %v8756
    %9795 = vmatprep.subr.bf16.mxu0 %v8764
    %9796 = vmatpush1.bf16.msra.mxu0 %v8763
    %9797 = vmatprep.subr.bf16.mxu0 %v8771
    %9798 = vmatpush1.bf16.msra.mxu0 %v8770
    %9799 = vmatprep.subr.bf16.mxu0 %v8778
    %9800 = vmatpush1.bf16.msra.mxu0 %v8777
    %9801 = vmatprep.subr.bf16.mxu0 %v8785
    %9802 = vmatpush1.bf16.msra.mxu0 %v8784
    %9803 = vmatprep.mubr.bf16.mxu0 %v5250
    %9804 = vmatmul.mubr.bf16.gmra.mrb[0].mxu0 %v5249
    %v9805 = vpop.f32.mrb[0].mxu0
    %v9806 = vadd.f32 %v9765, %v9805
    %v9807 = vpop.f32.mrb[0].mxu0
    %v9808 = vadd.f32 %v9767, %v9807
    %v9809 = vpop.f32.mrb[0].mxu0
    %v9810 = vpop.f32.mrb[0].mxu0
    %9811 = vdwg.mxu0
    %9812 = vmatprep.subr.bf16.mxu0 %v8792
    %9813 = vmatpush1.bf16.msra.mxu0 %v8791
    %9814 = vmatprep.subr.bf16.mxu0 %v8799
    %9815 = vmatpush1.bf16.msra.mxu0 %v8798
    %9816 = vmatprep.subr.bf16.mxu0 %v8806
    %9817 = vmatpush1.bf16.msra.mxu0 %v8805
    %9818 = vmatprep.subr.bf16.mxu0 %v8813
    %9819 = vmatpush1.bf16.msra.mxu0 %v8812
    %9820 = vmatprep.subr.bf16.mxu0 %v8820
    %9821 = vmatpush1.bf16.msra.mxu0 %v8819
    %9822 = vmatprep.subr.bf16.mxu0 %v8827
    %9823 = vmatpush1.bf16.msra.mxu0 %v8826
    %9824 = vmatprep.subr.bf16.mxu0 %v8834
    %9825 = vmatpush1.bf16.msra.mxu0 %v8833
    %9826 = vmatprep.subr.bf16.mxu0 %v8841
    %9827 = vmatpush1.bf16.msra.mxu0 %v8840
    %9828 = vmatprep.subr.bf16.mxu0 %v8848
    %9829 = vmatpush1.bf16.msra.mxu0 %v8847
    %9830 = vmatprep.subr.bf16.mxu0 %v8855
    %9831 = vmatpush1.bf16.msra.mxu0 %v8854
    %9832 = vmatprep.subr.bf16.mxu0 %v8862
    %9833 = vmatpush1.bf16.msra.mxu0 %v8861
    %9834 = vmatprep.subr.bf16.mxu0 %v8869
    %9835 = vmatpush1.bf16.msra.mxu0 %v8868
    %9836 = vmatprep.subr.bf16.mxu0 %v8876
    %9837 = vmatpush1.bf16.msra.mxu0 %v8875
    %9838 = vmatprep.subr.bf16.mxu0 %v8883
    %9839 = vmatpush1.bf16.msra.mxu0 %v8882
    %9840 = vmatprep.subr.bf16.mxu0 %v8890
    %9841 = vmatpush1.bf16.msra.mxu0 %v8889
    %9842 = vmatprep.subr.bf16.mxu0 %v8897
    %9843 = vmatpush1.bf16.msra.mxu0 %v8896
    %9844 = vmatprep.mubr.bf16.mxu0 %v5252
    %9845 = vmatmul.mubr.bf16.gmra.mrb[0].mxu0 %v5251
    %v9846 = vpop.f32.mrb[0].mxu0
    %v9847 = vadd.f32 %v9806, %v9846
    %v9848 = vpop.f32.mrb[0].mxu0
    %v9849 = vadd.f32 %v9808, %v9848
    %v9850 = vpop.f32.mrb[0].mxu0
    %v9851 = vpop.f32.mrb[0].mxu0
    %9852 = vdwg.mxu0
    %9853 = vmatprep.subr.bf16.mxu0 %v8904
    %9854 = vmatpush1.bf16.msra.mxu0 %v8903
    %9855 = vmatprep.subr.bf16.mxu0 %v8911
    %9856 = vmatpush1.bf16.msra.mxu0 %v8910
    %9857 = vmatprep.subr.bf16.mxu0 0
    %9858 = vmatpush1.bf16.msra.mxu0 0
    %9859 = vmatprep.subr.bf16.mxu0 0
    %9860 = vmatpush1.bf16.msra.mxu0 0
    %9861 = vmatprep.subr.bf16.mxu0 0
    %9862 = vmatpush1.bf16.msra.mxu0 0
    %9863 = vmatprep.subr.bf16.mxu0 0
    %9864 = vmatpush1.bf16.msra.mxu0 0
    %9865 = vmatprep.subr.bf16.mxu0 0
    %9866 = vmatpush1.bf16.msra.mxu0 0
    %9867 = vmatprep.subr.bf16.mxu0 0
    %9868 = vmatpush1.bf16.msra.mxu0 0
    %9869 = vmatprep.subr.bf16.mxu0 0
    %9870 = vmatpush1.bf16.msra.mxu0 0
    %9871 = vmatprep.subr.bf16.mxu0 0
    %9872 = vmatpush1.bf16.msra.mxu0 0
    %9873 = vmatprep.subr.bf16.mxu0 0
    %9874 = vmatpush1.bf16.msra.mxu0 0
    %9875 = vmatprep.subr.bf16.mxu0 0
    %9876 = vmatpush1.bf16.msra.mxu0 0
    %9877 = vmatprep.subr.bf16.mxu0 0
    %9878 = vmatpush1.bf16.msra.mxu0 0
    %9879 = vmatprep.subr.bf16.mxu0 0
    %9880 = vmatpush1.bf16.msra.mxu0 0
    %9881 = vmatprep.subr.bf16.mxu0 0
    %9882 = vmatpush1.bf16.msra.mxu0 0
    %9883 = vmatprep.subr.bf16.mxu0 0
    %9884 = vmatpush1.bf16.msra.mxu0 0
    %9885 = vmatprep.mubr.bf16.mxu0 0
    %9886 = vmatmul.mubr.bf16.gmra.mrb[0].mxu0 %v9605
    %v9887 = vpop.f32.mrb[0].mxu0
    %v9888 = vadd.f32 %v9847, %v9887
    %v9889 = vpop.f32.mrb[0].mxu0
    %v9890 = vadd.f32 %v9849, %v9889
    %v9891 = vpop.f32.mrb[0].mxu0
    %v9892 = vpop.f32.mrb[0].mxu0
    %9893 = vdwg.mxu0
    %9894 = vmatprep.subr.bf16.mxu0 %v8234
    %9895 = vmatpush1.bf16.msra.mxu0 %v8233
    %9896 = vmatprep.subr.bf16.mxu0 %v8241
    %9897 = vmatpush1.bf16.msra.mxu0 %v8240
    %9898 = vmatprep.subr.bf16.mxu0 %v8248
    %9899 = vmatpush1.bf16.msra.mxu0 %v8247
    %9900 = vmatprep.subr.bf16.mxu0 %v8255
    %9901 = vmatpush1.bf16.msra.mxu0 %v8254
    %9902 = vmatprep.subr.bf16.mxu0 %v8262
    %9903 = vmatpush1.bf16.msra.mxu0 %v8261
    %9904 = vmatprep.subr.bf16.mxu0 %v8269
    %9905 = vmatpush1.bf16.msra.mxu0 %v8268
    %9906 = vmatprep.subr.bf16.mxu0 %v8276
    %9907 = vmatpush1.bf16.msra.mxu0 %v8275
    %9908 = vmatprep.subr.bf16.mxu0 %v8283
    %9909 = vmatpush1.bf16.msra.mxu0 %v8282
    %9910 = vmatprep.subr.bf16.mxu0 %v8290
    %9911 = vmatpush1.bf16.msra.mxu0 %v8289
    %9912 = vmatprep.subr.bf16.mxu0 %v8297
    %9913 = vmatpush1.bf16.msra.mxu0 %v8296
    %9914 = vmatprep.subr.bf16.mxu0 %v8304
    %9915 = vmatpush1.bf16.msra.mxu0 %v8303
    %9916 = vmatprep.subr.bf16.mxu0 %v8311
    %9917 = vmatpush1.bf16.msra.mxu0 %v8310
    %9918 = vmatprep.subr.bf16.mxu0 %v8318
    %9919 = vmatpush1.bf16.msra.mxu0 %v8317
    %9920 = vmatprep.subr.bf16.mxu0 %v8325
    %9921 = vmatpush1.bf16.msra.mxu0 %v8324
    %9922 = vmatprep.subr.bf16.mxu0 %v8332
    %9923 = vmatpush1.bf16.msra.mxu0 %v8331
    %9924 = vmatprep.subr.bf16.mxu0 %v8339
    %9925 = vmatpush1.bf16.msra.mxu0 %v8338
    %9926 = vmatprep.mubr.bf16.mxu0 %v5242
    %9927 = vmatmul.mubr.bf16.gmra.mrb[0].mxu0 %v5241
    %v9928 = vpop.f32.mrb[0].mxu0
    %v9929 = vadd.f32 %v6051, %v9928
    %v9930 = vpop.f32.mrb[0].mxu0
    %v9931 = vadd.f32 %v6055, %v9930
    %v9932 = vpop.f32.mrb[0].mxu0
    %v9933 = vpop.f32.mrb[0].mxu0
    %9934 = vdwg.mxu0
    %9935 = vmatprep.subr.bf16.mxu0 %v8346
    %9936 = vmatpush1.bf16.msra.mxu0 %v8345
    %9937 = vmatprep.subr.bf16.mxu0 %v8353
    %9938 = vmatpush1.bf16.msra.mxu0 %v8352
    %9939 = vmatprep.subr.bf16.mxu0 %v8360
    %9940 = vmatpush1.bf16.msra.mxu0 %v8359
    %9941 = vmatprep.subr.bf16.mxu0 %v8367
    %9942 = vmatpush1.bf16.msra.mxu0 %v8366
    %9943 = vmatprep.subr.bf16.mxu0 %v8374
    %9944 = vmatpush1.bf16.msra.mxu0 %v8373
    %9945 = vmatprep.subr.bf16.mxu0 %v8381
    %9946 = vmatpush1.bf16.msra.mxu0 %v8380
    %9947 = vmatprep.subr.bf16.mxu0 %v8388
    %9948 = vmatpush1.bf16.msra.mxu0 %v8387
    %9949 = vmatprep.subr.bf16.mxu0 %v8395
    %9950 = vmatpush1.bf16.msra.mxu0 %v8394
    %9951 = vmatprep.subr.bf16.mxu0 %v8402
    %9952 = vmatpush1.bf16.msra.mxu0 %v8401
    %9953 = vmatprep.subr.bf16.mxu0 %v8409
    %9954 = vmatpush1.bf16.msra.mxu0 %v8408
    %9955 = vmatprep.subr.bf16.mxu0 %v8416
    %9956 = vmatpush1.bf16.msra.mxu0 %v8415
    %9957 = vmatprep.subr.bf16.mxu0 %v8423
    %9958 = vmatpush1.bf16.msra.mxu0 %v8422
    %9959 = vmatprep.subr.bf16.mxu0 %v8430
    %9960 = vmatpush1.bf16.msra.mxu0 %v8429
    %9961 = vmatprep.subr.bf16.mxu0 %v8437
    %9962 = vmatpush1.bf16.msra.mxu0 %v8436
    %9963 = vmatprep.subr.bf16.mxu0 %v8444
    %9964 = vmatpush1.bf16.msra.mxu0 %v8443
    %9965 = vmatprep.subr.bf16.mxu0 %v8451
    %9966 = vmatpush1.bf16.msra.mxu0 %v8450
    %9967 = vmatprep.mubr.bf16.mxu0 %v5244
    %9968 = vmatmul.mubr.bf16.gmra.mrb[0].mxu0 %v5243
    %v9969 = vpop.f32.mrb[0].mxu0
    %v9970 = vadd.f32 %v9929, %v9969
    %v9971 = vpop.f32.mrb[0].mxu0
    %v9972 = vadd.f32 %v9931, %v9971
    %v9973 = vpop.f32.mrb[0].mxu0
    %v9974 = vpop.f32.mrb[0].mxu0
    %9975 = vdwg.mxu0
    %9976 = vmatprep.subr.bf16.mxu0 %v8458
    %9977 = vmatpush1.bf16.msra.mxu0 %v8457
    %9978 = vmatprep.subr.bf16.mxu0 %v8465
    %9979 = vmatpush1.bf16.msra.mxu0 %v8464
    %9980 = vmatprep.subr.bf16.mxu0 %v8472
    %9981 = vmatpush1.bf16.msra.mxu0 %v8471
    %9982 = vmatprep.subr.bf16.mxu0 %v8479
    %9983 = vmatpush1.bf16.msra.mxu0 %v8478
    %9984 = vmatprep.subr.bf16.mxu0 %v8486
    %9985 = vmatpush1.bf16.msra.mxu0 %v8485
    %9986 = vmatprep.subr.bf16.mxu0 %v8493
    %9987 = vmatpush1.bf16.msra.mxu0 %v8492
    %9988 = vmatprep.subr.bf16.mxu0 %v8500
    %9989 = vmatpush1.bf16.msra.mxu0 %v8499
    %9990 = vmatprep.subr.bf16.mxu0 %v8507
    %9991 = vmatpush1.bf16.msra.mxu0 %v8506
    %9992 = vmatprep.subr.bf16.mxu0 %v8514
    %9993 = vmatpush1.bf16.msra.mxu0 %v8513
    %9994 = vmatprep.subr.bf16.mxu0 %v8521
    %9995 = vmatpush1.bf16.msra.mxu0 %v8520
    %9996 = vmatprep.subr.bf16.mxu0 %v8528
    %9997 = vmatpush1.bf16.msra.mxu0 %v8527
    %9998 = vmatprep.subr.bf16.mxu0 %v8535
    %9999 = vmatpush1.bf16.msra.mxu0 %v8534
    %10000 = vmatprep.subr.bf16.mxu0 %v8542
    %10001 = vmatpush1.bf16.msra.mxu0 %v8541
    %10002 = vmatprep.subr.bf16.mxu0 %v8549
    %10003 = vmatpush1.bf16.msra.mxu0 %v8548
    %10004 = vmatprep.subr.bf16.mxu0 %v8556
    %10005 = vmatpush1.bf16.msra.mxu0 %v8555
    %10006 = vmatprep.subr.bf16.mxu0 %v8563
    %10007 = vmatpush1.bf16.msra.mxu0 %v8562
    %10008 = vmatprep.mubr.bf16.mxu0 %v5246
    %10009 = vmatmul.mubr.bf16.gmra.mrb[0].mxu0 %v5245
    %v10010 = vpop.f32.mrb[0].mxu0
    %v10011 = vadd.f32 %v9970, %v10010
    %v10012 = vpop.f32.mrb[0].mxu0
    %v10013 = vadd.f32 %v9972, %v10012
    %v10014 = vpop.f32.mrb[0].mxu0
    %v10015 = vpop.f32.mrb[0].mxu0
    %10016 = vdwg.mxu0
    %10017 = vmatprep.subr.bf16.mxu0 %v8570
    %10018 = vmatpush1.bf16.msra.mxu0 %v8569
    %10019 = vmatprep.subr.bf16.mxu0 %v8577
    %10020 = vmatpush1.bf16.msra.mxu0 %v8576
    %10021 = vmatprep.subr.bf16.mxu0 %v8584
    %10022 = vmatpush1.bf16.msra.mxu0 %v8583
    %10023 = vmatprep.subr.bf16.mxu0 %v8591
    %10024 = vmatpush1.bf16.msra.mxu0 %v8590
    %10025 = vmatprep.subr.bf16.mxu0 %v8598
    %10026 = vmatpush1.bf16.msra.mxu0 %v8597
    %10027 = vmatprep.subr.bf16.mxu0 %v8605
    %10028 = vmatpush1.bf16.msra.mxu0 %v8604
    %10029 = vmatprep.subr.bf16.mxu0 %v8612
    %10030 = vmatpush1.bf16.msra.mxu0 %v8611
    %10031 = vmatprep.subr.bf16.mxu0 %v8619
    %10032 = vmatpush1.bf16.msra.mxu0 %v8618
    %10033 = vmatprep.subr.bf16.mxu0 %v8626
    %10034 = vmatpush1.bf16.msra.mxu0 %v8625
    %10035 = vmatprep.subr.bf16.mxu0 %v8633
    %10036 = vmatpush1.bf16.msra.mxu0 %v8632
    %10037 = vmatprep.subr.bf16.mxu0 %v8640
    %10038 = vmatpush1.bf16.msra.mxu0 %v8639
    %10039 = vmatprep.subr.bf16.mxu0 %v8647
    %10040 = vmatpush1.bf16.msra.mxu0 %v8646
    %10041 = vmatprep.subr.bf16.mxu0 %v8654
    %10042 = vmatpush1.bf16.msra.mxu0 %v8653
    %10043 = vmatprep.subr.bf16.mxu0 %v8661
    %10044 = vmatpush1.bf16.msra.mxu0 %v8660
    %10045 = vmatprep.subr.bf16.mxu0 %v8668
    %10046 = vmatpush1.bf16.msra.mxu0 %v8667
    %10047 = vmatprep.subr.bf16.mxu0 %v8675
    %10048 = vmatpush1.bf16.msra.mxu0 %v8674
    %10049 = vmatprep.mubr.bf16.mxu0 %v5248
    %10050 = vmatmul.mubr.bf16.gmra.mrb[0].mxu0 %v5247
    %v10051 = vpop.f32.mrb[0].mxu0
    %v10052 = vadd.f32 %v10011, %v10051
    %v10053 = vpop.f32.mrb[0].mxu0
    %v10054 = vadd.f32 %v10013, %v10053
    %v10055 = vpop.f32.mrb[0].mxu0
    %v10056 = vpop.f32.mrb[0].mxu0
    %10057 = vdwg.mxu0
    %10058 = vmatprep.subr.bf16.mxu0 %v8682
    %10059 = vmatpush1.bf16.msra.mxu0 %v8681
    %10060 = vmatprep.subr.bf16.mxu0 %v8689
    %10061 = vmatpush1.bf16.msra.mxu0 %v8688
    %10062 = vmatprep.subr.bf16.mxu0 %v8696
    %10063 = vmatpush1.bf16.msra.mxu0 %v8695
    %10064 = vmatprep.subr.bf16.mxu0 %v8703
    %10065 = vmatpush1.bf16.msra.mxu0 %v8702
    %10066 = vmatprep.subr.bf16.mxu0 %v8710
    %10067 = vmatpush1.bf16.msra.mxu0 %v8709
    %10068 = vmatprep.subr.bf16.mxu0 %v8717
    %10069 = vmatpush1.bf16.msra.mxu0 %v8716
    %10070 = vmatprep.subr.bf16.mxu0 %v8724
    %10071 = vmatpush1.bf16.msra.mxu0 %v8723
    %10072 = vmatprep.subr.bf16.mxu0 %v8731
    %10073 = vmatpush1.bf16.msra.mxu0 %v8730
    %10074 = vmatprep.subr.bf16.mxu0 %v8738
    %10075 = vmatpush1.bf16.msra.mxu0 %v8737
    %10076 = vmatprep.subr.bf16.mxu0 %v8745
    %10077 = vmatpush1.bf16.msra.mxu0 %v8744
    %10078 = vmatprep.subr.bf16.mxu0 %v8752
    %10079 = vmatpush1.bf16.msra.mxu0 %v8751
    %10080 = vmatprep.subr.bf16.mxu0 %v8759
    %10081 = vmatpush1.bf16.msra.mxu0 %v8758
    %10082 = vmatprep.subr.bf16.mxu0 %v8766
    %10083 = vmatpush1.bf16.msra.mxu0 %v8765
    %10084 = vmatprep.subr.bf16.mxu0 %v8773
    %10085 = vmatpush1.bf16.msra.mxu0 %v8772
    %10086 = vmatprep.subr.bf16.mxu0 %v8780
    %10087 = vmatpush1.bf16.msra.mxu0 %v8779
    %10088 = vmatprep.subr.bf16.mxu0 %v8787
    %10089 = vmatpush1.bf16.msra.mxu0 %v8786
    %10090 = vmatprep.mubr.bf16.mxu0 %v5250
    %10091 = vmatmul.mubr.bf16.gmra.mrb[0].mxu0 %v5249
    %v10092 = vpop.f32.mrb[0].mxu0
    %v10093 = vadd.f32 %v10052, %v10092
    %v10094 = vpop.f32.mrb[0].mxu0
    %v10095 = vadd.f32 %v10054, %v10094
    %v10096 = vpop.f32.mrb[0].mxu0
    %v10097 = vpop.f32.mrb[0].mxu0
    %10098 = vdwg.mxu0
    %10099 = vmatprep.subr.bf16.mxu0 %v8794
    %10100 = vmatpush1.bf16.msra.mxu0 %v8793
    %10101 = vmatprep.subr.bf16.mxu0 %v8801
    %10102 = vmatpush1.bf16.msra.mxu0 %v8800
    %10103 = vmatprep.subr.bf16.mxu0 %v8808
    %10104 = vmatpush1.bf16.msra.mxu0 %v8807
    %10105 = vmatprep.subr.bf16.mxu0 %v8815
    %10106 = vmatpush1.bf16.msra.mxu0 %v8814
    %10107 = vmatprep.subr.bf16.mxu0 %v8822
    %10108 = vmatpush1.bf16.msra.mxu0 %v8821
    %10109 = vmatprep.subr.bf16.mxu0 %v8829
    %10110 = vmatpush1.bf16.msra.mxu0 %v8828
    %10111 = vmatprep.subr.bf16.mxu0 %v8836
    %10112 = vmatpush1.bf16.msra.mxu0 %v8835
    %10113 = vmatprep.subr.bf16.mxu0 %v8843
    %10114 = vmatpush1.bf16.msra.mxu0 %v8842
    %10115 = vmatprep.subr.bf16.mxu0 %v8850
    %10116 = vmatpush1.bf16.msra.mxu0 %v8849
    %10117 = vmatprep.subr.bf16.mxu0 %v8857
    %10118 = vmatpush1.bf16.msra.mxu0 %v8856
    %10119 = vmatprep.subr.bf16.mxu0 %v8864
    %10120 = vmatpush1.bf16.msra.mxu0 %v8863
    %10121 = vmatprep.subr.bf16.mxu0 %v8871
    %10122 = vmatpush1.bf16.msra.mxu0 %v8870
    %10123 = vmatprep.subr.bf16.mxu0 %v8878
    %10124 = vmatpush1.bf16.msra.mxu0 %v8877
    %10125 = vmatprep.subr.bf16.mxu0 %v8885
    %10126 = vmatpush1.bf16.msra.mxu0 %v8884
    %10127 = vmatprep.subr.bf16.mxu0 %v8892
    %10128 = vmatpush1.bf16.msra.mxu0 %v8891
    %10129 = vmatprep.subr.bf16.mxu0 %v8899
    %10130 = vmatpush1.bf16.msra.mxu0 %v8898
    %10131 = vmatprep.mubr.bf16.mxu0 %v5252
    %10132 = vmatmul.mubr.bf16.gmra.mrb[0].mxu0 %v5251
    %v10133 = vpop.f32.mrb[0].mxu0
    %v10134 = vadd.f32 %v10093, %v10133
    %v10135 = vpop.f32.mrb[0].mxu0
    %v10136 = vadd.f32 %v10095, %v10135
    %v10137 = vpop.f32.mrb[0].mxu0
    %v10138 = vpop.f32.mrb[0].mxu0
    %10139 = vdwg.mxu0
    %10140 = vmatprep.subr.bf16.mxu0 %v8906
    %10141 = vmatpush1.bf16.msra.mxu0 %v8905
    %10142 = vmatprep.subr.bf16.mxu0 %v8913
    %10143 = vmatpush1.bf16.msra.mxu0 %v8912
    %10144 = vmatprep.subr.bf16.mxu0 0
    %10145 = vmatpush1.bf16.msra.mxu0 0
    %10146 = vmatprep.subr.bf16.mxu0 0
    %10147 = vmatpush1.bf16.msra.mxu0 0
    %10148 = vmatprep.subr.bf16.mxu0 0
    %10149 = vmatpush1.bf16.msra.mxu0 0
    %10150 = vmatprep.subr.bf16.mxu0 0
    %10151 = vmatpush1.bf16.msra.mxu0 0
    %10152 = vmatprep.subr.bf16.mxu0 0
    %10153 = vmatpush1.bf16.msra.mxu0 0
    %10154 = vmatprep.subr.bf16.mxu0 0
    %10155 = vmatpush1.bf16.msra.mxu0 0
    %10156 = vmatprep.subr.bf16.mxu0 0
    %10157 = vmatpush1.bf16.msra.mxu0 0
    %10158 = vmatprep.subr.bf16.mxu0 0
    %10159 = vmatpush1.bf16.msra.mxu0 0
    %10160 = vmatprep.subr.bf16.mxu0 0
    %10161 = vmatpush1.bf16.msra.mxu0 0
    %10162 = vmatprep.subr.bf16.mxu0 0
    %10163 = vmatpush1.bf16.msra.mxu0 0
    %10164 = vmatprep.subr.bf16.mxu0 0
    %10165 = vmatpush1.bf16.msra.mxu0 0
    %10166 = vmatprep.subr.bf16.mxu0 0
    %10167 = vmatpush1.bf16.msra.mxu0 0
    %10168 = vmatprep.subr.bf16.mxu0 0
    %10169 = vmatpush1.bf16.msra.mxu0 0
    %10170 = vmatprep.subr.bf16.mxu0 0
    %10171 = vmatpush1.bf16.msra.mxu0 0
    %10172 = vmatprep.mubr.bf16.mxu0 0
    %10173 = vmatmul.mubr.bf16.gmra.mrb[0].mxu0 %v9605
    %v10174 = vpop.f32.mrb[0].mxu0
    %v10175 = vadd.f32 %v10134, %v10174
    %v10176 = vpop.f32.mrb[0].mxu0
    %v10177 = vadd.f32 %v10136, %v10176
    %v10178 = vpop.f32.mrb[0].mxu0
    %v10179 = vpop.f32.mrb[0].mxu0
    %10180 = vdwg.mxu0
    %10181 = vmatprep.subr.bf16.mxu0 %v8236
    %10182 = vmatpush1.bf16.msra.mxu0 %v8235
    %10183 = vmatprep.subr.bf16.mxu0 %v8243
    %10184 = vmatpush1.bf16.msra.mxu0 %v8242
    %10185 = vmatprep.subr.bf16.mxu0 %v8250
    %10186 = vmatpush1.bf16.msra.mxu0 %v8249
    %10187 = vmatprep.subr.bf16.mxu0 %v8257
    %10188 = vmatpush1.bf16.msra.mxu0 %v8256
    %10189 = vmatprep.subr.bf16.mxu0 %v8264
    %10190 = vmatpush1.bf16.msra.mxu0 %v8263
    %10191 = vmatprep.subr.bf16.mxu0 %v8271
    %10192 = vmatpush1.bf16.msra.mxu0 %v8270
    %10193 = vmatprep.subr.bf16.mxu0 %v8278
    %10194 = vmatpush1.bf16.msra.mxu0 %v8277
    %10195 = vmatprep.subr.bf16.mxu0 %v8285
    %10196 = vmatpush1.bf16.msra.mxu0 %v8284
    %10197 = vmatprep.subr.bf16.mxu0 %v8292
    %10198 = vmatpush1.bf16.msra.mxu0 %v8291
    %10199 = vmatprep.subr.bf16.mxu0 %v8299
    %10200 = vmatpush1.bf16.msra.mxu0 %v8298
    %10201 = vmatprep.subr.bf16.mxu0 %v8306
    %10202 = vmatpush1.bf16.msra.mxu0 %v8305
    %10203 = vmatprep.subr.bf16.mxu0 %v8313
    %10204 = vmatpush1.bf16.msra.mxu0 %v8312
    %10205 = vmatprep.subr.bf16.mxu0 %v8320
    %10206 = vmatpush1.bf16.msra.mxu0 %v8319
    %10207 = vmatprep.subr.bf16.mxu0 %v8327
    %10208 = vmatpush1.bf16.msra.mxu0 %v8326
    %10209 = vmatprep.subr.bf16.mxu0 %v8334
    %10210 = vmatpush1.bf16.msra.mxu0 %v8333
    %10211 = vmatprep.subr.bf16.mxu0 %v8341
    %10212 = vmatpush1.bf16.msra.mxu0 %v8340
    %10213 = vmatprep.mubr.bf16.mxu0 %v5242
    %10214 = vmatmul.mubr.bf16.gmra.mrb[0].mxu0 %v5241
    %v10215 = vpop.f32.mrb[0].mxu0
    %v10216 = vadd.f32 %v6059, %v10215
    %v10217 = vpop.f32.mrb[0].mxu0
    %v10218 = vadd.f32 %v6063, %v10217
    %v10219 = vpop.f32.mrb[0].mxu0
    %v10220 = vpop.f32.mrb[0].mxu0
    %10221 = vdwg.mxu0
    %10222 = vmatprep.subr.bf16.mxu0 %v8348
    %10223 = vmatpush1.bf16.msra.mxu0 %v8347
    %10224 = vmatprep.subr.bf16.mxu0 %v8355
    %10225 = vmatpush1.bf16.msra.mxu0 %v8354
    %10226 = vmatprep.subr.bf16.mxu0 %v8362
    %10227 = vmatpush1.bf16.msra.mxu0 %v8361
    %10228 = vmatprep.subr.bf16.mxu0 %v8369
    %10229 = vmatpush1.bf16.msra.mxu0 %v8368
    %10230 = vmatprep.subr.bf16.mxu0 %v8376
    %10231 = vmatpush1.bf16.msra.mxu0 %v8375
    %10232 = vmatprep.subr.bf16.mxu0 %v8383
    %10233 = vmatpush1.bf16.msra.mxu0 %v8382
    %10234 = vmatprep.subr.bf16.mxu0 %v8390
    %10235 = vmatpush1.bf16.msra.mxu0 %v8389
    %10236 = vmatprep.subr.bf16.mxu0 %v8397
    %10237 = vmatpush1.bf16.msra.mxu0 %v8396
    %10238 = vmatprep.subr.bf16.mxu0 %v8404
    %10239 = vmatpush1.bf16.msra.mxu0 %v8403
    %10240 = vmatprep.subr.bf16.mxu0 %v8411
    %10241 = vmatpush1.bf16.msra.mxu0 %v8410
    %10242 = vmatprep.subr.bf16.mxu0 %v8418
    %10243 = vmatpush1.bf16.msra.mxu0 %v8417
    %10244 = vmatprep.subr.bf16.mxu0 %v8425
    %10245 = vmatpush1.bf16.msra.mxu0 %v8424
    %10246 = vmatprep.subr.bf16.mxu0 %v8432
    %10247 = vmatpush1.bf16.msra.mxu0 %v8431
    %10248 = vmatprep.subr.bf16.mxu0 %v8439
    %10249 = vmatpush1.bf16.msra.mxu0 %v8438
    %10250 = vmatprep.subr.bf16.mxu0 %v8446
    %10251 = vmatpush1.bf16.msra.mxu0 %v8445
    %10252 = vmatprep.subr.bf16.mxu0 %v8453
    %10253 = vmatpush1.bf16.msra.mxu0 %v8452
    %10254 = vmatprep.mubr.bf16.mxu0 %v5244
    %10255 = vmatmul.mubr.bf16.gmra.mrb[0].mxu0 %v5243
    %v10256 = vpop.f32.mrb[0].mxu0
    %v10257 = vadd.f32 %v10216, %v10256
    %v10258 = vpop.f32.mrb[0].mxu0
    %v10259 = vadd.f32 %v10218, %v10258
    %v10260 = vpop.f32.mrb[0].mxu0
    %v10261 = vpop.f32.mrb[0].mxu0
    %10262 = vdwg.mxu0
    %10263 = vmatprep.subr.bf16.mxu0 %v8460
    %10264 = vmatpush1.bf16.msra.mxu0 %v8459
    %10265 = vmatprep.subr.bf16.mxu0 %v8467
    %10266 = vmatpush1.bf16.msra.mxu0 %v8466
    %10267 = vmatprep.subr.bf16.mxu0 %v8474
    %10268 = vmatpush1.bf16.msra.mxu0 %v8473
    %10269 = vmatprep.subr.bf16.mxu0 %v8481
    %10270 = vmatpush1.bf16.msra.mxu0 %v8480
    %10271 = vmatprep.subr.bf16.mxu0 %v8488
    %10272 = vmatpush1.bf16.msra.mxu0 %v8487
    %10273 = vmatprep.subr.bf16.mxu0 %v8495
    %10274 = vmatpush1.bf16.msra.mxu0 %v8494
    %10275 = vmatprep.subr.bf16.mxu0 %v8502
    %10276 = vmatpush1.bf16.msra.mxu0 %v8501
    %10277 = vmatprep.subr.bf16.mxu0 %v8509
    %10278 = vmatpush1.bf16.msra.mxu0 %v8508
    %10279 = vmatprep.subr.bf16.mxu0 %v8516
    %10280 = vmatpush1.bf16.msra.mxu0 %v8515
    %10281 = vmatprep.subr.bf16.mxu0 %v8523
    %10282 = vmatpush1.bf16.msra.mxu0 %v8522
    %10283 = vmatprep.subr.bf16.mxu0 %v8530
    %10284 = vmatpush1.bf16.msra.mxu0 %v8529
    %10285 = vmatprep.subr.bf16.mxu0 %v8537
    %10286 = vmatpush1.bf16.msra.mxu0 %v8536
    %10287 = vmatprep.subr.bf16.mxu0 %v8544
    %10288 = vmatpush1.bf16.msra.mxu0 %v8543
    %10289 = vmatprep.subr.bf16.mxu0 %v8551
    %10290 = vmatpush1.bf16.msra.mxu0 %v8550
    %10291 = vmatprep.subr.bf16.mxu0 %v8558
    %10292 = vmatpush1.bf16.msra.mxu0 %v8557
    %10293 = vmatprep.subr.bf16.mxu0 %v8565
    %10294 = vmatpush1.bf16.msra.mxu0 %v8564
    %10295 = vmatprep.mubr.bf16.mxu0 %v5246
    %10296 = vmatmul.mubr.bf16.gmra.mrb[0].mxu0 %v5245
    %v10297 = vpop.f32.mrb[0].mxu0
    %v10298 = vadd.f32 %v10257, %v10297
    %v10299 = vpop.f32.mrb[0].mxu0
    %v10300 = vadd.f32 %v10259, %v10299
    %v10301 = vpop.f32.mrb[0].mxu0
    %v10302 = vpop.f32.mrb[0].mxu0
    %10303 = vdwg.mxu0
    %10304 = vmatprep.subr.bf16.mxu0 %v8572
    %10305 = vmatpush1.bf16.msra.mxu0 %v8571
    %10306 = vmatprep.subr.bf16.mxu0 %v8579
    %10307 = vmatpush1.bf16.msra.mxu0 %v8578
    %10308 = vmatprep.subr.bf16.mxu0 %v8586
    %10309 = vmatpush1.bf16.msra.mxu0 %v8585
    %10310 = vmatprep.subr.bf16.mxu0 %v8593
    %10311 = vmatpush1.bf16.msra.mxu0 %v8592
    %10312 = vmatprep.subr.bf16.mxu0 %v8600
    %10313 = vmatpush1.bf16.msra.mxu0 %v8599
    %10314 = vmatprep.subr.bf16.mxu0 %v8607
    %10315 = vmatpush1.bf16.msra.mxu0 %v8606
    %10316 = vmatprep.subr.bf16.mxu0 %v8614
    %10317 = vmatpush1.bf16.msra.mxu0 %v8613
    %10318 = vmatprep.subr.bf16.mxu0 %v8621
    %10319 = vmatpush1.bf16.msra.mxu0 %v8620
    %10320 = vmatprep.subr.bf16.mxu0 %v8628
    %10321 = vmatpush1.bf16.msra.mxu0 %v8627
    %10322 = vmatprep.subr.bf16.mxu0 %v8635
    %10323 = vmatpush1.bf16.msra.mxu0 %v8634
    %10324 = vmatprep.subr.bf16.mxu0 %v8642
    %10325 = vmatpush1.bf16.msra.mxu0 %v8641
    %10326 = vmatprep.subr.bf16.mxu0 %v8649
    %10327 = vmatpush1.bf16.msra.mxu0 %v8648
    %10328 = vmatprep.subr.bf16.mxu0 %v8656
    %10329 = vmatpush1.bf16.msra.mxu0 %v8655
    %10330 = vmatprep.subr.bf16.mxu0 %v8663
    %10331 = vmatpush1.bf16.msra.mxu0 %v8662
    %10332 = vmatprep.subr.bf16.mxu0 %v8670
    %10333 = vmatpush1.bf16.msra.mxu0 %v8669
    %10334 = vmatprep.subr.bf16.mxu0 %v8677
    %10335 = vmatpush1.bf16.msra.mxu0 %v8676
    %10336 = vmatprep.mubr.bf16.mxu0 %v5248
    %10337 = vmatmul.mubr.bf16.gmra.mrb[0].mxu0 %v5247
    %v10338 = vpop.f32.mrb[0].mxu0
    %v10339 = vadd.f32 %v10298, %v10338
    %v10340 = vpop.f32.mrb[0].mxu0
    %v10341 = vadd.f32 %v10300, %v10340
    %v10342 = vpop.f32.mrb[0].mxu0
    %v10343 = vpop.f32.mrb[0].mxu0
    %10344 = vdwg.mxu0
    %10345 = vmatprep.subr.bf16.mxu0 %v8684
    %10346 = vmatpush1.bf16.msra.mxu0 %v8683
    %10347 = vmatprep.subr.bf16.mxu0 %v8691
    %10348 = vmatpush1.bf16.msra.mxu0 %v8690
    %10349 = vmatprep.subr.bf16.mxu0 %v8698
    %10350 = vmatpush1.bf16.msra.mxu0 %v8697
    %10351 = vmatprep.subr.bf16.mxu0 %v8705
    %10352 = vmatpush1.bf16.msra.mxu0 %v8704
    %10353 = vmatprep.subr.bf16.mxu0 %v8712
    %10354 = vmatpush1.bf16.msra.mxu0 %v8711
    %10355 = vmatprep.subr.bf16.mxu0 %v8719
    %10356 = vmatpush1.bf16.msra.mxu0 %v8718
    %10357 = vmatprep.subr.bf16.mxu0 %v8726
    %10358 = vmatpush1.bf16.msra.mxu0 %v8725
    %10359 = vmatprep.subr.bf16.mxu0 %v8733
    %10360 = vmatpush1.bf16.msra.mxu0 %v8732
    %10361 = vmatprep.subr.bf16.mxu0 %v8740
    %10362 = vmatpush1.bf16.msra.mxu0 %v8739
    %10363 = vmatprep.subr.bf16.mxu0 %v8747
    %10364 = vmatpush1.bf16.msra.mxu0 %v8746
    %10365 = vmatprep.subr.bf16.mxu0 %v8754
    %10366 = vmatpush1.bf16.msra.mxu0 %v8753
    %10367 = vmatprep.subr.bf16.mxu0 %v8761
    %10368 = vmatpush1.bf16.msra.mxu0 %v8760
    %10369 = vmatprep.subr.bf16.mxu0 %v8768
    %10370 = vmatpush1.bf16.msra.mxu0 %v8767
    %10371 = vmatprep.subr.bf16.mxu0 %v8775
    %10372 = vmatpush1.bf16.msra.mxu0 %v8774
    %10373 = vmatprep.subr.bf16.mxu0 %v8782
    %10374 = vmatpush1.bf16.msra.mxu0 %v8781
    %10375 = vmatprep.subr.bf16.mxu0 %v8789
    %10376 = vmatpush1.bf16.msra.mxu0 %v8788
    %10377 = vmatprep.mubr.bf16.mxu0 %v5250
    %10378 = vmatmul.mubr.bf16.gmra.mrb[0].mxu0 %v5249
    %v10379 = vpop.f32.mrb[0].mxu0
    %v10380 = vadd.f32 %v10339, %v10379
    %v10381 = vpop.f32.mrb[0].mxu0
    %v10382 = vadd.f32 %v10341, %v10381
    %v10383 = vpop.f32.mrb[0].mxu0
    %v10384 = vpop.f32.mrb[0].mxu0
    %10385 = vdwg.mxu0
    %10386 = vmatprep.subr.bf16.mxu0 %v8796
    %10387 = vmatpush1.bf16.msra.mxu0 %v8795
    %10388 = vmatprep.subr.bf16.mxu0 %v8803
    %10389 = vmatpush1.bf16.msra.mxu0 %v8802
    %10390 = vmatprep.subr.bf16.mxu0 %v8810
    %10391 = vmatpush1.bf16.msra.mxu0 %v8809
    %10392 = vmatprep.subr.bf16.mxu0 %v8817
    %10393 = vmatpush1.bf16.msra.mxu0 %v8816
    %10394 = vmatprep.subr.bf16.mxu0 %v8824
    %10395 = vmatpush1.bf16.msra.mxu0 %v8823
    %10396 = vmatprep.subr.bf16.mxu0 %v8831
    %10397 = vmatpush1.bf16.msra.mxu0 %v8830
    %10398 = vmatprep.subr.bf16.mxu0 %v8838
    %10399 = vmatpush1.bf16.msra.mxu0 %v8837
    %10400 = vmatprep.subr.bf16.mxu0 %v8845
    %10401 = vmatpush1.bf16.msra.mxu0 %v8844
    %10402 = vmatprep.subr.bf16.mxu0 %v8852
    %10403 = vmatpush1.bf16.msra.mxu0 %v8851
    %10404 = vmatprep.subr.bf16.mxu0 %v8859
    %10405 = vmatpush1.bf16.msra.mxu0 %v8858
    %10406 = vmatprep.subr.bf16.mxu0 %v8866
    %10407 = vmatpush1.bf16.msra.mxu0 %v8865
    %10408 = vmatprep.subr.bf16.mxu0 %v8873
    %10409 = vmatpush1.bf16.msra.mxu0 %v8872
    %10410 = vmatprep.subr.bf16.mxu0 %v8880
    %10411 = vmatpush1.bf16.msra.mxu0 %v8879
    %10412 = vmatprep.subr.bf16.mxu0 %v8887
    %10413 = vmatpush1.bf16.msra.mxu0 %v8886
    %10414 = vmatprep.subr.bf16.mxu0 %v8894
    %10415 = vmatpush1.bf16.msra.mxu0 %v8893
    %10416 = vmatprep.subr.bf16.mxu0 %v8901
    %10417 = vmatpush1.bf16.msra.mxu0 %v8900
    %10418 = vmatprep.mubr.bf16.mxu0 %v5252
    %10419 = vmatmul.mubr.bf16.gmra.mrb[0].mxu0 %v5251
    %v10420 = vpop.f32.mrb[0].mxu0
    %v10421 = vadd.f32 %v10380, %v10420
    %v10422 = vpop.f32.mrb[0].mxu0
    %v10423 = vadd.f32 %v10382, %v10422
    %v10424 = vpop.f32.mrb[0].mxu0
    %v10425 = vpop.f32.mrb[0].mxu0
    %10426 = vdwg.mxu0
    %10427 = vmatprep.subr.bf16.mxu0 %v8908
    %10428 = vmatpush1.bf16.msra.mxu0 %v8907
    %10429 = vmatprep.subr.bf16.mxu0 %v8915
    %10430 = vmatpush1.bf16.msra.mxu0 %v8914
    %10431 = vmatprep.subr.bf16.mxu0 0
    %10432 = vmatpush1.bf16.msra.mxu0 0
    %10433 = vmatprep.subr.bf16.mxu0 0
    %10434 = vmatpush1.bf16.msra.mxu0 0
    %10435 = vmatprep.subr.bf16.mxu0 0
    %10436 = vmatpush1.bf16.msra.mxu0 0
    %10437 = vmatprep.subr.bf16.mxu0 0
    %10438 = vmatpush1.bf16.msra.mxu0 0
    %10439 = vmatprep.subr.bf16.mxu0 0
    %10440 = vmatpush1.bf16.msra.mxu0 0
    %10441 = vmatprep.subr.bf16.mxu0 0
    %10442 = vmatpush1.bf16.msra.mxu0 0
    %10443 = vmatprep.subr.bf16.mxu0 0
    %10444 = vmatpush1.bf16.msra.mxu0 0
    %10445 = vmatprep.subr.bf16.mxu0 0
    %10446 = vmatpush1.bf16.msra.mxu0 0
    %10447 = vmatprep.subr.bf16.mxu0 0
    %10448 = vmatpush1.bf16.msra.mxu0 0
    %10449 = vmatprep.subr.bf16.mxu0 0
    %10450 = vmatpush1.bf16.msra.mxu0 0
    %10451 = vmatprep.subr.bf16.mxu0 0
    %10452 = vmatpush1.bf16.msra.mxu0 0
    %10453 = vmatprep.subr.bf16.mxu0 0
    %10454 = vmatpush1.bf16.msra.mxu0 0
    %10455 = vmatprep.subr.bf16.mxu0 0
    %10456 = vmatpush1.bf16.msra.mxu0 0
    %10457 = vmatprep.subr.bf16.mxu0 0
    %10458 = vmatpush1.bf16.msra.mxu0 0
    %10459 = vmatprep.mubr.bf16.mxu0 0
    %10460 = vmatmul.mubr.bf16.gmra.mrb[0].mxu0 %v9605
    %v10461 = vpop.f32.mrb[0].mxu0
    %v10462 = vadd.f32 %v10421, %v10461
    %v10463 = vpop.f32.mrb[0].mxu0
    %v10464 = vadd.f32 %v10423, %v10463
    %v10465 = vpop.f32.mrb[0].mxu0
    %v10466 = vpop.f32.mrb[0].mxu0
    %10467 = vdwg.mxu0
    %10468 = vmatprep.subr.bf16.mxu0 0
    %10469 = vmatpush1.bf16.msra.mxu0 %v8237
    %10470 = vmatprep.subr.bf16.mxu0 0
    %10471 = vmatpush1.bf16.msra.mxu0 %v8244
    %10472 = vmatprep.subr.bf16.mxu0 0
    %10473 = vmatpush1.bf16.msra.mxu0 %v8251
    %10474 = vmatprep.subr.bf16.mxu0 0
    %10475 = vmatpush1.bf16.msra.mxu0 %v8258
    %10476 = vmatprep.subr.bf16.mxu0 0
    %10477 = vmatpush1.bf16.msra.mxu0 %v8265
    %10478 = vmatprep.subr.bf16.mxu0 0
    %10479 = vmatpush1.bf16.msra.mxu0 %v8272
    %10480 = vmatprep.subr.bf16.mxu0 0
    %10481 = vmatpush1.bf16.msra.mxu0 %v8279
    %10482 = vmatprep.subr.bf16.mxu0 0
    %10483 = vmatpush1.bf16.msra.mxu0 %v8286
    %10484 = vmatprep.subr.bf16.mxu0 0
    %10485 = vmatpush1.bf16.msra.mxu0 %v8293
    %10486 = vmatprep.subr.bf16.mxu0 0
    %10487 = vmatpush1.bf16.msra.mxu0 %v8300
    %10488 = vmatprep.subr.bf16.mxu0 0
    %10489 = vmatpush1.bf16.msra.mxu0 %v8307
    %10490 = vmatprep.subr.bf16.mxu0 0
    %10491 = vmatpush1.bf16.msra.mxu0 %v8314
    %10492 = vmatprep.subr.bf16.mxu0 0
    %10493 = vmatpush1.bf16.msra.mxu0 %v8321
    %10494 = vmatprep.subr.bf16.mxu0 0
    %10495 = vmatpush1.bf16.msra.mxu0 %v8328
    %10496 = vmatprep.subr.bf16.mxu0 0
    %10497 = vmatpush1.bf16.msra.mxu0 %v8335
    %10498 = vmatprep.subr.bf16.mxu0 0
    %10499 = vmatpush1.bf16.msra.mxu0 %v8342
    %10500 = vmatprep.mubr.bf16.mxu0 %v5242
    %10501 = vmatmul.mubr.bf16.gmra.mrb[0].mxu0 %v5241
    %v10502 = vpop.f32.mrb[0].mxu0
    %v10503 = vadd.f32 %v6067, %v10502
    %v10504 = vpop.f32.mrb[0].mxu0
    %v10505 = vpop.f32.mrb[0].mxu0
    %v10506 = vpop.f32.mrb[0].mxu0
    %10507 = vdwg.mxu0
    %10508 = vmatprep.subr.bf16.mxu0 0
    %10509 = vmatpush1.bf16.msra.mxu0 %v8349
    %10510 = vmatprep.subr.bf16.mxu0 0
    %10511 = vmatpush1.bf16.msra.mxu0 %v8356
    %10512 = vmatprep.subr.bf16.mxu0 0
    %10513 = vmatpush1.bf16.msra.mxu0 %v8363
    %10514 = vmatprep.subr.bf16.mxu0 0
    %10515 = vmatpush1.bf16.msra.mxu0 %v8370
    %10516 = vmatprep.subr.bf16.mxu0 0
    %10517 = vmatpush1.bf16.msra.mxu0 %v8377
    %10518 = vmatprep.subr.bf16.mxu0 0
    %10519 = vmatpush1.bf16.msra.mxu0 %v8384
    %10520 = vmatprep.subr.bf16.mxu0 0
    %10521 = vmatpush1.bf16.msra.mxu0 %v8391
    %10522 = vmatprep.subr.bf16.mxu0 0
    %10523 = vmatpush1.bf16.msra.mxu0 %v8398
    %10524 = vmatprep.subr.bf16.mxu0 0
    %10525 = vmatpush1.bf16.msra.mxu0 %v8405
    %10526 = vmatprep.subr.bf16.mxu0 0
    %10527 = vmatpush1.bf16.msra.mxu0 %v8412
    %10528 = vmatprep.subr.bf16.mxu0 0
    %10529 = vmatpush1.bf16.msra.mxu0 %v8419
    %10530 = vmatprep.subr.bf16.mxu0 0
    %10531 = vmatpush1.bf16.msra.mxu0 %v8426
    %10532 = vmatprep.subr.bf16.mxu0 0
    %10533 = vmatpush1.bf16.msra.mxu0 %v8433
    %10534 = vmatprep.subr.bf16.mxu0 0
    %10535 = vmatpush1.bf16.msra.mxu0 %v8440
    %10536 = vmatprep.subr.bf16.mxu0 0
    %10537 = vmatpush1.bf16.msra.mxu0 %v8447
    %10538 = vmatprep.subr.bf16.mxu0 0
    %10539 = vmatpush1.bf16.msra.mxu0 %v8454
    %10540 = vmatprep.mubr.bf16.mxu0 %v5244
    %10541 = vmatmul.mubr.bf16.gmra.mrb[0].mxu0 %v5243
    %v10542 = vpop.f32.mrb[0].mxu0
    %v10543 = vadd.f32 %v10503, %v10542
    %v10544 = vpop.f32.mrb[0].mxu0
    %v10545 = vpop.f32.mrb[0].mxu0
    %v10546 = vpop.f32.mrb[0].mxu0
    %10547 = vdwg.mxu0
    %10548 = vmatprep.subr.bf16.mxu0 0
    %10549 = vmatpush1.bf16.msra.mxu0 %v8461
    %10550 = vmatprep.subr.bf16.mxu0 0
    %10551 = vmatpush1.bf16.msra.mxu0 %v8468
    %10552 = vmatprep.subr.bf16.mxu0 0
    %10553 = vmatpush1.bf16.msra.mxu0 %v8475
    %10554 = vmatprep.subr.bf16.mxu0 0
    %10555 = vmatpush1.bf16.msra.mxu0 %v8482
    %10556 = vmatprep.subr.bf16.mxu0 0
    %10557 = vmatpush1.bf16.msra.mxu0 %v8489
    %10558 = vmatprep.subr.bf16.mxu0 0
    %10559 = vmatpush1.bf16.msra.mxu0 %v8496
    %10560 = vmatprep.subr.bf16.mxu0 0
    %10561 = vmatpush1.bf16.msra.mxu0 %v8503
    %10562 = vmatprep.subr.bf16.mxu0 0
    %10563 = vmatpush1.bf16.msra.mxu0 %v8510
    %10564 = vmatprep.subr.bf16.mxu0 0
    %10565 = vmatpush1.bf16.msra.mxu0 %v8517
    %10566 = vmatprep.subr.bf16.mxu0 0
    %10567 = vmatpush1.bf16.msra.mxu0 %v8524
    %10568 = vmatprep.subr.bf16.mxu0 0
    %10569 = vmatpush1.bf16.msra.mxu0 %v8531
    %10570 = vmatprep.subr.bf16.mxu0 0
    %10571 = vmatpush1.bf16.msra.mxu0 %v8538
    %10572 = vmatprep.subr.bf16.mxu0 0
    %10573 = vmatpush1.bf16.msra.mxu0 %v8545
    %10574 = vmatprep.subr.bf16.mxu0 0
    %10575 = vmatpush1.bf16.msra.mxu0 %v8552
    %10576 = vmatprep.subr.bf16.mxu0 0
    %10577 = vmatpush1.bf16.msra.mxu0 %v8559
    %10578 = vmatprep.subr.bf16.mxu0 0
    %10579 = vmatpush1.bf16.msra.mxu0 %v8566
    %10580 = vmatprep.mubr.bf16.mxu0 %v5246
    %10581 = vmatmul.mubr.bf16.gmra.mrb[0].mxu0 %v5245
    %v10582 = vpop.f32.mrb[0].mxu0
    %v10583 = vadd.f32 %v10543, %v10582
    %v10584 = vpop.f32.mrb[0].mxu0
    %v10585 = vpop.f32.mrb[0].mxu0
    %v10586 = vpop.f32.mrb[0].mxu0
    %10587 = vdwg.mxu0
    %10588 = vmatprep.subr.bf16.mxu0 0
    %10589 = vmatpush1.bf16.msra.mxu0 %v8573
    %10590 = vmatprep.subr.bf16.mxu0 0
    %10591 = vmatpush1.bf16.msra.mxu0 %v8580
    %10592 = vmatprep.subr.bf16.mxu0 0
    %10593 = vmatpush1.bf16.msra.mxu0 %v8587
    %10594 = vmatprep.subr.bf16.mxu0 0
    %10595 = vmatpush1.bf16.msra.mxu0 %v8594
    %10596 = vmatprep.subr.bf16.mxu0 0
    %10597 = vmatpush1.bf16.msra.mxu0 %v8601
    %10598 = vmatprep.subr.bf16.mxu0 0
    %10599 = vmatpush1.bf16.msra.mxu0 %v8608
    %10600 = vmatprep.subr.bf16.mxu0 0
    %10601 = vmatpush1.bf16.msra.mxu0 %v8615
    %10602 = vmatprep.subr.bf16.mxu0 0
    %10603 = vmatpush1.bf16.msra.mxu0 %v8622
    %10604 = vmatprep.subr.bf16.mxu0 0
    %10605 = vmatpush1.bf16.msra.mxu0 %v8629
    %10606 = vmatprep.subr.bf16.mxu0 0
    %10607 = vmatpush1.bf16.msra.mxu0 %v8636
    %10608 = vmatprep.subr.bf16.mxu0 0
    %10609 = vmatpush1.bf16.msra.mxu0 %v8643
    %10610 = vmatprep.subr.bf16.mxu0 0
    %10611 = vmatpush1.bf16.msra.mxu0 %v8650
    %10612 = vmatprep.subr.bf16.mxu0 0
    %10613 = vmatpush1.bf16.msra.mxu0 %v8657
    %10614 = vmatprep.subr.bf16.mxu0 0
    %10615 = vmatpush1.bf16.msra.mxu0 %v8664
    %10616 = vmatprep.subr.bf16.mxu0 0
    %10617 = vmatpush1.bf16.msra.mxu0 %v8671
    %10618 = vmatprep.subr.bf16.mxu0 0
    %10619 = vmatpush1.bf16.msra.mxu0 %v8678
    %10620 = vmatprep.mubr.bf16.mxu0 %v5248
    %10621 = vmatmul.mubr.bf16.gmra.mrb[0].mxu0 %v5247
    %v10622 = vpop.f32.mrb[0].mxu0
    %v10623 = vadd.f32 %v10583, %v10622
    %v10624 = vpop.f32.mrb[0].mxu0
    %v10625 = vpop.f32.mrb[0].mxu0
    %v10626 = vpop.f32.mrb[0].mxu0
    %10627 = vdwg.mxu0
    %10628 = vmatprep.subr.bf16.mxu0 0
    %10629 = vmatpush1.bf16.msra.mxu0 %v8685
    %10630 = vmatprep.subr.bf16.mxu0 0
    %10631 = vmatpush1.bf16.msra.mxu0 %v8692
    %10632 = vmatprep.subr.bf16.mxu0 0
    %10633 = vmatpush1.bf16.msra.mxu0 %v8699
    %10634 = vmatprep.subr.bf16.mxu0 0
    %10635 = vmatpush1.bf16.msra.mxu0 %v8706
    %10636 = vmatprep.subr.bf16.mxu0 0
    %10637 = vmatpush1.bf16.msra.mxu0 %v8713
    %10638 = vmatprep.subr.bf16.mxu0 0
    %10639 = vmatpush1.bf16.msra.mxu0 %v8720
    %10640 = vmatprep.subr.bf16.mxu0 0
    %10641 = vmatpush1.bf16.msra.mxu0 %v8727
    %10642 = vmatprep.subr.bf16.mxu0 0
    %10643 = vmatpush1.bf16.msra.mxu0 %v8734
    %10644 = vmatprep.subr.bf16.mxu0 0
    %10645 = vmatpush1.bf16.msra.mxu0 %v8741
    %10646 = vmatprep.subr.bf16.mxu0 0
    %10647 = vmatpush1.bf16.msra.mxu0 %v8748
    %10648 = vmatprep.subr.bf16.mxu0 0
    %10649 = vmatpush1.bf16.msra.mxu0 %v8755
    %10650 = vmatprep.subr.bf16.mxu0 0
    %10651 = vmatpush1.bf16.msra.mxu0 %v8762
    %10652 = vmatprep.subr.bf16.mxu0 0
    %10653 = vmatpush1.bf16.msra.mxu0 %v8769
    %10654 = vmatprep.subr.bf16.mxu0 0
    %10655 = vmatpush1.bf16.msra.mxu0 %v8776
    %10656 = vmatprep.subr.bf16.mxu0 0
    %10657 = vmatpush1.bf16.msra.mxu0 %v8783
    %10658 = vmatprep.subr.bf16.mxu0 0
    %10659 = vmatpush1.bf16.msra.mxu0 %v8790
    %10660 = vmatprep.mubr.bf16.mxu0 %v5250
    %10661 = vmatmul.mubr.bf16.gmra.mrb[0].mxu0 %v5249
    %v10662 = vpop.f32.mrb[0].mxu0
    %v10663 = vadd.f32 %v10623, %v10662
    %v10664 = vpop.f32.mrb[0].mxu0
    %v10665 = vpop.f32.mrb[0].mxu0
    %v10666 = vpop.f32.mrb[0].mxu0
    %10667 = vdwg.mxu0
    %10668 = vmatprep.subr.bf16.mxu0 0
    %10669 = vmatpush1.bf16.msra.mxu0 %v8797
    %10670 = vmatprep.subr.bf16.mxu0 0
    %10671 = vmatpush1.bf16.msra.mxu0 %v8804
    %10672 = vmatprep.subr.bf16.mxu0 0
    %10673 = vmatpush1.bf16.msra.mxu0 %v8811
    %10674 = vmatprep.subr.bf16.mxu0 0
    %10675 = vmatpush1.bf16.msra.mxu0 %v8818
    %10676 = vmatprep.subr.bf16.mxu0 0
    %10677 = vmatpush1.bf16.msra.mxu0 %v8825
    %10678 = vmatprep.subr.bf16.mxu0 0
    %10679 = vmatpush1.bf16.msra.mxu0 %v8832
    %10680 = vmatprep.subr.bf16.mxu0 0
    %10681 = vmatpush1.bf16.msra.mxu0 %v8839
    %10682 = vmatprep.subr.bf16.mxu0 0
    %10683 = vmatpush1.bf16.msra.mxu0 %v8846
    %10684 = vmatprep.subr.bf16.mxu0 0
    %10685 = vmatpush1.bf16.msra.mxu0 %v8853
    %10686 = vmatprep.subr.bf16.mxu0 0
    %10687 = vmatpush1.bf16.msra.mxu0 %v8860
    %10688 = vmatprep.subr.bf16.mxu0 0
    %10689 = vmatpush1.bf16.msra.mxu0 %v8867
    %10690 = vmatprep.subr.bf16.mxu0 0
    %10691 = vmatpush1.bf16.msra.mxu0 %v8874
    %10692 = vmatprep.subr.bf16.mxu0 0
    %10693 = vmatpush1.bf16.msra.mxu0 %v8881
    %10694 = vmatprep.subr.bf16.mxu0 0
    %10695 = vmatpush1.bf16.msra.mxu0 %v8888
    %10696 = vmatprep.subr.bf16.mxu0 0
    %10697 = vmatpush1.bf16.msra.mxu0 %v8895
    %10698 = vmatprep.subr.bf16.mxu0 0
    %10699 = vmatpush1.bf16.msra.mxu0 %v8902
    %10700 = vmatprep.mubr.bf16.mxu0 %v5252
    %10701 = vmatmul.mubr.bf16.gmra.mrb[0].mxu0 %v5251
    %v10702 = vpop.f32.mrb[0].mxu0
    %v10703 = vadd.f32 %v10663, %v10702
    %v10704 = vpop.f32.mrb[0].mxu0
    %v10705 = vpop.f32.mrb[0].mxu0
    %v10706 = vpop.f32.mrb[0].mxu0
    %10707 = vdwg.mxu0
    %10708 = vmatprep.subr.bf16.mxu0 0
    %10709 = vmatpush1.bf16.msra.mxu0 %v8909
    %10710 = vmatprep.subr.bf16.mxu0 0
    %10711 = vmatpush1.bf16.msra.mxu0 %v8916
    %10712 = vmatprep.subr.bf16.mxu0 0
    %10713 = vmatpush1.bf16.msra.mxu0 0
    %10714 = vmatprep.subr.bf16.mxu0 0
    %10715 = vmatpush1.bf16.msra.mxu0 0
    %10716 = vmatprep.subr.bf16.mxu0 0
    %10717 = vmatpush1.bf16.msra.mxu0 0
    %10718 = vmatprep.subr.bf16.mxu0 0
    %10719 = vmatpush1.bf16.msra.mxu0 0
    %10720 = vmatprep.subr.bf16.mxu0 0
    %10721 = vmatpush1.bf16.msra.mxu0 0
    %10722 = vmatprep.subr.bf16.mxu0 0
    %10723 = vmatpush1.bf16.msra.mxu0 0
    %10724 = vmatprep.subr.bf16.mxu0 0
    %10725 = vmatpush1.bf16.msra.mxu0 0
    %10726 = vmatprep.subr.bf16.mxu0 0
    %10727 = vmatpush1.bf16.msra.mxu0 0
    %10728 = vmatprep.subr.bf16.mxu0 0
    %10729 = vmatpush1.bf16.msra.mxu0 0
    %10730 = vmatprep.subr.bf16.mxu0 0
    %10731 = vmatpush1.bf16.msra.mxu0 0
    %10732 = vmatprep.subr.bf16.mxu0 0
    %10733 = vmatpush1.bf16.msra.mxu0 0
    %10734 = vmatprep.subr.bf16.mxu0 0
    %10735 = vmatpush1.bf16.msra.mxu0 0
    %10736 = vmatprep.subr.bf16.mxu0 0
    %10737 = vmatpush1.bf16.msra.mxu0 0
    %10738 = vmatprep.subr.bf16.mxu0 0
    %10739 = vmatpush1.bf16.msra.mxu0 0
    %10740 = vmatprep.mubr.bf16.mxu0 0
    %10741 = vmatmul.mubr.bf16.gmra.mrb[0].mxu0 %v9605
    %v10742 = vpop.f32.mrb[0].mxu0
    %v10743 = vadd.f32 %v10703, %v10742
    %v10744 = vpop.f32.mrb[0].mxu0
    %v10745 = vpop.f32.mrb[0].mxu0
    %v10746 = vpop.f32.mrb[0].mxu0
    %10747 = vdwg.mxu0
    %v10748 = vmax.f32 %v9888, 0.0
    %v10749 = vmax.f32 %v9890, 0.0
    %v10750 = vmax.f32 %v10175, 0.0
    %v10751 = vmax.f32 %v10177, 0.0
    %v10752 = vmax.f32 %v10462, 0.0
    %v10753 = vmax.f32 %v10464, 0.0
    %v10754 = vmax.f32 %v10743, 0.0
    %v10755 = vpack.c.bf16 %v10748, %v10748
    %v10756 = vpack.c.bf16 %v10749, %v10749
    %v10757 = vpack.c.bf16 %v10750, %v10750
    %v10758 = vpack.c.bf16 %v10751, %v10751
    %v10759 = vpack.c.bf16 %v10752, %v10752
    %v10760 = vpack.c.bf16 %v10753, %v10753
    %v10761 = vpack.c.bf16 %v10754, %v10754
    %v10762 = vld [vmem:[%s5] sm:$0xff]
    %v10763 = vld [vmem:[%s5 + $0x8] sm:$0xf]
    %v10764 = vld [vmem:[%s5 + $0xc] sm:$0xff]
    %v10765 = vld [vmem:[%s5 + $0x14] sm:$0xf]
    %v10766 = vld [vmem:[%s5 + $0x18] sm:$0xff]
    %v10767 = vld [vmem:[%s5 + $0x20] sm:$0xf]
    %v10768 = vld [vmem:[%s5 + $0x24] sm:$0xff]
    %v10769 = vld [vmem:[%s5 + $0x2c] sm:$0xf]
    %v10770 = vld [vmem:[%s5 + $0x30] sm:$0xff]
    %v10771 = vld [vmem:[%s5 + $0x38] sm:$0xf]
    %v10772 = vld [vmem:[%s5 + $0x3c] sm:$0xff]
    %v10773 = vld [vmem:[%s5 + $0x44] sm:$0xf]
    %v10774 = vld [vmem:[%s5 + $0x48] sm:$0xff]
    %v10775 = vld [vmem:[%s5 + $0x50] sm:$0xf]
    %v10776 = vld [vmem:[%s5 + $0x54] sm:$0xff]
    %v10777 = vld [vmem:[%s5 + $0x5c] sm:$0xf]
    %v10778 = vld [vmem:[%s5 + $0x60] sm:$0xff]
    %v10779 = vld [vmem:[%s5 + $0x68] sm:$0xf]
    %v10780 = vld [vmem:[%s5 + $0x6c] sm:$0xff]
    %v10781 = vld [vmem:[%s5 + $0x74] sm:$0xf]
    %v10782 = vld [vmem:[%s5 + $0x78] sm:$0xff]
    %v10783 = vld [vmem:[%s5 + $0x80] sm:$0xf]
    %v10784 = vld [vmem:[%s5 + $0x84] sm:$0xff]
    %v10785 = vld [vmem:[%s5 + $0x8c] sm:$0xf]
    %v10786 = vld [vmem:[%s5 + $0x90] sm:$0xff]
    %v10787 = vld [vmem:[%s5 + $0x98] sm:$0xf]
    %v10788 = vld [vmem:[%s5 + $0x9c] sm:$0xff]
    %v10789 = vld [vmem:[%s5 + $0xa4] sm:$0xf]
    %v10790 = vld [vmem:[%s5 + $0xa8] sm:$0xff]
    %v10791 = vld [vmem:[%s5 + $0xb0] sm:$0xf]
    %v10792 = vld [vmem:[%s5 + $0xb4] sm:$0xff]
    %v10793 = vld [vmem:[%s5 + $0xbc] sm:$0xf]
    %v10794 = vld [vmem:[%s5 + $0xc0] sm:$0xff]
    %v10795 = vld [vmem:[%s5 + $0xc8] sm:$0xf]
    %v10796 = vld [vmem:[%s5 + $0xcc] sm:$0xff]
    %v10797 = vld [vmem:[%s5 + $0xd4] sm:$0xf]
    %v10798 = vld [vmem:[%s5 + $0xd8] sm:$0xff]
    %v10799 = vld [vmem:[%s5 + $0xe0] sm:$0xf]
    %v10800 = vld [vmem:[%s5 + $0xe4] sm:$0xff]
    %v10801 = vld [vmem:[%s5 + $0xec] sm:$0xf]
    %v10802 = vld [vmem:[%s5 + $0xf0] sm:$0xff]
    %v10803 = vld [vmem:[%s5 + $0xf8] sm:$0xf]
    %v10804 = vld [vmem:[%s5 + $0xfc] sm:$0xff]
    %v10805 = vld [vmem:[%s5 + $0x104] sm:$0xf]
    %v10806 = vld [vmem:[%s5 + $0x108] sm:$0xff]
    %v10807 = vld [vmem:[%s5 + $0x110] sm:$0xf]
    %v10808 = vld [vmem:[%s5 + $0x114] sm:$0xff]
    %v10809 = vld [vmem:[%s5 + $0x11c] sm:$0xf]
    %v10810 = vld [vmem:[%s5 + $0x120] sm:$0xff]
    %v10811 = vld [vmem:[%s5 + $0x128] sm:$0xf]
    %v10812 = vld [vmem:[%s5 + $0x12c] sm:$0xff]
    %v10813 = vld [vmem:[%s5 + $0x134] sm:$0xf]
    %v10814 = vld [vmem:[%s5 + $0x138] sm:$0xff]
    %v10815 = vld [vmem:[%s5 + $0x140] sm:$0xf]
    %v10816 = vld [vmem:[%s5 + $0x144] sm:$0xff]
    %v10817 = vld [vmem:[%s5 + $0x14c] sm:$0xf]
    %v10818 = vld [vmem:[%s5 + $0x150] sm:$0xff]
    %v10819 = vld [vmem:[%s5 + $0x158] sm:$0xf]
    %v10820 = vld [vmem:[%s5 + $0x15c] sm:$0xff]
    %v10821 = vld [vmem:[%s5 + $0x164] sm:$0xf]
    %v10822 = vld [vmem:[%s5 + $0x168] sm:$0xff]
    %v10823 = vld [vmem:[%s5 + $0x170] sm:$0xf]
    %v10824 = vld [vmem:[%s5 + $0x174] sm:$0xff]
    %v10825 = vld [vmem:[%s5 + $0x17c] sm:$0xf]
    %v10826 = vld [vmem:[%s5 + $0x180] sm:$0xff]
    %v10827 = vld [vmem:[%s5 + $0x188] sm:$0xf]
    %v10828 = vld [vmem:[%s5 + $0x18c] sm:$0xff]
    %v10829 = vld [vmem:[%s5 + $0x194] sm:$0xf]
    %v10830 = vld [vmem:[%s5 + $0x198] sm:$0xff]
    %v10831 = vld [vmem:[%s5 + $0x1a0] sm:$0xf]
    %v10832 = vld [vmem:[%s5 + $0x1a4] sm:$0xff]
    %v10833 = vld [vmem:[%s5 + $0x1ac] sm:$0xf]
    %v10834 = vld [vmem:[%s5 + $0x1b0] sm:$0xff]
    %v10835 = vld [vmem:[%s5 + $0x1b8] sm:$0xf]
    %v10836 = vld [vmem:[%s5 + $0x1bc] sm:$0xff]
    %v10837 = vld [vmem:[%s5 + $0x1c4] sm:$0xf]
    %v10838 = vld [vmem:[%s5 + $0x1c8] sm:$0xff]
    %v10839 = vld [vmem:[%s5 + $0x1d0] sm:$0xf]
    %v10840 = vld [vmem:[%s5 + $0x1d4] sm:$0xff]
    %v10841 = vld [vmem:[%s5 + $0x1dc] sm:$0xf]
    %v10842 = vld [vmem:[%s5 + $0x1e0] sm:$0xff]
    %v10843 = vld [vmem:[%s5 + $0x1e8] sm:$0xf]
    %v10844 = vld [vmem:[%s5 + $0x1ec] sm:$0xff]
    %v10845 = vld [vmem:[%s5 + $0x1f4] sm:$0xf]
    %v10846 = vld [vmem:[%s5 + $0x1f8] sm:$0xff]
    %v10847 = vld [vmem:[%s5 + $0x200] sm:$0xf]
    %v10848 = vld [vmem:[%s5 + $0x204] sm:$0xff]
    %v10849 = vld [vmem:[%s5 + $0x20c] sm:$0xf]
    %v10850 = vld [vmem:[%s5 + $0x210] sm:$0xff]
    %v10851 = vld [vmem:[%s5 + $0x218] sm:$0xf]
    %v10852 = vld [vmem:[%s5 + $0x21c] sm:$0xff]
    %v10853 = vld [vmem:[%s5 + $0x224] sm:$0xf]
    %v10854 = vld [vmem:[%s5 + $0x228] sm:$0xff]
    %v10855 = vld [vmem:[%s5 + $0x230] sm:$0xf]
    %v10856 = vld [vmem:[%s5 + $0x234] sm:$0xff]
    %v10857 = vld [vmem:[%s5 + $0x23c] sm:$0xf]
    %v10858 = vld [vmem:[%s5 + $0x240] sm:$0xff]
    %v10859 = vld [vmem:[%s5 + $0x248] sm:$0xf]
    %v10860 = vld [vmem:[%s5 + $0x24c] sm:$0xff]
    %v10861 = vld [vmem:[%s5 + $0x254] sm:$0xf]
    %v10862 = vld [vmem:[%s5 + $0x258] sm:$0xff]
    %v10863 = vld [vmem:[%s5 + $0x260] sm:$0xf]
    %v10864 = vld [vmem:[%s5 + $0x264] sm:$0xff]
    %v10865 = vld [vmem:[%s5 + $0x26c] sm:$0xf]
    %v10866 = vld [vmem:[%s5 + $0x270] sm:$0xff]
    %v10867 = vld [vmem:[%s5 + $0x278] sm:$0xf]
    %v10868 = vld [vmem:[%s5 + $0x27c] sm:$0xff]
    %v10869 = vld [vmem:[%s5 + $0x284] sm:$0xf]
    %v10870 = vld [vmem:[%s5 + $0x288] sm:$0xff]
    %v10871 = vld [vmem:[%s5 + $0x290] sm:$0xf]
    %v10872 = vld [vmem:[%s5 + $0x294] sm:$0xff]
    %v10873 = vld [vmem:[%s5 + $0x29c] sm:$0xf]
    %v10874 = vld [vmem:[%s5 + $0x2a0] sm:$0xff]
    %v10875 = vld [vmem:[%s5 + $0x2a8] sm:$0xf]
    %v10876 = vld [vmem:[%s5 + $0x2ac] sm:$0xff]
    %v10877 = vld [vmem:[%s5 + $0x2b4] sm:$0xf]
    %v10878 = vld [vmem:[%s5 + $0x2b8] sm:$0xff]
    %v10879 = vld [vmem:[%s5 + $0x2c0] sm:$0xf]
    %v10880 = vld [vmem:[%s5 + $0x2c4] sm:$0xff]
    %v10881 = vld [vmem:[%s5 + $0x2cc] sm:$0xf]
    %v10882 = vld [vmem:[%s5 + $0x2d0] sm:$0xff]
    %v10883 = vld [vmem:[%s5 + $0x2d8] sm:$0xf]
    %v10884 = vld [vmem:[%s5 + $0x2dc] sm:$0xff]
    %v10885 = vld [vmem:[%s5 + $0x2e4] sm:$0xf]
    %v10886 = vld [vmem:[%s5 + $0x2e8] sm:$0xff]
    %v10887 = vld [vmem:[%s5 + $0x2f0] sm:$0xf]
    %v10888 = vld [vmem:[%s5 + $0x2f4] sm:$0xff]
    %v10889 = vld [vmem:[%s5 + $0x2fc] sm:$0xf]
    %v10890 = vld [vmem:[%s5 + $0x300] sm:$0xff]
    %v10891 = vld [vmem:[%s5 + $0x308] sm:$0xf]
    %v10892 = vld [vmem:[%s5 + $0x30c] sm:$0xff]
    %v10893 = vld [vmem:[%s5 + $0x314] sm:$0xf]
    %v10894 = vld [vmem:[%s5 + $0x318] sm:$0xff]
    %v10895 = vld [vmem:[%s5 + $0x320] sm:$0xf]
    %v10896 = vld [vmem:[%s5 + $0x324] sm:$0xff]
    %v10897 = vld [vmem:[%s5 + $0x32c] sm:$0xf]
    %v10898 = vld [vmem:[%s5 + $0x330] sm:$0xff]
    %v10899 = vld [vmem:[%s5 + $0x338] sm:$0xf]
    %v10900 = vld [vmem:[%s5 + $0x33c] sm:$0xff]
    %v10901 = vld [vmem:[%s5 + $0x344] sm:$0xf]
    %v10902 = vld [vmem:[%s5 + $0x348] sm:$0xff]
    %v10903 = vld [vmem:[%s5 + $0x350] sm:$0xf]
    %v10904 = vld [vmem:[%s5 + $0x354] sm:$0xff]
    %v10905 = vld [vmem:[%s5 + $0x35c] sm:$0xf]
    %v10906 = vld [vmem:[%s5 + $0x360] sm:$0xff]
    %v10907 = vld [vmem:[%s5 + $0x368] sm:$0xf]
    %v10908 = vld [vmem:[%s5 + $0x36c] sm:$0xff]
    %v10909 = vld [vmem:[%s5 + $0x374] sm:$0xf]
    %v10910 = vld [vmem:[%s5 + $0x378] sm:$0xff]
    %v10911 = vld [vmem:[%s5 + $0x380] sm:$0xf]
    %v10912 = vld [vmem:[%s5 + $0x384] sm:$0xff]
    %v10913 = vld [vmem:[%s5 + $0x38c] sm:$0xf]
    %v10914 = vld [vmem:[%s5 + $0x390] sm:$0xff]
    %v10915 = vld [vmem:[%s5 + $0x398] sm:$0xf]
    %v10916 = vld [vmem:[%s5 + $0x39c] sm:$0xff]
    %v10917 = vld [vmem:[%s5 + $0x3a4] sm:$0xf]
    %v10918 = vld [vmem:[%s5 + $0x3a8] sm:$0xff]
    %v10919 = vld [vmem:[%s5 + $0x3b0] sm:$0xf]
    %v10920 = vld [vmem:[%s5 + $0x3b4] sm:$0xff]
    %v10921 = vld [vmem:[%s5 + $0x3bc] sm:$0xf]
    %v10922 = vld [vmem:[%s5 + $0x3c0] sm:$0xff]
    %v10923 = vld [vmem:[%s5 + $0x3c8] sm:$0xf]
    %v10924 = vld [vmem:[%s5 + $0x3cc] sm:$0xff]
    %v10925 = vld [vmem:[%s5 + $0x3d4] sm:$0xf]
    %v10926 = vld [vmem:[%s5 + $0x3d8] sm:$0xff]
    %v10927 = vld [vmem:[%s5 + $0x3e0] sm:$0xf]
    %v10928 = vld [vmem:[%s5 + $0x3e4] sm:$0xff]
    %v10929 = vld [vmem:[%s5 + $0x3ec] sm:$0xf]
    %v10930 = vld [vmem:[%s5 + $0x3f0] sm:$0xff]
    %v10931 = vld [vmem:[%s5 + $0x3f8] sm:$0xf]
    %v10932 = vld [vmem:[%s5 + $0x3fc] sm:$0xff]
    %v10933 = vld [vmem:[%s5 + $0x404] sm:$0xf]
    %v10934 = vld [vmem:[%s5 + $0x408] sm:$0xff]
    %v10935 = vld [vmem:[%s5 + $0x410] sm:$0xf]
    %v10936 = vld [vmem:[%s5 + $0x414] sm:$0xff]
    %v10937 = vld [vmem:[%s5 + $0x41c] sm:$0xf]
    %v10938 = vld [vmem:[%s5 + $0x420] sm:$0xff]
    %v10939 = vld [vmem:[%s5 + $0x428] sm:$0xf]
    %v10940 = vld [vmem:[%s5 + $0x42c] sm:$0xff]
    %v10941 = vld [vmem:[%s5 + $0x434] sm:$0xf]
    %v10942 = vld [vmem:[%s5 + $0x438] sm:$0xff]
    %v10943 = vld [vmem:[%s5 + $0x440] sm:$0xf]
    %v10944 = vld [vmem:[%s5 + $0x444] sm:$0xff]
    %v10945 = vld [vmem:[%s5 + $0x44c] sm:$0xf]
    %v10946 = vld [vmem:[%s5 + $0x450] sm:$0xff]
    %v10947 = vld [vmem:[%s5 + $0x458] sm:$0xf]
    %v10948 = vld [vmem:[%s5 + $0x45c] sm:$0xff]
    %v10949 = vld [vmem:[%s5 + $0x464] sm:$0xf]
    %v10950 = vld [vmem:[%s5 + $0x468] sm:$0xff]
    %v10951 = vld [vmem:[%s5 + $0x470] sm:$0xf]
    %v10952 = vld [vmem:[%s5 + $0x474] sm:$0xff]
    %v10953 = vld [vmem:[%s5 + $0x47c] sm:$0xf]
    %v10954 = vld [vmem:[%s5 + $0x480] sm:$0xff]
    %v10955 = vld [vmem:[%s5 + $0x488] sm:$0xf]
    %v10956 = vld [vmem:[%s5 + $0x48c] sm:$0xff]
    %v10957 = vld [vmem:[%s5 + $0x494] sm:$0xf]
    %v10958 = vld [vmem:[%s6] sm:$0x7]
    %v10960 = vlaneseq
    %v10961 = vshrl.u32 %v10960, 7
    %v10962 = vsub.s32 0, %v10961
    %v10963 = vrot.slane %v10958, %v10962
    %v10964 = vlaneseq
    %v10965 = vshrl.u32 %v10964, 7
    %v10966 = vsub.s32 1, %v10965
    %v10967 = vrot.slane %v10958, %v10966
    %v10968 = vlaneseq
    %v10969 = vshrl.u32 %v10968, 7
    %v10970 = vsub.s32 2, %v10969
    %v10971 = vrot.slane %v10958, %v10970
    %v11171 = vunpack.c.l.b16 %v10762
    %v11172 = vunpack.c.h.b16 %v10762
    %v11173 = vunpack.c.l.b16 %v10763
    %v11174 = vunpack.c.l.b16 %v10764
    %v11175 = vunpack.c.h.b16 %v10764
    %v11176 = vunpack.c.l.b16 %v10765
    %v11177 = vunpack.c.l.b16 %v10766
    %v11178 = vunpack.c.h.b16 %v10766
    %v11179 = vunpack.c.l.b16 %v10767
    %v11180 = vunpack.c.l.b16 %v10768
    %v11181 = vunpack.c.h.b16 %v10768
    %v11182 = vunpack.c.l.b16 %v10769
    %v11183 = vunpack.c.l.b16 %v10770
    %v11184 = vunpack.c.h.b16 %v10770
    %v11185 = vunpack.c.l.b16 %v10771
    %v11186 = vunpack.c.l.b16 %v10772
    %v11187 = vunpack.c.h.b16 %v10772
    %v11188 = vunpack.c.l.b16 %v10773
    %v11189 = vunpack.c.l.b16 %v10774
    %v11190 = vunpack.c.h.b16 %v10774
    %v11191 = vunpack.c.l.b16 %v10775
    %v11192 = vunpack.c.l.b16 %v10776
    %v11193 = vunpack.c.h.b16 %v10776
    %v11194 = vunpack.c.l.b16 %v10777
    %v11195 = vunpack.c.l.b16 %v10778
    %v11196 = vunpack.c.h.b16 %v10778
    %v11197 = vunpack.c.l.b16 %v10779
    %v11198 = vunpack.c.l.b16 %v10780
    %v11199 = vunpack.c.h.b16 %v10780
    %v11200 = vunpack.c.l.b16 %v10781
    %v11201 = vunpack.c.l.b16 %v10782
    %v11202 = vunpack.c.h.b16 %v10782
    %v11203 = vunpack.c.l.b16 %v10783
    %v11204 = vunpack.c.l.b16 %v10784
    %v11205 = vunpack.c.h.b16 %v10784
    %v11206 = vunpack.c.l.b16 %v10785
    %v11207 = vunpack.c.l.b16 %v10786
    %v11208 = vunpack.c.h.b16 %v10786
    %v11209 = vunpack.c.l.b16 %v10787
    %v11210 = vunpack.c.l.b16 %v10788
    %v11211 = vunpack.c.h.b16 %v10788
    %v11212 = vunpack.c.l.b16 %v10789
    %v11213 = vunpack.c.l.b16 %v10790
    %v11214 = vunpack.c.h.b16 %v10790
    %v11215 = vunpack.c.l.b16 %v10791
    %v11216 = vunpack.c.l.b16 %v10792
    %v11217 = vunpack.c.h.b16 %v10792
    %v11218 = vunpack.c.l.b16 %v10793
    %v11219 = vunpack.c.l.b16 %v10794
    %v11220 = vunpack.c.h.b16 %v10794
    %v11221 = vunpack.c.l.b16 %v10795
    %v11222 = vunpack.c.l.b16 %v10796
    %v11223 = vunpack.c.h.b16 %v10796
    %v11224 = vunpack.c.l.b16 %v10797
    %v11225 = vunpack.c.l.b16 %v10798
    %v11226 = vunpack.c.h.b16 %v10798
    %v11227 = vunpack.c.l.b16 %v10799
    %v11228 = vunpack.c.l.b16 %v10800
    %v11229 = vunpack.c.h.b16 %v10800
    %v11230 = vunpack.c.l.b16 %v10801
    %v11231 = vunpack.c.l.b16 %v10802
    %v11232 = vunpack.c.h.b16 %v10802
    %v11233 = vunpack.c.l.b16 %v10803
    %v11234 = vunpack.c.l.b16 %v10804
    %v11235 = vunpack.c.h.b16 %v10804
    %v11236 = vunpack.c.l.b16 %v10805
    %v11237 = vunpack.c.l.b16 %v10806
    %v11238 = vunpack.c.h.b16 %v10806
    %v11239 = vunpack.c.l.b16 %v10807
    %v11240 = vunpack.c.l.b16 %v10808
    %v11241 = vunpack.c.h.b16 %v10808
    %v11242 = vunpack.c.l.b16 %v10809
    %v11243 = vunpack.c.l.b16 %v10810
    %v11244 = vunpack.c.h.b16 %v10810
    %v11245 = vunpack.c.l.b16 %v10811
    %v11246 = vunpack.c.l.b16 %v10812
    %v11247 = vunpack.c.h.b16 %v10812
    %v11248 = vunpack.c.l.b16 %v10813
    %v11249 = vunpack.c.l.b16 %v10814
    %v11250 = vunpack.c.h.b16 %v10814
    %v11251 = vunpack.c.l.b16 %v10815
    %v11252 = vunpack.c.l.b16 %v10816
    %v11253 = vunpack.c.h.b16 %v10816
    %v11254 = vunpack.c.l.b16 %v10817
    %v11255 = vunpack.c.l.b16 %v10818
    %v11256 = vunpack.c.h.b16 %v10818
    %v11257 = vunpack.c.l.b16 %v10819
    %v11258 = vunpack.c.l.b16 %v10820
    %v11259 = vunpack.c.h.b16 %v10820
    %v11260 = vunpack.c.l.b16 %v10821
    %v11261 = vunpack.c.l.b16 %v10822
    %v11262 = vunpack.c.h.b16 %v10822
    %v11263 = vunpack.c.l.b16 %v10823
    %v11264 = vunpack.c.l.b16 %v10824
    %v11265 = vunpack.c.h.b16 %v10824
    %v11266 = vunpack.c.l.b16 %v10825
    %v11267 = vunpack.c.l.b16 %v10826
    %v11268 = vunpack.c.h.b16 %v10826
    %v11269 = vunpack.c.l.b16 %v10827
    %v11270 = vunpack.c.l.b16 %v10828
    %v11271 = vunpack.c.h.b16 %v10828
    %v11272 = vunpack.c.l.b16 %v10829
    %v11273 = vunpack.c.l.b16 %v10830
    %v11274 = vunpack.c.h.b16 %v10830
    %v11275 = vunpack.c.l.b16 %v10831
    %v11276 = vunpack.c.l.b16 %v10832
    %v11277 = vunpack.c.h.b16 %v10832
    %v11278 = vunpack.c.l.b16 %v10833
    %v11279 = vunpack.c.l.b16 %v10834
    %v11280 = vunpack.c.h.b16 %v10834
    %v11281 = vunpack.c.l.b16 %v10835
    %v11282 = vunpack.c.l.b16 %v10836
    %v11283 = vunpack.c.h.b16 %v10836
    %v11284 = vunpack.c.l.b16 %v10837
    %v11285 = vunpack.c.l.b16 %v10838
    %v11286 = vunpack.c.h.b16 %v10838
    %v11287 = vunpack.c.l.b16 %v10839
    %v11288 = vunpack.c.l.b16 %v10840
    %v11289 = vunpack.c.h.b16 %v10840
    %v11290 = vunpack.c.l.b16 %v10841
    %v11291 = vunpack.c.l.b16 %v10842
    %v11292 = vunpack.c.h.b16 %v10842
    %v11293 = vunpack.c.l.b16 %v10843
    %v11294 = vunpack.c.l.b16 %v10844
    %v11295 = vunpack.c.h.b16 %v10844
    %v11296 = vunpack.c.l.b16 %v10845
    %v11297 = vunpack.c.l.b16 %v10846
    %v11298 = vunpack.c.h.b16 %v10846
    %v11299 = vunpack.c.l.b16 %v10847
    %v11300 = vunpack.c.l.b16 %v10848
    %v11301 = vunpack.c.h.b16 %v10848
    %v11302 = vunpack.c.l.b16 %v10849
    %v11303 = vunpack.c.l.b16 %v10850
    %v11304 = vunpack.c.h.b16 %v10850
    %v11305 = vunpack.c.l.b16 %v10851
    %v11306 = vunpack.c.l.b16 %v10852
    %v11307 = vunpack.c.h.b16 %v10852
    %v11308 = vunpack.c.l.b16 %v10853
    %v11309 = vunpack.c.l.b16 %v10854
    %v11310 = vunpack.c.h.b16 %v10854
    %v11311 = vunpack.c.l.b16 %v10855
    %v11312 = vunpack.c.l.b16 %v10856
    %v11313 = vunpack.c.h.b16 %v10856
    %v11314 = vunpack.c.l.b16 %v10857
    %v11315 = vunpack.c.l.b16 %v10858
    %v11316 = vunpack.c.h.b16 %v10858
    %v11317 = vunpack.c.l.b16 %v10859
    %v11318 = vunpack.c.l.b16 %v10860
    %v11319 = vunpack.c.h.b16 %v10860
    %v11320 = vunpack.c.l.b16 %v10861
    %v11321 = vunpack.c.l.b16 %v10862
    %v11322 = vunpack.c.h.b16 %v10862
    %v11323 = vunpack.c.l.b16 %v10863
    %v11324 = vunpack.c.l.b16 %v10864
    %v11325 = vunpack.c.h.b16 %v10864
    %v11326 = vunpack.c.l.b16 %v10865
    %v11327 = vunpack.c.l.b16 %v10866
    %v11328 = vunpack.c.h.b16 %v10866
    %v11329 = vunpack.c.l.b16 %v10867
    %v11330 = vunpack.c.l.b16 %v10868
    %v11331 = vunpack.c.h.b16 %v10868
    %v11332 = vunpack.c.l.b16 %v10869
    %v11333 = vunpack.c.l.b16 %v10870
    %v11334 = vunpack.c.h.b16 %v10870
    %v11335 = vunpack.c.l.b16 %v10871
    %v11336 = vunpack.c.l.b16 %v10872
    %v11337 = vunpack.c.h.b16 %v10872
    %v11338 = vunpack.c.l.b16 %v10873
    %v11339 = vunpack.c.l.b16 %v10874
    %v11340 = vunpack.c.h.b16 %v10874
    %v11341 = vunpack.c.l.b16 %v10875
    %v11342 = vunpack.c.l.b16 %v10876
    %v11343 = vunpack.c.h.b16 %v10876
    %v11344 = vunpack.c.l.b16 %v10877
    %v11345 = vunpack.c.l.b16 %v10878
    %v11346 = vunpack.c.h.b16 %v10878
    %v11347 = vunpack.c.l.b16 %v10879
    %v11348 = vunpack.c.l.b16 %v10880
    %v11349 = vunpack.c.h.b16 %v10880
    %v11350 = vunpack.c.l.b16 %v10881
    %v11351 = vunpack.c.l.b16 %v10882
    %v11352 = vunpack.c.h.b16 %v10882
    %v11353 = vunpack.c.l.b16 %v10883
    %v11354 = vunpack.c.l.b16 %v10884
    %v11355 = vunpack.c.h.b16 %v10884
    %v11356 = vunpack.c.l.b16 %v10885
    %v11357 = vunpack.c.l.b16 %v10886
    %v11358 = vunpack.c.h.b16 %v10886
    %v11359 = vunpack.c.l.b16 %v10887
    %v11360 = vunpack.c.l.b16 %v10888
    %v11361 = vunpack.c.h.b16 %v10888
    %v11362 = vunpack.c.l.b16 %v10889
    %v11363 = vunpack.c.l.b16 %v10890
    %v11364 = vunpack.c.h.b16 %v10890
    %v11365 = vunpack.c.l.b16 %v10891
    %v11366 = vunpack.c.l.b16 %v10892
    %v11367 = vunpack.c.h.b16 %v10892
    %v11368 = vunpack.c.l.b16 %v10893
    %v11369 = vunpack.c.l.b16 %v10894
    %v11370 = vunpack.c.h.b16 %v10894
    %v11371 = vunpack.c.l.b16 %v10895
    %v11372 = vunpack.c.l.b16 %v10896
    %v11373 = vunpack.c.h.b16 %v10896
    %v11374 = vunpack.c.l.b16 %v10897
    %v11375 = vunpack.c.l.b16 %v10898
    %v11376 = vunpack.c.h.b16 %v10898
    %v11377 = vunpack.c.l.b16 %v10899
    %v11378 = vunpack.c.l.b16 %v10900
    %v11379 = vunpack.c.h.b16 %v10900
    %v11380 = vunpack.c.l.b16 %v10901
    %v11381 = vunpack.c.l.b16 %v10902
    %v11382 = vunpack.c.h.b16 %v10902
    %v11383 = vunpack.c.l.b16 %v10903
    %v11384 = vunpack.c.l.b16 %v10904
    %v11385 = vunpack.c.h.b16 %v10904
    %v11386 = vunpack.c.l.b16 %v10905
    %v11387 = vunpack.c.l.b16 %v10906
    %v11388 = vunpack.c.h.b16 %v10906
    %v11389 = vunpack.c.l.b16 %v10907
    %v11390 = vunpack.c.l.b16 %v10908
    %v11391 = vunpack.c.h.b16 %v10908
    %v11392 = vunpack.c.l.b16 %v10909
    %v11393 = vunpack.c.l.b16 %v10910
    %v11394 = vunpack.c.h.b16 %v10910
    %v11395 = vunpack.c.l.b16 %v10911
    %v11396 = vunpack.c.l.b16 %v10912
    %v11397 = vunpack.c.h.b16 %v10912
    %v11398 = vunpack.c.l.b16 %v10913
    %v11399 = vunpack.c.l.b16 %v10914
    %v11400 = vunpack.c.h.b16 %v10914
    %v11401 = vunpack.c.l.b16 %v10915
    %v11402 = vunpack.c.l.b16 %v10916
    %v11403 = vunpack.c.h.b16 %v10916
    %v11404 = vunpack.c.l.b16 %v10917
    %v11405 = vunpack.c.l.b16 %v10918
    %v11406 = vunpack.c.h.b16 %v10918
    %v11407 = vunpack.c.l.b16 %v10919
    %v11408 = vunpack.c.l.b16 %v10920
    %v11409 = vunpack.c.h.b16 %v10920
    %v11410 = vunpack.c.l.b16 %v10921
    %v11411 = vunpack.c.l.b16 %v10922
    %v11412 = vunpack.c.h.b16 %v10922
    %v11413 = vunpack.c.l.b16 %v10923
    %v11414 = vunpack.c.l.b16 %v10924
    %v11415 = vunpack.c.h.b16 %v10924
    %v11416 = vunpack.c.l.b16 %v10925
    %v11417 = vunpack.c.l.b16 %v10926
    %v11418 = vunpack.c.h.b16 %v10926
    %v11419 = vunpack.c.l.b16 %v10927
    %v11420 = vunpack.c.l.b16 %v10928
    %v11421 = vunpack.c.h.b16 %v10928
    %v11422 = vunpack.c.l.b16 %v10929
    %v11423 = vunpack.c.l.b16 %v10930
    %v11424 = vunpack.c.h.b16 %v10930
    %v11425 = vunpack.c.l.b16 %v10931
    %v11426 = vunpack.c.l.b16 %v10932
    %v11427 = vunpack.c.h.b16 %v10932
    %v11428 = vunpack.c.l.b16 %v10933
    %v11429 = vunpack.c.l.b16 %v10934
    %v11430 = vunpack.c.h.b16 %v10934
    %v11431 = vunpack.c.l.b16 %v10935
    %v11432 = vunpack.c.l.b16 %v10936
    %v11433 = vunpack.c.h.b16 %v10936
    %v11434 = vunpack.c.l.b16 %v10937
    %v11435 = vunpack.c.l.b16 %v10938
    %v11436 = vunpack.c.h.b16 %v10938
    %v11437 = vunpack.c.l.b16 %v10939
    %v11438 = vunpack.c.l.b16 %v10940
    %v11439 = vunpack.c.h.b16 %v10940
    %v11440 = vunpack.c.l.b16 %v10941
    %v11441 = vunpack.c.l.b16 %v10942
    %v11442 = vunpack.c.h.b16 %v10942
    %v11443 = vunpack.c.l.b16 %v10943
    %v11444 = vunpack.c.l.b16 %v10944
    %v11445 = vunpack.c.h.b16 %v10944
    %v11446 = vunpack.c.l.b16 %v10945
    %v11447 = vunpack.c.l.b16 %v10946
    %v11448 = vunpack.c.h.b16 %v10946
    %v11449 = vunpack.c.l.b16 %v10947
    %v11450 = vunpack.c.l.b16 %v10948
    %v11451 = vunpack.c.h.b16 %v10948
    %v11452 = vunpack.c.l.b16 %v10949
    %v11453 = vunpack.c.l.b16 %v10950
    %v11454 = vunpack.c.h.b16 %v10950
    %v11455 = vunpack.c.l.b16 %v10951
    %v11456 = vunpack.c.l.b16 %v10952
    %v11457 = vunpack.c.h.b16 %v10952
    %v11458 = vunpack.c.l.b16 %v10953
    %v11459 = vunpack.c.l.b16 %v10954
    %v11460 = vunpack.c.h.b16 %v10954
    %v11461 = vunpack.c.l.b16 %v10955
    %v11462 = vunpack.c.l.b16 %v10956
    %v11463 = vunpack.c.h.b16 %v10956
    %v11464 = vunpack.c.l.b16 %v10957
    %v11465 = vpack.c.b16 %v11174, %v11171
    %v11466 = vpack.c.b16 %v11175, %v11172
    %v11467 = vpack.c.b16 %v11176, %v11173
    %v11468 = vpack.c.b16 %v11180, %v11177
    %v11469 = vpack.c.b16 %v11181, %v11178
    %v11470 = vpack.c.b16 %v11182, %v11179
    %v11471 = vpack.c.b16 %v11186, %v11183
    %v11472 = vpack.c.b16 %v11187, %v11184
    %v11473 = vpack.c.b16 %v11188, %v11185
    %v11474 = vpack.c.b16 %v11192, %v11189
    %v11475 = vpack.c.b16 %v11193, %v11190
    %v11476 = vpack.c.b16 %v11194, %v11191
    %v11477 = vpack.c.b16 %v11198, %v11195
    %v11478 = vpack.c.b16 %v11199, %v11196
    %v11479 = vpack.c.b16 %v11200, %v11197
    %v11480 = vpack.c.b16 %v11204, %v11201
    %v11481 = vpack.c.b16 %v11205, %v11202
    %v11482 = vpack.c.b16 %v11206, %v11203
    %v11483 = vpack.c.b16 %v11210, %v11207
    %v11484 = vpack.c.b16 %v11211, %v11208
    %v11485 = vpack.c.b16 %v11212, %v11209
    %v11486 = vpack.c.b16 %v11216, %v11213
    %v11487 = vpack.c.b16 %v11217, %v11214
    %v11488 = vpack.c.b16 %v11218, %v11215
    %v11489 = vpack.c.b16 %v11222, %v11219
    %v11490 = vpack.c.b16 %v11223, %v11220
    %v11491 = vpack.c.b16 %v11224, %v11221
    %v11492 = vpack.c.b16 %v11228, %v11225
    %v11493 = vpack.c.b16 %v11229, %v11226
    %v11494 = vpack.c.b16 %v11230, %v11227
    %v11495 = vpack.c.b16 %v11234, %v11231
    %v11496 = vpack.c.b16 %v11235, %v11232
    %v11497 = vpack.c.b16 %v11236, %v11233
    %v11498 = vpack.c.b16 %v11240, %v11237
    %v11499 = vpack.c.b16 %v11241, %v11238
    %v11500 = vpack.c.b16 %v11242, %v11239
    %v11501 = vpack.c.b16 %v11246, %v11243
    %v11502 = vpack.c.b16 %v11247, %v11244
    %v11503 = vpack.c.b16 %v11248, %v11245
    %v11504 = vpack.c.b16 %v11252, %v11249
    %v11505 = vpack.c.b16 %v11253, %v11250
    %v11506 = vpack.c.b16 %v11254, %v11251
    %v11507 = vpack.c.b16 %v11258, %v11255
    %v11508 = vpack.c.b16 %v11259, %v11256
    %v11509 = vpack.c.b16 %v11260, %v11257
    %v11510 = vpack.c.b16 %v11264, %v11261
    %v11511 = vpack.c.b16 %v11265, %v11262
    %v11512 = vpack.c.b16 %v11266, %v11263
    %v11513 = vpack.c.b16 %v11270, %v11267
    %v11514 = vpack.c.b16 %v11271, %v11268
    %v11515 = vpack.c.b16 %v11272, %v11269
    %v11516 = vpack.c.b16 %v11276, %v11273
    %v11517 = vpack.c.b16 %v11277, %v11274
    %v11518 = vpack.c.b16 %v11278, %v11275
    %v11519 = vpack.c.b16 %v11282, %v11279
    %v11520 = vpack.c.b16 %v11283, %v11280
    %v11521 = vpack.c.b16 %v11284, %v11281
    %v11522 = vpack.c.b16 %v11288, %v11285
    %v11523 = vpack.c.b16 %v11289, %v11286
    %v11524 = vpack.c.b16 %v11290, %v11287
    %v11525 = vpack.c.b16 %v11294, %v11291
    %v11526 = vpack.c.b16 %v11295, %v11292
    %v11527 = vpack.c.b16 %v11296, %v11293
    %v11528 = vpack.c.b16 %v11300, %v11297
    %v11529 = vpack.c.b16 %v11301, %v11298
    %v11530 = vpack.c.b16 %v11302, %v11299
    %v11531 = vpack.c.b16 %v11306, %v11303
    %v11532 = vpack.c.b16 %v11307, %v11304
    %v11533 = vpack.c.b16 %v11308, %v11305
    %v11534 = vpack.c.b16 %v11312, %v11309
    %v11535 = vpack.c.b16 %v11313, %v11310
    %v11536 = vpack.c.b16 %v11314, %v11311
    %v11537 = vpack.c.b16 %v11318, %v11315
    %v11538 = vpack.c.b16 %v11319, %v11316
    %v11539 = vpack.c.b16 %v11320, %v11317
    %v11540 = vpack.c.b16 %v11324, %v11321
    %v11541 = vpack.c.b16 %v11325, %v11322
    %v11542 = vpack.c.b16 %v11326, %v11323
    %v11543 = vpack.c.b16 %v11330, %v11327
    %v11544 = vpack.c.b16 %v11331, %v11328
    %v11545 = vpack.c.b16 %v11332, %v11329
    %v11546 = vpack.c.b16 %v11336, %v11333
    %v11547 = vpack.c.b16 %v11337, %v11334
    %v11548 = vpack.c.b16 %v11338, %v11335
    %v11549 = vpack.c.b16 %v11342, %v11339
    %v11550 = vpack.c.b16 %v11343, %v11340
    %v11551 = vpack.c.b16 %v11344, %v11341
    %v11552 = vpack.c.b16 %v11348, %v11345
    %v11553 = vpack.c.b16 %v11349, %v11346
    %v11554 = vpack.c.b16 %v11350, %v11347
    %v11555 = vpack.c.b16 %v11354, %v11351
    %v11556 = vpack.c.b16 %v11355, %v11352
    %v11557 = vpack.c.b16 %v11356, %v11353
    %v11558 = vpack.c.b16 %v11360, %v11357
    %v11559 = vpack.c.b16 %v11361, %v11358
    %v11560 = vpack.c.b16 %v11362, %v11359
    %v11561 = vpack.c.b16 %v11366, %v11363
    %v11562 = vpack.c.b16 %v11367, %v11364
    %v11563 = vpack.c.b16 %v11368, %v11365
    %v11564 = vpack.c.b16 %v11372, %v11369
    %v11565 = vpack.c.b16 %v11373, %v11370
    %v11566 = vpack.c.b16 %v11374, %v11371
    %v11567 = vpack.c.b16 %v11378, %v11375
    %v11568 = vpack.c.b16 %v11379, %v11376
    %v11569 = vpack.c.b16 %v11380, %v11377
    %v11570 = vpack.c.b16 %v11384, %v11381
    %v11571 = vpack.c.b16 %v11385, %v11382
    %v11572 = vpack.c.b16 %v11386, %v11383
    %v11573 = vpack.c.b16 %v11390, %v11387
    %v11574 = vpack.c.b16 %v11391, %v11388
    %v11575 = vpack.c.b16 %v11392, %v11389
    %v11576 = vpack.c.b16 %v11396, %v11393
    %v11577 = vpack.c.b16 %v11397, %v11394
    %v11578 = vpack.c.b16 %v11398, %v11395
    %v11579 = vpack.c.b16 %v11402, %v11399
    %v11580 = vpack.c.b16 %v11403, %v11400
    %v11581 = vpack.c.b16 %v11404, %v11401
    %v11582 = vpack.c.b16 %v11408, %v11405
    %v11583 = vpack.c.b16 %v11409, %v11406
    %v11584 = vpack.c.b16 %v11410, %v11407
    %v11585 = vpack.c.b16 %v11414, %v11411
    %v11586 = vpack.c.b16 %v11415, %v11412
    %v11587 = vpack.c.b16 %v11416, %v11413
    %v11588 = vpack.c.b16 %v11420, %v11417
    %v11589 = vpack.c.b16 %v11421, %v11418
    %v11590 = vpack.c.b16 %v11422, %v11419
    %v11591 = vpack.c.b16 %v11426, %v11423
    %v11592 = vpack.c.b16 %v11427, %v11424
    %v11593 = vpack.c.b16 %v11428, %v11425
    %v11594 = vpack.c.b16 %v11432, %v11429
    %v11595 = vpack.c.b16 %v11433, %v11430
    %v11596 = vpack.c.b16 %v11434, %v11431
    %v11597 = vpack.c.b16 %v11438, %v11435
    %v11598 = vpack.c.b16 %v11439, %v11436
    %v11599 = vpack.c.b16 %v11440, %v11437
    %v11600 = vpack.c.b16 %v11444, %v11441
    %v11601 = vpack.c.b16 %v11445, %v11442
    %v11602 = vpack.c.b16 %v11446, %v11443
    %v11603 = vpack.c.b16 %v11450, %v11447
    %v11604 = vpack.c.b16 %v11451, %v11448
    %v11605 = vpack.c.b16 %v11452, %v11449
    %v11606 = vpack.c.b16 %v11456, %v11453
    %v11607 = vpack.c.b16 %v11457, %v11454
    %v11608 = vpack.c.b16 %v11458, %v11455
    %v11609 = vpack.c.b16 %v11462, %v11459
    %v11610 = vpack.c.b16 %v11463, %v11460
    %v11611 = vpack.c.b16 %v11464, %v11461
    %v11760 = vsel %vm4080, %v10761, 0
    %11762 = vmatprep.subr.bf16.mxu0 %v11466
    %11763 = vmatpush1.bf16.msra.mxu0 %v11465
    %11764 = vmatprep.subr.bf16.mxu0 %v11469
    %11765 = vmatpush1.bf16.msra.mxu0 %v11468
    %11766 = vmatprep.subr.bf16.mxu0 %v11472
    %11767 = vmatpush1.bf16.msra.mxu0 %v11471
    %11768 = vmatprep.subr.bf16.mxu0 %v11475
    %11769 = vmatpush1.bf16.msra.mxu0 %v11474
    %11770 = vmatprep.subr.bf16.mxu0 %v11478
    %11771 = vmatpush1.bf16.msra.mxu0 %v11477
    %11772 = vmatprep.subr.bf16.mxu0 %v11481
    %11773 = vmatpush1.bf16.msra.mxu0 %v11480
    %11774 = vmatprep.subr.bf16.mxu0 %v11484
    %11775 = vmatpush1.bf16.msra.mxu0 %v11483
    %11776 = vmatprep.subr.bf16.mxu0 %v11487
    %11777 = vmatpush1.bf16.msra.mxu0 %v11486
    %11778 = vmatprep.subr.bf16.mxu0 %v11490
    %11779 = vmatpush1.bf16.msra.mxu0 %v11489
    %11780 = vmatprep.subr.bf16.mxu0 %v11493
    %11781 = vmatpush1.bf16.msra.mxu0 %v11492
    %11782 = vmatprep.subr.bf16.mxu0 %v11496
    %11783 = vmatpush1.bf16.msra.mxu0 %v11495
    %11784 = vmatprep.subr.bf16.mxu0 %v11499
    %11785 = vmatpush1.bf16.msra.mxu0 %v11498
    %11786 = vmatprep.subr.bf16.mxu0 %v11502
    %11787 = vmatpush1.bf16.msra.mxu0 %v11501
    %11788 = vmatprep.subr.bf16.mxu0 %v11505
    %11789 = vmatpush1.bf16.msra.mxu0 %v11504
    %11790 = vmatprep.subr.bf16.mxu0 %v11508
    %11791 = vmatpush1.bf16.msra.mxu0 %v11507
    %11792 = vmatprep.subr.bf16.mxu0 %v11511
    %11793 = vmatpush1.bf16.msra.mxu0 %v11510
    %11794 = vmatprep.mubr.bf16.mxu0 %v10756
    %11795 = vmatmul.mubr.bf16.gmra.mrb[0].mxu0 %v10755
    %v11796 = vpop.f32.mrb[0].mxu0
    %v11797 = vadd.f32 %v10963, %v11796
    %v11798 = vpop.f32.mrb[0].mxu0
    %v11799 = vadd.f32 %v10967, %v11798
    %v11800 = vpop.f32.mrb[0].mxu0
    %v11801 = vpop.f32.mrb[0].mxu0
    %11802 = vdwg.mxu0
    %11803 = vmatprep.subr.bf16.mxu0 %v11514
    %11804 = vmatpush1.bf16.msra.mxu0 %v11513
    %11805 = vmatprep.subr.bf16.mxu0 %v11517
    %11806 = vmatpush1.bf16.msra.mxu0 %v11516
    %11807 = vmatprep.subr.bf16.mxu0 %v11520
    %11808 = vmatpush1.bf16.msra.mxu0 %v11519
    %11809 = vmatprep.subr.bf16.mxu0 %v11523
    %11810 = vmatpush1.bf16.msra.mxu0 %v11522
    %11811 = vmatprep.subr.bf16.mxu0 %v11526
    %11812 = vmatpush1.bf16.msra.mxu0 %v11525
    %11813 = vmatprep.subr.bf16.mxu0 %v11529
    %11814 = vmatpush1.bf16.msra.mxu0 %v11528
    %11815 = vmatprep.subr.bf16.mxu0 %v11532
    %11816 = vmatpush1.bf16.msra.mxu0 %v11531
    %11817 = vmatprep.subr.bf16.mxu0 %v11535
    %11818 = vmatpush1.bf16.msra.mxu0 %v11534
    %11819 = vmatprep.subr.bf16.mxu0 %v11538
    %11820 = vmatpush1.bf16.msra.mxu0 %v11537
    %11821 = vmatprep.subr.bf16.mxu0 %v11541
    %11822 = vmatpush1.bf16.msra.mxu0 %v11540
    %11823 = vmatprep.subr.bf16.mxu0 %v11544
    %11824 = vmatpush1.bf16.msra.mxu0 %v11543
    %11825 = vmatprep.subr.bf16.mxu0 %v11547
    %11826 = vmatpush1.bf16.msra.mxu0 %v11546
    %11827 = vmatprep.subr.bf16.mxu0 %v11550
    %11828 = vmatpush1.bf16.msra.mxu0 %v11549
    %11829 = vmatprep.subr.bf16.mxu0 %v11553
    %11830 = vmatpush1.bf16.msra.mxu0 %v11552
    %11831 = vmatprep.subr.bf16.mxu0 %v11556
    %11832 = vmatpush1.bf16.msra.mxu0 %v11555
    %11833 = vmatprep.subr.bf16.mxu0 %v11559
    %11834 = vmatpush1.bf16.msra.mxu0 %v11558
    %11835 = vmatprep.mubr.bf16.mxu0 %v10758
    %11836 = vmatmul.mubr.bf16.gmra.mrb[0].mxu0 %v10757
    %v11837 = vpop.f32.mrb[0].mxu0
    %v11838 = vadd.f32 %v11797, %v11837
    %v11839 = vpop.f32.mrb[0].mxu0
    %v11840 = vadd.f32 %v11799, %v11839
    %v11841 = vpop.f32.mrb[0].mxu0
    %v11842 = vpop.f32.mrb[0].mxu0
    %11843 = vdwg.mxu0
    %11844 = vmatprep.subr.bf16.mxu0 %v11562
    %11845 = vmatpush1.bf16.msra.mxu0 %v11561
    %11846 = vmatprep.subr.bf16.mxu0 %v11565
    %11847 = vmatpush1.bf16.msra.mxu0 %v11564
    %11848 = vmatprep.subr.bf16.mxu0 %v11568
    %11849 = vmatpush1.bf16.msra.mxu0 %v11567
    %11850 = vmatprep.subr.bf16.mxu0 %v11571
    %11851 = vmatpush1.bf16.msra.mxu0 %v11570
    %11852 = vmatprep.subr.bf16.mxu0 %v11574
    %11853 = vmatpush1.bf16.msra.mxu0 %v11573
    %11854 = vmatprep.subr.bf16.mxu0 %v11577
    %11855 = vmatpush1.bf16.msra.mxu0 %v11576
    %11856 = vmatprep.subr.bf16.mxu0 %v11580
    %11857 = vmatpush1.bf16.msra.mxu0 %v11579
    %11858 = vmatprep.subr.bf16.mxu0 %v11583
    %11859 = vmatpush1.bf16.msra.mxu0 %v11582
    %11860 = vmatprep.subr.bf16.mxu0 %v11586
    %11861 = vmatpush1.bf16.msra.mxu0 %v11585
    %11862 = vmatprep.subr.bf16.mxu0 %v11589
    %11863 = vmatpush1.bf16.msra.mxu0 %v11588
    %11864 = vmatprep.subr.bf16.mxu0 %v11592
    %11865 = vmatpush1.bf16.msra.mxu0 %v11591
    %11866 = vmatprep.subr.bf16.mxu0 %v11595
    %11867 = vmatpush1.bf16.msra.mxu0 %v11594
    %11868 = vmatprep.subr.bf16.mxu0 %v11598
    %11869 = vmatpush1.bf16.msra.mxu0 %v11597
    %11870 = vmatprep.subr.bf16.mxu0 %v11601
    %11871 = vmatpush1.bf16.msra.mxu0 %v11600
    %11872 = vmatprep.subr.bf16.mxu0 %v11604
    %11873 = vmatpush1.bf16.msra.mxu0 %v11603
    %11874 = vmatprep.subr.bf16.mxu0 %v11607
    %11875 = vmatpush1.bf16.msra.mxu0 %v11606
    %11876 = vmatprep.mubr.bf16.mxu0 %v10760
    %11877 = vmatmul.mubr.bf16.gmra.mrb[0].mxu0 %v10759
    %v11878 = vpop.f32.mrb[0].mxu0
    %v11879 = vadd.f32 %v11838, %v11878
    %v11880 = vpop.f32.mrb[0].mxu0
    %v11881 = vadd.f32 %v11840, %v11880
    %v11882 = vpop.f32.mrb[0].mxu0
    %v11883 = vpop.f32.mrb[0].mxu0
    %11884 = vdwg.mxu0
    %11885 = vmatprep.subr.bf16.mxu0 %v11610
    %11886 = vmatpush1.bf16.msra.mxu0 %v11609
    %11887 = vmatprep.subr.bf16.mxu0 0
    %11888 = vmatpush1.bf16.msra.mxu0 0
    %11889 = vmatprep.subr.bf16.mxu0 0
    %11890 = vmatpush1.bf16.msra.mxu0 0
    %11891 = vmatprep.subr.bf16.mxu0 0
    %11892 = vmatpush1.bf16.msra.mxu0 0
    %11893 = vmatprep.subr.bf16.mxu0 0
    %11894 = vmatpush1.bf16.msra.mxu0 0
    %11895 = vmatprep.subr.bf16.mxu0 0
    %11896 = vmatpush1.bf16.msra.mxu0 0
    %11897 = vmatprep.subr.bf16.mxu0 0
    %11898 = vmatpush1.bf16.msra.mxu0 0
    %11899 = vmatprep.subr.bf16.mxu0 0
    %11900 = vmatpush1.bf16.msra.mxu0 0
    %11901 = vmatprep.subr.bf16.mxu0 0
    %11902 = vmatpush1.bf16.msra.mxu0 0
    %11903 = vmatprep.subr.bf16.mxu0 0
    %11904 = vmatpush1.bf16.msra.mxu0 0
    %11905 = vmatprep.subr.bf16.mxu0 0
    %11906 = vmatpush1.bf16.msra.mxu0 0
    %11907 = vmatprep.subr.bf16.mxu0 0
    %11908 = vmatpush1.bf16.msra.mxu0 0
    %11909 = vmatprep.subr.bf16.mxu0 0
    %11910 = vmatpush1.bf16.msra.mxu0 0
    %11911 = vmatprep.subr.bf16.mxu0 0
    %11912 = vmatpush1.bf16.msra.mxu0 0
    %11913 = vmatprep.subr.bf16.mxu0 0
    %11914 = vmatpush1.bf16.msra.mxu0 0
    %11915 = vmatprep.subr.bf16.mxu0 0
    %11916 = vmatpush1.bf16.msra.mxu0 0
    %11917 = vmatprep.mubr.bf16.mxu0 0
    %11918 = vmatmul.mubr.bf16.gmra.mrb[0].mxu0 %v11760
    %v11919 = vpop.f32.mrb[0].mxu0
    %v11920 = vadd.f32 %v11879, %v11919
    %v11921 = vpop.f32.mrb[0].mxu0
    %v11922 = vadd.f32 %v11881, %v11921
    %v11923 = vpop.f32.mrb[0].mxu0
    %v11924 = vpop.f32.mrb[0].mxu0
    %11925 = vdwg.mxu0
    %11926 = vmatprep.subr.bf16.mxu0 0
    %11927 = vmatpush1.bf16.msra.mxu0 %v11467
    %11928 = vmatprep.subr.bf16.mxu0 0
    %11929 = vmatpush1.bf16.msra.mxu0 %v11470
    %11930 = vmatprep.subr.bf16.mxu0 0
    %11931 = vmatpush1.bf16.msra.mxu0 %v11473
    %11932 = vmatprep.subr.bf16.mxu0 0
    %11933 = vmatpush1.bf16.msra.mxu0 %v11476
    %11934 = vmatprep.subr.bf16.mxu0 0
    %11935 = vmatpush1.bf16.msra.mxu0 %v11479
    %11936 = vmatprep.subr.bf16.mxu0 0
    %11937 = vmatpush1.bf16.msra.mxu0 %v11482
    %11938 = vmatprep.subr.bf16.mxu0 0
    %11939 = vmatpush1.bf16.msra.mxu0 %v11485
    %11940 = vmatprep.subr.bf16.mxu0 0
    %11941 = vmatpush1.bf16.msra.mxu0 %v11488
    %11942 = vmatprep.subr.bf16.mxu0 0
    %11943 = vmatpush1.bf16.msra.mxu0 %v11491
    %11944 = vmatprep.subr.bf16.mxu0 0
    %11945 = vmatpush1.bf16.msra.mxu0 %v11494
    %11946 = vmatprep.subr.bf16.mxu0 0
    %11947 = vmatpush1.bf16.msra.mxu0 %v11497
    %11948 = vmatprep.subr.bf16.mxu0 0
    %11949 = vmatpush1.bf16.msra.mxu0 %v11500
    %11950 = vmatprep.subr.bf16.mxu0 0
    %11951 = vmatpush1.bf16.msra.mxu0 %v11503
    %11952 = vmatprep.subr.bf16.mxu0 0
    %11953 = vmatpush1.bf16.msra.mxu0 %v11506
    %11954 = vmatprep.subr.bf16.mxu0 0
    %11955 = vmatpush1.bf16.msra.mxu0 %v11509
    %11956 = vmatprep.subr.bf16.mxu0 0
    %11957 = vmatpush1.bf16.msra.mxu0 %v11512
    %11958 = vmatprep.mubr.bf16.mxu0 %v10756
    %11959 = vmatmul.mubr.bf16.gmra.mrb[0].mxu0 %v10755
    %v11960 = vpop.f32.mrb[0].mxu0
    %v11961 = vadd.f32 %v10971, %v11960
    %v11962 = vpop.f32.mrb[0].mxu0
    %v11963 = vpop.f32.mrb[0].mxu0
    %v11964 = vpop.f32.mrb[0].mxu0
    %11965 = vdwg.mxu0
    %11966 = vmatprep.subr.bf16.mxu0 0
    %11967 = vmatpush1.bf16.msra.mxu0 %v11515
    %11968 = vmatprep.subr.bf16.mxu0 0
    %11969 = vmatpush1.bf16.msra.mxu0 %v11518
    %11970 = vmatprep.subr.bf16.mxu0 0
    %11971 = vmatpush1.bf16.msra.mxu0 %v11521
    %11972 = vmatprep.subr.bf16.mxu0 0
    %11973 = vmatpush1.bf16.msra.mxu0 %v11524
    %11974 = vmatprep.subr.bf16.mxu0 0
    %11975 = vmatpush1.bf16.msra.mxu0 %v11527
    %11976 = vmatprep.subr.bf16.mxu0 0
    %11977 = vmatpush1.bf16.msra.mxu0 %v11530
    %11978 = vmatprep.subr.bf16.mxu0 0
    %11979 = vmatpush1.bf16.msra.mxu0 %v11533
    %11980 = vmatprep.subr.bf16.mxu0 0
    %11981 = vmatpush1.bf16.msra.mxu0 %v11536
    %11982 = vmatprep.subr.bf16.mxu0 0
    %11983 = vmatpush1.bf16.msra.mxu0 %v11539
    %11984 = vmatprep.subr.bf16.mxu0 0
    %11985 = vmatpush1.bf16.msra.mxu0 %v11542
    %11986 = vmatprep.subr.bf16.mxu0 0
    %11987 = vmatpush1.bf16.msra.mxu0 %v11545
    %11988 = vmatprep.subr.bf16.mxu0 0
    %11989 = vmatpush1.bf16.msra.mxu0 %v11548
    %11990 = vmatprep.subr.bf16.mxu0 0
    %11991 = vmatpush1.bf16.msra.mxu0 %v11551
    %11992 = vmatprep.subr.bf16.mxu0 0
    %11993 = vmatpush1.bf16.msra.mxu0 %v11554
    %11994 = vmatprep.subr.bf16.mxu0 0
    %11995 = vmatpush1.bf16.msra.mxu0 %v11557
    %11996 = vmatprep.subr.bf16.mxu0 0
    %11997 = vmatpush1.bf16.msra.mxu0 %v11560
    %11998 = vmatprep.mubr.bf16.mxu0 %v10758
    %11999 = vmatmul.mubr.bf16.gmra.mrb[0].mxu0 %v10757
    %v12000 = vpop.f32.mrb[0].mxu0
    %v12001 = vadd.f32 %v11961, %v12000
    %v12002 = vpop.f32.mrb[0].mxu0
    %v12003 = vpop.f32.mrb[0].mxu0
    %v12004 = vpop.f32.mrb[0].mxu0
    %12005 = vdwg.mxu0
    %12006 = vmatprep.subr.bf16.mxu0 0
    %12007 = vmatpush1.bf16.msra.mxu0 %v11563
    %12008 = vmatprep.subr.bf16.mxu0 0
    %12009 = vmatpush1.bf16.msra.mxu0 %v11566
    %12010 = vmatprep.subr.bf16.mxu0 0
    %12011 = vmatpush1.bf16.msra.mxu0 %v11569
    %12012 = vmatprep.subr.bf16.mxu0 0
    %12013 = vmatpush1.bf16.msra.mxu0 %v11572
    %12014 = vmatprep.subr.bf16.mxu0 0
    %12015 = vmatpush1.bf16.msra.mxu0 %v11575
    %12016 = vmatprep.subr.bf16.mxu0 0
    %12017 = vmatpush1.bf16.msra.mxu0 %v11578
    %12018 = vmatprep.subr.bf16.mxu0 0
    %12019 = vmatpush1.bf16.msra.mxu0 %v11581
    %12020 = vmatprep.subr.bf16.mxu0 0
    %12021 = vmatpush1.bf16.msra.mxu0 %v11584
    %12022 = vmatprep.subr.bf16.mxu0 0
    %12023 = vmatpush1.bf16.msra.mxu0 %v11587
    %12024 = vmatprep.subr.bf16.mxu0 0
    %12025 = vmatpush1.bf16.msra.mxu0 %v11590
    %12026 = vmatprep.subr.bf16.mxu0 0
    %12027 = vmatpush1.bf16.msra.mxu0 %v11593
    %12028 = vmatprep.subr.bf16.mxu0 0
    %12029 = vmatpush1.bf16.msra.mxu0 %v11596
    %12030 = vmatprep.subr.bf16.mxu0 0
    %12031 = vmatpush1.bf16.msra.mxu0 %v11599
    %12032 = vmatprep.subr.bf16.mxu0 0
    %12033 = vmatpush1.bf16.msra.mxu0 %v11602
    %12034 = vmatprep.subr.bf16.mxu0 0
    %12035 = vmatpush1.bf16.msra.mxu0 %v11605
    %12036 = vmatprep.subr.bf16.mxu0 0
    %12037 = vmatpush1.bf16.msra.mxu0 %v11608
    %12038 = vmatprep.mubr.bf16.mxu0 %v10760
    %12039 = vmatmul.mubr.bf16.gmra.mrb[0].mxu0 %v10759
    %v12040 = vpop.f32.mrb[0].mxu0
    %v12041 = vadd.f32 %v12001, %v12040
    %v12042 = vpop.f32.mrb[0].mxu0
    %v12043 = vpop.f32.mrb[0].mxu0
    %v12044 = vpop.f32.mrb[0].mxu0
    %12045 = vdwg.mxu0
    %12046 = vmatprep.subr.bf16.mxu0 0
    %12047 = vmatpush1.bf16.msra.mxu0 %v11611
    %12048 = vmatprep.subr.bf16.mxu0 0
    %12049 = vmatpush1.bf16.msra.mxu0 0
    %12050 = vmatprep.subr.bf16.mxu0 0
    %12051 = vmatpush1.bf16.msra.mxu0 0
    %12052 = vmatprep.subr.bf16.mxu0 0
    %12053 = vmatpush1.bf16.msra.mxu0 0
    %12054 = vmatprep.subr.bf16.mxu0 0
    %12055 = vmatpush1.bf16.msra.mxu0 0
    %12056 = vmatprep.subr.bf16.mxu0 0
    %12057 = vmatpush1.bf16.msra.mxu0 0
    %12058 = vmatprep.subr.bf16.mxu0 0
    %12059 = vmatpush1.bf16.msra.mxu0 0
    %12060 = vmatprep.subr.bf16.mxu0 0
    %12061 = vmatpush1.bf16.msra.mxu0 0
    %12062 = vmatprep.subr.bf16.mxu0 0
    %12063 = vmatpush1.bf16.msra.mxu0 0
    %12064 = vmatprep.subr.bf16.mxu0 0
    %12065 = vmatpush1.bf16.msra.mxu0 0
    %12066 = vmatprep.subr.bf16.mxu0 0
    %12067 = vmatpush1.bf16.msra.mxu0 0
    %12068 = vmatprep.subr.bf16.mxu0 0
    %12069 = vmatpush1.bf16.msra.mxu0 0
    %12070 = vmatprep.subr.bf16.mxu0 0
    %12071 = vmatpush1.bf16.msra.mxu0 0
    %12072 = vmatprep.subr.bf16.mxu0 0
    %12073 = vmatpush1.bf16.msra.mxu0 0
    %12074 = vmatprep.subr.bf16.mxu0 0
    %12075 = vmatpush1.bf16.msra.mxu0 0
    %12076 = vmatprep.subr.bf16.mxu0 0
    %12077 = vmatpush1.bf16.msra.mxu0 0
    %12078 = vmatprep.mubr.bf16.mxu0 0
    %12079 = vmatmul.mubr.bf16.gmra.mrb[0].mxu0 %v11760
    %v12080 = vpop.f32.mrb[0].mxu0
    %v12081 = vadd.f32 %v12041, %v12080
    %v12082 = vpop.f32.mrb[0].mxu0
    %v12083 = vpop.f32.mrb[0].mxu0
    %v12084 = vpop.f32.mrb[0].mxu0
    %12085 = vdwg.mxu0
    %v12086 = vmax.f32 %v11920, 0.0
    %v12087 = vmax.f32 %v11922, 0.0
    %v12088 = vmax.f32 %v12081, 0.0
    %v12089 = vpack.c.bf16 %v12086, %v12086
    %v12090 = vpack.c.bf16 %v12087, %v12087
    %v12091 = vpack.c.bf16 %v12088, %v12088
    %v12092 = vld [vmem:[%s7] sm:$0xf]
    %v12093 = vld [vmem:[%s7 + $0x4] sm:$0xf]
    %v12094 = vld [vmem:[%s7 + $0x8] sm:$0xf]
    %v12095 = vld [vmem:[%s7 + $0xc] sm:$0xf]
    %v12096 = vld [vmem:[%s7 + $0x10] sm:$0xf]
    %v12097 = vld [vmem:[%s7 + $0x14] sm:$0xf]
    %v12098 = vld [vmem:[%s7 + $0x18] sm:$0xf]
    %v12099 = vld [vmem:[%s7 + $0x1c] sm:$0xf]
    %v12100 = vld [vmem:[%s7 + $0x20] sm:$0xf]
    %v12101 = vld [vmem:[%s7 + $0x24] sm:$0xf]
    %v12102 = vld [vmem:[%s7 + $0x28] sm:$0xf]
    %v12103 = vld [vmem:[%s7 + $0x2c] sm:$0xf]
    %v12104 = vld [vmem:[%s7 + $0x30] sm:$0xf]
    %v12105 = vld [vmem:[%s7 + $0x34] sm:$0xf]
    %v12106 = vld [vmem:[%s7 + $0x38] sm:$0xf]
    %v12107 = vld [vmem:[%s7 + $0x3c] sm:$0xf]
    %v12108 = vld [vmem:[%s7 + $0x40] sm:$0xf]
    %v12109 = vld [vmem:[%s7 + $0x44] sm:$0xf]
    %v12110 = vld [vmem:[%s7 + $0x48] sm:$0xf]
    %v12111 = vld [vmem:[%s7 + $0x4c] sm:$0xf]
    %v12112 = vld [vmem:[%s7 + $0x50] sm:$0xf]
    %v12113 = vld [vmem:[%s7 + $0x54] sm:$0xf]
    %v12114 = vld [vmem:[%s7 + $0x58] sm:$0xf]
    %v12115 = vld [vmem:[%s7 + $0x5c] sm:$0xf]
    %v12116 = vld [vmem:[%s7 + $0x60] sm:$0xf]
    %v12117 = vld [vmem:[%s7 + $0x64] sm:$0xf]
    %v12118 = vld [vmem:[%s7 + $0x68] sm:$0xf]
    %v12119 = vld [vmem:[%s7 + $0x6c] sm:$0xf]
    %v12120 = vld [vmem:[%s7 + $0x70] sm:$0xf]
    %v12121 = vld [vmem:[%s7 + $0x74] sm:$0xf]
    %v12122 = vld [vmem:[%s7 + $0x78] sm:$0xf]
    %v12123 = vld [vmem:[%s7 + $0x7c] sm:$0xf]
    %v12124 = vld [vmem:[%s7 + $0x80] sm:$0xf]
    %v12125 = vld [vmem:[%s7 + $0x84] sm:$0xf]
    %v12126 = vld [vmem:[%s7 + $0x88] sm:$0xf]
    %v12127 = vld [vmem:[%s7 + $0x8c] sm:$0xf]
    %v12128 = vld [vmem:[%s8] sm:$0x1]
    %v12130 = vlaneseq
    %v12131 = vshrl.u32 %v12130, 7
    %v12132 = vsub.s32 0, %v12131
    %v12133 = vrot.slane %v12128, %v12132
    %v12171 = vunpack.c.l.b16 %v12092
    %v12172 = vunpack.c.l.b16 %v12093
    %v12173 = vunpack.c.l.b16 %v12094
    %v12174 = vunpack.c.l.b16 %v12095
    %v12175 = vunpack.c.l.b16 %v12096
    %v12176 = vunpack.c.l.b16 %v12097
    %v12177 = vunpack.c.l.b16 %v12098
    %v12178 = vunpack.c.l.b16 %v12099
    %v12179 = vunpack.c.l.b16 %v12100
    %v12180 = vunpack.c.l.b16 %v12101
    %v12181 = vunpack.c.l.b16 %v12102
    %v12182 = vunpack.c.l.b16 %v12103
    %v12183 = vunpack.c.l.b16 %v12104
    %v12184 = vunpack.c.l.b16 %v12105
    %v12185 = vunpack.c.l.b16 %v12106
    %v12186 = vunpack.c.l.b16 %v12107
    %v12187 = vunpack.c.l.b16 %v12108
    %v12188 = vunpack.c.l.b16 %v12109
    %v12189 = vunpack.c.l.b16 %v12110
    %v12190 = vunpack.c.l.b16 %v12111
    %v12191 = vunpack.c.l.b16 %v12112
    %v12192 = vunpack.c.l.b16 %v12113
    %v12193 = vunpack.c.l.b16 %v12114
    %v12194 = vunpack.c.l.b16 %v12115
    %v12195 = vunpack.c.l.b16 %v12116
    %v12196 = vunpack.c.l.b16 %v12117
    %v12197 = vunpack.c.l.b16 %v12118
    %v12198 = vunpack.c.l.b16 %v12119
    %v12199 = vunpack.c.l.b16 %v12120
    %v12200 = vunpack.c.l.b16 %v12121
    %v12201 = vunpack.c.l.b16 %v12122
    %v12202 = vunpack.c.l.b16 %v12123
    %v12203 = vunpack.c.l.b16 %v12124
    %v12204 = vunpack.c.l.b16 %v12125
    %v12205 = vunpack.c.l.b16 %v12126
    %v12206 = vunpack.c.l.b16 %v12127
    %v12207 = vpack.c.b16 %v12172, %v12171
    %v12208 = vpack.c.b16 %v12174, %v12173
    %v12209 = vpack.c.b16 %v12176, %v12175
    %v12210 = vpack.c.b16 %v12178, %v12177
    %v12211 = vpack.c.b16 %v12180, %v12179
    %v12212 = vpack.c.b16 %v12182, %v12181
    %v12213 = vpack.c.b16 %v12184, %v12183
    %v12214 = vpack.c.b16 %v12186, %v12185
    %v12215 = vpack.c.b16 %v12188, %v12187
    %v12216 = vpack.c.b16 %v12190, %v12189
    %v12217 = vpack.c.b16 %v12192, %v12191
    %v12218 = vpack.c.b16 %v12194, %v12193
    %v12219 = vpack.c.b16 %v12196, %v12195
    %v12220 = vpack.c.b16 %v12198, %v12197
    %v12221 = vpack.c.b16 %v12200, %v12199
    %v12222 = vpack.c.b16 %v12202, %v12201
    %v12223 = vpack.c.b16 %v12204, %v12203
    %v12224 = vpack.c.b16 %v12206, %v12205
    %v12244 = vsel %vm9603, %v12091, 0
    %12246 = vmatprep.subr.bf16.mxu0 0
    %12247 = vmatpush1.bf16.msra.mxu0 %v12207
    %12248 = vmatprep.subr.bf16.mxu0 0
    %12249 = vmatpush1.bf16.msra.mxu0 %v12208
    %12250 = vmatprep.subr.bf16.mxu0 0
    %12251 = vmatpush1.bf16.msra.mxu0 %v12209
    %12252 = vmatprep.subr.bf16.mxu0 0
    %12253 = vmatpush1.bf16.msra.mxu0 %v12210
    %12254 = vmatprep.subr.bf16.mxu0 0
    %12255 = vmatpush1.bf16.msra.mxu0 %v12211
    %12256 = vmatprep.subr.bf16.mxu0 0
    %12257 = vmatpush1.bf16.msra.mxu0 %v12212
    %12258 = vmatprep.subr.bf16.mxu0 0
    %12259 = vmatpush1.bf16.msra.mxu0 %v12213
    %12260 = vmatprep.subr.bf16.mxu0 0
    %12261 = vmatpush1.bf16.msra.mxu0 %v12214
    %12262 = vmatprep.subr.bf16.mxu0 0
    %12263 = vmatpush1.bf16.msra.mxu0 %v12215
    %12264 = vmatprep.subr.bf16.mxu0 0
    %12265 = vmatpush1.bf16.msra.mxu0 %v12216
    %12266 = vmatprep.subr.bf16.mxu0 0
    %12267 = vmatpush1.bf16.msra.mxu0 %v12217
    %12268 = vmatprep.subr.bf16.mxu0 0
    %12269 = vmatpush1.bf16.msra.mxu0 %v12218
    %12270 = vmatprep.subr.bf16.mxu0 0
    %12271 = vmatpush1.bf16.msra.mxu0 %v12219
    %12272 = vmatprep.subr.bf16.mxu0 0
    %12273 = vmatpush1.bf16.msra.mxu0 %v12220
    %12274 = vmatprep.subr.bf16.mxu0 0
    %12275 = vmatpush1.bf16.msra.mxu0 %v12221
    %12276 = vmatprep.subr.bf16.mxu0 0
    %12277 = vmatpush1.bf16.msra.mxu0 %v12222
    %12278 = vmatprep.mubr.bf16.mxu0 %v12090
    %12279 = vmatmul.mubr.bf16.gmra.mrb[0].mxu0 %v12089
    %v12280 = vpop.f32.mrb[0].mxu0
    %v12281 = vadd.f32 %v12133, %v12280
    %v12282 = vpop.f32.mrb[0].mxu0
    %v12283 = vpop.f32.mrb[0].mxu0
    %v12284 = vpop.f32.mrb[0].mxu0
    %12285 = vdwg.mxu0
    %12286 = vmatprep.subr.bf16.mxu0 0
    %12287 = vmatpush1.bf16.msra.mxu0 %v12223
    %12288 = vmatprep.subr.bf16.mxu0 0
    %12289 = vmatpush1.bf16.msra.mxu0 %v12224
    %12290 = vmatprep.subr.bf16.mxu0 0
    %12291 = vmatpush1.bf16.msra.mxu0 0
    %12292 = vmatprep.subr.bf16.mxu0 0
    %12293 = vmatpush1.bf16.msra.mxu0 0
    %12294 = vmatprep.subr.bf16.mxu0 0
    %12295 = vmatpush1.bf16.msra.mxu0 0
    %12296 = vmatprep.subr.bf16.mxu0 0
    %12297 = vmatpush1.bf16.msra.mxu0 0
    %12298 = vmatprep.subr.bf16.mxu0 0
    %12299 = vmatpush1.bf16.msra.mxu0 0
    %12300 = vmatprep.subr.bf16.mxu0 0
    %12301 = vmatpush1.bf16.msra.mxu0 0
    %12302 = vmatprep.subr.bf16.mxu0 0
    %12303 = vmatpush1.bf16.msra.mxu0 0
    %12304 = vmatprep.subr.bf16.mxu0 0
    %12305 = vmatpush1.bf16.msra.mxu0 0
    %12306 = vmatprep.subr.bf16.mxu0 0
    %12307 = vmatpush1.bf16.msra.mxu0 0
    %12308 = vmatprep.subr.bf16.mxu0 0
    %12309 = vmatpush1.bf16.msra.mxu0 0
    %12310 = vmatprep.subr.bf16.mxu0 0
    %12311 = vmatpush1.bf16.msra.mxu0 0
    %12312 = vmatprep.subr.bf16.mxu0 0
    %12313 = vmatpush1.bf16.msra.mxu0 0
    %12314 = vmatprep.subr.bf16.mxu0 0
    %12315 = vmatpush1.bf16.msra.mxu0 0
    %12316 = vmatprep.subr.bf16.mxu0 0
    %12317 = vmatpush1.bf16.msra.mxu0 0
    %12318 = vmatprep.mubr.bf16.mxu0 0
    %12319 = vmatmul.mubr.bf16.gmra.mrb[0].mxu0 %v12244
    %v12320 = vpop.f32.mrb[0].mxu0
    %v12321 = vadd.f32 %v12281, %v12320
    %v12322 = vpop.f32.mrb[0].mxu0
    %v12323 = vpop.f32.mrb[0].mxu0
    %v12324 = vpop.f32.mrb[0].mxu0
    %12325 = vdwg.mxu0
    %v12326 = vmax.f32 %v12321, 0.0
    %v12327 = vpack.c.bf16 %v12326, %v12326
    %v12328 = vld [vmem:[%s9] sm:$0xf]
    %v12329 = vld [vmem:[%s9 + $0x4] sm:$0xf]
    %v12330 = vld [vmem:[%s9 + $0x8] sm:$0xf]
    %v12331 = vld [vmem:[%s9 + $0xc] sm:$0xf]
    %v12332 = vld [vmem:[%s9 + $0x10] sm:$0xf]
    %v12333 = vld [vmem:[%s9 + $0x14] sm:$0xf]
    %v12334 = vld [vmem:[%s9 + $0x18] sm:$0xf]
    %v12335 = vld [vmem:[%s9 + $0x1c] sm:$0xf]
    %v12336 = vld [vmem:[%s9 + $0x20] sm:$0xf]
    %v12337 = vld [vmem:[%s9 + $0x24] sm:$0xf]
    %v12338 = vld [vmem:[%s9 + $0x28] sm:$0xf]
    %v12339 = vld [vmem:[%s9 + $0x2c] sm:$0xf]
    %v12340 = vld [vmem:[%s9 + $0x30] sm:$0xf]
    %v12341 = vld [vmem:[%s9 + $0x34] sm:$0xf]
    %v12342 = vld [vmem:[%s9 + $0x38] sm:$0xf]
    %v12343 = vld [vmem:[%s9 + $0x3c] sm:$0xf]
    %v12344 = vld [vmem:[%s10] sm:$0x1]
    %v12346 = vlaneseq
    %v12347 = vshrl.u32 %v12346, 7
    %v12348 = vsub.s32 0, %v12347
    %v12349 = vrot.slane %v12344, %v12348
    %v12367 = vunpack.c.l.b16 %v12328
    %v12368 = vunpack.c.l.b16 %v12329
    %v12369 = vunpack.c.l.b16 %v12330
    %v12370 = vunpack.c.l.b16 %v12331
    %v12371 = vunpack.c.l.b16 %v12332
    %v12372 = vunpack.c.l.b16 %v12333
    %v12373 = vunpack.c.l.b16 %v12334
    %v12374 = vunpack.c.l.b16 %v12335
    %v12375 = vunpack.c.l.b16 %v12336
    %v12376 = vunpack.c.l.b16 %v12337
    %v12377 = vunpack.c.l.b16 %v12338
    %v12378 = vunpack.c.l.b16 %v12339
    %v12379 = vunpack.c.l.b16 %v12340
    %v12380 = vunpack.c.l.b16 %v12341
    %v12381 = vunpack.c.l.b16 %v12342
    %v12382 = vunpack.c.l.b16 %v12343
    %v12383 = vpack.c.b16 %v12368, %v12367
    %v12384 = vpack.c.b16 %v12370, %v12369
    %v12385 = vpack.c.b16 %v12372, %v12371
    %v12386 = vpack.c.b16 %v12374, %v12373
    %v12387 = vpack.c.b16 %v12376, %v12375
    %v12388 = vpack.c.b16 %v12378, %v12377
    %v12389 = vpack.c.b16 %v12380, %v12379
    %v12390 = vpack.c.b16 %v12382, %v12381
    %12399 = vmatprep.subr.bf16.mxu0 0
    %12400 = vmatpush1.bf16.msra.mxu0 %v12383
    %12401 = vmatprep.subr.bf16.mxu0 0
    %12402 = vmatpush1.bf16.msra.mxu0 %v12384
    %12403 = vmatprep.subr.bf16.mxu0 0
    %12404 = vmatpush1.bf16.msra.mxu0 %v12385
    %12405 = vmatprep.subr.bf16.mxu0 0
    %12406 = vmatpush1.bf16.msra.mxu0 %v12386
    %12407 = vmatprep.subr.bf16.mxu0 0
    %12408 = vmatpush1.bf16.msra.mxu0 %v12387
    %12409 = vmatprep.subr.bf16.mxu0 0
    %12410 = vmatpush1.bf16.msra.mxu0 %v12388
    %12411 = vmatprep.subr.bf16.mxu0 0
    %12412 = vmatpush1.bf16.msra.mxu0 %v12389
    %12413 = vmatprep.subr.bf16.mxu0 0
    %12414 = vmatpush1.bf16.msra.mxu0 %v12390
    %12415 = vmatprep.subr.bf16.mxu0 0
    %12416 = vmatpush1.bf16.msra.mxu0 0
    %12417 = vmatprep.subr.bf16.mxu0 0
    %12418 = vmatpush1.bf16.msra.mxu0 0
    %12419 = vmatprep.subr.bf16.mxu0 0
    %12420 = vmatpush1.bf16.msra.mxu0 0
    %12421 = vmatprep.subr.bf16.mxu0 0
    %12422 = vmatpush1.bf16.msra.mxu0 0
    %12423 = vmatprep.subr.bf16.mxu0 0
    %12424 = vmatpush1.bf16.msra.mxu0 0
    %12425 = vmatprep.subr.bf16.mxu0 0
    %12426 = vmatpush1.bf16.msra.mxu0 0
    %12427 = vmatprep.subr.bf16.mxu0 0
    %12428 = vmatpush1.bf16.msra.mxu0 0
    %12429 = vmatprep.subr.bf16.mxu0 0
    %12430 = vmatpush1.bf16.msra.mxu0 0
    %12431 = vmatprep.mubr.bf16.mxu0 0
    %12432 = vmatmul.mubr.bf16.gmra.mrb[0].mxu0 %v12327
    %v12433 = vpop.f32.mrb[0].mxu0
    %v12434 = vadd.f32 %v12349, %v12433
    %v12435 = vpop.f32.mrb[0].mxu0
    %v12436 = vpop.f32.mrb[0].mxu0
    %v12437 = vpop.f32.mrb[0].mxu0
    %12438 = vdwg.mxu0
    %vm12439 = vcmask 58368
    %12440 = vst.msk [vmem:[#allocation2] sm:$0x3] %vm12439, %v12434
    // Predicated region
    $region46: #{encoder_forward.1} parent=1 // pred_check
      _
    $region47: #{encoder_forward.1} parent=1 // pred_check_branch
      %12442 = sbr.rel (0) target = $region49
    $region48: #{encoder_forward.1} parent=1 // pred_region
      %s12444 = ssub.s32 32, 32
      %12445 = vsyncadd [#allocation3], %s12444
      %s12447 = sshll.u32 [#allocation2], 4
      %s12448 = int_to_ptr.vmem [resolvable:$true] %s12447
      %12450 = dma.vmem_to_hbm [thread:$0]  %s12448, 32, %s11, [#allocation3]
    $region49: #{encoder_forward.1} parent=1 // pred_fallthru
      _
    // Predicated region
    $region50: #{encoder_forward.1} parent=1 // pred_check
      _
    $region51: #{encoder_forward.1} parent=1 // pred_check_branch
      %12452 = sbr.rel (0) target = $region53
    $region52: #{encoder_forward.1} parent=1 // pred_region
      %12453 = dma.done [#allocation3], 32
    $region53: #{encoder_forward.1} parent=1 // pred_fallthru
      _
    %12454 = vsyncpa [#allocation3], 1

</llo_original>
